<compile_context>
chip_gen: v7x
topology: tpu7x:2x2x1
jax: 0.10.0
libtpu: 0.0.40
codegen_flags: <defaults>
</compile_context>

<pallas_src>
import functools
import math

import jax
import jax.numpy as jnp
from jax import lax
from jax.experimental import pallas as pl
from jax.experimental.pallas import tpu as pltpu


# ----------------------------------------------------------------------------
# Pallas kernels
# ----------------------------------------------------------------------------
def _conv_kernel(p_ref, w_ref, b_ref, *rest, activation, res_mode):
    """One row-tile of: act(patches @ w + bias [+ residual]).

    res_mode:
      "none"   : rest = (o_ref,)
      "tensor" : rest = (res_ref, o_ref)                      residual added pre-activation
      "conv"   : rest = (ds_p_ref, wd_ref, bd_ref, o_ref)     fused 1x1 downsample residual
    """
    o_ref = rest[-1]
    acc = jnp.dot(p_ref[...], w_ref[...], preferred_element_type=jnp.float32)
    acc = acc + b_ref[...]
    if res_mode == "tensor":
        acc = acc + rest[0][...]
    elif res_mode == "conv":
        acc = acc + jnp.dot(rest[0][...], rest[1][...],
                            preferred_element_type=jnp.float32) + rest[2][...]
    if activation == "relu":
        acc = jnp.maximum(acc, 0.0)
    o_ref[...] = acc.astype(o_ref.dtype)


def _maxpool_kernel(p_ref, o_ref):
    # p_ref: (KK, rows, 128) lane-dense slab; elementwise max over the KK window taps.
    o_ref[...] = jnp.max(p_ref[...], axis=0)


def _layernorm(x, g, b):
    mean = jnp.mean(x, axis=-1, keepdims=True)
    var = jnp.mean(jnp.square(x - mean), axis=-1, keepdims=True)
    return (x - mean) * lax.rsqrt(var + 1e-5) * g + b


def _transformer_layer_kernel(x_ref, mask_ref, in_w_ref, in_b_ref,
                              out_w_ref, out_b_ref, ln1_g_ref, ln1_b_ref,
                              ff1_w_ref, ff1_b_ref, ff2_w_ref, ff2_b_ref,
                              ln2_g_ref, ln2_b_ref, o_ref,
                              qkv_scr, attn_scr, *, num_heads):
    """Whole PyTorch TransformerEncoderLayer (post-norm, gelu, eval) in one kernel.

    x_ref: (B*S, D) tokens, rows laid out batch-major (b*S + s).  mask_ref is an
    additive (B*S, B*S) block-diagonal mask (0 same-batch, -1e30 cross-batch) so
    per-head attention over all rows equals independent per-batch attention.
    """
    D = x_ref.shape[1]
    Dh = D // num_heads
    scale = 1.0 / math.sqrt(Dh)

    x = x_ref[...]
    qkv_scr[...] = (jnp.dot(x, in_w_ref[...], preferred_element_type=jnp.float32)
                    + in_b_ref[...])
    mask = mask_ref[...]

    for h in range(num_heads):
        q = qkv_scr[:, h * Dh:(h + 1) * Dh]
        k = qkv_scr[:, D + h * Dh:D + (h + 1) * Dh]
        v = qkv_scr[:, 2 * D + h * Dh:2 * D + (h + 1) * Dh]
        s = lax.dot_general(q, k, (((1,), (1,)), ((), ())),
                            preferred_element_type=jnp.float32) * scale + mask
        s = s - jnp.max(s, axis=-1, keepdims=True)
        p = jnp.exp(s)
        p = p * pl.reciprocal(jnp.sum(p, axis=-1, keepdims=True), approx=True)
        attn_scr[:, h * Dh:(h + 1) * Dh] = jnp.dot(
            p, v, preferred_element_type=jnp.float32)

    attn = (jnp.dot(attn_scr[...], out_w_ref[...],
                    preferred_element_type=jnp.float32) + out_b_ref[...])
    x1 = _layernorm(x + attn, ln1_g_ref[...], ln1_b_ref[...])

    h1 = jnp.dot(x1, ff1_w_ref[...], preferred_element_type=jnp.float32) + ff1_b_ref[...]
    h1 = 0.5 * h1 * (1.0 + lax.erf(h1 * (1.0 / math.sqrt(2.0))))  # exact torch GELU
    h2 = jnp.dot(h1, ff2_w_ref[...], preferred_element_type=jnp.float32) + ff2_b_ref[...]
    o_ref[...] = _layernorm(x1 + h2, ln2_g_ref[...], ln2_b_ref[...])


def _pool_fc_kernel(x_ref, pool_ref, w_ref, b_ref, o_ref):
    # mean over sequence expressed as a tiny matmul: (B, B*S) @ (B*S, D), then FC.
    pooled = jnp.dot(pool_ref[...], x_ref[...], preferred_element_type=jnp.float32)
    o_ref[...] = (jnp.dot(pooled, w_ref[...], preferred_element_type=jnp.float32)
                  + b_ref[...])


# ----------------------------------------------------------------------------
# Wrappers
# ----------------------------------------------------------------------------
def _pick_tile(M, tmax=256):
    for t in (tmax, 128, 64, 32, 16, 8):
        if t <= M and M % t == 0:
            return t
    return M


def _im2col(x, kh, kw, stride, pad):
    """x: NHWC f32 -> bf16 patches (B*Ho*Wo, kh*kw*C)."""
    if pad:
        x = jnp.pad(x, ((0, 0), (pad, pad), (pad, pad), (0, 0)))
    Bn, Hp, Wp, C = x.shape
    Ho = (Hp - kh) // stride + 1
    Wo = (Wp - kw) // stride + 1
    cols = []
    for i in range(kh):
        for j in range(kw):
            cols.append(x[:, i:i + Ho * stride:stride, j:j + Wo * stride:stride, :])
    patches = jnp.concatenate(cols, axis=-1).reshape(Bn * Ho * Wo, kh * kw * C)
    return patches.astype(jnp.bfloat16), Ho, Wo


def conv2d(x, w, b, stride, pad, activation=None, residual=None, ds=None):
    """Fused conv (+folded-BN bias, +optional residual, +activation).

    x: NHWC f32.  w: (kh,kw,cin,cout) bf16.  b: (1,cout) f32.
    residual: (B,Ho,Wo,cout) f32 added before activation.
    ds: (x_in, wd, bd, stride) fused 1x1 downsample path producing the residual.
    """
    kh, kw, cin, cout = w.shape
    patches, Ho, Wo = _im2col(x, kh, kw, stride, pad)
    Bn = x.shape[0]
    M = Bn * Ho * Wo
    K = kh * kw * cin
    tm = _pick_tile(M)

    inputs = [patches, w.reshape(K, cout), b]
    in_specs = [pl.BlockSpec((tm, K), lambda i: (i, 0)),
                pl.BlockSpec((K, cout), lambda i: (0, 0)),
                pl.BlockSpec((1, cout), lambda i: (0, 0))]
    res_mode = "none"
    if residual is not None:
        res_mode = "tensor"
        inputs.append(residual.reshape(M, cout))
        in_specs.append(pl.BlockSpec((tm, cout), lambda i: (i, 0)))
    elif ds is not None:
        res_mode = "conv"
        x_in, wd, bd, s_ds = ds
        ds_p = x_in[:, ::s_ds, ::s_ds, :].reshape(M, -1).astype(jnp.bfloat16)
        Kd = ds_p.shape[1]
        inputs += [ds_p, wd, bd]
        in_specs += [pl.BlockSpec((tm, Kd), lambda i: (i, 0)),
                     pl.BlockSpec((Kd, cout), lambda i: (0, 0)),
                     pl.BlockSpec((1, cout), lambda i: (0, 0))]

    out = pl.pallas_call(
        functools.partial(_conv_kernel, activation=activation, res_mode=res_mode),
        out_shape=jax.ShapeDtypeStruct((M, cout), jnp.float32),
        grid=(M // tm,),
        in_specs=in_specs,
        out_specs=pl.BlockSpec((tm, cout), lambda i: (i, 0)),
        compiler_params=pltpu.CompilerParams(dimension_semantics=("parallel",)),
    )(*inputs)
    return out.reshape(Bn, Ho, Wo, cout)


def maxpool3x3_s2(x):
    Bn, Hh, Ww, C = x.shape
    xp = jnp.pad(x, ((0, 0), (1, 1), (1, 1), (0, 0)), constant_values=-jnp.inf)
    Ho = (Hh + 2 - 3) // 2 + 1
    Wo = (Ww + 2 - 3) // 2 + 1
    M = Bn * Ho * Wo
    taps = [xp[:, i:i + Ho * 2:2, j:j + Wo * 2:2, :].reshape(M * C)
            for i in range(3) for j in range(3)]
    stacked = jnp.stack(taps, axis=0)
    if (M * C) % 128 == 0:                      # lane-dense slab for unmasked stores
        rows = (M * C) // 128
        out = pl.pallas_call(
            _maxpool_kernel,
            out_shape=jax.ShapeDtypeStruct((rows, 128), jnp.float32),
        )(stacked.reshape(9, rows, 128))
    else:
        out = pl.pallas_call(
            _maxpool_kernel,
            out_shape=jax.ShapeDtypeStruct((M, C), jnp.float32),
        )(stacked.reshape(9, M, C))
    return out.reshape(Bn, Ho, Wo, C)


def transformer_encoder_layer(x2d, mask, p, num_heads):
    BS, D = x2d.shape
    return pl.pallas_call(
        functools.partial(_transformer_layer_kernel, num_heads=num_heads),
        out_shape=jax.ShapeDtypeStruct((BS, D), jnp.float32),
        scratch_shapes=[pltpu.VMEM((BS, 3 * D), jnp.float32),
                        pltpu.VMEM((BS, D), jnp.float32)],
    )(x2d, mask, p["in_w"], p["in_b"], p["out_w"], p["out_b"],
      p["ln1_g"], p["ln1_b"], p["ff1_w"], p["ff1_b"],
      p["ff2_w"], p["ff2_b"], p["ln2_g"], p["ln2_b"])


def resnet_transformer_forward(x_nchw, params, strides, num_heads):
    x = jnp.transpose(x_nchw, (0, 2, 3, 1)).astype(jnp.float32)   # NCHW -> NHWC

    # stem: conv7x7/2 + folded BN + ReLU, then maxpool 3x3/2
    x = conv2d(x, params["stem_w"], params["stem_b"], 2, 3, activation="relu")
    x = maxpool3x3_s2(x)

    # residual stages (ResNet-18 topology, 2 basic blocks per stage)
    for blk, s in zip(params["blocks"], strides):
        out1 = conv2d(x, blk["w1"], blk["b1"], s, 1, activation="relu")
        if "wd" in blk:    # fused downsample residual path
            x = conv2d(out1, blk["w2"], blk["b2"], 1, 1, activation="relu",
                       ds=(x, blk["wd"], blk["bd"], s))
        else:              # fused identity residual
            x = conv2d(out1, blk["w2"], blk["b2"], 1, 1, activation="relu",
                       residual=x)

    # tokens: batch-first (B*S, D); equivalent to PyTorch's (S, B, D) pipeline.
    Bn, Hh, Ww, C = x.shape
    S = Hh * Ww
    tokens = x.reshape(Bn * S, C)
    batch_ids = jnp.repeat(jnp.arange(Bn), S)
    attn_mask = jnp.where(batch_ids[:, None] == batch_ids[None, :],
                          0.0, -1e30).astype(jnp.float32)

    for lp in params["layers"]:
        tokens = transformer_encoder_layer(tokens, attn_mask, lp, num_heads)

    # fused mean-over-sequence + final FC (dropout is identity in eval mode)
    pool_mat = jnp.where(jnp.arange(Bn)[:, None] == batch_ids[None, :],
                         1.0 / S, 0.0).astype(jnp.float32)
    num_classes = params["fc_w"].shape[1]
    logits = pl.pallas_call(
        _pool_fc_kernel,
        out_shape=jax.ShapeDtypeStruct((Bn, num_classes), jnp.float32),
    )(tokens, pool_mat, params["fc_w"], params["fc_b"])
    return logits


# ----------------------------------------------------------------------------
# Deterministic parameter construction
# ----------------------------------------------------------------------------
def _xavier_uniform(key, shape):
    fan_in, fan_out = shape[0], shape[1]
    a = math.sqrt(6.0 / (fan_in + fan_out))
    return jax.random.uniform(key, shape, jnp.float32, -a, a)


def _conv_init(key, kh, kw, cin, cout):
    std = math.sqrt(2.0 / (kh * kw * cin))
    return jax.random.normal(key, (kh, kw, cin, cout), jnp.float32) * std


def init_params(key, c0, num_layers, num_classes):
    d = 8 * c0  # feature_dim
    keys = jax.random.split(key, 256)
    ki = iter(keys)
    params = {
        "stem_w": _conv_init(next(ki), 7, 7, 3, c0).astype(jnp.bfloat16),
        "stem_b": jnp.zeros((1, c0), jnp.float32),   # folded BN(eval) shift
    }
    blocks = []
    strides = []
    cin = c0
    for cout, stride in [(c0, 1), (2 * c0, 2), (4 * c0, 2), (8 * c0, 2)]:
        for bidx in range(2):
            s = stride if bidx == 0 else 1
            bcin = cin if bidx == 0 else cout
            blk = {
                "w1": _conv_init(next(ki), 3, 3, bcin, cout).astype(jnp.bfloat16),
                "b1": jnp.zeros((1, cout), jnp.float32),
                "w2": _conv_init(next(ki), 3, 3, cout, cout).astype(jnp.bfloat16),
                "b2": jnp.zeros((1, cout), jnp.float32),
            }
            if s != 1 or bcin != cout:
                blk["wd"] = (_conv_init(next(ki), 1, 1, bcin, cout)
                             .reshape(bcin, cout).astype(jnp.bfloat16))
                blk["bd"] = jnp.zeros((1, cout), jnp.float32)
            blocks.append(blk)
            strides.append(s)
        cin = cout
    params["blocks"] = blocks

    layers = []
    for _ in range(num_layers):
        layers.append({
            "in_w": _xavier_uniform(next(ki), (d, 3 * d)),
            "in_b": jnp.zeros((1, 3 * d), jnp.float32),
            "out_w": _xavier_uniform(next(ki), (d, d)),
            "out_b": jnp.zeros((1, d), jnp.float32),
            "ln1_g": jnp.ones((1, d), jnp.float32),
            "ln1_b": jnp.zeros((1, d), jnp.float32),
            "ff1_w": _xavier_uniform(next(ki), (d, 4 * d)),
            "ff1_b": jnp.zeros((1, 4 * d), jnp.float32),
            "ff2_w": _xavier_uniform(next(ki), (4 * d, d)),
            "ff2_b": jnp.zeros((1, d), jnp.float32),
            "ln2_g": jnp.ones((1, d), jnp.float32),
            "ln2_b": jnp.zeros((1, d), jnp.float32),
        })
    params["layers"] = layers
    params["fc_w"] = _xavier_uniform(next(ki), (d, num_classes))
    params["fc_b"] = jnp.zeros((1, num_classes), jnp.float32)
    return params, tuple(strides)


# ----------------------------------------------------------------------------
if __name__ == "__main__":
    num_classes = 7  # HAM10000-style skin-lesion classes
    config = {"model": {"backbone": "resnet18", "pretrained": False,
                        "transformer_dim": 64, "transformer_heads": 4,
                        "transformer_layers": 2, "dropout_rate": 0.1}}
    c0 = 8  # mini ResNet-18 base width -> feature_dim = 64

    key = jax.random.PRNGKey(0)
    pkey, xkey = jax.random.split(key)
    params, strides = init_params(pkey, c0,
                                  config["model"]["transformer_layers"],
                                  num_classes)

    # NCHW input, like the PyTorch module
    x = jax.random.normal(xkey, (2, 3, 64, 64), jnp.float32)

    fwd = jax.jit(functools.partial(
        resnet_transformer_forward, strides=strides,
        num_heads=config["model"]["transformer_heads"]))

    logits = jax.block_until_ready(fwd(x, params))

    assert logits.shape == (2, num_classes), logits.shape
    assert bool(jnp.all(jnp.isfinite(logits)))
    print("KERNEL_OK")
</pallas_src>

<mosaic_0001>
module attributes {stable_mosaic.version = 11 : i64} {
  func.func @_conv_kernel(%arg0: i32, %arg1: memref<256x147xbf16, #tpu.memory_space<vmem>>, %arg2: memref<147x8xbf16, #tpu.memory_space<vmem>>, %arg3: memref<1x8xf32, #tpu.memory_space<vmem>>, %arg4: memref<256x8xf32, #tpu.memory_space<vmem>>) attributes {dimension_semantics = [#tpu.dimension_semantics<parallel>], iteration_bounds = array<i64: 8>, scalar_prefetch = 0 : i64, scratch_operands = 0 : i64, tpu.core_type = #tpu.core_type<tc>, window_params = [{transform_indices = @transform_0, window_bounds = array<i64: 256, 147>}, {pipeline_mode = #tpu.pipeline_mode<synchronous>, transform_indices = @transform_1, window_bounds = array<i64: 147, 8>}, {pipeline_mode = #tpu.pipeline_mode<synchronous>, transform_indices = @transform_2, window_bounds = array<i64: 1, 8>}, {transform_indices = @transform_3, window_bounds = array<i64: 256, 8>}]} {
    %c0 = arith.constant 0 : index
    %c0_0 = arith.constant 0 : index
    %0 = vector.load %arg1[%c0, %c0_0] : memref<256x147xbf16, #tpu.memory_space<vmem>>, vector<256x147xbf16>
    %c0_1 = arith.constant 0 : index
    %c0_2 = arith.constant 0 : index
    %1 = vector.load %arg2[%c0_1, %c0_2] : memref<147x8xbf16, #tpu.memory_space<vmem>>, vector<147x8xbf16>
    %cst = arith.constant dense<0.000000e+00> : vector<256x8xf32>
    %2 = tpu.matmul %0, %1, %cst {dimension_numbers = #tpu.dot_dimension_numbers<[1], [0], [0], [1], [0, 0, 1, 1], [], []>} : vector<256x147xbf16>, vector<147x8xbf16>, vector<256x8xf32> -> vector<256x8xf32>
    %c0_3 = arith.constant 0 : index
    %c0_4 = arith.constant 0 : index
    %3 = vector.load %arg3[%c0_3, %c0_4] : memref<1x8xf32, #tpu.memory_space<vmem>>, vector<1x8xf32>
    %4 = vector.broadcast %3 : vector<1x8xf32> to vector<256x8xf32>
    %5 = arith.addf %2, %4 : vector<256x8xf32>
    %cst_5 = arith.constant 0.000000e+00 : f32
    %6 = vector.broadcast %cst_5 : f32 to vector<256x8xf32>
    %7 = arith.maximumf %5, %6 : vector<256x8xf32>
    %c0_6 = arith.constant 0 : index
    %c0_7 = arith.constant 0 : index
    %8 = vector.load %arg4[%c0_6, %c0_7] : memref<256x8xf32, #tpu.memory_space<vmem>>, vector<256x8xf32>
    tpu.vector_store %arg4[%c0_6, %c0_7], %7 {strides = array<i32>} : memref<256x8xf32, #tpu.memory_space<vmem>>, vector<256x8xf32>,
    return
  }
  func.func @transform_0(%arg0: i32) -> (i32, i32) {
    %c0_i32 = arith.constant 0 : i32
    %c0_i32_0 = arith.constant 0 : i32
    return %arg0, %c0_i32 : i32, i32
  }
  func.func @transform_1(%arg0: i32) -> (i32, i32) {
    %c0_i32 = arith.constant 0 : i32
    %c0_i32_0 = arith.constant 0 : i32
    %c0_i32_1 = arith.constant 0 : i32
    return %c0_i32, %c0_i32_0 : i32, i32
  }
  func.func @transform_2(%arg0: i32) -> (i32, i32) {
    %c0_i32 = arith.constant 0 : i32
    %c0_i32_0 = arith.constant 0 : i32
    %c0_i32_1 = arith.constant 0 : i32
    return %c0_i32, %c0_i32_0 : i32, i32
  }
  func.func @transform_3(%arg0: i32) -> (i32, i32) {
    %c0_i32 = arith.constant 0 : i32
    %c0_i32_0 = arith.constant 0 : i32
    return %arg0, %c0_i32 : i32, i32
  }
}

module attributes {stable_mosaic.version = 11 : i64} {
  func.func @_maxpool_kernel(%arg0: memref<9x32x128xf32, #tpu.memory_space<vmem>>, %arg1: memref<32x128xf32, #tpu.memory_space<vmem>>) attributes {dimension_semantics = [], scalar_prefetch = 0 : i64, scratch_operands = 0 : i64, tpu.core_type = #tpu.core_type<tc>} {
    %c0 = arith.constant 0 : index
    %c0_0 = arith.constant 0 : index
    %c0_1 = arith.constant 0 : index
    %0 = vector.load %arg0[%c0, %c0_0, %c0_1] : memref<9x32x128xf32, #tpu.memory_space<vmem>>, vector<9x32x128xf32>
    %cst = arith.constant dense<0xFF800000> : vector<32x128xf32>
    %1 = vector.multi_reduction <maximumf>, %0, %cst [0] : vector<9x32x128xf32> to vector<32x128xf32>
    %c0_2 = arith.constant 0 : index
    %c0_3 = arith.constant 0 : index
    %2 = vector.load %arg1[%c0_2, %c0_3] : memref<32x128xf32, #tpu.memory_space<vmem>>, vector<32x128xf32>
    tpu.vector_store %arg1[%c0_2, %c0_3], %1 {strides = array<i32>} : memref<32x128xf32, #tpu.memory_space<vmem>>, vector<32x128xf32>,
    return
  }
}

module attributes {stable_mosaic.version = 11 : i64} {
  func.func @_conv_kernel(%arg0: i32, %arg1: memref<256x72xbf16, #tpu.memory_space<vmem>>, %arg2: memref<72x8xbf16, #tpu.memory_space<vmem>>, %arg3: memref<1x8xf32, #tpu.memory_space<vmem>>, %arg4: memref<256x8xf32, #tpu.memory_space<vmem>>) attributes {dimension_semantics = [#tpu.dimension_semantics<parallel>], iteration_bounds = array<i64: 2>, scalar_prefetch = 0 : i64, scratch_operands = 0 : i64, tpu.core_type = #tpu.core_type<tc>, window_params = [{transform_indices = @transform_0, window_bounds = array<i64: 256, 72>}, {pipeline_mode = #tpu.pipeline_mode<synchronous>, transform_indices = @transform_1, window_bounds = array<i64: 72, 8>}, {pipeline_mode = #tpu.pipeline_mode<synchronous>, transform_indices = @transform_2, window_bounds = array<i64: 1, 8>}, {transform_indices = @transform_3, window_bounds = array<i64: 256, 8>}]} {
    %c0 = arith.constant 0 : index
    %c0_0 = arith.constant 0 : index
    %0 = vector.load %arg1[%c0, %c0_0] : memref<256x72xbf16, #tpu.memory_space<vmem>>, vector<256x72xbf16>
    %c0_1 = arith.constant 0 : index
    %c0_2 = arith.constant 0 : index
    %1 = vector.load %arg2[%c0_1, %c0_2] : memref<72x8xbf16, #tpu.memory_space<vmem>>, vector<72x8xbf16>
    %cst = arith.constant dense<0.000000e+00> : vector<256x8xf32>
    %2 = tpu.matmul %0, %1, %cst {dimension_numbers = #tpu.dot_dimension_numbers<[1], [0], [0], [1], [0, 0, 1, 1], [], []>} : vector<256x72xbf16>, vector<72x8xbf16>, vector<256x8xf32> -> vector<256x8xf32>
    %c0_3 = arith.constant 0 : index
    %c0_4 = arith.constant 0 : index
    %3 = vector.load %arg3[%c0_3, %c0_4] : memref<1x8xf32, #tpu.memory_space<vmem>>, vector<1x8xf32>
    %4 = vector.broadcast %3 : vector<1x8xf32> to vector<256x8xf32>
    %5 = arith.addf %2, %4 : vector<256x8xf32>
    %cst_5 = arith.constant 0.000000e+00 : f32
    %6 = vector.broadcast %cst_5 : f32 to vector<256x8xf32>
    %7 = arith.maximumf %5, %6 : vector<256x8xf32>
    %c0_6 = arith.constant 0 : index
    %c0_7 = arith.constant 0 : index
    %8 = vector.load %arg4[%c0_6, %c0_7] : memref<256x8xf32, #tpu.memory_space<vmem>>, vector<256x8xf32>
    tpu.vector_store %arg4[%c0_6, %c0_7], %7 {strides = array<i32>} : memref<256x8xf32, #tpu.memory_space<vmem>>, vector<256x8xf32>,
    return
  }
  func.func @transform_0(%arg0: i32) -> (i32, i32) {
    %c0_i32 = arith.constant 0 : i32
    %c0_i32_0 = arith.constant 0 : i32
    return %arg0, %c0_i32 : i32, i32
  }
  func.func @transform_1(%arg0: i32) -> (i32, i32) {
    %c0_i32 = arith.constant 0 : i32
    %c0_i32_0 = arith.constant 0 : i32
    %c0_i32_1 = arith.constant 0 : i32
    return %c0_i32, %c0_i32_0 : i32, i32
  }
  func.func @transform_2(%arg0: i32) -> (i32, i32) {
    %c0_i32 = arith.constant 0 : i32
    %c0_i32_0 = arith.constant 0 : i32
    %c0_i32_1 = arith.constant 0 : i32
    return %c0_i32, %c0_i32_0 : i32, i32
  }
  func.func @transform_3(%arg0: i32) -> (i32, i32) {
    %c0_i32 = arith.constant 0 : i32
    %c0_i32_0 = arith.constant 0 : i32
    return %arg0, %c0_i32 : i32, i32
  }
}

module attributes {stable_mosaic.version = 11 : i64} {
  func.func @_conv_kernel(%arg0: i32, %arg1: memref<256x72xbf16, #tpu.memory_space<vmem>>, %arg2: memref<72x8xbf16, #tpu.memory_space<vmem>>, %arg3: memref<1x8xf32, #tpu.memory_space<vmem>>, %arg4: memref<256x8xf32, #tpu.memory_space<vmem>>, %arg5: memref<256x8xf32, #tpu.memory_space<vmem>>) attributes {dimension_semantics = [#tpu.dimension_semantics<parallel>], iteration_bounds = array<i64: 2>, scalar_prefetch = 0 : i64, scratch_operands = 0 : i64, tpu.core_type = #tpu.core_type<tc>, window_params = [{transform_indices = @transform_0, window_bounds = array<i64: 256, 72>}, {pipeline_mode = #tpu.pipeline_mode<synchronous>, transform_indices = @transform_1, window_bounds = array<i64: 72, 8>}, {pipeline_mode = #tpu.pipeline_mode<synchronous>, transform_indices = @transform_2, window_bounds = array<i64: 1, 8>}, {transform_indices = @transform_3, window_bounds = array<i64: 256, 8>}, {transform_indices = @transform_4, window_bounds = array<i64: 256, 8>}]} {
    %c0 = arith.constant 0 : index
    %c0_0 = arith.constant 0 : index
    %0 = vector.load %arg1[%c0, %c0_0] : memref<256x72xbf16, #tpu.memory_space<vmem>>, vector<256x72xbf16>
    %c0_1 = arith.constant 0 : index
    %c0_2 = arith.constant 0 : index
    %1 = vector.load %arg2[%c0_1, %c0_2] : memref<72x8xbf16, #tpu.memory_space<vmem>>, vector<72x8xbf16>
    %cst = arith.constant dense<0.000000e+00> : vector<256x8xf32>
    %2 = tpu.matmul %0, %1, %cst {dimension_numbers = #tpu.dot_dimension_numbers<[1], [0], [0], [1], [0, 0, 1, 1], [], []>} : vector<256x72xbf16>, vector<72x8xbf16>, vector<256x8xf32> -> vector<256x8xf32>
    %c0_3 = arith.constant 0 : index
    %c0_4 = arith.constant 0 : index
    %3 = vector.load %arg3[%c0_3, %c0_4] : memref<1x8xf32, #tpu.memory_space<vmem>>, vector<1x8xf32>
    %4 = vector.broadcast %3 : vector<1x8xf32> to vector<256x8xf32>
    %5 = arith.addf %2, %4 : vector<256x8xf32>
    %c0_5 = arith.constant 0 : index
    %c0_6 = arith.constant 0 : index
    %6 = vector.load %arg4[%c0_5, %c0_6] : memref<256x8xf32, #tpu.memory_space<vmem>>, vector<256x8xf32>
    %7 = arith.addf %5, %6 : vector<256x8xf32>
    %cst_7 = arith.constant 0.000000e+00 : f32
    %8 = vector.broadcast %cst_7 : f32 to vector<256x8xf32>
    %9 = arith.maximumf %7, %8 : vector<256x8xf32>
    %c0_8 = arith.constant 0 : index
    %c0_9 = arith.constant 0 : index
    %10 = vector.load %arg5[%c0_8, %c0_9] : memref<256x8xf32, #tpu.memory_space<vmem>>, vector<256x8xf32>
    tpu.vector_store %arg5[%c0_8, %c0_9], %9 {strides = array<i32>} : memref<256x8xf32, #tpu.memory_space<vmem>>, vector<256x8xf32>,
    return
  }
  func.func @transform_0(%arg0: i32) -> (i32, i32) {
    %c0_i32 = arith.constant 0 : i32
    %c0_i32_0 = arith.constant 0 : i32
    return %arg0, %c0_i32 : i32, i32
  }
  func.func @transform_1(%arg0: i32) -> (i32, i32) {
    %c0_i32 = arith.constant 0 : i32
    %c0_i32_0 = arith.constant 0 : i32
    %c0_i32_1 = arith.constant 0 : i32
    return %c0_i32, %c0_i32_0 : i32, i32
  }
  func.func @transform_2(%arg0: i32) -> (i32, i32) {
    %c0_i32 = arith.constant 0 : i32
    %c0_i32_0 = arith.constant 0 : i32
    %c0_i32_1 = arith.constant 0 : i32
    return %c0_i32, %c0_i32_0 : i32, i32
  }
  func.func @transform_3(%arg0: i32) -> (i32, i32) {
    %c0_i32 = arith.constant 0 : i32
    %c0_i32_0 = arith.constant 0 : i32
    return %arg0, %c0_i32 : i32, i32
  }
  func.func @transform_4(%arg0: i32) -> (i32, i32) {
    %c0_i32 = arith.constant 0 : i32
    %c0_i32_0 = arith.constant 0 : i32
    return %arg0, %c0_i32 : i32, i32
  }
}

module attributes {stable_mosaic.version = 11 : i64} {
  func.func @_conv_kernel(%arg0: i32, %arg1: memref<128x72xbf16, #tpu.memory_space<vmem>>, %arg2: memref<72x16xbf16, #tpu.memory_space<vmem>>, %arg3: memref<1x16xf32, #tpu.memory_space<vmem>>, %arg4: memref<128x16xf32, #tpu.memory_space<vmem>>) attributes {dimension_semantics = [#tpu.dimension_semantics<parallel>], iteration_bounds = array<i64: 1>, scalar_prefetch = 0 : i64, scratch_operands = 0 : i64, tpu.core_type = #tpu.core_type<tc>, window_params = [{transform_indices = @transform_0, window_bounds = array<i64: 128, 72>}, {pipeline_mode = #tpu.pipeline_mode<synchronous>, transform_indices = @transform_1, window_bounds = array<i64: 72, 16>}, {pipeline_mode = #tpu.pipeline_mode<synchronous>, transform_indices = @transform_2, window_bounds = array<i64: 1, 16>}, {transform_indices = @transform_3, window_bounds = array<i64: 128, 16>}]} {
    %c0 = arith.constant 0 : index
    %c0_0 = arith.constant 0 : index
    %0 = vector.load %arg1[%c0, %c0_0] : memref<128x72xbf16, #tpu.memory_space<vmem>>, vector<128x72xbf16>
    %c0_1 = arith.constant 0 : index
    %c0_2 = arith.constant 0 : index
    %1 = vector.load %arg2[%c0_1, %c0_2] : memref<72x16xbf16, #tpu.memory_space<vmem>>, vector<72x16xbf16>
    %cst = arith.constant dense<0.000000e+00> : vector<128x16xf32>
    %2 = tpu.matmul %0, %1, %cst {dimension_numbers = #tpu.dot_dimension_numbers<[1], [0], [0], [1], [0, 0, 1, 1], [], []>} : vector<128x72xbf16>, vector<72x16xbf16>, vector<128x16xf32> -> vector<128x16xf32>
    %c0_3 = arith.constant 0 : index
    %c0_4 = arith.constant 0 : index
    %3 = vector.load %arg3[%c0_3, %c0_4] : memref<1x16xf32, #tpu.memory_space<vmem>>, vector<1x16xf32>
    %4 = vector.broadcast %3 : vector<1x16xf32> to vector<128x16xf32>
    %5 = arith.addf %2, %4 : vector<128x16xf32>
    %cst_5 = arith.constant 0.000000e+00 : f32
    %6 = vector.broadcast %cst_5 : f32 to vector<128x16xf32>
    %7 = arith.maximumf %5, %6 : vector<128x16xf32>
    %c0_6 = arith.constant 0 : index
    %c0_7 = arith.constant 0 : index
    %8 = vector.load %arg4[%c0_6, %c0_7] : memref<128x16xf32, #tpu.memory_space<vmem>>, vector<128x16xf32>
    tpu.vector_store %arg4[%c0_6, %c0_7], %7 {strides = array<i32>} : memref<128x16xf32, #tpu.memory_space<vmem>>, vector<128x16xf32>,
    return
  }
  func.func @transform_0(%arg0: i32) -> (i32, i32) {
    %c0_i32 = arith.constant 0 : i32
    %c0_i32_0 = arith.constant 0 : i32
    return %arg0, %c0_i32 : i32, i32
  }
  func.func @transform_1(%arg0: i32) -> (i32, i32) {
    %c0_i32 = arith.constant 0 : i32
    %c0_i32_0 = arith.constant 0 : i32
    %c0_i32_1 = arith.constant 0 : i32
    return %c0_i32, %c0_i32_0 : i32, i32
  }
  func.func @transform_2(%arg0: i32) -> (i32, i32) {
    %c0_i32 = arith.constant 0 : i32
    %c0_i32_0 = arith.constant 0 : i32
    %c0_i32_1 = arith.constant 0 : i32
    return %c0_i32, %c0_i32_0 : i32, i32
  }
  func.func @transform_3(%arg0: i32) -> (i32, i32) {
    %c0_i32 = arith.constant 0 : i32
    %c0_i32_0 = arith.constant 0 : i32
    return %arg0, %c0_i32 : i32, i32
  }
}

module attributes {stable_mosaic.version = 11 : i64} {
  func.func @_conv_kernel(%arg0: i32, %arg1: memref<128x144xbf16, #tpu.memory_space<vmem>>, %arg2: memref<144x16xbf16, #tpu.memory_space<vmem>>, %arg3: memref<1x16xf32, #tpu.memory_space<vmem>>, %arg4: memref<128x16xf32, #tpu.memory_space<vmem>>) attributes {dimension_semantics = [#tpu.dimension_semantics<parallel>], iteration_bounds = array<i64: 1>, scalar_prefetch = 0 : i64, scratch_operands = 0 : i64, tpu.core_type = #tpu.core_type<tc>, window_params = [{transform_indices = @transform_0, window_bounds = array<i64: 128, 144>}, {pipeline_mode = #tpu.pipeline_mode<synchronous>, transform_indices = @transform_1, window_bounds = array<i64: 144, 16>}, {pipeline_mode = #tpu.pipeline_mode<synchronous>, transform_indices = @transform_2, window_bounds = array<i64: 1, 16>}, {transform_indices = @transform_3, window_bounds = array<i64: 128, 16>}]} {
    %c0 = arith.constant 0 : index
    %c0_0 = arith.constant 0 : index
    %0 = vector.load %arg1[%c0, %c0_0] : memref<128x144xbf16, #tpu.memory_space<vmem>>, vector<128x144xbf16>
    %c0_1 = arith.constant 0 : index
    %c0_2 = arith.constant 0 : index
    %1 = vector.load %arg2[%c0_1, %c0_2] : memref<144x16xbf16, #tpu.memory_space<vmem>>, vector<144x16xbf16>
    %cst = arith.constant dense<0.000000e+00> : vector<128x16xf32>
    %2 = tpu.matmul %0, %1, %cst {dimension_numbers = #tpu.dot_dimension_numbers<[1], [0], [0], [1], [0, 0, 1, 1], [], []>} : vector<128x144xbf16>, vector<144x16xbf16>, vector<128x16xf32> -> vector<128x16xf32>
    %c0_3 = arith.constant 0 : index
    %c0_4 = arith.constant 0 : index
    %3 = vector.load %arg3[%c0_3, %c0_4] : memref<1x16xf32, #tpu.memory_space<vmem>>, vector<1x16xf32>
    %4 = vector.broadcast %3 : vector<1x16xf32> to vector<128x16xf32>
    %5 = arith.addf %2, %4 : vector<128x16xf32>
    %cst_5 = arith.constant 0.000000e+00 : f32
    %6 = vector.broadcast %cst_5 : f32 to vector<128x16xf32>
    %7 = arith.maximumf %5, %6 : vector<128x16xf32>
    %c0_6 = arith.constant 0 : index
    %c0_7 = arith.constant 0 : index
    %8 = vector.load %arg4[%c0_6, %c0_7] : memref<128x16xf32, #tpu.memory_space<vmem>>, vector<128x16xf32>
    tpu.vector_store %arg4[%c0_6, %c0_7], %7 {strides = array<i32>} : memref<128x16xf32, #tpu.memory_space<vmem>>, vector<128x16xf32>,
    return
  }
  func.func @transform_0(%arg0: i32) -> (i32, i32) {
    %c0_i32 = arith.constant 0 : i32
    %c0_i32_0 = arith.constant 0 : i32
    return %arg0, %c0_i32 : i32, i32
  }
  func.func @transform_1(%arg0: i32) -> (i32, i32) {
    %c0_i32 = arith.constant 0 : i32
    %c0_i32_0 = arith.constant 0 : i32
    %c0_i32_1 = arith.constant 0 : i32
    return %c0_i32, %c0_i32_0 : i32, i32
  }
  func.func @transform_2(%arg0: i32) -> (i32, i32) {
    %c0_i32 = arith.constant 0 : i32
    %c0_i32_0 = arith.constant 0 : i32
    %c0_i32_1 = arith.constant 0 : i32
    return %c0_i32, %c0_i32_0 : i32, i32
  }
  func.func @transform_3(%arg0: i32) -> (i32, i32) {
    %c0_i32 = arith.constant 0 : i32
    %c0_i32_0 = arith.constant 0 : i32
    return %arg0, %c0_i32 : i32, i32
  }
}

module attributes {stable_mosaic.version = 11 : i64} {
  func.func @_conv_kernel(%arg0: i32, %arg1: memref<128x144xbf16, #tpu.memory_space<vmem>>, %arg2: memref<144x16xbf16, #tpu.memory_space<vmem>>, %arg3: memref<1x16xf32, #tpu.memory_space<vmem>>, %arg4: memref<128x8xbf16, #tpu.memory_space<vmem>>, %arg5: memref<8x16xbf16, #tpu.memory_space<vmem>>, %arg6: memref<1x16xf32, #tpu.memory_space<vmem>>, %arg7: memref<128x16xf32, #tpu.memory_space<vmem>>) attributes {dimension_semantics = [#tpu.dimension_semantics<parallel>], iteration_bounds = array<i64: 1>, scalar_prefetch = 0 : i64, scratch_operands = 0 : i64, tpu.core_type = #tpu.core_type<tc>, window_params = [{transform_indices = @transform_0, window_bounds = array<i64: 128, 144>}, {pipeline_mode = #tpu.pipeline_mode<synchronous>, transform_indices = @transform_1, window_bounds = array<i64: 144, 16>}, {pipeline_mode = #tpu.pipeline_mode<synchronous>, transform_indices = @transform_2, window_bounds = array<i64: 1, 16>}, {transform_indices = @transform_3, window_bounds = array<i64: 128, 8>}, {pipeline_mode = #tpu.pipeline_mode<synchronous>, transform_indices = @transform_4, window_bounds = array<i64: 8, 16>}, {pipeline_mode = #tpu.pipeline_mode<synchronous>, transform_indices = @transform_5, window_bounds = array<i64: 1, 16>}, {transform_indices = @transform_6, window_bounds = array<i64: 128, 16>}]} {
    %c0 = arith.constant 0 : index
    %c0_0 = arith.constant 0 : index
    %0 = vector.load %arg1[%c0, %c0_0] : memref<128x144xbf16, #tpu.memory_space<vmem>>, vector<128x144xbf16>
    %c0_1 = arith.constant 0 : index
    %c0_2 = arith.constant 0 : index
    %1 = vector.load %arg2[%c0_1, %c0_2] : memref<144x16xbf16, #tpu.memory_space<vmem>>, vector<144x16xbf16>
    %cst = arith.constant dense<0.000000e+00> : vector<128x16xf32>
    %2 = tpu.matmul %0, %1, %cst {dimension_numbers = #tpu.dot_dimension_numbers<[1], [0], [0], [1], [0, 0, 1, 1], [], []>} : vector<128x144xbf16>, vector<144x16xbf16>, vector<128x16xf32> -> vector<128x16xf32>
    %c0_3 = arith.constant 0 : index
    %c0_4 = arith.constant 0 : index
    %3 = vector.load %arg3[%c0_3, %c0_4] : memref<1x16xf32, #tpu.memory_space<vmem>>, vector<1x16xf32>
    %4 = vector.broadcast %3 : vector<1x16xf32> to vector<128x16xf32>
    %5 = arith.addf %2, %4 : vector<128x16xf32>
    %c0_5 = arith.constant 0 : index
    %c0_6 = arith.constant 0 : index
    %6 = vector.load %arg4[%c0_5, %c0_6] : memref<128x8xbf16, #tpu.memory_space<vmem>>, vector<128x8xbf16>
    %c0_7 = arith.constant 0 : index
    %c0_8 = arith.constant 0 : index
    %7 = vector.load %arg5[%c0_7, %c0_8] : memref<8x16xbf16, #tpu.memory_space<vmem>>, vector<8x16xbf16>
    %cst_9 = arith.constant dense<0.000000e+00> : vector<128x16xf32>
    %8 = tpu.matmul %6, %7, %cst_9 {dimension_numbers = #tpu.dot_dimension_numbers<[1], [0], [0], [1], [0, 0, 1, 1], [], []>} : vector<128x8xbf16>, vector<8x16xbf16>, vector<128x16xf32> -> vector<128x16xf32>
    %9 = arith.addf %5, %8 : vector<128x16xf32>
    %c0_10 = arith.constant 0 : index
    %c0_11 = arith.constant 0 : index
    %10 = vector.load %arg6[%c0_10, %c0_11] : memref<1x16xf32, #tpu.memory_space<vmem>>, vector<1x16xf32>
    %11 = vector.broadcast %10 : vector<1x16xf32> to vector<128x16xf32>
    %12 = arith.addf %9, %11 : vector<128x16xf32>
    %cst_12 = arith.constant 0.000000e+00 : f32
    %13 = vector.broadcast %cst_12 : f32 to vector<128x16xf32>
    %14 = arith.maximumf %12, %13 : vector<128x16xf32>
    %c0_13 = arith.constant 0 : index
    %c0_14 = arith.constant 0 : index
    %15 = vector.load %arg7[%c0_13, %c0_14] : memref<128x16xf32, #tpu.memory_space<vmem>>, vector<128x16xf32>
    tpu.vector_store %arg7[%c0_13, %c0_14], %14 {strides = array<i32>} : memref<128x16xf32, #tpu.memory_space<vmem>>, vector<128x16xf32>,
    return
  }
  func.func @transform_0(%arg0: i32) -> (i32, i32) {
    %c0_i32 = arith.constant 0 : i32
    %c0_i32_0 = arith.constant 0 : i32
    return %arg0, %c0_i32 : i32, i32
  }
  func.func @transform_1(%arg0: i32) -> (i32, i32) {
    %c0_i32 = arith.constant 0 : i32
    %c0_i32_0 = arith.constant 0 : i32
    %c0_i32_1 = arith.constant 0 : i32
    return %c0_i32, %c0_i32_0 : i32, i32
  }
  func.func @transform_2(%arg0: i32) -> (i32, i32) {
    %c0_i32 = arith.constant 0 : i32
    %c0_i32_0 = arith.constant 0 : i32
    %c0_i32_1 = arith.constant 0 : i32
    return %c0_i32, %c0_i32_0 : i32, i32
  }
  func.func @transform_3(%arg0: i32) -> (i32, i32) {
    %c0_i32 = arith.constant 0 : i32
    %c0_i32_0 = arith.constant 0 : i32
    return %arg0, %c0_i32 : i32, i32
  }
  func.func @transform_4(%arg0: i32) -> (i32, i32) {
    %c0_i32 = arith.constant 0 : i32
    %c0_i32_0 = arith.constant 0 : i32
    %c0_i32_1 = arith.constant 0 : i32
    return %c0_i32, %c0_i32_0 : i32, i32
  }
  func.func @transform_5(%arg0: i32) -> (i32, i32) {
    %c0_i32 = arith.constant 0 : i32
    %c0_i32_0 = arith.constant 0 : i32
    %c0_i32_1 = arith.constant 0 : i32
    return %c0_i32, %c0_i32_0 : i32, i32
  }
  func.func @transform_6(%arg0: i32) -> (i32, i32) {
    %c0_i32 = arith.constant 0 : i32
    %c0_i32_0 = arith.constant 0 : i32
    return %arg0, %c0_i32 : i32, i32
  }
}

module attributes {stable_mosaic.version = 11 : i64} {
  func.func @_conv_kernel(%arg0: i32, %arg1: memref<128x144xbf16, #tpu.memory_space<vmem>>, %arg2: memref<144x16xbf16, #tpu.memory_space<vmem>>, %arg3: memref<1x16xf32, #tpu.memory_space<vmem>>, %arg4: memref<128x16xf32, #tpu.memory_space<vmem>>, %arg5: memref<128x16xf32, #tpu.memory_space<vmem>>) attributes {dimension_semantics = [#tpu.dimension_semantics<parallel>], iteration_bounds = array<i64: 1>, scalar_prefetch = 0 : i64, scratch_operands = 0 : i64, tpu.core_type = #tpu.core_type<tc>, window_params = [{transform_indices = @transform_0, window_bounds = array<i64: 128, 144>}, {pipeline_mode = #tpu.pipeline_mode<synchronous>, transform_indices = @transform_1, window_bounds = array<i64: 144, 16>}, {pipeline_mode = #tpu.pipeline_mode<synchronous>, transform_indices = @transform_2, window_bounds = array<i64: 1, 16>}, {transform_indices = @transform_3, window_bounds = array<i64: 128, 16>}, {transform_indices = @transform_4, window_bounds = array<i64: 128, 16>}]} {
    %c0 = arith.constant 0 : index
    %c0_0 = arith.constant 0 : index
    %0 = vector.load %arg1[%c0, %c0_0] : memref<128x144xbf16, #tpu.memory_space<vmem>>, vector<128x144xbf16>
    %c0_1 = arith.constant 0 : index
    %c0_2 = arith.constant 0 : index
    %1 = vector.load %arg2[%c0_1, %c0_2] : memref<144x16xbf16, #tpu.memory_space<vmem>>, vector<144x16xbf16>
    %cst = arith.constant dense<0.000000e+00> : vector<128x16xf32>
    %2 = tpu.matmul %0, %1, %cst {dimension_numbers = #tpu.dot_dimension_numbers<[1], [0], [0], [1], [0, 0, 1, 1], [], []>} : vector<128x144xbf16>, vector<144x16xbf16>, vector<128x16xf32> -> vector<128x16xf32>
    %c0_3 = arith.constant 0 : index
    %c0_4 = arith.constant 0 : index
    %3 = vector.load %arg3[%c0_3, %c0_4] : memref<1x16xf32, #tpu.memory_space<vmem>>, vector<1x16xf32>
    %4 = vector.broadcast %3 : vector<1x16xf32> to vector<128x16xf32>
    %5 = arith.addf %2, %4 : vector<128x16xf32>
    %c0_5 = arith.constant 0 : index
    %c0_6 = arith.constant 0 : index
    %6 = vector.load %arg4[%c0_5, %c0_6] : memref<128x16xf32, #tpu.memory_space<vmem>>, vector<128x16xf32>
    %7 = arith.addf %5, %6 : vector<128x16xf32>
    %cst_7 = arith.constant 0.000000e+00 : f32
    %8 = vector.broadcast %cst_7 : f32 to vector<128x16xf32>
    %9 = arith.maximumf %7, %8 : vector<128x16xf32>
    %c0_8 = arith.constant 0 : index
    %c0_9 = arith.constant 0 : index
    %10 = vector.load %arg5[%c0_8, %c0_9] : memref<128x16xf32, #tpu.memory_space<vmem>>, vector<128x16xf32>
    tpu.vector_store %arg5[%c0_8, %c0_9], %9 {strides = array<i32>} : memref<128x16xf32, #tpu.memory_space<vmem>>, vector<128x16xf32>,
    return
  }
  func.func @transform_0(%arg0: i32) -> (i32, i32) {
    %c0_i32 = arith.constant 0 : i32
    %c0_i32_0 = arith.constant 0 : i32
    return %arg0, %c0_i32 : i32, i32
  }
  func.func @transform_1(%arg0: i32) -> (i32, i32) {
    %c0_i32 = arith.constant 0 : i32
    %c0_i32_0 = arith.constant 0 : i32
    %c0_i32_1 = arith.constant 0 : i32
    return %c0_i32, %c0_i32_0 : i32, i32
  }
  func.func @transform_2(%arg0: i32) -> (i32, i32) {
    %c0_i32 = arith.constant 0 : i32
    %c0_i32_0 = arith.constant 0 : i32
    %c0_i32_1 = arith.constant 0 : i32
    return %c0_i32, %c0_i32_0 : i32, i32
  }
  func.func @transform_3(%arg0: i32) -> (i32, i32) {
    %c0_i32 = arith.constant 0 : i32
    %c0_i32_0 = arith.constant 0 : i32
    return %arg0, %c0_i32 : i32, i32
  }
  func.func @transform_4(%arg0: i32) -> (i32, i32) {
    %c0_i32 = arith.constant 0 : i32
    %c0_i32_0 = arith.constant 0 : i32
    return %arg0, %c0_i32 : i32, i32
  }
}

module attributes {stable_mosaic.version = 11 : i64} {
  func.func @_conv_kernel(%arg0: i32, %arg1: memref<32x144xbf16, #tpu.memory_space<vmem>>, %arg2: memref<144x32xbf16, #tpu.memory_space<vmem>>, %arg3: memref<1x32xf32, #tpu.memory_space<vmem>>, %arg4: memref<32x32xf32, #tpu.memory_space<vmem>>) attributes {dimension_semantics = [#tpu.dimension_semantics<parallel>], iteration_bounds = array<i64: 1>, scalar_prefetch = 0 : i64, scratch_operands = 0 : i64, tpu.core_type = #tpu.core_type<tc>, window_params = [{transform_indices = @transform_0, window_bounds = array<i64: 32, 144>}, {pipeline_mode = #tpu.pipeline_mode<synchronous>, transform_indices = @transform_1, window_bounds = array<i64: 144, 32>}, {pipeline_mode = #tpu.pipeline_mode<synchronous>, transform_indices = @transform_2, window_bounds = array<i64: 1, 32>}, {transform_indices = @transform_3, window_bounds = array<i64: 32, 32>}]} {
    %c0 = arith.constant 0 : index
    %c0_0 = arith.constant 0 : index
    %0 = vector.load %arg1[%c0, %c0_0] : memref<32x144xbf16, #tpu.memory_space<vmem>>, vector<32x144xbf16>
    %c0_1 = arith.constant 0 : index
    %c0_2 = arith.constant 0 : index
    %1 = vector.load %arg2[%c0_1, %c0_2] : memref<144x32xbf16, #tpu.memory_space<vmem>>, vector<144x32xbf16>
    %cst = arith.constant dense<0.000000e+00> : vector<32x32xf32>
    %2 = tpu.matmul %0, %1, %cst {dimension_numbers = #tpu.dot_dimension_numbers<[1], [0], [0], [1], [0, 0, 1, 1], [], []>} : vector<32x144xbf16>, vector<144x32xbf16>, vector<32x32xf32> -> vector<32x32xf32>
    %c0_3 = arith.constant 0 : index
    %c0_4 = arith.constant 0 : index
    %3 = vector.load %arg3[%c0_3, %c0_4] : memref<1x32xf32, #tpu.memory_space<vmem>>, vector<1x32xf32>
    %4 = vector.broadcast %3 : vector<1x32xf32> to vector<32x32xf32>
    %5 = arith.addf %2, %4 : vector<32x32xf32>
    %cst_5 = arith.constant 0.000000e+00 : f32
    %6 = vector.broadcast %cst_5 : f32 to vector<32x32xf32>
    %7 = arith.maximumf %5, %6 : vector<32x32xf32>
    %c0_6 = arith.constant 0 : index
    %c0_7 = arith.constant 0 : index
    %8 = vector.load %arg4[%c0_6, %c0_7] : memref<32x32xf32, #tpu.memory_space<vmem>>, vector<32x32xf32>
    tpu.vector_store %arg4[%c0_6, %c0_7], %7 {strides = array<i32>} : memref<32x32xf32, #tpu.memory_space<vmem>>, vector<32x32xf32>,
    return
  }
  func.func @transform_0(%arg0: i32) -> (i32, i32) {
    %c0_i32 = arith.constant 0 : i32
    %c0_i32_0 = arith.constant 0 : i32
    return %arg0, %c0_i32 : i32, i32
  }
  func.func @transform_1(%arg0: i32) -> (i32, i32) {
    %c0_i32 = arith.constant 0 : i32
    %c0_i32_0 = arith.constant 0 : i32
    %c0_i32_1 = arith.constant 0 : i32
    return %c0_i32, %c0_i32_0 : i32, i32
  }
  func.func @transform_2(%arg0: i32) -> (i32, i32) {
    %c0_i32 = arith.constant 0 : i32
    %c0_i32_0 = arith.constant 0 : i32
    %c0_i32_1 = arith.constant 0 : i32
    return %c0_i32, %c0_i32_0 : i32, i32
  }
  func.func @transform_3(%arg0: i32) -> (i32, i32) {
    %c0_i32 = arith.constant 0 : i32
    %c0_i32_0 = arith.constant 0 : i32
    return %arg0, %c0_i32 : i32, i32
  }
}

module attributes {stable_mosaic.version = 11 : i64} {
  func.func @_conv_kernel(%arg0: i32, %arg1: memref<32x288xbf16, #tpu.memory_space<vmem>>, %arg2: memref<288x32xbf16, #tpu.memory_space<vmem>>, %arg3: memref<1x32xf32, #tpu.memory_space<vmem>>, %arg4: memref<32x32xf32, #tpu.memory_space<vmem>>, %arg5: memref<32x32xf32, #tpu.memory_space<vmem>>) attributes {dimension_semantics = [#tpu.dimension_semantics<parallel>], iteration_bounds = array<i64: 1>, scalar_prefetch = 0 : i64, scratch_operands = 0 : i64, tpu.core_type = #tpu.core_type<tc>, window_params = [{transform_indices = @transform_0, window_bounds = array<i64: 32, 288>}, {pipeline_mode = #tpu.pipeline_mode<synchronous>, transform_indices = @transform_1, window_bounds = array<i64: 288, 32>}, {pipeline_mode = #tpu.pipeline_mode<synchronous>, transform_indices = @transform_2, window_bounds = array<i64: 1, 32>}, {transform_indices = @transform_3, window_bounds = array<i64: 32, 32>}, {transform_indices = @transform_4, window_bounds = array<i64: 32, 32>}]} {
    %c0 = arith.constant 0 : index
    %c0_0 = arith.constant 0 : index
    %0 = vector.load %arg1[%c0, %c0_0] : memref<32x288xbf16, #tpu.memory_space<vmem>>, vector<32x288xbf16>
    %c0_1 = arith.constant 0 : index
    %c0_2 = arith.constant 0 : index
    %1 = vector.load %arg2[%c0_1, %c0_2] : memref<288x32xbf16, #tpu.memory_space<vmem>>, vector<288x32xbf16>
    %cst = arith.constant dense<0.000000e+00> : vector<32x32xf32>
    %2 = tpu.matmul %0, %1, %cst {dimension_numbers = #tpu.dot_dimension_numbers<[1], [0], [0], [1], [0, 0, 1, 1], [], []>} : vector<32x288xbf16>, vector<288x32xbf16>, vector<32x32xf32> -> vector<32x32xf32>
    %c0_3 = arith.constant 0 : index
    %c0_4 = arith.constant 0 : index
    %3 = vector.load %arg3[%c0_3, %c0_4] : memref<1x32xf32, #tpu.memory_space<vmem>>, vector<1x32xf32>
    %4 = vector.broadcast %3 : vector<1x32xf32> to vector<32x32xf32>
    %5 = arith.addf %2, %4 : vector<32x32xf32>
    %c0_5 = arith.constant 0 : index
    %c0_6 = arith.constant 0 : index
    %6 = vector.load %arg4[%c0_5, %c0_6] : memref<32x32xf32, #tpu.memory_space<vmem>>, vector<32x32xf32>
    %7 = arith.addf %5, %6 : vector<32x32xf32>
    %cst_7 = arith.constant 0.000000e+00 : f32
    %8 = vector.broadcast %cst_7 : f32 to vector<32x32xf32>
    %9 = arith.maximumf %7, %8 : vector<32x32xf32>
    %c0_8 = arith.constant 0 : index
    %c0_9 = arith.constant 0 : index
    %10 = vector.load %arg5[%c0_8, %c0_9] : memref<32x32xf32, #tpu.memory_space<vmem>>, vector<32x32xf32>
    tpu.vector_store %arg5[%c0_8, %c0_9], %9 {strides = array<i32>} : memref<32x32xf32, #tpu.memory_space<vmem>>, vector<32x32xf32>,
    return
  }
  func.func @transform_0(%arg0: i32) -> (i32, i32) {
    %c0_i32 = arith.constant 0 : i32
    %c0_i32_0 = arith.constant 0 : i32
    return %arg0, %c0_i32 : i32, i32
  }
  func.func @transform_1(%arg0: i32) -> (i32, i32) {
    %c0_i32 = arith.constant 0 : i32
    %c0_i32_0 = arith.constant 0 : i32
    %c0_i32_1 = arith.constant 0 : i32
    return %c0_i32, %c0_i32_0 : i32, i32
  }
  func.func @transform_2(%arg0: i32) -> (i32, i32) {
    %c0_i32 = arith.constant 0 : i32
    %c0_i32_0 = arith.constant 0 : i32
    %c0_i32_1 = arith.constant 0 : i32
    return %c0_i32, %c0_i32_0 : i32, i32
  }
  func.func @transform_3(%arg0: i32) -> (i32, i32) {
    %c0_i32 = arith.constant 0 : i32
    %c0_i32_0 = arith.constant 0 : i32
    return %arg0, %c0_i32 : i32, i32
  }
  func.func @transform_4(%arg0: i32) -> (i32, i32) {
    %c0_i32 = arith.constant 0 : i32
    %c0_i32_0 = arith.constant 0 : i32
    return %arg0, %c0_i32 : i32, i32
  }
}

module attributes {stable_mosaic.version = 11 : i64} {
  func.func @_conv_kernel(%arg0: i32, %arg1: memref<32x288xbf16, #tpu.memory_space<vmem>>, %arg2: memref<288x32xbf16, #tpu.memory_space<vmem>>, %arg3: memref<1x32xf32, #tpu.memory_space<vmem>>, %arg4: memref<32x32xf32, #tpu.memory_space<vmem>>) attributes {dimension_semantics = [#tpu.dimension_semantics<parallel>], iteration_bounds = array<i64: 1>, scalar_prefetch = 0 : i64, scratch_operands = 0 : i64, tpu.core_type = #tpu.core_type<tc>, window_params = [{transform_indices = @transform_0, window_bounds = array<i64: 32, 288>}, {pipeline_mode = #tpu.pipeline_mode<synchronous>, transform_indices = @transform_1, window_bounds = array<i64: 288, 32>}, {pipeline_mode = #tpu.pipeline_mode<synchronous>, transform_indices = @transform_2, window_bounds = array<i64: 1, 32>}, {transform_indices = @transform_3, window_bounds = array<i64: 32, 32>}]} {
    %c0 = arith.constant 0 : index
    %c0_0 = arith.constant 0 : index
    %0 = vector.load %arg1[%c0, %c0_0] : memref<32x288xbf16, #tpu.memory_space<vmem>>, vector<32x288xbf16>
    %c0_1 = arith.constant 0 : index
    %c0_2 = arith.constant 0 : index
    %1 = vector.load %arg2[%c0_1, %c0_2] : memref<288x32xbf16, #tpu.memory_space<vmem>>, vector<288x32xbf16>
    %cst = arith.constant dense<0.000000e+00> : vector<32x32xf32>
    %2 = tpu.matmul %0, %1, %cst {dimension_numbers = #tpu.dot_dimension_numbers<[1], [0], [0], [1], [0, 0, 1, 1], [], []>} : vector<32x288xbf16>, vector<288x32xbf16>, vector<32x32xf32> -> vector<32x32xf32>
    %c0_3 = arith.constant 0 : index
    %c0_4 = arith.constant 0 : index
    %3 = vector.load %arg3[%c0_3, %c0_4] : memref<1x32xf32, #tpu.memory_space<vmem>>, vector<1x32xf32>
    %4 = vector.broadcast %3 : vector<1x32xf32> to vector<32x32xf32>
    %5 = arith.addf %2, %4 : vector<32x32xf32>
    %cst_5 = arith.constant 0.000000e+00 : f32
    %6 = vector.broadcast %cst_5 : f32 to vector<32x32xf32>
    %7 = arith.maximumf %5, %6 : vector<32x32xf32>
    %c0_6 = arith.constant 0 : index
    %c0_7 = arith.constant 0 : index
    %8 = vector.load %arg4[%c0_6, %c0_7] : memref<32x32xf32, #tpu.memory_space<vmem>>, vector<32x32xf32>
    tpu.vector_store %arg4[%c0_6, %c0_7], %7 {strides = array<i32>} : memref<32x32xf32, #tpu.memory_space<vmem>>, vector<32x32xf32>,
    return
  }
  func.func @transform_0(%arg0: i32) -> (i32, i32) {
    %c0_i32 = arith.constant 0 : i32
    %c0_i32_0 = arith.constant 0 : i32
    return %arg0, %c0_i32 : i32, i32
  }
  func.func @transform_1(%arg0: i32) -> (i32, i32) {
    %c0_i32 = arith.constant 0 : i32
    %c0_i32_0 = arith.constant 0 : i32
    %c0_i32_1 = arith.constant 0 : i32
    return %c0_i32, %c0_i32_0 : i32, i32
  }
  func.func @transform_2(%arg0: i32) -> (i32, i32) {
    %c0_i32 = arith.constant 0 : i32
    %c0_i32_0 = arith.constant 0 : i32
    %c0_i32_1 = arith.constant 0 : i32
    return %c0_i32, %c0_i32_0 : i32, i32
  }
  func.func @transform_3(%arg0: i32) -> (i32, i32) {
    %c0_i32 = arith.constant 0 : i32
    %c0_i32_0 = arith.constant 0 : i32
    return %arg0, %c0_i32 : i32, i32
  }
}

module attributes {stable_mosaic.version = 11 : i64} {
  func.func @_conv_kernel(%arg0: i32, %arg1: memref<32x288xbf16, #tpu.memory_space<vmem>>, %arg2: memref<288x32xbf16, #tpu.memory_space<vmem>>, %arg3: memref<1x32xf32, #tpu.memory_space<vmem>>, %arg4: memref<32x16xbf16, #tpu.memory_space<vmem>>, %arg5: memref<16x32xbf16, #tpu.memory_space<vmem>>, %arg6: memref<1x32xf32, #tpu.memory_space<vmem>>, %arg7: memref<32x32xf32, #tpu.memory_space<vmem>>) attributes {dimension_semantics = [#tpu.dimension_semantics<parallel>], iteration_bounds = array<i64: 1>, scalar_prefetch = 0 : i64, scratch_operands = 0 : i64, tpu.core_type = #tpu.core_type<tc>, window_params = [{transform_indices = @transform_0, window_bounds = array<i64: 32, 288>}, {pipeline_mode = #tpu.pipeline_mode<synchronous>, transform_indices = @transform_1, window_bounds = array<i64: 288, 32>}, {pipeline_mode = #tpu.pipeline_mode<synchronous>, transform_indices = @transform_2, window_bounds = array<i64: 1, 32>}, {transform_indices = @transform_3, window_bounds = array<i64: 32, 16>}, {pipeline_mode = #tpu.pipeline_mode<synchronous>, transform_indices = @transform_4, window_bounds = array<i64: 16, 32>}, {pipeline_mode = #tpu.pipeline_mode<synchronous>, transform_indices = @transform_5, window_bounds = array<i64: 1, 32>}, {transform_indices = @transform_6, window_bounds = array<i64: 32, 32>}]} {
    %c0 = arith.constant 0 : index
    %c0_0 = arith.constant 0 : index
    %0 = vector.load %arg1[%c0, %c0_0] : memref<32x288xbf16, #tpu.memory_space<vmem>>, vector<32x288xbf16>
    %c0_1 = arith.constant 0 : index
    %c0_2 = arith.constant 0 : index
    %1 = vector.load %arg2[%c0_1, %c0_2] : memref<288x32xbf16, #tpu.memory_space<vmem>>, vector<288x32xbf16>
    %cst = arith.constant dense<0.000000e+00> : vector<32x32xf32>
    %2 = tpu.matmul %0, %1, %cst {dimension_numbers = #tpu.dot_dimension_numbers<[1], [0], [0], [1], [0, 0, 1, 1], [], []>} : vector<32x288xbf16>, vector<288x32xbf16>, vector<32x32xf32> -> vector<32x32xf32>
    %c0_3 = arith.constant 0 : index
    %c0_4 = arith.constant 0 : index
    %3 = vector.load %arg3[%c0_3, %c0_4] : memref<1x32xf32, #tpu.memory_space<vmem>>, vector<1x32xf32>
    %4 = vector.broadcast %3 : vector<1x32xf32> to vector<32x32xf32>
    %5 = arith.addf %2, %4 : vector<32x32xf32>
    %c0_5 = arith.constant 0 : index
    %c0_6 = arith.constant 0 : index
    %6 = vector.load %arg4[%c0_5, %c0_6] : memref<32x16xbf16, #tpu.memory_space<vmem>>, vector<32x16xbf16>
    %c0_7 = arith.constant 0 : index
    %c0_8 = arith.constant 0 : index
    %7 = vector.load %arg5[%c0_7, %c0_8] : memref<16x32xbf16, #tpu.memory_space<vmem>>, vector<16x32xbf16>
    %cst_9 = arith.constant dense<0.000000e+00> : vector<32x32xf32>
    %8 = tpu.matmul %6, %7, %cst_9 {dimension_numbers = #tpu.dot_dimension_numbers<[1], [0], [0], [1], [0, 0, 1, 1], [], []>} : vector<32x16xbf16>, vector<16x32xbf16>, vector<32x32xf32> -> vector<32x32xf32>
    %9 = arith.addf %5, %8 : vector<32x32xf32>
    %c0_10 = arith.constant 0 : index
    %c0_11 = arith.constant 0 : index
    %10 = vector.load %arg6[%c0_10, %c0_11] : memref<1x32xf32, #tpu.memory_space<vmem>>, vector<1x32xf32>
    %11 = vector.broadcast %10 : vector<1x32xf32> to vector<32x32xf32>
    %12 = arith.addf %9, %11 : vector<32x32xf32>
    %cst_12 = arith.constant 0.000000e+00 : f32
    %13 = vector.broadcast %cst_12 : f32 to vector<32x32xf32>
    %14 = arith.maximumf %12, %13 : vector<32x32xf32>
    %c0_13 = arith.constant 0 : index
    %c0_14 = arith.constant 0 : index
    %15 = vector.load %arg7[%c0_13, %c0_14] : memref<32x32xf32, #tpu.memory_space<vmem>>, vector<32x32xf32>
    tpu.vector_store %arg7[%c0_13, %c0_14], %14 {strides = array<i32>} : memref<32x32xf32, #tpu.memory_space<vmem>>, vector<32x32xf32>,
    return
  }
  func.func @transform_0(%arg0: i32) -> (i32, i32) {
    %c0_i32 = arith.constant 0 : i32
    %c0_i32_0 = arith.constant 0 : i32
    return %arg0, %c0_i32 : i32, i32
  }
  func.func @transform_1(%arg0: i32) -> (i32, i32) {
    %c0_i32 = arith.constant 0 : i32
    %c0_i32_0 = arith.constant 0 : i32
    %c0_i32_1 = arith.constant 0 : i32
    return %c0_i32, %c0_i32_0 : i32, i32
  }
  func.func @transform_2(%arg0: i32) -> (i32, i32) {
    %c0_i32 = arith.constant 0 : i32
    %c0_i32_0 = arith.constant 0 : i32
    %c0_i32_1 = arith.constant 0 : i32
    return %c0_i32, %c0_i32_0 : i32, i32
  }
  func.func @transform_3(%arg0: i32) -> (i32, i32) {
    %c0_i32 = arith.constant 0 : i32
    %c0_i32_0 = arith.constant 0 : i32
    return %arg0, %c0_i32 : i32, i32
  }
  func.func @transform_4(%arg0: i32) -> (i32, i32) {
    %c0_i32 = arith.constant 0 : i32
    %c0_i32_0 = arith.constant 0 : i32
    %c0_i32_1 = arith.constant 0 : i32
    return %c0_i32, %c0_i32_0 : i32, i32
  }
  func.func @transform_5(%arg0: i32) -> (i32, i32) {
    %c0_i32 = arith.constant 0 : i32
    %c0_i32_0 = arith.constant 0 : i32
    %c0_i32_1 = arith.constant 0 : i32
    return %c0_i32, %c0_i32_0 : i32, i32
  }
  func.func @transform_6(%arg0: i32) -> (i32, i32) {
    %c0_i32 = arith.constant 0 : i32
    %c0_i32_0 = arith.constant 0 : i32
    return %arg0, %c0_i32 : i32, i32
  }
}

module attributes {stable_mosaic.version = 11 : i64} {
  func.func @_conv_kernel(%arg0: i32, %arg1: memref<8x288xbf16, #tpu.memory_space<vmem>>, %arg2: memref<288x64xbf16, #tpu.memory_space<vmem>>, %arg3: memref<1x64xf32, #tpu.memory_space<vmem>>, %arg4: memref<8x64xf32, #tpu.memory_space<vmem>>) attributes {dimension_semantics = [#tpu.dimension_semantics<parallel>], iteration_bounds = array<i64: 1>, scalar_prefetch = 0 : i64, scratch_operands = 0 : i64, tpu.core_type = #tpu.core_type<tc>, window_params = [{transform_indices = @transform_0, window_bounds = array<i64: 8, 288>}, {pipeline_mode = #tpu.pipeline_mode<synchronous>, transform_indices = @transform_1, window_bounds = array<i64: 288, 64>}, {pipeline_mode = #tpu.pipeline_mode<synchronous>, transform_indices = @transform_2, window_bounds = array<i64: 1, 64>}, {transform_indices = @transform_3, window_bounds = array<i64: 8, 64>}]} {
    %c0 = arith.constant 0 : index
    %c0_0 = arith.constant 0 : index
    %0 = vector.load %arg1[%c0, %c0_0] : memref<8x288xbf16, #tpu.memory_space<vmem>>, vector<8x288xbf16>
    %c0_1 = arith.constant 0 : index
    %c0_2 = arith.constant 0 : index
    %1 = vector.load %arg2[%c0_1, %c0_2] : memref<288x64xbf16, #tpu.memory_space<vmem>>, vector<288x64xbf16>
    %cst = arith.constant dense<0.000000e+00> : vector<8x64xf32>
    %2 = tpu.matmul %0, %1, %cst {dimension_numbers = #tpu.dot_dimension_numbers<[1], [0], [0], [1], [0, 0, 1, 1], [], []>} : vector<8x288xbf16>, vector<288x64xbf16>, vector<8x64xf32> -> vector<8x64xf32>
    %c0_3 = arith.constant 0 : index
    %c0_4 = arith.constant 0 : index
    %3 = vector.load %arg3[%c0_3, %c0_4] : memref<1x64xf32, #tpu.memory_space<vmem>>, vector<1x64xf32>
    %4 = vector.broadcast %3 : vector<1x64xf32> to vector<8x64xf32>
    %5 = arith.addf %2, %4 : vector<8x64xf32>
    %cst_5 = arith.constant 0.000000e+00 : f32
    %6 = vector.broadcast %cst_5 : f32 to vector<8x64xf32>
    %7 = arith.maximumf %5, %6 : vector<8x64xf32>
    %c0_6 = arith.constant 0 : index
    %c0_7 = arith.constant 0 : index
    %8 = vector.load %arg4[%c0_6, %c0_7] : memref<8x64xf32, #tpu.memory_space<vmem>>, vector<8x64xf32>
    tpu.vector_store %arg4[%c0_6, %c0_7], %7 {strides = array<i32>} : memref<8x64xf32, #tpu.memory_space<vmem>>, vector<8x64xf32>,
    return
  }
  func.func @transform_0(%arg0: i32) -> (i32, i32) {
    %c0_i32 = arith.constant 0 : i32
    %c0_i32_0 = arith.constant 0 : i32
    return %arg0, %c0_i32 : i32, i32
  }
  func.func @transform_1(%arg0: i32) -> (i32, i32) {
    %c0_i32 = arith.constant 0 : i32
    %c0_i32_0 = arith.constant 0 : i32
    %c0_i32_1 = arith.constant 0 : i32
    return %c0_i32, %c0_i32_0 : i32, i32
  }
  func.func @transform_2(%arg0: i32) -> (i32, i32) {
    %c0_i32 = arith.constant 0 : i32
    %c0_i32_0 = arith.constant 0 : i32
    %c0_i32_1 = arith.constant 0 : i32
    return %c0_i32, %c0_i32_0 : i32, i32
  }
  func.func @transform_3(%arg0: i32) -> (i32, i32) {
    %c0_i32 = arith.constant 0 : i32
    %c0_i32_0 = arith.constant 0 : i32
    return %arg0, %c0_i32 : i32, i32
  }
}

module attributes {stable_mosaic.version = 11 : i64} {
  func.func @_conv_kernel(%arg0: i32, %arg1: memref<8x576xbf16, #tpu.memory_space<vmem>>, %arg2: memref<576x64xbf16, #tpu.memory_space<vmem>>, %arg3: memref<1x64xf32, #tpu.memory_space<vmem>>, %arg4: memref<8x64xf32, #tpu.memory_space<vmem>>, %arg5: memref<8x64xf32, #tpu.memory_space<vmem>>) attributes {dimension_semantics = [#tpu.dimension_semantics<parallel>], iteration_bounds = array<i64: 1>, scalar_prefetch = 0 : i64, scratch_operands = 0 : i64, tpu.core_type = #tpu.core_type<tc>, window_params = [{transform_indices = @transform_0, window_bounds = array<i64: 8, 576>}, {pipeline_mode = #tpu.pipeline_mode<synchronous>, transform_indices = @transform_1, window_bounds = array<i64: 576, 64>}, {pipeline_mode = #tpu.pipeline_mode<synchronous>, transform_indices = @transform_2, window_bounds = array<i64: 1, 64>}, {transform_indices = @transform_3, window_bounds = array<i64: 8, 64>}, {transform_indices = @transform_4, window_bounds = array<i64: 8, 64>}]} {
    %c0 = arith.constant 0 : index
    %c0_0 = arith.constant 0 : index
    %0 = vector.load %arg1[%c0, %c0_0] : memref<8x576xbf16, #tpu.memory_space<vmem>>, vector<8x576xbf16>
    %c0_1 = arith.constant 0 : index
    %c0_2 = arith.constant 0 : index
    %1 = vector.load %arg2[%c0_1, %c0_2] : memref<576x64xbf16, #tpu.memory_space<vmem>>, vector<576x64xbf16>
    %cst = arith.constant dense<0.000000e+00> : vector<8x64xf32>
    %2 = tpu.matmul %0, %1, %cst {dimension_numbers = #tpu.dot_dimension_numbers<[1], [0], [0], [1], [0, 0, 1, 1], [], []>} : vector<8x576xbf16>, vector<576x64xbf16>, vector<8x64xf32> -> vector<8x64xf32>
    %c0_3 = arith.constant 0 : index
    %c0_4 = arith.constant 0 : index
    %3 = vector.load %arg3[%c0_3, %c0_4] : memref<1x64xf32, #tpu.memory_space<vmem>>, vector<1x64xf32>
    %4 = vector.broadcast %3 : vector<1x64xf32> to vector<8x64xf32>
    %5 = arith.addf %2, %4 : vector<8x64xf32>
    %c0_5 = arith.constant 0 : index
    %c0_6 = arith.constant 0 : index
    %6 = vector.load %arg4[%c0_5, %c0_6] : memref<8x64xf32, #tpu.memory_space<vmem>>, vector<8x64xf32>
    %7 = arith.addf %5, %6 : vector<8x64xf32>
    %cst_7 = arith.constant 0.000000e+00 : f32
    %8 = vector.broadcast %cst_7 : f32 to vector<8x64xf32>
    %9 = arith.maximumf %7, %8 : vector<8x64xf32>
    %c0_8 = arith.constant 0 : index
    %c0_9 = arith.constant 0 : index
    %10 = vector.load %arg5[%c0_8, %c0_9] : memref<8x64xf32, #tpu.memory_space<vmem>>, vector<8x64xf32>
    tpu.vector_store %arg5[%c0_8, %c0_9], %9 {strides = array<i32>} : memref<8x64xf32, #tpu.memory_space<vmem>>, vector<8x64xf32>,
    return
  }
  func.func @transform_0(%arg0: i32) -> (i32, i32) {
    %c0_i32 = arith.constant 0 : i32
    %c0_i32_0 = arith.constant 0 : i32
    return %arg0, %c0_i32 : i32, i32
  }
  func.func @transform_1(%arg0: i32) -> (i32, i32) {
    %c0_i32 = arith.constant 0 : i32
    %c0_i32_0 = arith.constant 0 : i32
    %c0_i32_1 = arith.constant 0 : i32
    return %c0_i32, %c0_i32_0 : i32, i32
  }
  func.func @transform_2(%arg0: i32) -> (i32, i32) {
    %c0_i32 = arith.constant 0 : i32
    %c0_i32_0 = arith.constant 0 : i32
    %c0_i32_1 = arith.constant 0 : i32
    return %c0_i32, %c0_i32_0 : i32, i32
  }
  func.func @transform_3(%arg0: i32) -> (i32, i32) {
    %c0_i32 = arith.constant 0 : i32
    %c0_i32_0 = arith.constant 0 : i32
    return %arg0, %c0_i32 : i32, i32
  }
  func.func @transform_4(%arg0: i32) -> (i32, i32) {
    %c0_i32 = arith.constant 0 : i32
    %c0_i32_0 = arith.constant 0 : i32
    return %arg0, %c0_i32 : i32, i32
  }
}

module attributes {stable_mosaic.version = 11 : i64} {
  func.func @_conv_kernel(%arg0: i32, %arg1: memref<8x576xbf16, #tpu.memory_space<vmem>>, %arg2: memref<576x64xbf16, #tpu.memory_space<vmem>>, %arg3: memref<1x64xf32, #tpu.memory_space<vmem>>, %arg4: memref<8x32xbf16, #tpu.memory_space<vmem>>, %arg5: memref<32x64xbf16, #tpu.memory_space<vmem>>, %arg6: memref<1x64xf32, #tpu.memory_space<vmem>>, %arg7: memref<8x64xf32, #tpu.memory_space<vmem>>) attributes {dimension_semantics = [#tpu.dimension_semantics<parallel>], iteration_bounds = array<i64: 1>, scalar_prefetch = 0 : i64, scratch_operands = 0 : i64, tpu.core_type = #tpu.core_type<tc>, window_params = [{transform_indices = @transform_0, window_bounds = array<i64: 8, 576>}, {pipeline_mode = #tpu.pipeline_mode<synchronous>, transform_indices = @transform_1, window_bounds = array<i64: 576, 64>}, {pipeline_mode = #tpu.pipeline_mode<synchronous>, transform_indices = @transform_2, window_bounds = array<i64: 1, 64>}, {transform_indices = @transform_3, window_bounds = array<i64: 8, 32>}, {pipeline_mode = #tpu.pipeline_mode<synchronous>, transform_indices = @transform_4, window_bounds = array<i64: 32, 64>}, {pipeline_mode = #tpu.pipeline_mode<synchronous>, transform_indices = @transform_5, window_bounds = array<i64: 1, 64>}, {transform_indices = @transform_6, window_bounds = array<i64: 8, 64>}]} {
    %c0 = arith.constant 0 : index
    %c0_0 = arith.constant 0 : index
    %0 = vector.load %arg1[%c0, %c0_0] : memref<8x576xbf16, #tpu.memory_space<vmem>>, vector<8x576xbf16>
    %c0_1 = arith.constant 0 : index
    %c0_2 = arith.constant 0 : index
    %1 = vector.load %arg2[%c0_1, %c0_2] : memref<576x64xbf16, #tpu.memory_space<vmem>>, vector<576x64xbf16>
    %cst = arith.constant dense<0.000000e+00> : vector<8x64xf32>
    %2 = tpu.matmul %0, %1, %cst {dimension_numbers = #tpu.dot_dimension_numbers<[1], [0], [0], [1], [0, 0, 1, 1], [], []>} : vector<8x576xbf16>, vector<576x64xbf16>, vector<8x64xf32> -> vector<8x64xf32>
    %c0_3 = arith.constant 0 : index
    %c0_4 = arith.constant 0 : index
    %3 = vector.load %arg3[%c0_3, %c0_4] : memref<1x64xf32, #tpu.memory_space<vmem>>, vector<1x64xf32>
    %4 = vector.broadcast %3 : vector<1x64xf32> to vector<8x64xf32>
    %5 = arith.addf %2, %4 : vector<8x64xf32>
    %c0_5 = arith.constant 0 : index
    %c0_6 = arith.constant 0 : index
    %6 = vector.load %arg4[%c0_5, %c0_6] : memref<8x32xbf16, #tpu.memory_space<vmem>>, vector<8x32xbf16>
    %c0_7 = arith.constant 0 : index
    %c0_8 = arith.constant 0 : index
    %7 = vector.load %arg5[%c0_7, %c0_8] : memref<32x64xbf16, #tpu.memory_space<vmem>>, vector<32x64xbf16>
    %cst_9 = arith.constant dense<0.000000e+00> : vector<8x64xf32>
    %8 = tpu.matmul %6, %7, %cst_9 {dimension_numbers = #tpu.dot_dimension_numbers<[1], [0], [0], [1], [0, 0, 1, 1], [], []>} : vector<8x32xbf16>, vector<32x64xbf16>, vector<8x64xf32> -> vector<8x64xf32>
    %9 = arith.addf %5, %8 : vector<8x64xf32>
    %c0_10 = arith.constant 0 : index
    %c0_11 = arith.constant 0 : index
    %10 = vector.load %arg6[%c0_10, %c0_11] : memref<1x64xf32, #tpu.memory_space<vmem>>, vector<1x64xf32>
    %11 = vector.broadcast %10 : vector<1x64xf32> to vector<8x64xf32>
    %12 = arith.addf %9, %11 : vector<8x64xf32>
    %cst_12 = arith.constant 0.000000e+00 : f32
    %13 = vector.broadcast %cst_12 : f32 to vector<8x64xf32>
    %14 = arith.maximumf %12, %13 : vector<8x64xf32>
    %c0_13 = arith.constant 0 : index
    %c0_14 = arith.constant 0 : index
    %15 = vector.load %arg7[%c0_13, %c0_14] : memref<8x64xf32, #tpu.memory_space<vmem>>, vector<8x64xf32>
    tpu.vector_store %arg7[%c0_13, %c0_14], %14 {strides = array<i32>} : memref<8x64xf32, #tpu.memory_space<vmem>>, vector<8x64xf32>,
    return
  }
  func.func @transform_0(%arg0: i32) -> (i32, i32) {
    %c0_i32 = arith.constant 0 : i32
    %c0_i32_0 = arith.constant 0 : i32
    return %arg0, %c0_i32 : i32, i32
  }
  func.func @transform_1(%arg0: i32) -> (i32, i32) {
    %c0_i32 = arith.constant 0 : i32
    %c0_i32_0 = arith.constant 0 : i32
    %c0_i32_1 = arith.constant 0 : i32
    return %c0_i32, %c0_i32_0 : i32, i32
  }
  func.func @transform_2(%arg0: i32) -> (i32, i32) {
    %c0_i32 = arith.constant 0 : i32
    %c0_i32_0 = arith.constant 0 : i32
    %c0_i32_1 = arith.constant 0 : i32
    return %c0_i32, %c0_i32_0 : i32, i32
  }
  func.func @transform_3(%arg0: i32) -> (i32, i32) {
    %c0_i32 = arith.constant 0 : i32
    %c0_i32_0 = arith.constant 0 : i32
    return %arg0, %c0_i32 : i32, i32
  }
  func.func @transform_4(%arg0: i32) -> (i32, i32) {
    %c0_i32 = arith.constant 0 : i32
    %c0_i32_0 = arith.constant 0 : i32
    %c0_i32_1 = arith.constant 0 : i32
    return %c0_i32, %c0_i32_0 : i32, i32
  }
  func.func @transform_5(%arg0: i32) -> (i32, i32) {
    %c0_i32 = arith.constant 0 : i32
    %c0_i32_0 = arith.constant 0 : i32
    %c0_i32_1 = arith.constant 0 : i32
    return %c0_i32, %c0_i32_0 : i32, i32
  }
  func.func @transform_6(%arg0: i32) -> (i32, i32) {
    %c0_i32 = arith.constant 0 : i32
    %c0_i32_0 = arith.constant 0 : i32
    return %arg0, %c0_i32 : i32, i32
  }
}

module attributes {stable_mosaic.version = 11 : i64} {
  func.func @_conv_kernel(%arg0: i32, %arg1: memref<8x576xbf16, #tpu.memory_space<vmem>>, %arg2: memref<576x64xbf16, #tpu.memory_space<vmem>>, %arg3: memref<1x64xf32, #tpu.memory_space<vmem>>, %arg4: memref<8x64xf32, #tpu.memory_space<vmem>>) attributes {dimension_semantics = [#tpu.dimension_semantics<parallel>], iteration_bounds = array<i64: 1>, scalar_prefetch = 0 : i64, scratch_operands = 0 : i64, tpu.core_type = #tpu.core_type<tc>, window_params = [{transform_indices = @transform_0, window_bounds = array<i64: 8, 576>}, {pipeline_mode = #tpu.pipeline_mode<synchronous>, transform_indices = @transform_1, window_bounds = array<i64: 576, 64>}, {pipeline_mode = #tpu.pipeline_mode<synchronous>, transform_indices = @transform_2, window_bounds = array<i64: 1, 64>}, {transform_indices = @transform_3, window_bounds = array<i64: 8, 64>}]} {
    %c0 = arith.constant 0 : index
    %c0_0 = arith.constant 0 : index
    %0 = vector.load %arg1[%c0, %c0_0] : memref<8x576xbf16, #tpu.memory_space<vmem>>, vector<8x576xbf16>
    %c0_1 = arith.constant 0 : index
    %c0_2 = arith.constant 0 : index
    %1 = vector.load %arg2[%c0_1, %c0_2] : memref<576x64xbf16, #tpu.memory_space<vmem>>, vector<576x64xbf16>
    %cst = arith.constant dense<0.000000e+00> : vector<8x64xf32>
    %2 = tpu.matmul %0, %1, %cst {dimension_numbers = #tpu.dot_dimension_numbers<[1], [0], [0], [1], [0, 0, 1, 1], [], []>} : vector<8x576xbf16>, vector<576x64xbf16>, vector<8x64xf32> -> vector<8x64xf32>
    %c0_3 = arith.constant 0 : index
    %c0_4 = arith.constant 0 : index
    %3 = vector.load %arg3[%c0_3, %c0_4] : memref<1x64xf32, #tpu.memory_space<vmem>>, vector<1x64xf32>
    %4 = vector.broadcast %3 : vector<1x64xf32> to vector<8x64xf32>
    %5 = arith.addf %2, %4 : vector<8x64xf32>
    %cst_5 = arith.constant 0.000000e+00 : f32
    %6 = vector.broadcast %cst_5 : f32 to vector<8x64xf32>
    %7 = arith.maximumf %5, %6 : vector<8x64xf32>
    %c0_6 = arith.constant 0 : index
    %c0_7 = arith.constant 0 : index
    %8 = vector.load %arg4[%c0_6, %c0_7] : memref<8x64xf32, #tpu.memory_space<vmem>>, vector<8x64xf32>
    tpu.vector_store %arg4[%c0_6, %c0_7], %7 {strides = array<i32>} : memref<8x64xf32, #tpu.memory_space<vmem>>, vector<8x64xf32>,
    return
  }
  func.func @transform_0(%arg0: i32) -> (i32, i32) {
    %c0_i32 = arith.constant 0 : i32
    %c0_i32_0 = arith.constant 0 : i32
    return %arg0, %c0_i32 : i32, i32
  }
  func.func @transform_1(%arg0: i32) -> (i32, i32) {
    %c0_i32 = arith.constant 0 : i32
    %c0_i32_0 = arith.constant 0 : i32
    %c0_i32_1 = arith.constant 0 : i32
    return %c0_i32, %c0_i32_0 : i32, i32
  }
  func.func @transform_2(%arg0: i32) -> (i32, i32) {
    %c0_i32 = arith.constant 0 : i32
    %c0_i32_0 = arith.constant 0 : i32
    %c0_i32_1 = arith.constant 0 : i32
    return %c0_i32, %c0_i32_0 : i32, i32
  }
  func.func @transform_3(%arg0: i32) -> (i32, i32) {
    %c0_i32 = arith.constant 0 : i32
    %c0_i32_0 = arith.constant 0 : i32
    return %arg0, %c0_i32 : i32, i32
  }
}

module attributes {stable_mosaic.version = 11 : i64} {
  func.func @_transformer_layer_kernel(%arg0: memref<8x64xf32, #tpu.memory_space<vmem>>, %arg1: memref<8x8xf32, #tpu.memory_space<vmem>>, %arg2: memref<64x192xf32, #tpu.memory_space<vmem>>, %arg3: memref<1x192xf32, #tpu.memory_space<vmem>>, %arg4: memref<64x64xf32, #tpu.memory_space<vmem>>, %arg5: memref<1x64xf32, #tpu.memory_space<vmem>>, %arg6: memref<1x64xf32, #tpu.memory_space<vmem>>, %arg7: memref<1x64xf32, #tpu.memory_space<vmem>>, %arg8: memref<64x256xf32, #tpu.memory_space<vmem>>, %arg9: memref<1x256xf32, #tpu.memory_space<vmem>>, %arg10: memref<256x64xf32, #tpu.memory_space<vmem>>, %arg11: memref<1x64xf32, #tpu.memory_space<vmem>>, %arg12: memref<1x64xf32, #tpu.memory_space<vmem>>, %arg13: memref<1x64xf32, #tpu.memory_space<vmem>>, %arg14: memref<8x64xf32, #tpu.memory_space<vmem>>, %arg15: memref<8x192xf32, #tpu.memory_space<vmem>>, %arg16: memref<8x64xf32, #tpu.memory_space<vmem>>) attributes {dimension_semantics = [], scalar_prefetch = 0 : i64, scratch_operands = 2 : i64, tpu.core_type = #tpu.core_type<tc>} {
    %c0 = arith.constant 0 : index
    %c0_0 = arith.constant 0 : index
    %0 = vector.load %arg0[%c0, %c0_0] : memref<8x64xf32, #tpu.memory_space<vmem>>, vector<8x64xf32>
    %c0_1 = arith.constant 0 : index
    %c0_2 = arith.constant 0 : index
    %1 = vector.load %arg2[%c0_1, %c0_2] : memref<64x192xf32, #tpu.memory_space<vmem>>, vector<64x192xf32>
    %cst = arith.constant dense<0.000000e+00> : vector<8x192xf32>
    %2 = tpu.matmul %0, %1, %cst {dimension_numbers = #tpu.dot_dimension_numbers<[1], [0], [0], [1], [0, 0, 1, 1], [], []>} : vector<8x64xf32>, vector<64x192xf32>, vector<8x192xf32> -> vector<8x192xf32>
    %c0_3 = arith.constant 0 : index
    %c0_4 = arith.constant 0 : index
    %3 = vector.load %arg3[%c0_3, %c0_4] : memref<1x192xf32, #tpu.memory_space<vmem>>, vector<1x192xf32>
    %4 = vector.broadcast %3 : vector<1x192xf32> to vector<8x192xf32>
    %5 = arith.addf %2, %4 : vector<8x192xf32>
    %c0_5 = arith.constant 0 : index
    %c0_6 = arith.constant 0 : index
    %6 = vector.load %arg15[%c0_5, %c0_6] : memref<8x192xf32, #tpu.memory_space<vmem>>, vector<8x192xf32>
    tpu.vector_store %arg15[%c0_5, %c0_6], %5 {strides = array<i32>} : memref<8x192xf32, #tpu.memory_space<vmem>>, vector<8x192xf32>,
    %c0_7 = arith.constant 0 : index
    %c0_8 = arith.constant 0 : index
    %7 = vector.load %arg1[%c0_7, %c0_8] : memref<8x8xf32, #tpu.memory_space<vmem>>, vector<8x8xf32>
    %c0_9 = arith.constant 0 : index
    %c0_10 = arith.constant 0 : index
    %8 = vector.load %arg15[%c0_9, %c0_10] : memref<8x192xf32, #tpu.memory_space<vmem>>, vector<8x16xf32>
    %c0_11 = arith.constant 0 : index
    %c64 = arith.constant 64 : index
    %9 = vector.load %arg15[%c0_11, %c64] : memref<8x192xf32, #tpu.memory_space<vmem>>, vector<8x16xf32>
    %c0_12 = arith.constant 0 : index
    %c128 = arith.constant 128 : index
    %10 = vector.load %arg15[%c0_12, %c128] : memref<8x192xf32, #tpu.memory_space<vmem>>, vector<8x16xf32>
    %cst_13 = arith.constant dense<0.000000e+00> : vector<8x8xf32>
    %11 = tpu.matmul %8, %9, %cst_13 {dimension_numbers = #tpu.dot_dimension_numbers<[1], [1], [0], [0], [0, 0, 1, 0], [], []>} : vector<8x16xf32>, vector<8x16xf32>, vector<8x8xf32> -> vector<8x8xf32>
    %cst_14 = arith.constant 2.500000e-01 : f32
    %12 = vector.broadcast %cst_14 : f32 to vector<8x8xf32>
    %13 = arith.mulf %11, %12 : vector<8x8xf32>
    %14 = arith.addf %13, %7 : vector<8x8xf32>
    %cst_15 = arith.constant dense<0xFF800000> : vector<8xf32>
    %15 = vector.multi_reduction <maximumf>, %14, %cst_15 [1] : vector<8x8xf32> to vector<8xf32>
    %16 = vector.shape_cast %15 : vector<8xf32> to vector<8x1xf32>
    %17 = vector.broadcast %16 : vector<8x1xf32> to vector<8x8xf32>
    %18 = arith.subf %14, %17 : vector<8x8xf32>
    %19 = math.exp %18 : vector<8x8xf32>
    %cst_16 = arith.constant dense<0.000000e+00> : vector<8xf32>
    %20 = vector.multi_reduction <add>, %19, %cst_16 [1] : vector<8x8xf32> to vector<8xf32>
    %21 = vector.shape_cast %20 : vector<8xf32> to vector<8x1xf32>
    %22 = tpu.reciprocal %21 {approx = true} : vector<8x1xf32> -> vector<8x1xf32>
    %23 = vector.broadcast %22 : vector<8x1xf32> to vector<8x8xf32>
    %24 = arith.mulf %19, %23 : vector<8x8xf32>
    %cst_17 = arith.constant dense<0.000000e+00> : vector<8x16xf32>
    %25 = tpu.matmul %24, %10, %cst_17 {dimension_numbers = #tpu.dot_dimension_numbers<[1], [0], [0], [1], [0, 0, 1, 1], [], []>} : vector<8x8xf32>, vector<8x16xf32>, vector<8x16xf32> -> vector<8x16xf32>
    %c0_18 = arith.constant 0 : index
    %c0_19 = arith.constant 0 : index
    %26 = vector.load %arg16[%c0_18, %c0_19] : memref<8x64xf32, #tpu.memory_space<vmem>>, vector<8x16xf32>
    tpu.vector_store %arg16[%c0_18, %c0_19], %25 {strides = array<i32>} : memref<8x64xf32, #tpu.memory_space<vmem>>, vector<8x16xf32>,
    %c0_20 = arith.constant 0 : index
    %c16 = arith.constant 16 : index
    %27 = vector.load %arg15[%c0_20, %c16] : memref<8x192xf32, #tpu.memory_space<vmem>>, vector<8x16xf32>
    %c0_21 = arith.constant 0 : index
    %c80 = arith.constant 80 : index
    %28 = vector.load %arg15[%c0_21, %c80] : memref<8x192xf32, #tpu.memory_space<vmem>>, vector<8x16xf32>
    %c0_22 = arith.constant 0 : index
    %c144 = arith.constant 144 : index
    %29 = vector.load %arg15[%c0_22, %c144] : memref<8x192xf32, #tpu.memory_space<vmem>>, vector<8x16xf32>
    %cst_23 = arith.constant dense<0.000000e+00> : vector<8x8xf32>
    %30 = tpu.matmul %27, %28, %cst_23 {dimension_numbers = #tpu.dot_dimension_numbers<[1], [1], [0], [0], [0, 0, 1, 0], [], []>} : vector<8x16xf32>, vector<8x16xf32>, vector<8x8xf32> -> vector<8x8xf32>
    %cst_24 = arith.constant 2.500000e-01 : f32
    %31 = vector.broadcast %cst_24 : f32 to vector<8x8xf32>
    %32 = arith.mulf %30, %31 : vector<8x8xf32>
    %33 = arith.addf %32, %7 : vector<8x8xf32>
    %cst_25 = arith.constant dense<0xFF800000> : vector<8xf32>
    %34 = vector.multi_reduction <maximumf>, %33, %cst_25 [1] : vector<8x8xf32> to vector<8xf32>
    %35 = vector.shape_cast %34 : vector<8xf32> to vector<8x1xf32>
    %36 = vector.broadcast %35 : vector<8x1xf32> to vector<8x8xf32>
    %37 = arith.subf %33, %36 : vector<8x8xf32>
    %38 = math.exp %37 : vector<8x8xf32>
    %cst_26 = arith.constant dense<0.000000e+00> : vector<8xf32>
    %39 = vector.multi_reduction <add>, %38, %cst_26 [1] : vector<8x8xf32> to vector<8xf32>
    %40 = vector.shape_cast %39 : vector<8xf32> to vector<8x1xf32>
    %41 = tpu.reciprocal %40 {approx = true} : vector<8x1xf32> -> vector<8x1xf32>
    %42 = vector.broadcast %41 : vector<8x1xf32> to vector<8x8xf32>
    %43 = arith.mulf %38, %42 : vector<8x8xf32>
    %cst_27 = arith.constant dense<0.000000e+00> : vector<8x16xf32>
    %44 = tpu.matmul %43, %29, %cst_27 {dimension_numbers = #tpu.dot_dimension_numbers<[1], [0], [0], [1], [0, 0, 1, 1], [], []>} : vector<8x8xf32>, vector<8x16xf32>, vector<8x16xf32> -> vector<8x16xf32>
    %c0_28 = arith.constant 0 : index
    %c16_29 = arith.constant 16 : index
    %45 = vector.load %arg16[%c0_28, %c16_29] : memref<8x64xf32, #tpu.memory_space<vmem>>, vector<8x16xf32>
    tpu.vector_store %arg16[%c0_28, %c16_29], %44 {strides = array<i32>} : memref<8x64xf32, #tpu.memory_space<vmem>>, vector<8x16xf32>,
    %c0_30 = arith.constant 0 : index
    %c32 = arith.constant 32 : index
    %46 = vector.load %arg15[%c0_30, %c32] : memref<8x192xf32, #tpu.memory_space<vmem>>, vector<8x16xf32>
    %c0_31 = arith.constant 0 : index
    %c96 = arith.constant 96 : index
    %47 = vector.load %arg15[%c0_31, %c96] : memref<8x192xf32, #tpu.memory_space<vmem>>, vector<8x16xf32>
    %c0_32 = arith.constant 0 : index
    %c160 = arith.constant 160 : index
    %48 = vector.load %arg15[%c0_32, %c160] : memref<8x192xf32, #tpu.memory_space<vmem>>, vector<8x16xf32>
    %cst_33 = arith.constant dense<0.000000e+00> : vector<8x8xf32>
    %49 = tpu.matmul %46, %47, %cst_33 {dimension_numbers = #tpu.dot_dimension_numbers<[1], [1], [0], [0], [0, 0, 1, 0], [], []>} : vector<8x16xf32>, vector<8x16xf32>, vector<8x8xf32> -> vector<8x8xf32>
    %cst_34 = arith.constant 2.500000e-01 : f32
    %50 = vector.broadcast %cst_34 : f32 to vector<8x8xf32>
    %51 = arith.mulf %49, %50 : vector<8x8xf32>
    %52 = arith.addf %51, %7 : vector<8x8xf32>
    %cst_35 = arith.constant dense<0xFF800000> : vector<8xf32>
    %53 = vector.multi_reduction <maximumf>, %52, %cst_35 [1] : vector<8x8xf32> to vector<8xf32>
    %54 = vector.shape_cast %53 : vector<8xf32> to vector<8x1xf32>
    %55 = vector.broadcast %54 : vector<8x1xf32> to vector<8x8xf32>
    %56 = arith.subf %52, %55 : vector<8x8xf32>
    %57 = math.exp %56 : vector<8x8xf32>
    %cst_36 = arith.constant dense<0.000000e+00> : vector<8xf32>
    %58 = vector.multi_reduction <add>, %57, %cst_36 [1] : vector<8x8xf32> to vector<8xf32>
    %59 = vector.shape_cast %58 : vector<8xf32> to vector<8x1xf32>
    %60 = tpu.reciprocal %59 {approx = true} : vector<8x1xf32> -> vector<8x1xf32>
    %61 = vector.broadcast %60 : vector<8x1xf32> to vector<8x8xf32>
    %62 = arith.mulf %57, %61 : vector<8x8xf32>
    %cst_37 = arith.constant dense<0.000000e+00> : vector<8x16xf32>
    %63 = tpu.matmul %62, %48, %cst_37 {dimension_numbers = #tpu.dot_dimension_numbers<[1], [0], [0], [1], [0, 0, 1, 1], [], []>} : vector<8x8xf32>, vector<8x16xf32>, vector<8x16xf32> -> vector<8x16xf32>
    %c0_38 = arith.constant 0 : index
    %c32_39 = arith.constant 32 : index
    %64 = vector.load %arg16[%c0_38, %c32_39] : memref<8x64xf32, #tpu.memory_space<vmem>>, vector<8x16xf32>
    tpu.vector_store %arg16[%c0_38, %c32_39], %63 {strides = array<i32>} : memref<8x64xf32, #tpu.memory_space<vmem>>, vector<8x16xf32>,
    %c0_40 = arith.constant 0 : index
    %c48 = arith.constant 48 : index
    %65 = vector.load %arg15[%c0_40, %c48] : memref<8x192xf32, #tpu.memory_space<vmem>>, vector<8x16xf32>
    %c0_41 = arith.constant 0 : index
    %c112 = arith.constant 112 : index
    %66 = vector.load %arg15[%c0_41, %c112] : memref<8x192xf32, #tpu.memory_space<vmem>>, vector<8x16xf32>
    %c0_42 = arith.constant 0 : index
    %c176 = arith.constant 176 : index
    %67 = vector.load %arg15[%c0_42, %c176] : memref<8x192xf32, #tpu.memory_space<vmem>>, vector<8x16xf32>
    %cst_43 = arith.constant dense<0.000000e+00> : vector<8x8xf32>
    %68 = tpu.matmul %65, %66, %cst_43 {dimension_numbers = #tpu.dot_dimension_numbers<[1], [1], [0], [0], [0, 0, 1, 0], [], []>} : vector<8x16xf32>, vector<8x16xf32>, vector<8x8xf32> -> vector<8x8xf32>
    %cst_44 = arith.constant 2.500000e-01 : f32
    %69 = vector.broadcast %cst_44 : f32 to vector<8x8xf32>
    %70 = arith.mulf %68, %69 : vector<8x8xf32>
    %71 = arith.addf %70, %7 : vector<8x8xf32>
    %cst_45 = arith.constant dense<0xFF800000> : vector<8xf32>
    %72 = vector.multi_reduction <maximumf>, %71, %cst_45 [1] : vector<8x8xf32> to vector<8xf32>
    %73 = vector.shape_cast %72 : vector<8xf32> to vector<8x1xf32>
    %74 = vector.broadcast %73 : vector<8x1xf32> to vector<8x8xf32>
    %75 = arith.subf %71, %74 : vector<8x8xf32>
    %76 = math.exp %75 : vector<8x8xf32>
    %cst_46 = arith.constant dense<0.000000e+00> : vector<8xf32>
    %77 = vector.multi_reduction <add>, %76, %cst_46 [1] : vector<8x8xf32> to vector<8xf32>
    %78 = vector.shape_cast %77 : vector<8xf32> to vector<8x1xf32>
    %79 = tpu.reciprocal %78 {approx = true} : vector<8x1xf32> -> vector<8x1xf32>
    %80 = vector.broadcast %79 : vector<8x1xf32> to vector<8x8xf32>
    %81 = arith.mulf %76, %80 : vector<8x8xf32>
    %cst_47 = arith.constant dense<0.000000e+00> : vector<8x16xf32>
    %82 = tpu.matmul %81, %67, %cst_47 {dimension_numbers = #tpu.dot_dimension_numbers<[1], [0], [0], [1], [0, 0, 1, 1], [], []>} : vector<8x8xf32>, vector<8x16xf32>, vector<8x16xf32> -> vector<8x16xf32>
    %c0_48 = arith.constant 0 : index
    %c48_49 = arith.constant 48 : index
    %83 = vector.load %arg16[%c0_48, %c48_49] : memref<8x64xf32, #tpu.memory_space<vmem>>, vector<8x16xf32>
    tpu.vector_store %arg16[%c0_48, %c48_49], %82 {strides = array<i32>} : memref<8x64xf32, #tpu.memory_space<vmem>>, vector<8x16xf32>,
    %c0_50 = arith.constant 0 : index
    %c0_51 = arith.constant 0 : index
    %84 = vector.load %arg16[%c0_50, %c0_51] : memref<8x64xf32, #tpu.memory_space<vmem>>, vector<8x64xf32>
    %c0_52 = arith.constant 0 : index
    %c0_53 = arith.constant 0 : index
    %85 = vector.load %arg4[%c0_52, %c0_53] : memref<64x64xf32, #tpu.memory_space<vmem>>, vector<64x64xf32>
    %cst_54 = arith.constant dense<0.000000e+00> : vector<8x64xf32>
    %86 = tpu.matmul %84, %85, %cst_54 {dimension_numbers = #tpu.dot_dimension_numbers<[1], [0], [0], [1], [0, 0, 1, 1], [], []>} : vector<8x64xf32>, vector<64x64xf32>, vector<8x64xf32> -> vector<8x64xf32>
    %c0_55 = arith.constant 0 : index
    %c0_56 = arith.constant 0 : index
    %87 = vector.load %arg5[%c0_55, %c0_56] : memref<1x64xf32, #tpu.memory_space<vmem>>, vector<1x64xf32>
    %88 = vector.broadcast %87 : vector<1x64xf32> to vector<8x64xf32>
    %89 = arith.addf %86, %88 : vector<8x64xf32>
    %90 = arith.addf %0, %89 : vector<8x64xf32>
    %c0_57 = arith.constant 0 : index
    %c0_58 = arith.constant 0 : index
    %91 = vector.load %arg6[%c0_57, %c0_58] : memref<1x64xf32, #tpu.memory_space<vmem>>, vector<1x64xf32>
    %c0_59 = arith.constant 0 : index
    %c0_60 = arith.constant 0 : index
    %92 = vector.load %arg7[%c0_59, %c0_60] : memref<1x64xf32, #tpu.memory_space<vmem>>, vector<1x64xf32>
    %cst_61 = arith.constant dense<0.000000e+00> : vector<8xf32>
    %93 = vector.multi_reduction <add>, %90, %cst_61 [1] : vector<8x64xf32> to vector<8xf32>
    %94 = vector.shape_cast %93 : vector<8xf32> to vector<8x1xf32>
    %cst_62 = arith.constant 6.400000e+01 : f32
    %95 = vector.broadcast %cst_62 : f32 to vector<8x1xf32>
    %96 = arith.divf %94, %95 : vector<8x1xf32>
    %97 = vector.broadcast %96 : vector<8x1xf32> to vector<8x64xf32>
    %98 = arith.subf %90, %97 : vector<8x64xf32>
    %99 = arith.mulf %98, %98 : vector<8x64xf32>
    %cst_63 = arith.constant dense<0.000000e+00> : vector<8xf32>
    %100 = vector.multi_reduction <add>, %99, %cst_63 [1] : vector<8x64xf32> to vector<8xf32>
    %101 = vector.shape_cast %100 : vector<8xf32> to vector<8x1xf32>
    %cst_64 = arith.constant 6.400000e+01 : f32
    %102 = vector.broadcast %cst_64 : f32 to vector<8x1xf32>
    %103 = arith.divf %101, %102 : vector<8x1xf32>
    %104 = vector.broadcast %96 : vector<8x1xf32> to vector<8x64xf32>
    %105 = arith.subf %90, %104 : vector<8x64xf32>
    %cst_65 = arith.constant 9.99999974E-6 : f32
    %106 = vector.broadcast %cst_65 : f32 to vector<8x1xf32>
    %107 = arith.addf %103, %106 : vector<8x1xf32>
    %108 = math.rsqrt %107 : vector<8x1xf32>
    %109 = vector.broadcast %108 : vector<8x1xf32> to vector<8x64xf32>
    %110 = arith.mulf %105, %109 : vector<8x64xf32>
    %111 = vector.broadcast %91 : vector<1x64xf32> to vector<8x64xf32>
    %112 = arith.mulf %110, %111 : vector<8x64xf32>
    %113 = vector.broadcast %92 : vector<1x64xf32> to vector<8x64xf32>
    %114 = arith.addf %112, %113 : vector<8x64xf32>
    %c0_66 = arith.constant 0 : index
    %c0_67 = arith.constant 0 : index
    %115 = vector.load %arg8[%c0_66, %c0_67] : memref<64x256xf32, #tpu.memory_space<vmem>>, vector<64x256xf32>
    %cst_68 = arith.constant dense<0.000000e+00> : vector<8x256xf32>
    %116 = tpu.matmul %114, %115, %cst_68 {dimension_numbers = #tpu.dot_dimension_numbers<[1], [0], [0], [1], [0, 0, 1, 1], [], []>} : vector<8x64xf32>, vector<64x256xf32>, vector<8x256xf32> -> vector<8x256xf32>
    %c0_69 = arith.constant 0 : index
    %c0_70 = arith.constant 0 : index
    %117 = vector.load %arg9[%c0_69, %c0_70] : memref<1x256xf32, #tpu.memory_space<vmem>>, vector<1x256xf32>
    %118 = vector.broadcast %117 : vector<1x256xf32> to vector<8x256xf32>
    %119 = arith.addf %116, %118 : vector<8x256xf32>
    %cst_71 = arith.constant 5.000000e-01 : f32
    %120 = vector.broadcast %cst_71 : f32 to vector<8x256xf32>
    %121 = arith.mulf %120, %119 : vector<8x256xf32>
    %cst_72 = arith.constant 0.707106769 : f32
    %122 = vector.broadcast %cst_72 : f32 to vector<8x256xf32>
    %123 = arith.mulf %119, %122 : vector<8x256xf32>
    %124 = math.erf %123 : vector<8x256xf32>
    %cst_73 = arith.constant 1.000000e+00 : f32
    %125 = vector.broadcast %cst_73 : f32 to vector<8x256xf32>
    %126 = arith.addf %125, %124 : vector<8x256xf32>
    %127 = arith.mulf %121, %126 : vector<8x256xf32>
    %c0_74 = arith.constant 0 : index
    %c0_75 = arith.constant 0 : index
    %128 = vector.load %arg10[%c0_74, %c0_75] : memref<256x64xf32, #tpu.memory_space<vmem>>, vector<256x64xf32>
    %cst_76 = arith.constant dense<0.000000e+00> : vector<8x64xf32>
    %129 = tpu.matmul %127, %128, %cst_76 {dimension_numbers = #tpu.dot_dimension_numbers<[1], [0], [0], [1], [0, 0, 1, 1], [], []>} : vector<8x256xf32>, vector<256x64xf32>, vector<8x64xf32> -> vector<8x64xf32>
    %c0_77 = arith.constant 0 : index
    %c0_78 = arith.constant 0 : index
    %130 = vector.load %arg11[%c0_77, %c0_78] : memref<1x64xf32, #tpu.memory_space<vmem>>, vector<1x64xf32>
    %131 = vector.broadcast %130 : vector<1x64xf32> to vector<8x64xf32>
    %132 = arith.addf %129, %131 : vector<8x64xf32>
    %133 = arith.addf %114, %132 : vector<8x64xf32>
    %c0_79 = arith.constant 0 : index
    %c0_80 = arith.constant 0 : index
    %134 = vector.load %arg12[%c0_79, %c0_80] : memref<1x64xf32, #tpu.memory_space<vmem>>, vector<1x64xf32>
    %c0_81 = arith.constant 0 : index
    %c0_82 = arith.constant 0 : index
    %135 = vector.load %arg13[%c0_81, %c0_82] : memref<1x64xf32, #tpu.memory_space<vmem>>, vector<1x64xf32>
    %cst_83 = arith.constant dense<0.000000e+00> : vector<8xf32>
    %136 = vector.multi_reduction <add>, %133, %cst_83 [1] : vector<8x64xf32> to vector<8xf32>
    %137 = vector.shape_cast %136 : vector<8xf32> to vector<8x1xf32>
    %cst_84 = arith.constant 6.400000e+01 : f32
    %138 = vector.broadcast %cst_84 : f32 to vector<8x1xf32>
    %139 = arith.divf %137, %138 : vector<8x1xf32>
    %140 = vector.broadcast %139 : vector<8x1xf32> to vector<8x64xf32>
    %141 = arith.subf %133, %140 : vector<8x64xf32>
    %142 = arith.mulf %141, %141 : vector<8x64xf32>
    %cst_85 = arith.constant dense<0.000000e+00> : vector<8xf32>
    %143 = vector.multi_reduction <add>, %142, %cst_85 [1] : vector<8x64xf32> to vector<8xf32>
    %144 = vector.shape_cast %143 : vector<8xf32> to vector<8x1xf32>
    %cst_86 = arith.constant 6.400000e+01 : f32
    %145 = vector.broadcast %cst_86 : f32 to vector<8x1xf32>
    %146 = arith.divf %144, %145 : vector<8x1xf32>
    %147 = vector.broadcast %139 : vector<8x1xf32> to vector<8x64xf32>
    %148 = arith.subf %133, %147 : vector<8x64xf32>
    %cst_87 = arith.constant 9.99999974E-6 : f32
    %149 = vector.broadcast %cst_87 : f32 to vector<8x1xf32>
    %150 = arith.addf %146, %149 : vector<8x1xf32>
    %151 = math.rsqrt %150 : vector<8x1xf32>
    %152 = vector.broadcast %151 : vector<8x1xf32> to vector<8x64xf32>
    %153 = arith.mulf %148, %152 : vector<8x64xf32>
    %154 = vector.broadcast %134 : vector<1x64xf32> to vector<8x64xf32>
    %155 = arith.mulf %153, %154 : vector<8x64xf32>
    %156 = vector.broadcast %135 : vector<1x64xf32> to vector<8x64xf32>
    %157 = arith.addf %155, %156 : vector<8x64xf32>
    %c0_88 = arith.constant 0 : index
    %c0_89 = arith.constant 0 : index
    %158 = vector.load %arg14[%c0_88, %c0_89] : memref<8x64xf32, #tpu.memory_space<vmem>>, vector<8x64xf32>
    tpu.vector_store %arg14[%c0_88, %c0_89], %157 {strides = array<i32>} : memref<8x64xf32, #tpu.memory_space<vmem>>, vector<8x64xf32>,
    return
  }
}

module attributes {stable_mosaic.version = 11 : i64} {
  func.func @_pool_fc_kernel(%arg0: memref<8x64xf32, #tpu.memory_space<vmem>>, %arg1: memref<2x8xf32, #tpu.memory_space<vmem>>, %arg2: memref<64x7xf32, #tpu.memory_space<vmem>>, %arg3: memref<1x7xf32, #tpu.memory_space<vmem>>, %arg4: memref<2x7xf32, #tpu.memory_space<vmem>>) attributes {dimension_semantics = [], scalar_prefetch = 0 : i64, scratch_operands = 0 : i64, tpu.core_type = #tpu.core_type<tc>} {
    %c0 = arith.constant 0 : index
    %c0_0 = arith.constant 0 : index
    %0 = vector.load %arg1[%c0, %c0_0] : memref<2x8xf32, #tpu.memory_space<vmem>>, vector<2x8xf32>
    %c0_1 = arith.constant 0 : index
    %c0_2 = arith.constant 0 : index
    %1 = vector.load %arg0[%c0_1, %c0_2] : memref<8x64xf32, #tpu.memory_space<vmem>>, vector<8x64xf32>
    %cst = arith.constant dense<0.000000e+00> : vector<2x64xf32>
    %2 = tpu.matmul %0, %1, %cst {dimension_numbers = #tpu.dot_dimension_numbers<[1], [0], [0], [1], [0, 0, 1, 1], [], []>} : vector<2x8xf32>, vector<8x64xf32>, vector<2x64xf32> -> vector<2x64xf32>
    %c0_3 = arith.constant 0 : index
    %c0_4 = arith.constant 0 : index
    %3 = vector.load %arg2[%c0_3, %c0_4] : memref<64x7xf32, #tpu.memory_space<vmem>>, vector<64x7xf32>
    %cst_5 = arith.constant dense<0.000000e+00> : vector<2x7xf32>
    %4 = tpu.matmul %2, %3, %cst_5 {dimension_numbers = #tpu.dot_dimension_numbers<[1], [0], [0], [1], [0, 0, 1, 1], [], []>} : vector<2x64xf32>, vector<64x7xf32>, vector<2x7xf32> -> vector<2x7xf32>
    %c0_6 = arith.constant 0 : index
    %c0_7 = arith.constant 0 : index
    %5 = vector.load %arg3[%c0_6, %c0_7] : memref<1x7xf32, #tpu.memory_space<vmem>>, vector<1x7xf32>
    %6 = vector.broadcast %5 : vector<1x7xf32> to vector<2x7xf32>
    %7 = arith.addf %4, %6 : vector<2x7xf32>
    %c0_8 = arith.constant 0 : index
    %c0_9 = arith.constant 0 : index
    %8 = vector.load %arg4[%c0_8, %c0_9] : memref<2x7xf32, #tpu.memory_space<vmem>>, vector<2x7xf32>
    tpu.vector_store %arg4[%c0_8, %c0_9], %7 {strides = array<i32>} : memref<2x7xf32, #tpu.memory_space<vmem>>, vector<2x7xf32>,
    return
  }
}

</mosaic_0001>

<llo_original>
// kernel: resnet_transformer_forward.21
$region0: #{resnet_transformer_forward.21}
  #allocation0 [shape = 'u32[]', space=smem, size = 0x4, offset = 0x4, fixed_abs, tag = 'smem constant byte address 0x4 - core index']
  #allocation1 [shape = 'u32[144,128]{1,0:T(1,128)}', space=vmem, size = 0x12000, scoped, tag = 'internal scratch']
  %s0 = inlined_call_operand.vmem [shape: bf16[2048,147], index: 0, kind: input, shape index: {}]
  %s1 = inlined_call_operand.vmem [shape: bf16[147,8], index: 1, kind: input, shape index: {}]
  %s2 = inlined_call_operand.vmem [shape: f32[1,8], index: 2, kind: input, shape index: {}]
  %s3 = inlined_call_operand.vmem [shape: f32[2048,8], index: 3, kind: output, shape index: {}]
  %s4 = sld [smem:[#allocation0]]
  $region45: #{resnet_transformer_forward.21} parent=0
    _
  %s6 = ssub.s32 1, %s4
  %s7 = scalar_select 0, %s6, %s4
  loop: start=0, step=1, limit=10
  $region2: #{resnet_transformer_forward.21} parent=0 // loop_pre_header
    _
  $region3: #{resnet_transformer_forward.21} parent=0 // loop_header
    %s9 = sphi 0, %s13
    %p10 = scmp.ge.s32.totalorder %s9, 10
    %s19 = sphi 0, %s21
    %s22 = sphi 0, %s19
    %s23 = sphi 0, %s22
    %s39 = sphi 0, %s23
    %s43 = sphi 0, %s43
    %s45 = sphi 0, %s43
    %s46 = sphi 0, %s45
    %s60 = sphi 0, %s46
    %s64 = sphi 0, %s64
    %s66 = sphi 0, %s64
    %s67 = sphi 0, %s66
    %s81 = sphi 0, %s67
    %s87 = sphi 0, %s89
    %s90 = sphi 0, %s87
    %s91 = sphi 0, %s90
    %s107 = sphi 0, %s91
  $region4: #{resnet_transformer_forward.21} parent=0 // loop_header_branch
    %12 = sbr.rel (%p10) target = $region8
  $region5: #{resnet_transformer_forward.21} parent=0 // loop_body
    %s14 = ssub.s32 %s9, 1
    %s15 = ssub.s32 %s9, 2
    %s16 = sadd.s32 %s9, 1
    %s17 = ssub.s32 %s9, %s16
    %p18 = scmp.eq.s32.totalorder %s17, 0
    %s20 = sadd.s32 %s19, 1
    %s21 = scalar_select %p18, %s19, %s20
    %p24 = pneg %p18
    %p25 = scmp.eq.s32.totalorder %s9, 7
    %p26 = por %p24, %p25
    %p27 = scmp.ne.s32.totalorder %s19, %s22
    %p28 = scmp.eq.s32.totalorder %s9, 0
    %p29 = por %p27, %p28
    %p30 = scmp.ne.s32.totalorder %s19, %s22
    %p31 = scmp.eq.s32.totalorder %s14, 7
    %p32 = por %p30, %p31
    %p33 = scmp.ne.s32.totalorder %s22, %s23
    %p34 = scmp.eq.s32.totalorder %s14, 0
    %p35 = por %p33, %p34
    %p36 = scmp.ne.s32.totalorder %s22, %s23
    %p37 = scmp.eq.s32.totalorder %s15, 7
    %p38 = por %p36, %p37
    %p40 = scmp.ne.s32.totalorder %s23, %s39
    %p41 = scmp.eq.s32.totalorder %s15, 0
    %p42 = por %p40, %p41
    %s44 = sadd.s32 %s43, 1
    %p47 = scmp.eq.s32.totalorder %s9, 7
    %p48 = scmp.ne.s32.totalorder %s43, %s45
    %p49 = scmp.eq.s32.totalorder %s9, 0
    %p50 = por %p48, %p49
    %p51 = scmp.ne.s32.totalorder %s43, %s45
    %p52 = scmp.eq.s32.totalorder %s14, 7
    %p53 = por %p51, %p52
    %p54 = scmp.ne.s32.totalorder %s45, %s46
    %p55 = scmp.eq.s32.totalorder %s14, 0
    %p56 = por %p54, %p55
    %p57 = scmp.ne.s32.totalorder %s45, %s46
    %p58 = scmp.eq.s32.totalorder %s15, 7
    %p59 = por %p57, %p58
    %p61 = scmp.ne.s32.totalorder %s46, %s60
    %p62 = scmp.eq.s32.totalorder %s15, 0
    %p63 = por %p61, %p62
    %s65 = sadd.s32 %s64, 1
    %p68 = scmp.eq.s32.totalorder %s9, 7
    %p69 = scmp.ne.s32.totalorder %s64, %s66
    %p70 = scmp.eq.s32.totalorder %s9, 0
    %p71 = por %p69, %p70
    %p72 = scmp.ne.s32.totalorder %s64, %s66
    %p73 = scmp.eq.s32.totalorder %s14, 7
    %p74 = por %p72, %p73
    %p75 = scmp.ne.s32.totalorder %s66, %s67
    %p76 = scmp.eq.s32.totalorder %s14, 0
    %p77 = por %p75, %p76
    %p78 = scmp.ne.s32.totalorder %s66, %s67
    %p79 = scmp.eq.s32.totalorder %s15, 7
    %p80 = por %p78, %p79
    %p82 = scmp.ne.s32.totalorder %s67, %s81
    %p83 = scmp.eq.s32.totalorder %s15, 0
    %p84 = por %p82, %p83
    %s85 = ssub.s32 %s9, %s16
    %p86 = scmp.eq.s32.totalorder %s85, 0
    %s88 = sadd.s32 %s87, 1
    %s89 = scalar_select %p86, %s87, %s88
    %p92 = pneg %p86
    %p93 = scmp.eq.s32.totalorder %s9, 7
    %p94 = por %p92, %p93
    %p95 = scmp.ne.s32.totalorder %s87, %s90
    %p96 = scmp.eq.s32.totalorder %s9, 0
    %p97 = por %p95, %p96
    %p98 = scmp.ne.s32.totalorder %s87, %s90
    %p99 = scmp.eq.s32.totalorder %s14, 7
    %p100 = por %p98, %p99
    %p101 = scmp.ne.s32.totalorder %s90, %s91
    %p102 = scmp.eq.s32.totalorder %s14, 0
    %p103 = por %p101, %p102
    %p104 = scmp.ne.s32.totalorder %s90, %s91
    %p105 = scmp.eq.s32.totalorder %s15, 7
    %p106 = por %p104, %p105
    %p108 = scmp.ne.s32.totalorder %s91, %s107
    %p109 = scmp.eq.s32.totalorder %s15, 0
    %p110 = por %p108, %p109
    %p111 = scmp.le.s32.totalorder 1, %s9
    %p112 = scmp.lt.s32.totalorder %s9, 9
    %p113 = pnand %p111, %p112
    %p114 = pneg %p113
    // Predicated region
    $region9: #{resnet_transformer_forward.21} parent=5 // pred_check
      _
    $region10: #{resnet_transformer_forward.21} parent=5 // pred_check_branch
      %116 = sbr.rel (%p113) target = $region12
    $region11: #{resnet_transformer_forward.21} parent=5 // pred_region
      %s117 = ssub.s32 %s9, 1
      // Predicated region
      $region13: #{resnet_transformer_forward.21} parent=11 // pred_check
        %p118 = pneg %p56
      $region14: #{resnet_transformer_forward.21} parent=11 // pred_check_branch
        %120 = sbr.rel (%p118) target = $region16
      $region15: #{resnet_transformer_forward.21} parent=11 // pred_region
        _
      $region16: #{resnet_transformer_forward.21} parent=11 // pred_fallthru
        _
      // Predicated region
      $region17: #{resnet_transformer_forward.21} parent=11 // pred_check
        %p121 = pneg %p77
      $region18: #{resnet_transformer_forward.21} parent=11 // pred_check_branch
        %123 = sbr.rel (%p121) target = $region20
      $region19: #{resnet_transformer_forward.21} parent=11 // pred_region
        _
      $region20: #{resnet_transformer_forward.21} parent=11 // pred_fallthru
        _
    $region12: #{resnet_transformer_forward.21} parent=5 // pred_fallthru
      _
    %p124 = scmp.lt.s32.totalorder %s9, 8
    // Predicated region
    $region21: #{resnet_transformer_forward.21} parent=5 // pred_check
      %p125 = pneg %p124
    $region22: #{resnet_transformer_forward.21} parent=5 // pred_check_branch
      %127 = sbr.rel (%p125) target = $region24
    $region23: #{resnet_transformer_forward.21} parent=5 // pred_region
      // Predicated region
      $region25: #{resnet_transformer_forward.21} parent=23 // pred_check
        %p128 = pneg %p29
      $region26: #{resnet_transformer_forward.21} parent=23 // pred_check_branch
        %130 = sbr.rel (%p128) target = $region28
      $region27: #{resnet_transformer_forward.21} parent=23 // pred_region
        %s131 = smul.u32 32, %s9
        %p132 = scmp.lt.s32.totalorder %s131, 255
        %s133 = scalar_select %p132, %s131, 255
        %s134 = smul.addr %s133, 2
        %s135 = smul.addr %s134, 4
        %s136 = scalar_lea.vmem %s0, %s135
        %s137 = smul.u32 32, %s9
      $region28: #{resnet_transformer_forward.21} parent=23 // pred_fallthru
        _
    $region24: #{resnet_transformer_forward.21} parent=5 // pred_fallthru
      _
    %p138 = scmp.le.s32.totalorder 1, %s9
    %p139 = scmp.lt.s32.totalorder %s9, 9
    %p140 = pnand %p138, %p139
    %p141 = pneg %p140
    // Predicated region
    $region29: #{resnet_transformer_forward.21} parent=5 // pred_check
      _
    $region30: #{resnet_transformer_forward.21} parent=5 // pred_check_branch
      %143 = sbr.rel (%p140) target = $region32
    $region31: #{resnet_transformer_forward.21} parent=5 // pred_region
      %s144 = ssub.s32 %s9, 1
      %s145 = smul.u32 32, %s14
      %p146 = scmp.lt.s32.totalorder %s145, 255
      %s147 = scalar_select %p146, %s145, 255
      %s148 = smul.addr %s147, 2
      %s149 = smul.addr %s148, 4
      %s150 = scalar_lea.vmem %s0, %s149
      %p151 = pneg %p35
      %p152 = pneg %p32
      %p153 = pneg %p56
      %p154 = pneg %p53
      %p155 = pneg %p77
      %p156 = pneg %p74
      %p157 = pneg %p103
      %p158 = pneg %p100
      %s159 = smul.u32 32, %s14
      %p160 = scmp.lt.s32.totalorder %s159, 255
      %s161 = scalar_select %p160, %s159, 255
      %s162 = smul.addr %s161, 8
      %s163 = scalar_lea.vmem %s3, %s162
      %s164 = smul.u32 32, %s14
      %p165 = scmp.lt.s32.totalorder %s164, 255
      %s166 = scalar_select %p165, %s164, 255
      %s167 = smul.addr %s166, 2
      %s168 = smul.addr %s167, 4
      %s169 = scalar_lea.vmem %s0, %s168
      %s170 = smul.u32 32, %s14
      %s171 = smul.u32 32, %s14
      %p172 = scmp.lt.s32.totalorder %s171, 255
      %s173 = scalar_select %p172, %s171, 255
      %s174 = smul.addr %s173, 8
      %s175 = scalar_lea.vmem %s3, %s174
      %s176 = smul.u32 32, %s14
      %v178 = vld [vmem:[%s169] sm:$0xff]
      %v179 = vld [vmem:[%s169 + $0x8] sm:$0xff]
      %v180 = vld [vmem:[%s169 + $0x10] sm:$0xff]
      %v181 = vld [vmem:[%s169 + $0x18] sm:$0xff]
      %v182 = vld [vmem:[%s169 + $0x20] sm:$0xff]
      %v183 = vld [vmem:[%s169 + $0x28] sm:$0xff]
      %v184 = vld [vmem:[%s169 + $0x30] sm:$0xff]
      %v185 = vld [vmem:[%s169 + $0x38] sm:$0xff]
      %v186 = vld [vmem:[%s169 + $0x40] sm:$0xff]
      %v187 = vld [vmem:[%s169 + $0x48] sm:$0xff]
      %v188 = vld [vmem:[%s169 + $0x50] sm:$0xff]
      %v189 = vld [vmem:[%s169 + $0x58] sm:$0xff]
      %v190 = vld [vmem:[%s169 + $0x60] sm:$0xff]
      %v191 = vld [vmem:[%s169 + $0x68] sm:$0xff]
      %v192 = vld [vmem:[%s169 + $0x70] sm:$0xff]
      %v193 = vld [vmem:[%s169 + $0x78] sm:$0xff]
      %v194 = vld [vmem:[%s169 + $0x80] sm:$0xff]
      %v195 = vld [vmem:[%s169 + $0x88] sm:$0xff]
      %v196 = vld [vmem:[%s169 + $0x90] sm:$0xff]
      %v197 = vld [vmem:[%s169 + $0x98] sm:$0xff]
      %v198 = vld [vmem:[%s169 + $0xa0] sm:$0xff]
      %v199 = vld [vmem:[%s169 + $0xa8] sm:$0xff]
      %v200 = vld [vmem:[%s169 + $0xb0] sm:$0xff]
      %v201 = vld [vmem:[%s169 + $0xb8] sm:$0xff]
      %v202 = vld [vmem:[%s169 + $0xc0] sm:$0xff]
      %v203 = vld [vmem:[%s169 + $0xc8] sm:$0xff]
      %v204 = vld [vmem:[%s169 + $0xd0] sm:$0xff]
      %v205 = vld [vmem:[%s169 + $0xd8] sm:$0xff]
      %v206 = vld [vmem:[%s169 + $0xe0] sm:$0xff]
      %v207 = vld [vmem:[%s169 + $0xe8] sm:$0xff]
      %v208 = vld [vmem:[%s169 + $0xf0] sm:$0xff]
      %v209 = vld [vmem:[%s169 + $0xf8] sm:$0xff]
      %v210 = vld [vmem:[%s1] sm:$0xf]
      %v211 = vld [vmem:[%s1 + $0x4] sm:$0xf]
      %v212 = vld [vmem:[%s1 + $0x8] sm:$0xf]
      %v213 = vld [vmem:[%s1 + $0xc] sm:$0xf]
      %v214 = vld [vmem:[%s1 + $0x10] sm:$0xf]
      %v215 = vld [vmem:[%s1 + $0x14] sm:$0xf]
      %v216 = vld [vmem:[%s1 + $0x18] sm:$0xf]
      %v217 = vld [vmem:[%s1 + $0x1c] sm:$0xf]
      %v218 = vld [vmem:[%s1 + $0x20] sm:$0xf]
      %v219 = vld [vmem:[%s1 + $0x24] sm:$0xf]
      %v220 = vld [vmem:[%s1 + $0x28] sm:$0xf]
      %v221 = vld [vmem:[%s1 + $0x2c] sm:$0xf]
      %v222 = vld [vmem:[%s1 + $0x30] sm:$0xf]
      %v223 = vld [vmem:[%s1 + $0x34] sm:$0xf]
      %v224 = vld [vmem:[%s1 + $0x38] sm:$0xf]
      %v225 = vld [vmem:[%s1 + $0x3c] sm:$0xf]
      %v226 = vld [vmem:[%s1 + $0x40] sm:$0xf]
      %v227 = vld [vmem:[%s1 + $0x44] sm:$0xf]
      %v228 = vld [vmem:[%s1 + $0x48] sm:$0x3]
      %v229 = vld [vmem:[%s2] sm:$0x1]
      %v231 = vlaneseq
      %v232 = vshrl.u32 %v231, 7
      %v233 = vsub.s32 0, %v232
      %v234 = vrot.slane %v229, %v233
      %v268 = vunpack.c.l.b16 %v178
      %v269 = vunpack.c.h.b16 %v178
      %v270 = vunpack.c.l.b16 %v179
      %v271 = vunpack.c.h.b16 %v179
      %v272 = vunpack.c.l.b16 %v180
      %v273 = vunpack.c.h.b16 %v180
      %v274 = vunpack.c.l.b16 %v181
      %v275 = vunpack.c.h.b16 %v181
      %v276 = vunpack.c.l.b16 %v182
      %v277 = vunpack.c.h.b16 %v182
      %v278 = vunpack.c.l.b16 %v183
      %v279 = vunpack.c.h.b16 %v183
      %v280 = vunpack.c.l.b16 %v184
      %v281 = vunpack.c.h.b16 %v184
      %v282 = vunpack.c.l.b16 %v185
      %v283 = vunpack.c.h.b16 %v185
      %v284 = vunpack.c.l.b16 %v186
      %v285 = vunpack.c.h.b16 %v186
      %v286 = vunpack.c.l.b16 %v187
      %v287 = vunpack.c.h.b16 %v187
      %v288 = vunpack.c.l.b16 %v188
      %v289 = vunpack.c.h.b16 %v188
      %v290 = vunpack.c.l.b16 %v189
      %v291 = vunpack.c.h.b16 %v189
      %v292 = vunpack.c.l.b16 %v190
      %v293 = vunpack.c.h.b16 %v190
      %v294 = vunpack.c.l.b16 %v191
      %v295 = vunpack.c.h.b16 %v191
      %v296 = vunpack.c.l.b16 %v192
      %v297 = vunpack.c.h.b16 %v192
      %v298 = vunpack.c.l.b16 %v193
      %v299 = vunpack.c.h.b16 %v193
      %v300 = vunpack.c.l.b16 %v194
      %v301 = vunpack.c.h.b16 %v194
      %v302 = vunpack.c.l.b16 %v195
      %v303 = vunpack.c.h.b16 %v195
      %v304 = vunpack.c.l.b16 %v196
      %v305 = vunpack.c.h.b16 %v196
      %v306 = vunpack.c.l.b16 %v197
      %v307 = vunpack.c.h.b16 %v197
      %v308 = vunpack.c.l.b16 %v198
      %v309 = vunpack.c.h.b16 %v198
      %v310 = vunpack.c.l.b16 %v199
      %v311 = vunpack.c.h.b16 %v199
      %v312 = vunpack.c.l.b16 %v200
      %v313 = vunpack.c.h.b16 %v200
      %v314 = vunpack.c.l.b16 %v201
      %v315 = vunpack.c.h.b16 %v201
      %v316 = vunpack.c.l.b16 %v202
      %v317 = vunpack.c.h.b16 %v202
      %v318 = vunpack.c.l.b16 %v203
      %v319 = vunpack.c.h.b16 %v203
      %v320 = vunpack.c.l.b16 %v204
      %v321 = vunpack.c.h.b16 %v204
      %v322 = vunpack.c.l.b16 %v205
      %v323 = vunpack.c.h.b16 %v205
      %v324 = vunpack.c.l.b16 %v206
      %v325 = vunpack.c.h.b16 %v206
      %v326 = vunpack.c.l.b16 %v207
      %v327 = vunpack.c.h.b16 %v207
      %v328 = vunpack.c.l.b16 %v208
      %v329 = vunpack.c.h.b16 %v208
      %v330 = vunpack.c.l.b16 %v209
      %v331 = vunpack.c.h.b16 %v209
      %v332 = vpack.c.b16 %v270, %v268
      %v333 = vpack.c.b16 %v271, %v269
      %v334 = vpack.c.b16 %v274, %v272
      %v335 = vpack.c.b16 %v275, %v273
      %v336 = vpack.c.b16 %v278, %v276
      %v337 = vpack.c.b16 %v279, %v277
      %v338 = vpack.c.b16 %v282, %v280
      %v339 = vpack.c.b16 %v283, %v281
      %v340 = vpack.c.b16 %v286, %v284
      %v341 = vpack.c.b16 %v287, %v285
      %v342 = vpack.c.b16 %v290, %v288
      %v343 = vpack.c.b16 %v291, %v289
      %v344 = vpack.c.b16 %v294, %v292
      %v345 = vpack.c.b16 %v295, %v293
      %v346 = vpack.c.b16 %v298, %v296
      %v347 = vpack.c.b16 %v299, %v297
      %v348 = vpack.c.b16 %v302, %v300
      %v349 = vpack.c.b16 %v303, %v301
      %v350 = vpack.c.b16 %v306, %v304
      %v351 = vpack.c.b16 %v307, %v305
      %v352 = vpack.c.b16 %v310, %v308
      %v353 = vpack.c.b16 %v311, %v309
      %v354 = vpack.c.b16 %v314, %v312
      %v355 = vpack.c.b16 %v315, %v313
      %v356 = vpack.c.b16 %v318, %v316
      %v357 = vpack.c.b16 %v319, %v317
      %v358 = vpack.c.b16 %v322, %v320
      %v359 = vpack.c.b16 %v323, %v321
      %v360 = vpack.c.b16 %v326, %v324
      %v361 = vpack.c.b16 %v327, %v325
      %v362 = vpack.c.b16 %v330, %v328
      %v363 = vpack.c.b16 %v331, %v329
      %v399 = vunpack.c.l.b16 %v210
      %v400 = vunpack.c.l.b16 %v211
      %v401 = vunpack.c.l.b16 %v212
      %v402 = vunpack.c.l.b16 %v213
      %v403 = vunpack.c.l.b16 %v214
      %v404 = vunpack.c.l.b16 %v215
      %v405 = vunpack.c.l.b16 %v216
      %v406 = vunpack.c.l.b16 %v217
      %v407 = vunpack.c.l.b16 %v218
      %v408 = vunpack.c.l.b16 %v219
      %v409 = vunpack.c.l.b16 %v220
      %v410 = vunpack.c.l.b16 %v221
      %v411 = vunpack.c.l.b16 %v222
      %v412 = vunpack.c.l.b16 %v223
      %v413 = vunpack.c.l.b16 %v224
      %v414 = vunpack.c.l.b16 %v225
      %v415 = vunpack.c.l.b16 %v226
      %v416 = vunpack.c.l.b16 %v227
      %v417 = vunpack.c.l.b16 %v228
      %v418 = vpack.c.b16 %v400, %v399
      %v419 = vpack.c.b16 %v402, %v401
      %v420 = vpack.c.b16 %v404, %v403
      %v421 = vpack.c.b16 %v406, %v405
      %v422 = vpack.c.b16 %v408, %v407
      %v423 = vpack.c.b16 %v410, %v409
      %v424 = vpack.c.b16 %v412, %v411
      %v425 = vpack.c.b16 %v414, %v413
      %v426 = vpack.c.b16 %v416, %v415
      %v427 = vpack.c.b16 %v417, %v417
      %vm437 = vcmask 154624
      %v439 = vsel %vm437, %v333, 0
      %v442 = vsel %vm437, %v335, 0
      %v445 = vsel %vm437, %v337, 0
      %v448 = vsel %vm437, %v339, 0
      %v451 = vsel %vm437, %v341, 0
      %v454 = vsel %vm437, %v343, 0
      %v457 = vsel %vm437, %v345, 0
      %v460 = vsel %vm437, %v347, 0
      %v463 = vsel %vm437, %v349, 0
      %v466 = vsel %vm437, %v351, 0
      %v469 = vsel %vm437, %v353, 0
      %v472 = vsel %vm437, %v355, 0
      %v475 = vsel %vm437, %v357, 0
      %v478 = vsel %vm437, %v359, 0
      %v481 = vsel %vm437, %v361, 0
      %v484 = vsel %vm437, %v363, 0
      %vm486 = vcmask 1040384
      %vm487 = vcmask 1041408
      %v488 = vsel %vm486, 4294967295, 65535
      %v489 = vsel %vm487, %v488, 0
      %v491 = vand.u32 %v427, %v489
      %493 = vmatprep.subr.bf16.mxu0 0
      %494 = vmatpush1.bf16.msra.mxu0 %v418
      %495 = vmatprep.subr.bf16.mxu0 0
      %496 = vmatpush1.bf16.msra.mxu0 %v419
      %497 = vmatprep.subr.bf16.mxu0 0
      %498 = vmatpush1.bf16.msra.mxu0 %v420
      %499 = vmatprep.subr.bf16.mxu0 0
      %500 = vmatpush1.bf16.msra.mxu0 %v421
      %501 = vmatprep.subr.bf16.mxu0 0
      %502 = vmatpush1.bf16.msra.mxu0 %v422
      %503 = vmatprep.subr.bf16.mxu0 0
      %504 = vmatpush1.bf16.msra.mxu0 %v423
      %505 = vmatprep.subr.bf16.mxu0 0
      %506 = vmatpush1.bf16.msra.mxu0 %v424
      %507 = vmatprep.subr.bf16.mxu0 0
      %508 = vmatpush1.bf16.msra.mxu0 %v425
      %509 = vmatprep.subr.bf16.mxu0 0
      %510 = vmatpush1.bf16.msra.mxu0 %v426
      %511 = vmatprep.subr.bf16.mxu0 0
      %512 = vmatpush1.bf16.msra.mxu0 %v491
      %513 = vmatprep.subr.bf16.mxu0 0
      %514 = vmatpush1.bf16.msra.mxu0 0
      %515 = vmatprep.subr.bf16.mxu0 0
      %516 = vmatpush1.bf16.msra.mxu0 0
      %517 = vmatprep.subr.bf16.mxu0 0
      %518 = vmatpush1.bf16.msra.mxu0 0
      %519 = vmatprep.subr.bf16.mxu0 0
      %520 = vmatpush1.bf16.msra.mxu0 0
      %521 = vmatprep.subr.bf16.mxu0 0
      %522 = vmatpush1.bf16.msra.mxu0 0
      %523 = vmatprep.subr.bf16.mxu0 0
      %524 = vmatpush1.bf16.msra.mxu0 0
      %525 = vmatprep.mubr.bf16.mxu0 %v439
      %526 = vmatmul.mubr.bf16.gmra.mrb[0].mxu0 %v332
      %v527 = vpop.f32.mrb[0].mxu0
      %v528 = vadd.f32 %v234, %v527
      %v529 = vpop.f32.mrb[0].mxu0
      %v530 = vpop.f32.mrb[0].mxu0
      %v531 = vadd.f32 %v234, %v530
      %v532 = vpop.f32.mrb[0].mxu0
      %533 = vmatprep.mubr.bf16.mxu0 %v442
      %534 = vmatmul.mubr.bf16.gmra.mrb[0].mxu0 %v334
      %v535 = vpop.f32.mrb[0].mxu0
      %v536 = vadd.f32 %v234, %v535
      %v537 = vpop.f32.mrb[0].mxu0
      %v538 = vpop.f32.mrb[0].mxu0
      %v539 = vadd.f32 %v234, %v538
      %v540 = vpop.f32.mrb[0].mxu0
      %541 = vmatprep.mubr.bf16.mxu0 %v445
      %542 = vmatmul.mubr.bf16.gmra.mrb[0].mxu0 %v336
      %v543 = vpop.f32.mrb[0].mxu0
      %v544 = vadd.f32 %v234, %v543
      %v545 = vpop.f32.mrb[0].mxu0
      %v546 = vpop.f32.mrb[0].mxu0
      %v547 = vadd.f32 %v234, %v546
      %v548 = vpop.f32.mrb[0].mxu0
      %549 = vmatprep.mubr.bf16.mxu0 %v448
      %550 = vmatmul.mubr.bf16.gmra.mrb[0].mxu0 %v338
      %v551 = vpop.f32.mrb[0].mxu0
      %v552 = vadd.f32 %v234, %v551
      %v553 = vpop.f32.mrb[0].mxu0
      %v554 = vpop.f32.mrb[0].mxu0
      %v555 = vadd.f32 %v234, %v554
      %v556 = vpop.f32.mrb[0].mxu0
      %557 = vmatprep.mubr.bf16.mxu0 %v451
      %558 = vmatmul.mubr.bf16.gmra.mrb[0].mxu0 %v340
      %v559 = vpop.f32.mrb[0].mxu0
      %v560 = vadd.f32 %v234, %v559
      %v561 = vpop.f32.mrb[0].mxu0
      %v562 = vpop.f32.mrb[0].mxu0
      %v563 = vadd.f32 %v234, %v562
      %v564 = vpop.f32.mrb[0].mxu0
      %565 = vmatprep.mubr.bf16.mxu0 %v454
      %566 = vmatmul.mubr.bf16.gmra.mrb[0].mxu0 %v342
      %v567 = vpop.f32.mrb[0].mxu0
      %v568 = vadd.f32 %v234, %v567
      %v569 = vpop.f32.mrb[0].mxu0
      %v570 = vpop.f32.mrb[0].mxu0
      %v571 = vadd.f32 %v234, %v570
      %v572 = vpop.f32.mrb[0].mxu0
      %573 = vmatprep.mubr.bf16.mxu0 %v457
      %574 = vmatmul.mubr.bf16.gmra.mrb[0].mxu0 %v344
      %v575 = vpop.f32.mrb[0].mxu0
      %v576 = vadd.f32 %v234, %v575
      %v577 = vpop.f32.mrb[0].mxu0
      %v578 = vpop.f32.mrb[0].mxu0
      %v579 = vadd.f32 %v234, %v578
      %v580 = vpop.f32.mrb[0].mxu0
      %581 = vmatprep.mubr.bf16.mxu0 %v460
      %582 = vmatmul.mubr.bf16.gmra.mrb[0].mxu0 %v346
      %v583 = vpop.f32.mrb[0].mxu0
      %v584 = vadd.f32 %v234, %v583
      %v585 = vpop.f32.mrb[0].mxu0
      %v586 = vpop.f32.mrb[0].mxu0
      %v587 = vadd.f32 %v234, %v586
      %v588 = vpop.f32.mrb[0].mxu0
      %589 = vmatprep.mubr.bf16.mxu0 %v463
      %590 = vmatmul.mubr.bf16.gmra.mrb[0].mxu0 %v348
      %v591 = vpop.f32.mrb[0].mxu0
      %v592 = vadd.f32 %v234, %v591
      %v593 = vpop.f32.mrb[0].mxu0
      %v594 = vpop.f32.mrb[0].mxu0
      %v595 = vadd.f32 %v234, %v594
      %v596 = vpop.f32.mrb[0].mxu0
      %597 = vmatprep.mubr.bf16.mxu0 %v466
      %598 = vmatmul.mubr.bf16.gmra.mrb[0].mxu0 %v350
      %v599 = vpop.f32.mrb[0].mxu0
      %v600 = vadd.f32 %v234, %v599
      %v601 = vpop.f32.mrb[0].mxu0
      %v602 = vpop.f32.mrb[0].mxu0
      %v603 = vadd.f32 %v234, %v602
      %v604 = vpop.f32.mrb[0].mxu0
      %605 = vmatprep.mubr.bf16.mxu0 %v469
      %606 = vmatmul.mubr.bf16.gmra.mrb[0].mxu0 %v352
      %v607 = vpop.f32.mrb[0].mxu0
      %v608 = vadd.f32 %v234, %v607
      %v609 = vpop.f32.mrb[0].mxu0
      %v610 = vpop.f32.mrb[0].mxu0
      %v611 = vadd.f32 %v234, %v610
      %v612 = vpop.f32.mrb[0].mxu0
      %613 = vmatprep.mubr.bf16.mxu0 %v472
      %614 = vmatmul.mubr.bf16.gmra.mrb[0].mxu0 %v354
      %v615 = vpop.f32.mrb[0].mxu0
      %v616 = vadd.f32 %v234, %v615
      %v617 = vpop.f32.mrb[0].mxu0
      %v618 = vpop.f32.mrb[0].mxu0
      %v619 = vadd.f32 %v234, %v618
      %v620 = vpop.f32.mrb[0].mxu0
      %621 = vmatprep.mubr.bf16.mxu0 %v475
      %622 = vmatmul.mubr.bf16.gmra.mrb[0].mxu0 %v356
      %v623 = vpop.f32.mrb[0].mxu0
      %v624 = vadd.f32 %v234, %v623
      %v625 = vpop.f32.mrb[0].mxu0
      %v626 = vpop.f32.mrb[0].mxu0
      %v627 = vadd.f32 %v234, %v626
      %v628 = vpop.f32.mrb[0].mxu0
      %629 = vmatprep.mubr.bf16.mxu0 %v478
      %630 = vmatmul.mubr.bf16.gmra.mrb[0].mxu0 %v358
      %v631 = vpop.f32.mrb[0].mxu0
      %v632 = vadd.f32 %v234, %v631
      %v633 = vpop.f32.mrb[0].mxu0
      %v634 = vpop.f32.mrb[0].mxu0
      %v635 = vadd.f32 %v234, %v634
      %v636 = vpop.f32.mrb[0].mxu0
      %637 = vmatprep.mubr.bf16.mxu0 %v481
      %638 = vmatmul.mubr.bf16.gmra.mrb[0].mxu0 %v360
      %v639 = vpop.f32.mrb[0].mxu0
      %v640 = vadd.f32 %v234, %v639
      %v641 = vpop.f32.mrb[0].mxu0
      %v642 = vpop.f32.mrb[0].mxu0
      %v643 = vadd.f32 %v234, %v642
      %v644 = vpop.f32.mrb[0].mxu0
      %645 = vmatprep.mubr.bf16.mxu0 %v484
      %646 = vmatmul.mubr.bf16.gmra.mrb[0].mxu0 %v362
      %v647 = vpop.f32.mrb[0].mxu0
      %v648 = vadd.f32 %v234, %v647
      %v649 = vpop.f32.mrb[0].mxu0
      %v650 = vpop.f32.mrb[0].mxu0
      %v651 = vadd.f32 %v234, %v650
      %v652 = vpop.f32.mrb[0].mxu0
      %653 = vdwg.mxu0
      %v654 = vmax.f32 %v528, 0.0
      %v655 = vmax.f32 %v531, 0.0
      %v656 = vmax.f32 %v536, 0.0
      %v657 = vmax.f32 %v539, 0.0
      %v658 = vmax.f32 %v544, 0.0
      %v659 = vmax.f32 %v547, 0.0
      %v660 = vmax.f32 %v552, 0.0
      %v661 = vmax.f32 %v555, 0.0
      %v662 = vmax.f32 %v560, 0.0
      %v663 = vmax.f32 %v563, 0.0
      %v664 = vmax.f32 %v568, 0.0
      %v665 = vmax.f32 %v571, 0.0
      %v666 = vmax.f32 %v576, 0.0
      %v667 = vmax.f32 %v579, 0.0
      %v668 = vmax.f32 %v584, 0.0
      %v669 = vmax.f32 %v587, 0.0
      %v670 = vmax.f32 %v592, 0.0
      %v671 = vmax.f32 %v595, 0.0
      %v672 = vmax.f32 %v600, 0.0
      %v673 = vmax.f32 %v603, 0.0
      %v674 = vmax.f32 %v608, 0.0
      %v675 = vmax.f32 %v611, 0.0
      %v676 = vmax.f32 %v616, 0.0
      %v677 = vmax.f32 %v619, 0.0
      %v678 = vmax.f32 %v624, 0.0
      %v679 = vmax.f32 %v627, 0.0
      %v680 = vmax.f32 %v632, 0.0
      %v681 = vmax.f32 %v635, 0.0
      %v682 = vmax.f32 %v640, 0.0
      %v683 = vmax.f32 %v643, 0.0
      %v684 = vmax.f32 %v648, 0.0
      %v685 = vmax.f32 %v651, 0.0
      %vm686 = vcmask 64512
      %687 = vst.msk [vmem:[%s175] sm:$0xff] %vm686, %v654
      %688 = vst.msk [vmem:[%s175 + $0x8] sm:$0xff] %vm686, %v655
      %689 = vst.msk [vmem:[%s175 + $0x10] sm:$0xff] %vm686, %v656
      %690 = vst.msk [vmem:[%s175 + $0x18] sm:$0xff] %vm686, %v657
      %691 = vst.msk [vmem:[%s175 + $0x20] sm:$0xff] %vm686, %v658
      %692 = vst.msk [vmem:[%s175 + $0x28] sm:$0xff] %vm686, %v659
      %693 = vst.msk [vmem:[%s175 + $0x30] sm:$0xff] %vm686, %v660
      %694 = vst.msk [vmem:[%s175 + $0x38] sm:$0xff] %vm686, %v661
      %695 = vst.msk [vmem:[%s175 + $0x40] sm:$0xff] %vm686, %v662
      %696 = vst.msk [vmem:[%s175 + $0x48] sm:$0xff] %vm686, %v663
      %697 = vst.msk [vmem:[%s175 + $0x50] sm:$0xff] %vm686, %v664
      %698 = vst.msk [vmem:[%s175 + $0x58] sm:$0xff] %vm686, %v665
      %699 = vst.msk [vmem:[%s175 + $0x60] sm:$0xff] %vm686, %v666
      %700 = vst.msk [vmem:[%s175 + $0x68] sm:$0xff] %vm686, %v667
      %701 = vst.msk [vmem:[%s175 + $0x70] sm:$0xff] %vm686, %v668
      %702 = vst.msk [vmem:[%s175 + $0x78] sm:$0xff] %vm686, %v669
      %703 = vst.msk [vmem:[%s175 + $0x80] sm:$0xff] %vm686, %v670
      %704 = vst.msk [vmem:[%s175 + $0x88] sm:$0xff] %vm686, %v671
      %705 = vst.msk [vmem:[%s175 + $0x90] sm:$0xff] %vm686, %v672
      %706 = vst.msk [vmem:[%s175 + $0x98] sm:$0xff] %vm686, %v673
      %707 = vst.msk [vmem:[%s175 + $0xa0] sm:$0xff] %vm686, %v674
      %708 = vst.msk [vmem:[%s175 + $0xa8] sm:$0xff] %vm686, %v675
      %709 = vst.msk [vmem:[%s175 + $0xb0] sm:$0xff] %vm686, %v676
      %710 = vst.msk [vmem:[%s175 + $0xb8] sm:$0xff] %vm686, %v677
      %711 = vst.msk [vmem:[%s175 + $0xc0] sm:$0xff] %vm686, %v678
      %712 = vst.msk [vmem:[%s175 + $0xc8] sm:$0xff] %vm686, %v679
      %713 = vst.msk [vmem:[%s175 + $0xd0] sm:$0xff] %vm686, %v680
      %714 = vst.msk [vmem:[%s175 + $0xd8] sm:$0xff] %vm686, %v681
      %715 = vst.msk [vmem:[%s175 + $0xe0] sm:$0xff] %vm686, %v682
      %716 = vst.msk [vmem:[%s175 + $0xe8] sm:$0xff] %vm686, %v683
      %717 = vst.msk [vmem:[%s175 + $0xf0] sm:$0xff] %vm686, %v684
      %718 = vst.msk [vmem:[%s175 + $0xf8] sm:$0xff] %vm686, %v685
      %s719 = smul.u32 32, %s14
      %p720 = scmp.lt.s32.totalorder %s719, 255
      %s721 = scalar_select %p720, %s719, 255
      %s722 = smul.addr %s721, 8
      %s723 = scalar_lea.vmem %s3, %s722
      // Predicated region
      $region33: #{resnet_transformer_forward.21} parent=31 // pred_check
        %p724 = pneg %p100
      $region34: #{resnet_transformer_forward.21} parent=31 // pred_check_branch
        %726 = sbr.rel (%p724) target = $region36
      $region35: #{resnet_transformer_forward.21} parent=31 // pred_region
        %s727 = smul.u32 32, %s14
      $region36: #{resnet_transformer_forward.21} parent=31 // pred_fallthru
        _
    $region32: #{resnet_transformer_forward.21} parent=5 // pred_fallthru
      _
    %p728 = scmp.le.s32.totalorder 2, %s9
    // Predicated region
    $region37: #{resnet_transformer_forward.21} parent=5 // pred_check
      %p729 = pneg %p728
    $region38: #{resnet_transformer_forward.21} parent=5 // pred_check_branch
      %731 = sbr.rel (%p729) target = $region40
    $region39: #{resnet_transformer_forward.21} parent=5 // pred_region
      %s732 = ssub.s32 %s9, 2
      // Predicated region
      $region41: #{resnet_transformer_forward.21} parent=39 // pred_check
        %p733 = pneg %p106
      $region42: #{resnet_transformer_forward.21} parent=39 // pred_check_branch
        %735 = sbr.rel (%p733) target = $region44
      $region43: #{resnet_transformer_forward.21} parent=39 // pred_region
        %s736 = smul.u32 32, %s15
        %p737 = scmp.lt.s32.totalorder %s736, 255
        %s738 = scalar_select %p737, %s736, 255
        %s739 = smul.addr %s738, 8
        %s740 = scalar_lea.vmem %s3, %s739
      $region44: #{resnet_transformer_forward.21} parent=39 // pred_fallthru
        _
    $region40: #{resnet_transformer_forward.21} parent=5 // pred_fallthru
      _
  $region6: #{resnet_transformer_forward.21} parent=0 // loop_footer
    %s13 = sadd.s32 1, %s9
  $region7: #{resnet_transformer_forward.21} parent=0 // loop_footer_branch
    %8 = sbr.rel target = $region3
  $region8: #{resnet_transformer_forward.21} parent=0 // loop_exit
    _

// kernel: resnet_transformer_forward.22
$region0: #{resnet_transformer_forward.22}
  #allocation0 [shape = 'u32[]', space=smem, size = 0x4, offset = 0x4, fixed_abs, tag = 'smem constant byte address 0x4 - core index']
  #allocation1 [shape = 'u32[144,128]{1,0:T(1,128)}', space=vmem, size = 0x12000, scoped, tag = 'internal scratch']
  %s0 = inlined_call_operand.vmem [shape: f32[9,32,128], index: 0, kind: input, shape index: {}]
  %s1 = inlined_call_operand.vmem [shape: f32[32,128], index: 1, kind: output, shape index: {}]
  %s2 = sld [smem:[#allocation0]]
  $region14: #{resnet_transformer_forward.22} parent=0
    _
  %s4 = ssub.s32 1, %s2
  %s5 = scalar_select 0, %s4, %s2
  // Predicated region
  $region2: #{resnet_transformer_forward.22} parent=0 // pred_check
    _
  $region3: #{resnet_transformer_forward.22} parent=0 // pred_check_branch
    %7 = sbr.rel (0) target = $region5
  $region4: #{resnet_transformer_forward.22} parent=0 // pred_region
    _
  $region5: #{resnet_transformer_forward.22} parent=0 // pred_fallthru
    _
  %v8 = vld [vmem:[%s0] sm:$0xff]
  %v9 = vld [vmem:[%s0 + $0x8] sm:$0xff]
  %v10 = vld [vmem:[%s0 + $0x10] sm:$0xff]
  %v11 = vld [vmem:[%s0 + $0x18] sm:$0xff]
  %v12 = vld [vmem:[%s0 + $0x20] sm:$0xff]
  %v13 = vld [vmem:[%s0 + $0x28] sm:$0xff]
  %v14 = vld [vmem:[%s0 + $0x30] sm:$0xff]
  %v15 = vld [vmem:[%s0 + $0x38] sm:$0xff]
  %v16 = vld [vmem:[%s0 + $0x40] sm:$0xff]
  %v17 = vld [vmem:[%s0 + $0x48] sm:$0xff]
  %v18 = vld [vmem:[%s0 + $0x50] sm:$0xff]
  %v19 = vld [vmem:[%s0 + $0x58] sm:$0xff]
  %v20 = vld [vmem:[%s0 + $0x60] sm:$0xff]
  %v21 = vld [vmem:[%s0 + $0x68] sm:$0xff]
  %v22 = vld [vmem:[%s0 + $0x70] sm:$0xff]
  %v23 = vld [vmem:[%s0 + $0x78] sm:$0xff]
  %v24 = vld [vmem:[%s0 + $0x80] sm:$0xff]
  %v25 = vld [vmem:[%s0 + $0x88] sm:$0xff]
  %v26 = vld [vmem:[%s0 + $0x90] sm:$0xff]
  %v27 = vld [vmem:[%s0 + $0x98] sm:$0xff]
  %v28 = vld [vmem:[%s0 + $0xa0] sm:$0xff]
  %v29 = vld [vmem:[%s0 + $0xa8] sm:$0xff]
  %v30 = vld [vmem:[%s0 + $0xb0] sm:$0xff]
  %v31 = vld [vmem:[%s0 + $0xb8] sm:$0xff]
  %v32 = vld [vmem:[%s0 + $0xc0] sm:$0xff]
  %v33 = vld [vmem:[%s0 + $0xc8] sm:$0xff]
  %v34 = vld [vmem:[%s0 + $0xd0] sm:$0xff]
  %v35 = vld [vmem:[%s0 + $0xd8] sm:$0xff]
  %v36 = vld [vmem:[%s0 + $0xe0] sm:$0xff]
  %v37 = vld [vmem:[%s0 + $0xe8] sm:$0xff]
  %v38 = vld [vmem:[%s0 + $0xf0] sm:$0xff]
  %v39 = vld [vmem:[%s0 + $0xf8] sm:$0xff]
  %v40 = vld [vmem:[%s0 + $0x100] sm:$0xff]
  %v41 = vld [vmem:[%s0 + $0x108] sm:$0xff]
  %v42 = vld [vmem:[%s0 + $0x110] sm:$0xff]
  %v43 = vld [vmem:[%s0 + $0x118] sm:$0xff]
  %v44 = vmax.f32 %v8, %v12
  %v45 = vmax.f32 %v44, %v16
  %v46 = vmax.f32 %v45, %v20
  %v47 = vmax.f32 %v46, %v24
  %v48 = vmax.f32 %v47, %v28
  %v49 = vmax.f32 %v48, %v32
  %v50 = vmax.f32 %v49, %v36
  %v51 = vmax.f32 %v50, %v40
  %v52 = vmax.f32 %v9, %v13
  %v53 = vmax.f32 %v52, %v17
  %v54 = vmax.f32 %v53, %v21
  %v55 = vmax.f32 %v54, %v25
  %v56 = vmax.f32 %v55, %v29
  %v57 = vmax.f32 %v56, %v33
  %v58 = vmax.f32 %v57, %v37
  %v59 = vmax.f32 %v58, %v41
  %v60 = vmax.f32 %v10, %v14
  %v61 = vmax.f32 %v60, %v18
  %v62 = vmax.f32 %v61, %v22
  %v63 = vmax.f32 %v62, %v26
  %v64 = vmax.f32 %v63, %v30
  %v65 = vmax.f32 %v64, %v34
  %v66 = vmax.f32 %v65, %v38
  %v67 = vmax.f32 %v66, %v42
  %v68 = vmax.f32 %v11, %v15
  %v69 = vmax.f32 %v68, %v19
  %v70 = vmax.f32 %v69, %v23
  %v71 = vmax.f32 %v70, %v27
  %v72 = vmax.f32 %v71, %v31
  %v73 = vmax.f32 %v72, %v35
  %v74 = vmax.f32 %v73, %v39
  %v75 = vmax.f32 %v74, %v43
  %76 = vst [vmem:[%s1] sm:$0xff] %v51
  %77 = vst [vmem:[%s1 + $0x8] sm:$0xff] %v59
  %78 = vst [vmem:[%s1 + $0x10] sm:$0xff] %v67
  %79 = vst [vmem:[%s1 + $0x18] sm:$0xff] %v75
  // Predicated region
  $region6: #{resnet_transformer_forward.22} parent=0 // pred_check
    _
  $region7: #{resnet_transformer_forward.22} parent=0 // pred_check_branch
    %81 = sbr.rel (0) target = $region9
  $region8: #{resnet_transformer_forward.22} parent=0 // pred_region
    _
  $region9: #{resnet_transformer_forward.22} parent=0 // pred_fallthru
    _
  // Predicated region
  $region10: #{resnet_transformer_forward.22} parent=0 // pred_check
    _
  $region11: #{resnet_transformer_forward.22} parent=0 // pred_check_branch
    %83 = sbr.rel (0) target = $region13
  $region12: #{resnet_transformer_forward.22} parent=0 // pred_region
    _
  $region13: #{resnet_transformer_forward.22} parent=0 // pred_fallthru
    _

// kernel: resnet_transformer_forward.23
$region0: #{resnet_transformer_forward.23}
  #allocation0 [shape = 'u32[]', space=smem, size = 0x4, offset = 0x4, fixed_abs, tag = 'smem constant byte address 0x4 - core index']
  #allocation1 [shape = 'u32[144,128]{1,0:T(1,128)}', space=vmem, size = 0x12000, scoped, tag = 'internal scratch']
  %s0 = inlined_call_operand.vmem [shape: bf16[512,72], index: 0, kind: input, shape index: {}]
  %s1 = inlined_call_operand.vmem [shape: bf16[72,8], index: 1, kind: input, shape index: {}]
  %s2 = inlined_call_operand.vmem [shape: f32[1,8], index: 2, kind: input, shape index: {}]
  %s3 = inlined_call_operand.vmem [shape: f32[512,8], index: 3, kind: output, shape index: {}]
  %s4 = sld [smem:[#allocation0]]
  $region45: #{resnet_transformer_forward.23} parent=0
    _
  %s6 = ssub.s32 1, %s4
  %s7 = scalar_select 0, %s6, %s4
  loop: start=0, step=1, limit=4
  $region2: #{resnet_transformer_forward.23} parent=0 // loop_pre_header
    _
  $region3: #{resnet_transformer_forward.23} parent=0 // loop_header
    %s9 = sphi 0, %s13
    %p10 = scmp.ge.s32.totalorder %s9, 4
    %s19 = sphi 0, %s21
    %s22 = sphi 0, %s19
    %s23 = sphi 0, %s22
    %s39 = sphi 0, %s23
    %s43 = sphi 0, %s43
    %s45 = sphi 0, %s43
    %s46 = sphi 0, %s45
    %s60 = sphi 0, %s46
    %s64 = sphi 0, %s64
    %s66 = sphi 0, %s64
    %s67 = sphi 0, %s66
    %s81 = sphi 0, %s67
    %s87 = sphi 0, %s89
    %s90 = sphi 0, %s87
    %s91 = sphi 0, %s90
    %s107 = sphi 0, %s91
  $region4: #{resnet_transformer_forward.23} parent=0 // loop_header_branch
    %12 = sbr.rel (%p10) target = $region8
  $region5: #{resnet_transformer_forward.23} parent=0 // loop_body
    %s14 = ssub.s32 %s9, 1
    %s15 = ssub.s32 %s9, 2
    %s16 = sadd.s32 %s9, 1
    %s17 = ssub.s32 %s9, %s16
    %p18 = scmp.eq.s32.totalorder %s17, 0
    %s20 = sadd.s32 %s19, 1
    %s21 = scalar_select %p18, %s19, %s20
    %p24 = pneg %p18
    %p25 = scmp.eq.s32.totalorder %s9, 1
    %p26 = por %p24, %p25
    %p27 = scmp.ne.s32.totalorder %s19, %s22
    %p28 = scmp.eq.s32.totalorder %s9, 0
    %p29 = por %p27, %p28
    %p30 = scmp.ne.s32.totalorder %s19, %s22
    %p31 = scmp.eq.s32.totalorder %s14, 1
    %p32 = por %p30, %p31
    %p33 = scmp.ne.s32.totalorder %s22, %s23
    %p34 = scmp.eq.s32.totalorder %s14, 0
    %p35 = por %p33, %p34
    %p36 = scmp.ne.s32.totalorder %s22, %s23
    %p37 = scmp.eq.s32.totalorder %s15, 1
    %p38 = por %p36, %p37
    %p40 = scmp.ne.s32.totalorder %s23, %s39
    %p41 = scmp.eq.s32.totalorder %s15, 0
    %p42 = por %p40, %p41
    %s44 = sadd.s32 %s43, 1
    %p47 = scmp.eq.s32.totalorder %s9, 1
    %p48 = scmp.ne.s32.totalorder %s43, %s45
    %p49 = scmp.eq.s32.totalorder %s9, 0
    %p50 = por %p48, %p49
    %p51 = scmp.ne.s32.totalorder %s43, %s45
    %p52 = scmp.eq.s32.totalorder %s14, 1
    %p53 = por %p51, %p52
    %p54 = scmp.ne.s32.totalorder %s45, %s46
    %p55 = scmp.eq.s32.totalorder %s14, 0
    %p56 = por %p54, %p55
    %p57 = scmp.ne.s32.totalorder %s45, %s46
    %p58 = scmp.eq.s32.totalorder %s15, 1
    %p59 = por %p57, %p58
    %p61 = scmp.ne.s32.totalorder %s46, %s60
    %p62 = scmp.eq.s32.totalorder %s15, 0
    %p63 = por %p61, %p62
    %s65 = sadd.s32 %s64, 1
    %p68 = scmp.eq.s32.totalorder %s9, 1
    %p69 = scmp.ne.s32.totalorder %s64, %s66
    %p70 = scmp.eq.s32.totalorder %s9, 0
    %p71 = por %p69, %p70
    %p72 = scmp.ne.s32.totalorder %s64, %s66
    %p73 = scmp.eq.s32.totalorder %s14, 1
    %p74 = por %p72, %p73
    %p75 = scmp.ne.s32.totalorder %s66, %s67
    %p76 = scmp.eq.s32.totalorder %s14, 0
    %p77 = por %p75, %p76
    %p78 = scmp.ne.s32.totalorder %s66, %s67
    %p79 = scmp.eq.s32.totalorder %s15, 1
    %p80 = por %p78, %p79
    %p82 = scmp.ne.s32.totalorder %s67, %s81
    %p83 = scmp.eq.s32.totalorder %s15, 0
    %p84 = por %p82, %p83
    %s85 = ssub.s32 %s9, %s16
    %p86 = scmp.eq.s32.totalorder %s85, 0
    %s88 = sadd.s32 %s87, 1
    %s89 = scalar_select %p86, %s87, %s88
    %p92 = pneg %p86
    %p93 = scmp.eq.s32.totalorder %s9, 1
    %p94 = por %p92, %p93
    %p95 = scmp.ne.s32.totalorder %s87, %s90
    %p96 = scmp.eq.s32.totalorder %s9, 0
    %p97 = por %p95, %p96
    %p98 = scmp.ne.s32.totalorder %s87, %s90
    %p99 = scmp.eq.s32.totalorder %s14, 1
    %p100 = por %p98, %p99
    %p101 = scmp.ne.s32.totalorder %s90, %s91
    %p102 = scmp.eq.s32.totalorder %s14, 0
    %p103 = por %p101, %p102
    %p104 = scmp.ne.s32.totalorder %s90, %s91
    %p105 = scmp.eq.s32.totalorder %s15, 1
    %p106 = por %p104, %p105
    %p108 = scmp.ne.s32.totalorder %s91, %s107
    %p109 = scmp.eq.s32.totalorder %s15, 0
    %p110 = por %p108, %p109
    %p111 = scmp.le.s32.totalorder 1, %s9
    %p112 = scmp.lt.s32.totalorder %s9, 3
    %p113 = pnand %p111, %p112
    %p114 = pneg %p113
    // Predicated region
    $region9: #{resnet_transformer_forward.23} parent=5 // pred_check
      _
    $region10: #{resnet_transformer_forward.23} parent=5 // pred_check_branch
      %116 = sbr.rel (%p113) target = $region12
    $region11: #{resnet_transformer_forward.23} parent=5 // pred_region
      %s117 = ssub.s32 %s9, 1
      // Predicated region
      $region13: #{resnet_transformer_forward.23} parent=11 // pred_check
        %p118 = pneg %p56
      $region14: #{resnet_transformer_forward.23} parent=11 // pred_check_branch
        %120 = sbr.rel (%p118) target = $region16
      $region15: #{resnet_transformer_forward.23} parent=11 // pred_region
        _
      $region16: #{resnet_transformer_forward.23} parent=11 // pred_fallthru
        _
      // Predicated region
      $region17: #{resnet_transformer_forward.23} parent=11 // pred_check
        %p121 = pneg %p77
      $region18: #{resnet_transformer_forward.23} parent=11 // pred_check_branch
        %123 = sbr.rel (%p121) target = $region20
      $region19: #{resnet_transformer_forward.23} parent=11 // pred_region
        _
      $region20: #{resnet_transformer_forward.23} parent=11 // pred_fallthru
        _
    $region12: #{resnet_transformer_forward.23} parent=5 // pred_fallthru
      _
    %p124 = scmp.lt.s32.totalorder %s9, 2
    // Predicated region
    $region21: #{resnet_transformer_forward.23} parent=5 // pred_check
      %p125 = pneg %p124
    $region22: #{resnet_transformer_forward.23} parent=5 // pred_check_branch
      %127 = sbr.rel (%p125) target = $region24
    $region23: #{resnet_transformer_forward.23} parent=5 // pred_region
      // Predicated region
      $region25: #{resnet_transformer_forward.23} parent=23 // pred_check
        %p128 = pneg %p29
      $region26: #{resnet_transformer_forward.23} parent=23 // pred_check_branch
        %130 = sbr.rel (%p128) target = $region28
      $region27: #{resnet_transformer_forward.23} parent=23 // pred_region
        %s131 = smul.u32 32, %s9
        %p132 = scmp.lt.s32.totalorder %s131, 63
        %s133 = scalar_select %p132, %s131, 63
        %s134 = smul.addr %s133, 4
        %s135 = scalar_lea.vmem %s0, %s134
        %s136 = smul.u32 32, %s9
      $region28: #{resnet_transformer_forward.23} parent=23 // pred_fallthru
        _
    $region24: #{resnet_transformer_forward.23} parent=5 // pred_fallthru
      _
    %p137 = scmp.le.s32.totalorder 1, %s9
    %p138 = scmp.lt.s32.totalorder %s9, 3
    %p139 = pnand %p137, %p138
    %p140 = pneg %p139
    // Predicated region
    $region29: #{resnet_transformer_forward.23} parent=5 // pred_check
      _
    $region30: #{resnet_transformer_forward.23} parent=5 // pred_check_branch
      %142 = sbr.rel (%p139) target = $region32
    $region31: #{resnet_transformer_forward.23} parent=5 // pred_region
      %s143 = ssub.s32 %s9, 1
      %s144 = smul.u32 32, %s14
      %p145 = scmp.lt.s32.totalorder %s144, 63
      %s146 = scalar_select %p145, %s144, 63
      %s147 = smul.addr %s146, 4
      %s148 = scalar_lea.vmem %s0, %s147
      %p149 = pneg %p35
      %p150 = pneg %p32
      %p151 = pneg %p56
      %p152 = pneg %p53
      %p153 = pneg %p77
      %p154 = pneg %p74
      %p155 = pneg %p103
      %p156 = pneg %p100
      %s157 = smul.u32 32, %s14
      %p158 = scmp.lt.s32.totalorder %s157, 63
      %s159 = scalar_select %p158, %s157, 63
      %s160 = smul.addr %s159, 8
      %s161 = scalar_lea.vmem %s3, %s160
      %s162 = smul.u32 32, %s14
      %p163 = scmp.lt.s32.totalorder %s162, 63
      %s164 = scalar_select %p163, %s162, 63
      %s165 = smul.addr %s164, 4
      %s166 = scalar_lea.vmem %s0, %s165
      %s167 = smul.u32 32, %s14
      %s168 = smul.u32 32, %s14
      %p169 = scmp.lt.s32.totalorder %s168, 63
      %s170 = scalar_select %p169, %s168, 63
      %s171 = smul.addr %s170, 8
      %s172 = scalar_lea.vmem %s3, %s171
      %s173 = smul.u32 32, %s14
      %v175 = vld [vmem:[%s166] sm:$0xf]
      %v176 = vld [vmem:[%s166 + $0x4] sm:$0xf]
      %v177 = vld [vmem:[%s166 + $0x8] sm:$0xf]
      %v178 = vld [vmem:[%s166 + $0xc] sm:$0xf]
      %v179 = vld [vmem:[%s166 + $0x10] sm:$0xf]
      %v180 = vld [vmem:[%s166 + $0x14] sm:$0xf]
      %v181 = vld [vmem:[%s166 + $0x18] sm:$0xf]
      %v182 = vld [vmem:[%s166 + $0x1c] sm:$0xf]
      %v183 = vld [vmem:[%s166 + $0x20] sm:$0xf]
      %v184 = vld [vmem:[%s166 + $0x24] sm:$0xf]
      %v185 = vld [vmem:[%s166 + $0x28] sm:$0xf]
      %v186 = vld [vmem:[%s166 + $0x2c] sm:$0xf]
      %v187 = vld [vmem:[%s166 + $0x30] sm:$0xf]
      %v188 = vld [vmem:[%s166 + $0x34] sm:$0xf]
      %v189 = vld [vmem:[%s166 + $0x38] sm:$0xf]
      %v190 = vld [vmem:[%s166 + $0x3c] sm:$0xf]
      %v191 = vld [vmem:[%s166 + $0x40] sm:$0xf]
      %v192 = vld [vmem:[%s166 + $0x44] sm:$0xf]
      %v193 = vld [vmem:[%s166 + $0x48] sm:$0xf]
      %v194 = vld [vmem:[%s166 + $0x4c] sm:$0xf]
      %v195 = vld [vmem:[%s166 + $0x50] sm:$0xf]
      %v196 = vld [vmem:[%s166 + $0x54] sm:$0xf]
      %v197 = vld [vmem:[%s166 + $0x58] sm:$0xf]
      %v198 = vld [vmem:[%s166 + $0x5c] sm:$0xf]
      %v199 = vld [vmem:[%s166 + $0x60] sm:$0xf]
      %v200 = vld [vmem:[%s166 + $0x64] sm:$0xf]
      %v201 = vld [vmem:[%s166 + $0x68] sm:$0xf]
      %v202 = vld [vmem:[%s166 + $0x6c] sm:$0xf]
      %v203 = vld [vmem:[%s166 + $0x70] sm:$0xf]
      %v204 = vld [vmem:[%s166 + $0x74] sm:$0xf]
      %v205 = vld [vmem:[%s166 + $0x78] sm:$0xf]
      %v206 = vld [vmem:[%s166 + $0x7c] sm:$0xf]
      %v207 = vld [vmem:[%s1] sm:$0xf]
      %v208 = vld [vmem:[%s1 + $0x4] sm:$0xf]
      %v209 = vld [vmem:[%s1 + $0x8] sm:$0xf]
      %v210 = vld [vmem:[%s1 + $0xc] sm:$0xf]
      %v211 = vld [vmem:[%s1 + $0x10] sm:$0xf]
      %v212 = vld [vmem:[%s1 + $0x14] sm:$0xf]
      %v213 = vld [vmem:[%s1 + $0x18] sm:$0xf]
      %v214 = vld [vmem:[%s1 + $0x1c] sm:$0xf]
      %v215 = vld [vmem:[%s1 + $0x20] sm:$0xf]
      %v216 = vld [vmem:[%s2] sm:$0x1]
      %v218 = vlaneseq
      %v219 = vshrl.u32 %v218, 7
      %v220 = vsub.s32 0, %v219
      %v221 = vrot.slane %v216, %v220
      %v255 = vunpack.c.l.b16 %v175
      %v256 = vunpack.c.l.b16 %v176
      %v257 = vunpack.c.l.b16 %v177
      %v258 = vunpack.c.l.b16 %v178
      %v259 = vunpack.c.l.b16 %v179
      %v260 = vunpack.c.l.b16 %v180
      %v261 = vunpack.c.l.b16 %v181
      %v262 = vunpack.c.l.b16 %v182
      %v263 = vunpack.c.l.b16 %v183
      %v264 = vunpack.c.l.b16 %v184
      %v265 = vunpack.c.l.b16 %v185
      %v266 = vunpack.c.l.b16 %v186
      %v267 = vunpack.c.l.b16 %v187
      %v268 = vunpack.c.l.b16 %v188
      %v269 = vunpack.c.l.b16 %v189
      %v270 = vunpack.c.l.b16 %v190
      %v271 = vunpack.c.l.b16 %v191
      %v272 = vunpack.c.l.b16 %v192
      %v273 = vunpack.c.l.b16 %v193
      %v274 = vunpack.c.l.b16 %v194
      %v275 = vunpack.c.l.b16 %v195
      %v276 = vunpack.c.l.b16 %v196
      %v277 = vunpack.c.l.b16 %v197
      %v278 = vunpack.c.l.b16 %v198
      %v279 = vunpack.c.l.b16 %v199
      %v280 = vunpack.c.l.b16 %v200
      %v281 = vunpack.c.l.b16 %v201
      %v282 = vunpack.c.l.b16 %v202
      %v283 = vunpack.c.l.b16 %v203
      %v284 = vunpack.c.l.b16 %v204
      %v285 = vunpack.c.l.b16 %v205
      %v286 = vunpack.c.l.b16 %v206
      %v287 = vpack.c.b16 %v256, %v255
      %v288 = vpack.c.b16 %v258, %v257
      %v289 = vpack.c.b16 %v260, %v259
      %v290 = vpack.c.b16 %v262, %v261
      %v291 = vpack.c.b16 %v264, %v263
      %v292 = vpack.c.b16 %v266, %v265
      %v293 = vpack.c.b16 %v268, %v267
      %v294 = vpack.c.b16 %v270, %v269
      %v295 = vpack.c.b16 %v272, %v271
      %v296 = vpack.c.b16 %v274, %v273
      %v297 = vpack.c.b16 %v276, %v275
      %v298 = vpack.c.b16 %v278, %v277
      %v299 = vpack.c.b16 %v280, %v279
      %v300 = vpack.c.b16 %v282, %v281
      %v301 = vpack.c.b16 %v284, %v283
      %v302 = vpack.c.b16 %v286, %v285
      %v312 = vunpack.c.l.b16 %v207
      %v313 = vunpack.c.l.b16 %v208
      %v314 = vunpack.c.l.b16 %v209
      %v315 = vunpack.c.l.b16 %v210
      %v316 = vunpack.c.l.b16 %v211
      %v317 = vunpack.c.l.b16 %v212
      %v318 = vunpack.c.l.b16 %v213
      %v319 = vunpack.c.l.b16 %v214
      %v320 = vunpack.c.l.b16 %v215
      %v321 = vpack.c.b16 %v313, %v312
      %v322 = vpack.c.b16 %v315, %v314
      %v323 = vpack.c.b16 %v317, %v316
      %v324 = vpack.c.b16 %v319, %v318
      %v325 = vpack.c.b16 %v320, %v320
      %vm330 = vcmask 588800
      %v332 = vsel %vm330, %v287, 0
      %v335 = vsel %vm330, %v288, 0
      %v338 = vsel %vm330, %v289, 0
      %v341 = vsel %vm330, %v290, 0
      %v344 = vsel %vm330, %v291, 0
      %v347 = vsel %vm330, %v292, 0
      %v350 = vsel %vm330, %v293, 0
      %v353 = vsel %vm330, %v294, 0
      %v356 = vsel %vm330, %v295, 0
      %v359 = vsel %vm330, %v296, 0
      %v362 = vsel %vm330, %v297, 0
      %v365 = vsel %vm330, %v298, 0
      %v368 = vsel %vm330, %v299, 0
      %v371 = vsel %vm330, %v300, 0
      %v374 = vsel %vm330, %v301, 0
      %v377 = vsel %vm330, %v302, 0
      %vm379 = vcmask 1043456
      %v381 = vsel %vm379, %v325, 0
      %383 = vmatprep.subr.bf16.mxu0 0
      %384 = vmatpush1.bf16.msra.mxu0 %v321
      %385 = vmatprep.subr.bf16.mxu0 0
      %386 = vmatpush1.bf16.msra.mxu0 %v322
      %387 = vmatprep.subr.bf16.mxu0 0
      %388 = vmatpush1.bf16.msra.mxu0 %v323
      %389 = vmatprep.subr.bf16.mxu0 0
      %390 = vmatpush1.bf16.msra.mxu0 %v324
      %391 = vmatprep.subr.bf16.mxu0 0
      %392 = vmatpush1.bf16.msra.mxu0 %v381
      %393 = vmatprep.subr.bf16.mxu0 0
      %394 = vmatpush1.bf16.msra.mxu0 0
      %395 = vmatprep.subr.bf16.mxu0 0
      %396 = vmatpush1.bf16.msra.mxu0 0
      %397 = vmatprep.subr.bf16.mxu0 0
      %398 = vmatpush1.bf16.msra.mxu0 0
      %399 = vmatprep.subr.bf16.mxu0 0
      %400 = vmatpush1.bf16.msra.mxu0 0
      %401 = vmatprep.subr.bf16.mxu0 0
      %402 = vmatpush1.bf16.msra.mxu0 0
      %403 = vmatprep.subr.bf16.mxu0 0
      %404 = vmatpush1.bf16.msra.mxu0 0
      %405 = vmatprep.subr.bf16.mxu0 0
      %406 = vmatpush1.bf16.msra.mxu0 0
      %407 = vmatprep.subr.bf16.mxu0 0
      %408 = vmatpush1.bf16.msra.mxu0 0
      %409 = vmatprep.subr.bf16.mxu0 0
      %410 = vmatpush1.bf16.msra.mxu0 0
      %411 = vmatprep.subr.bf16.mxu0 0
      %412 = vmatpush1.bf16.msra.mxu0 0
      %413 = vmatprep.subr.bf16.mxu0 0
      %414 = vmatpush1.bf16.msra.mxu0 0
      %415 = vmatprep.mubr.bf16.mxu0 0
      %416 = vmatmul.mubr.bf16.gmra.mrb[0].mxu0 %v332
      %v417 = vpop.f32.mrb[0].mxu0
      %v418 = vadd.f32 %v221, %v417
      %v419 = vpop.f32.mrb[0].mxu0
      %v420 = vpop.f32.mrb[0].mxu0
      %v421 = vadd.f32 %v221, %v420
      %v422 = vpop.f32.mrb[0].mxu0
      %423 = vmatprep.mubr.bf16.mxu0 0
      %424 = vmatmul.mubr.bf16.gmra.mrb[0].mxu0 %v335
      %v425 = vpop.f32.mrb[0].mxu0
      %v426 = vadd.f32 %v221, %v425
      %v427 = vpop.f32.mrb[0].mxu0
      %v428 = vpop.f32.mrb[0].mxu0
      %v429 = vadd.f32 %v221, %v428
      %v430 = vpop.f32.mrb[0].mxu0
      %431 = vmatprep.mubr.bf16.mxu0 0
      %432 = vmatmul.mubr.bf16.gmra.mrb[0].mxu0 %v338
      %v433 = vpop.f32.mrb[0].mxu0
      %v434 = vadd.f32 %v221, %v433
      %v435 = vpop.f32.mrb[0].mxu0
      %v436 = vpop.f32.mrb[0].mxu0
      %v437 = vadd.f32 %v221, %v436
      %v438 = vpop.f32.mrb[0].mxu0
      %439 = vmatprep.mubr.bf16.mxu0 0
      %440 = vmatmul.mubr.bf16.gmra.mrb[0].mxu0 %v341
      %v441 = vpop.f32.mrb[0].mxu0
      %v442 = vadd.f32 %v221, %v441
      %v443 = vpop.f32.mrb[0].mxu0
      %v444 = vpop.f32.mrb[0].mxu0
      %v445 = vadd.f32 %v221, %v444
      %v446 = vpop.f32.mrb[0].mxu0
      %447 = vmatprep.mubr.bf16.mxu0 0
      %448 = vmatmul.mubr.bf16.gmra.mrb[0].mxu0 %v344
      %v449 = vpop.f32.mrb[0].mxu0
      %v450 = vadd.f32 %v221, %v449
      %v451 = vpop.f32.mrb[0].mxu0
      %v452 = vpop.f32.mrb[0].mxu0
      %v453 = vadd.f32 %v221, %v452
      %v454 = vpop.f32.mrb[0].mxu0
      %455 = vmatprep.mubr.bf16.mxu0 0
      %456 = vmatmul.mubr.bf16.gmra.mrb[0].mxu0 %v347
      %v457 = vpop.f32.mrb[0].mxu0
      %v458 = vadd.f32 %v221, %v457
      %v459 = vpop.f32.mrb[0].mxu0
      %v460 = vpop.f32.mrb[0].mxu0
      %v461 = vadd.f32 %v221, %v460
      %v462 = vpop.f32.mrb[0].mxu0
      %463 = vmatprep.mubr.bf16.mxu0 0
      %464 = vmatmul.mubr.bf16.gmra.mrb[0].mxu0 %v350
      %v465 = vpop.f32.mrb[0].mxu0
      %v466 = vadd.f32 %v221, %v465
      %v467 = vpop.f32.mrb[0].mxu0
      %v468 = vpop.f32.mrb[0].mxu0
      %v469 = vadd.f32 %v221, %v468
      %v470 = vpop.f32.mrb[0].mxu0
      %471 = vmatprep.mubr.bf16.mxu0 0
      %472 = vmatmul.mubr.bf16.gmra.mrb[0].mxu0 %v353
      %v473 = vpop.f32.mrb[0].mxu0
      %v474 = vadd.f32 %v221, %v473
      %v475 = vpop.f32.mrb[0].mxu0
      %v476 = vpop.f32.mrb[0].mxu0
      %v477 = vadd.f32 %v221, %v476
      %v478 = vpop.f32.mrb[0].mxu0
      %479 = vmatprep.mubr.bf16.mxu0 0
      %480 = vmatmul.mubr.bf16.gmra.mrb[0].mxu0 %v356
      %v481 = vpop.f32.mrb[0].mxu0
      %v482 = vadd.f32 %v221, %v481
      %v483 = vpop.f32.mrb[0].mxu0
      %v484 = vpop.f32.mrb[0].mxu0
      %v485 = vadd.f32 %v221, %v484
      %v486 = vpop.f32.mrb[0].mxu0
      %487 = vmatprep.mubr.bf16.mxu0 0
      %488 = vmatmul.mubr.bf16.gmra.mrb[0].mxu0 %v359
      %v489 = vpop.f32.mrb[0].mxu0
      %v490 = vadd.f32 %v221, %v489
      %v491 = vpop.f32.mrb[0].mxu0
      %v492 = vpop.f32.mrb[0].mxu0
      %v493 = vadd.f32 %v221, %v492
      %v494 = vpop.f32.mrb[0].mxu0
      %495 = vmatprep.mubr.bf16.mxu0 0
      %496 = vmatmul.mubr.bf16.gmra.mrb[0].mxu0 %v362
      %v497 = vpop.f32.mrb[0].mxu0
      %v498 = vadd.f32 %v221, %v497
      %v499 = vpop.f32.mrb[0].mxu0
      %v500 = vpop.f32.mrb[0].mxu0
      %v501 = vadd.f32 %v221, %v500
      %v502 = vpop.f32.mrb[0].mxu0
      %503 = vmatprep.mubr.bf16.mxu0 0
      %504 = vmatmul.mubr.bf16.gmra.mrb[0].mxu0 %v365
      %v505 = vpop.f32.mrb[0].mxu0
      %v506 = vadd.f32 %v221, %v505
      %v507 = vpop.f32.mrb[0].mxu0
      %v508 = vpop.f32.mrb[0].mxu0
      %v509 = vadd.f32 %v221, %v508
      %v510 = vpop.f32.mrb[0].mxu0
      %511 = vmatprep.mubr.bf16.mxu0 0
      %512 = vmatmul.mubr.bf16.gmra.mrb[0].mxu0 %v368
      %v513 = vpop.f32.mrb[0].mxu0
      %v514 = vadd.f32 %v221, %v513
      %v515 = vpop.f32.mrb[0].mxu0
      %v516 = vpop.f32.mrb[0].mxu0
      %v517 = vadd.f32 %v221, %v516
      %v518 = vpop.f32.mrb[0].mxu0
      %519 = vmatprep.mubr.bf16.mxu0 0
      %520 = vmatmul.mubr.bf16.gmra.mrb[0].mxu0 %v371
      %v521 = vpop.f32.mrb[0].mxu0
      %v522 = vadd.f32 %v221, %v521
      %v523 = vpop.f32.mrb[0].mxu0
      %v524 = vpop.f32.mrb[0].mxu0
      %v525 = vadd.f32 %v221, %v524
      %v526 = vpop.f32.mrb[0].mxu0
      %527 = vmatprep.mubr.bf16.mxu0 0
      %528 = vmatmul.mubr.bf16.gmra.mrb[0].mxu0 %v374
      %v529 = vpop.f32.mrb[0].mxu0
      %v530 = vadd.f32 %v221, %v529
      %v531 = vpop.f32.mrb[0].mxu0
      %v532 = vpop.f32.mrb[0].mxu0
      %v533 = vadd.f32 %v221, %v532
      %v534 = vpop.f32.mrb[0].mxu0
      %535 = vmatprep.mubr.bf16.mxu0 0
      %536 = vmatmul.mubr.bf16.gmra.mrb[0].mxu0 %v377
      %v537 = vpop.f32.mrb[0].mxu0
      %v538 = vadd.f32 %v221, %v537
      %v539 = vpop.f32.mrb[0].mxu0
      %v540 = vpop.f32.mrb[0].mxu0
      %v541 = vadd.f32 %v221, %v540
      %v542 = vpop.f32.mrb[0].mxu0
      %543 = vdwg.mxu0
      %v544 = vmax.f32 %v418, 0.0
      %v545 = vmax.f32 %v421, 0.0
      %v546 = vmax.f32 %v426, 0.0
      %v547 = vmax.f32 %v429, 0.0
      %v548 = vmax.f32 %v434, 0.0
      %v549 = vmax.f32 %v437, 0.0
      %v550 = vmax.f32 %v442, 0.0
      %v551 = vmax.f32 %v445, 0.0
      %v552 = vmax.f32 %v450, 0.0
      %v553 = vmax.f32 %v453, 0.0
      %v554 = vmax.f32 %v458, 0.0
      %v555 = vmax.f32 %v461, 0.0
      %v556 = vmax.f32 %v466, 0.0
      %v557 = vmax.f32 %v469, 0.0
      %v558 = vmax.f32 %v474, 0.0
      %v559 = vmax.f32 %v477, 0.0
      %v560 = vmax.f32 %v482, 0.0
      %v561 = vmax.f32 %v485, 0.0
      %v562 = vmax.f32 %v490, 0.0
      %v563 = vmax.f32 %v493, 0.0
      %v564 = vmax.f32 %v498, 0.0
      %v565 = vmax.f32 %v501, 0.0
      %v566 = vmax.f32 %v506, 0.0
      %v567 = vmax.f32 %v509, 0.0
      %v568 = vmax.f32 %v514, 0.0
      %v569 = vmax.f32 %v517, 0.0
      %v570 = vmax.f32 %v522, 0.0
      %v571 = vmax.f32 %v525, 0.0
      %v572 = vmax.f32 %v530, 0.0
      %v573 = vmax.f32 %v533, 0.0
      %v574 = vmax.f32 %v538, 0.0
      %v575 = vmax.f32 %v541, 0.0
      %vm576 = vcmask 64512
      %577 = vst.msk [vmem:[%s172] sm:$0xff] %vm576, %v544
      %578 = vst.msk [vmem:[%s172 + $0x8] sm:$0xff] %vm576, %v545
      %579 = vst.msk [vmem:[%s172 + $0x10] sm:$0xff] %vm576, %v546
      %580 = vst.msk [vmem:[%s172 + $0x18] sm:$0xff] %vm576, %v547
      %581 = vst.msk [vmem:[%s172 + $0x20] sm:$0xff] %vm576, %v548
      %582 = vst.msk [vmem:[%s172 + $0x28] sm:$0xff] %vm576, %v549
      %583 = vst.msk [vmem:[%s172 + $0x30] sm:$0xff] %vm576, %v550
      %584 = vst.msk [vmem:[%s172 + $0x38] sm:$0xff] %vm576, %v551
      %585 = vst.msk [vmem:[%s172 + $0x40] sm:$0xff] %vm576, %v552
      %586 = vst.msk [vmem:[%s172 + $0x48] sm:$0xff] %vm576, %v553
      %587 = vst.msk [vmem:[%s172 + $0x50] sm:$0xff] %vm576, %v554
      %588 = vst.msk [vmem:[%s172 + $0x58] sm:$0xff] %vm576, %v555
      %589 = vst.msk [vmem:[%s172 + $0x60] sm:$0xff] %vm576, %v556
      %590 = vst.msk [vmem:[%s172 + $0x68] sm:$0xff] %vm576, %v557
      %591 = vst.msk [vmem:[%s172 + $0x70] sm:$0xff] %vm576, %v558
      %592 = vst.msk [vmem:[%s172 + $0x78] sm:$0xff] %vm576, %v559
      %593 = vst.msk [vmem:[%s172 + $0x80] sm:$0xff] %vm576, %v560
      %594 = vst.msk [vmem:[%s172 + $0x88] sm:$0xff] %vm576, %v561
      %595 = vst.msk [vmem:[%s172 + $0x90] sm:$0xff] %vm576, %v562
      %596 = vst.msk [vmem:[%s172 + $0x98] sm:$0xff] %vm576, %v563
      %597 = vst.msk [vmem:[%s172 + $0xa0] sm:$0xff] %vm576, %v564
      %598 = vst.msk [vmem:[%s172 + $0xa8] sm:$0xff] %vm576, %v565
      %599 = vst.msk [vmem:[%s172 + $0xb0] sm:$0xff] %vm576, %v566
      %600 = vst.msk [vmem:[%s172 + $0xb8] sm:$0xff] %vm576, %v567
      %601 = vst.msk [vmem:[%s172 + $0xc0] sm:$0xff] %vm576, %v568
      %602 = vst.msk [vmem:[%s172 + $0xc8] sm:$0xff] %vm576, %v569
      %603 = vst.msk [vmem:[%s172 + $0xd0] sm:$0xff] %vm576, %v570
      %604 = vst.msk [vmem:[%s172 + $0xd8] sm:$0xff] %vm576, %v571
      %605 = vst.msk [vmem:[%s172 + $0xe0] sm:$0xff] %vm576, %v572
      %606 = vst.msk [vmem:[%s172 + $0xe8] sm:$0xff] %vm576, %v573
      %607 = vst.msk [vmem:[%s172 + $0xf0] sm:$0xff] %vm576, %v574
      %608 = vst.msk [vmem:[%s172 + $0xf8] sm:$0xff] %vm576, %v575
      %s609 = smul.u32 32, %s14
      %p610 = scmp.lt.s32.totalorder %s609, 63
      %s611 = scalar_select %p610, %s609, 63
      %s612 = smul.addr %s611, 8
      %s613 = scalar_lea.vmem %s3, %s612
      // Predicated region
      $region33: #{resnet_transformer_forward.23} parent=31 // pred_check
        %p614 = pneg %p100
      $region34: #{resnet_transformer_forward.23} parent=31 // pred_check_branch
        %616 = sbr.rel (%p614) target = $region36
      $region35: #{resnet_transformer_forward.23} parent=31 // pred_region
        %s617 = smul.u32 32, %s14
      $region36: #{resnet_transformer_forward.23} parent=31 // pred_fallthru
        _
    $region32: #{resnet_transformer_forward.23} parent=5 // pred_fallthru
      _
    %p618 = scmp.le.s32.totalorder 2, %s9
    // Predicated region
    $region37: #{resnet_transformer_forward.23} parent=5 // pred_check
      %p619 = pneg %p618
    $region38: #{resnet_transformer_forward.23} parent=5 // pred_check_branch
      %621 = sbr.rel (%p619) target = $region40
    $region39: #{resnet_transformer_forward.23} parent=5 // pred_region
      %s622 = ssub.s32 %s9, 2
      // Predicated region
      $region41: #{resnet_transformer_forward.23} parent=39 // pred_check
        %p623 = pneg %p106
      $region42: #{resnet_transformer_forward.23} parent=39 // pred_check_branch
        %625 = sbr.rel (%p623) target = $region44
      $region43: #{resnet_transformer_forward.23} parent=39 // pred_region
        %s626 = smul.u32 32, %s15
        %p627 = scmp.lt.s32.totalorder %s626, 63
        %s628 = scalar_select %p627, %s626, 63
        %s629 = smul.addr %s628, 8
        %s630 = scalar_lea.vmem %s3, %s629
      $region44: #{resnet_transformer_forward.23} parent=39 // pred_fallthru
        _
    $region40: #{resnet_transformer_forward.23} parent=5 // pred_fallthru
      _
  $region6: #{resnet_transformer_forward.23} parent=0 // loop_footer
    %s13 = sadd.s32 1, %s9
  $region7: #{resnet_transformer_forward.23} parent=0 // loop_footer_branch
    %8 = sbr.rel target = $region3
  $region8: #{resnet_transformer_forward.23} parent=0 // loop_exit
    _

// kernel: resnet_transformer_forward.24
$region0: #{resnet_transformer_forward.24}
  #allocation0 [shape = 'u32[]', space=smem, size = 0x4, offset = 0x4, fixed_abs, tag = 'smem constant byte address 0x4 - core index']
  #allocation1 [shape = 'u32[144,128]{1,0:T(1,128)}', space=vmem, size = 0x12000, scoped, tag = 'internal scratch']
  %s0 = inlined_call_operand.vmem [shape: bf16[512,72], index: 0, kind: input, shape index: {}]
  %s1 = inlined_call_operand.vmem [shape: bf16[72,8], index: 1, kind: input, shape index: {}]
  %s2 = inlined_call_operand.vmem [shape: f32[1,8], index: 2, kind: input, shape index: {}]
  %s3 = inlined_call_operand.vmem [shape: f32[512,8], index: 3, kind: input, shape index: {}]
  %s4 = inlined_call_operand.vmem [shape: f32[512,8], index: 4, kind: output, shape index: {}]
  %s5 = sld [smem:[#allocation0]]
  $region49: #{resnet_transformer_forward.24} parent=0
    _
  %s7 = ssub.s32 1, %s5
  %s8 = scalar_select 0, %s7, %s5
  loop: start=0, step=1, limit=4
  $region2: #{resnet_transformer_forward.24} parent=0 // loop_pre_header
    _
  $region3: #{resnet_transformer_forward.24} parent=0 // loop_header
    %s10 = sphi 0, %s14
    %p11 = scmp.ge.s32.totalorder %s10, 4
    %s20 = sphi 0, %s22
    %s23 = sphi 0, %s20
    %s24 = sphi 0, %s23
    %s40 = sphi 0, %s24
    %s44 = sphi 0, %s44
    %s46 = sphi 0, %s44
    %s47 = sphi 0, %s46
    %s61 = sphi 0, %s47
    %s65 = sphi 0, %s65
    %s67 = sphi 0, %s65
    %s68 = sphi 0, %s67
    %s82 = sphi 0, %s68
    %s88 = sphi 0, %s90
    %s91 = sphi 0, %s88
    %s92 = sphi 0, %s91
    %s108 = sphi 0, %s92
    %s114 = sphi 0, %s116
    %s117 = sphi 0, %s114
    %s118 = sphi 0, %s117
    %s134 = sphi 0, %s118
  $region4: #{resnet_transformer_forward.24} parent=0 // loop_header_branch
    %13 = sbr.rel (%p11) target = $region8
  $region5: #{resnet_transformer_forward.24} parent=0 // loop_body
    %s15 = ssub.s32 %s10, 1
    %s16 = ssub.s32 %s10, 2
    %s17 = sadd.s32 %s10, 1
    %s18 = ssub.s32 %s10, %s17
    %p19 = scmp.eq.s32.totalorder %s18, 0
    %s21 = sadd.s32 %s20, 1
    %s22 = scalar_select %p19, %s20, %s21
    %p25 = pneg %p19
    %p26 = scmp.eq.s32.totalorder %s10, 1
    %p27 = por %p25, %p26
    %p28 = scmp.ne.s32.totalorder %s20, %s23
    %p29 = scmp.eq.s32.totalorder %s10, 0
    %p30 = por %p28, %p29
    %p31 = scmp.ne.s32.totalorder %s20, %s23
    %p32 = scmp.eq.s32.totalorder %s15, 1
    %p33 = por %p31, %p32
    %p34 = scmp.ne.s32.totalorder %s23, %s24
    %p35 = scmp.eq.s32.totalorder %s15, 0
    %p36 = por %p34, %p35
    %p37 = scmp.ne.s32.totalorder %s23, %s24
    %p38 = scmp.eq.s32.totalorder %s16, 1
    %p39 = por %p37, %p38
    %p41 = scmp.ne.s32.totalorder %s24, %s40
    %p42 = scmp.eq.s32.totalorder %s16, 0
    %p43 = por %p41, %p42
    %s45 = sadd.s32 %s44, 1
    %p48 = scmp.eq.s32.totalorder %s10, 1
    %p49 = scmp.ne.s32.totalorder %s44, %s46
    %p50 = scmp.eq.s32.totalorder %s10, 0
    %p51 = por %p49, %p50
    %p52 = scmp.ne.s32.totalorder %s44, %s46
    %p53 = scmp.eq.s32.totalorder %s15, 1
    %p54 = por %p52, %p53
    %p55 = scmp.ne.s32.totalorder %s46, %s47
    %p56 = scmp.eq.s32.totalorder %s15, 0
    %p57 = por %p55, %p56
    %p58 = scmp.ne.s32.totalorder %s46, %s47
    %p59 = scmp.eq.s32.totalorder %s16, 1
    %p60 = por %p58, %p59
    %p62 = scmp.ne.s32.totalorder %s47, %s61
    %p63 = scmp.eq.s32.totalorder %s16, 0
    %p64 = por %p62, %p63
    %s66 = sadd.s32 %s65, 1
    %p69 = scmp.eq.s32.totalorder %s10, 1
    %p70 = scmp.ne.s32.totalorder %s65, %s67
    %p71 = scmp.eq.s32.totalorder %s10, 0
    %p72 = por %p70, %p71
    %p73 = scmp.ne.s32.totalorder %s65, %s67
    %p74 = scmp.eq.s32.totalorder %s15, 1
    %p75 = por %p73, %p74
    %p76 = scmp.ne.s32.totalorder %s67, %s68
    %p77 = scmp.eq.s32.totalorder %s15, 0
    %p78 = por %p76, %p77
    %p79 = scmp.ne.s32.totalorder %s67, %s68
    %p80 = scmp.eq.s32.totalorder %s16, 1
    %p81 = por %p79, %p80
    %p83 = scmp.ne.s32.totalorder %s68, %s82
    %p84 = scmp.eq.s32.totalorder %s16, 0
    %p85 = por %p83, %p84
    %s86 = ssub.s32 %s10, %s17
    %p87 = scmp.eq.s32.totalorder %s86, 0
    %s89 = sadd.s32 %s88, 1
    %s90 = scalar_select %p87, %s88, %s89
    %p93 = pneg %p87
    %p94 = scmp.eq.s32.totalorder %s10, 1
    %p95 = por %p93, %p94
    %p96 = scmp.ne.s32.totalorder %s88, %s91
    %p97 = scmp.eq.s32.totalorder %s10, 0
    %p98 = por %p96, %p97
    %p99 = scmp.ne.s32.totalorder %s88, %s91
    %p100 = scmp.eq.s32.totalorder %s15, 1
    %p101 = por %p99, %p100
    %p102 = scmp.ne.s32.totalorder %s91, %s92
    %p103 = scmp.eq.s32.totalorder %s15, 0
    %p104 = por %p102, %p103
    %p105 = scmp.ne.s32.totalorder %s91, %s92
    %p106 = scmp.eq.s32.totalorder %s16, 1
    %p107 = por %p105, %p106
    %p109 = scmp.ne.s32.totalorder %s92, %s108
    %p110 = scmp.eq.s32.totalorder %s16, 0
    %p111 = por %p109, %p110
    %s112 = ssub.s32 %s10, %s17
    %p113 = scmp.eq.s32.totalorder %s112, 0
    %s115 = sadd.s32 %s114, 1
    %s116 = scalar_select %p113, %s114, %s115
    %p119 = pneg %p113
    %p120 = scmp.eq.s32.totalorder %s10, 1
    %p121 = por %p119, %p120
    %p122 = scmp.ne.s32.totalorder %s114, %s117
    %p123 = scmp.eq.s32.totalorder %s10, 0
    %p124 = por %p122, %p123
    %p125 = scmp.ne.s32.totalorder %s114, %s117
    %p126 = scmp.eq.s32.totalorder %s15, 1
    %p127 = por %p125, %p126
    %p128 = scmp.ne.s32.totalorder %s117, %s118
    %p129 = scmp.eq.s32.totalorder %s15, 0
    %p130 = por %p128, %p129
    %p131 = scmp.ne.s32.totalorder %s117, %s118
    %p132 = scmp.eq.s32.totalorder %s16, 1
    %p133 = por %p131, %p132
    %p135 = scmp.ne.s32.totalorder %s118, %s134
    %p136 = scmp.eq.s32.totalorder %s16, 0
    %p137 = por %p135, %p136
    %p138 = scmp.le.s32.totalorder 1, %s10
    %p139 = scmp.lt.s32.totalorder %s10, 3
    %p140 = pnand %p138, %p139
    %p141 = pneg %p140
    // Predicated region
    $region9: #{resnet_transformer_forward.24} parent=5 // pred_check
      _
    $region10: #{resnet_transformer_forward.24} parent=5 // pred_check_branch
      %143 = sbr.rel (%p140) target = $region12
    $region11: #{resnet_transformer_forward.24} parent=5 // pred_region
      %s144 = ssub.s32 %s10, 1
      // Predicated region
      $region13: #{resnet_transformer_forward.24} parent=11 // pred_check
        %p145 = pneg %p57
      $region14: #{resnet_transformer_forward.24} parent=11 // pred_check_branch
        %147 = sbr.rel (%p145) target = $region16
      $region15: #{resnet_transformer_forward.24} parent=11 // pred_region
        _
      $region16: #{resnet_transformer_forward.24} parent=11 // pred_fallthru
        _
      // Predicated region
      $region17: #{resnet_transformer_forward.24} parent=11 // pred_check
        %p148 = pneg %p78
      $region18: #{resnet_transformer_forward.24} parent=11 // pred_check_branch
        %150 = sbr.rel (%p148) target = $region20
      $region19: #{resnet_transformer_forward.24} parent=11 // pred_region
        _
      $region20: #{resnet_transformer_forward.24} parent=11 // pred_fallthru
        _
    $region12: #{resnet_transformer_forward.24} parent=5 // pred_fallthru
      _
    %p151 = scmp.lt.s32.totalorder %s10, 2
    // Predicated region
    $region21: #{resnet_transformer_forward.24} parent=5 // pred_check
      %p152 = pneg %p151
    $region22: #{resnet_transformer_forward.24} parent=5 // pred_check_branch
      %154 = sbr.rel (%p152) target = $region24
    $region23: #{resnet_transformer_forward.24} parent=5 // pred_region
      // Predicated region
      $region25: #{resnet_transformer_forward.24} parent=23 // pred_check
        %p155 = pneg %p30
      $region26: #{resnet_transformer_forward.24} parent=23 // pred_check_branch
        %157 = sbr.rel (%p155) target = $region28
      $region27: #{resnet_transformer_forward.24} parent=23 // pred_region
        %s158 = smul.u32 32, %s10
        %p159 = scmp.lt.s32.totalorder %s158, 63
        %s160 = scalar_select %p159, %s158, 63
        %s161 = smul.addr %s160, 4
        %s162 = scalar_lea.vmem %s0, %s161
        %s163 = smul.u32 32, %s10
      $region28: #{resnet_transformer_forward.24} parent=23 // pred_fallthru
        _
      // Predicated region
      $region29: #{resnet_transformer_forward.24} parent=23 // pred_check
        %p164 = pneg %p98
      $region30: #{resnet_transformer_forward.24} parent=23 // pred_check_branch
        %166 = sbr.rel (%p164) target = $region32
      $region31: #{resnet_transformer_forward.24} parent=23 // pred_region
        %s167 = smul.u32 32, %s10
        %p168 = scmp.lt.s32.totalorder %s167, 63
        %s169 = scalar_select %p168, %s167, 63
        %s170 = smul.addr %s169, 8
        %s171 = scalar_lea.vmem %s3, %s170
        %s172 = smul.u32 32, %s10
      $region32: #{resnet_transformer_forward.24} parent=23 // pred_fallthru
        _
    $region24: #{resnet_transformer_forward.24} parent=5 // pred_fallthru
      _
    %p173 = scmp.le.s32.totalorder 1, %s10
    %p174 = scmp.lt.s32.totalorder %s10, 3
    %p175 = pnand %p173, %p174
    %p176 = pneg %p175
    // Predicated region
    $region33: #{resnet_transformer_forward.24} parent=5 // pred_check
      _
    $region34: #{resnet_transformer_forward.24} parent=5 // pred_check_branch
      %178 = sbr.rel (%p175) target = $region36
    $region35: #{resnet_transformer_forward.24} parent=5 // pred_region
      %s179 = ssub.s32 %s10, 1
      %s180 = smul.u32 32, %s15
      %p181 = scmp.lt.s32.totalorder %s180, 63
      %s182 = scalar_select %p181, %s180, 63
      %s183 = smul.addr %s182, 4
      %s184 = scalar_lea.vmem %s0, %s183
      %p185 = pneg %p36
      %p186 = pneg %p33
      %p187 = pneg %p57
      %p188 = pneg %p54
      %p189 = pneg %p78
      %p190 = pneg %p75
      %s191 = smul.u32 32, %s15
      %p192 = scmp.lt.s32.totalorder %s191, 63
      %s193 = scalar_select %p192, %s191, 63
      %s194 = smul.addr %s193, 8
      %s195 = scalar_lea.vmem %s3, %s194
      %p196 = pneg %p104
      %p197 = pneg %p101
      %p198 = pneg %p130
      %p199 = pneg %p127
      %s200 = smul.u32 32, %s15
      %p201 = scmp.lt.s32.totalorder %s200, 63
      %s202 = scalar_select %p201, %s200, 63
      %s203 = smul.addr %s202, 8
      %s204 = scalar_lea.vmem %s4, %s203
      %s205 = smul.u32 32, %s15
      %p206 = scmp.lt.s32.totalorder %s205, 63
      %s207 = scalar_select %p206, %s205, 63
      %s208 = smul.addr %s207, 4
      %s209 = scalar_lea.vmem %s0, %s208
      %s210 = smul.u32 32, %s15
      %s211 = smul.u32 32, %s15
      %p212 = scmp.lt.s32.totalorder %s211, 63
      %s213 = scalar_select %p212, %s211, 63
      %s214 = smul.addr %s213, 8
      %s215 = scalar_lea.vmem %s3, %s214
      %s216 = smul.u32 32, %s15
      %s217 = smul.u32 32, %s15
      %p218 = scmp.lt.s32.totalorder %s217, 63
      %s219 = scalar_select %p218, %s217, 63
      %s220 = smul.addr %s219, 8
      %s221 = scalar_lea.vmem %s4, %s220
      %s222 = smul.u32 32, %s15
      %v224 = vld [vmem:[%s209] sm:$0xf]
      %v225 = vld [vmem:[%s209 + $0x4] sm:$0xf]
      %v226 = vld [vmem:[%s209 + $0x8] sm:$0xf]
      %v227 = vld [vmem:[%s209 + $0xc] sm:$0xf]
      %v228 = vld [vmem:[%s209 + $0x10] sm:$0xf]
      %v229 = vld [vmem:[%s209 + $0x14] sm:$0xf]
      %v230 = vld [vmem:[%s209 + $0x18] sm:$0xf]
      %v231 = vld [vmem:[%s209 + $0x1c] sm:$0xf]
      %v232 = vld [vmem:[%s209 + $0x20] sm:$0xf]
      %v233 = vld [vmem:[%s209 + $0x24] sm:$0xf]
      %v234 = vld [vmem:[%s209 + $0x28] sm:$0xf]
      %v235 = vld [vmem:[%s209 + $0x2c] sm:$0xf]
      %v236 = vld [vmem:[%s209 + $0x30] sm:$0xf]
      %v237 = vld [vmem:[%s209 + $0x34] sm:$0xf]
      %v238 = vld [vmem:[%s209 + $0x38] sm:$0xf]
      %v239 = vld [vmem:[%s209 + $0x3c] sm:$0xf]
      %v240 = vld [vmem:[%s209 + $0x40] sm:$0xf]
      %v241 = vld [vmem:[%s209 + $0x44] sm:$0xf]
      %v242 = vld [vmem:[%s209 + $0x48] sm:$0xf]
      %v243 = vld [vmem:[%s209 + $0x4c] sm:$0xf]
      %v244 = vld [vmem:[%s209 + $0x50] sm:$0xf]
      %v245 = vld [vmem:[%s209 + $0x54] sm:$0xf]
      %v246 = vld [vmem:[%s209 + $0x58] sm:$0xf]
      %v247 = vld [vmem:[%s209 + $0x5c] sm:$0xf]
      %v248 = vld [vmem:[%s209 + $0x60] sm:$0xf]
      %v249 = vld [vmem:[%s209 + $0x64] sm:$0xf]
      %v250 = vld [vmem:[%s209 + $0x68] sm:$0xf]
      %v251 = vld [vmem:[%s209 + $0x6c] sm:$0xf]
      %v252 = vld [vmem:[%s209 + $0x70] sm:$0xf]
      %v253 = vld [vmem:[%s209 + $0x74] sm:$0xf]
      %v254 = vld [vmem:[%s209 + $0x78] sm:$0xf]
      %v255 = vld [vmem:[%s209 + $0x7c] sm:$0xf]
      %v256 = vld [vmem:[%s1] sm:$0xf]
      %v257 = vld [vmem:[%s1 + $0x4] sm:$0xf]
      %v258 = vld [vmem:[%s1 + $0x8] sm:$0xf]
      %v259 = vld [vmem:[%s1 + $0xc] sm:$0xf]
      %v260 = vld [vmem:[%s1 + $0x10] sm:$0xf]
      %v261 = vld [vmem:[%s1 + $0x14] sm:$0xf]
      %v262 = vld [vmem:[%s1 + $0x18] sm:$0xf]
      %v263 = vld [vmem:[%s1 + $0x1c] sm:$0xf]
      %v264 = vld [vmem:[%s1 + $0x20] sm:$0xf]
      %v265 = vld [vmem:[%s2] sm:$0x1]
      %v267 = vlaneseq
      %v268 = vshrl.u32 %v267, 7
      %v269 = vsub.s32 0, %v268
      %v270 = vrot.slane %v265, %v269
      %v304 = vunpack.c.l.b16 %v224
      %v305 = vunpack.c.l.b16 %v225
      %v306 = vunpack.c.l.b16 %v226
      %v307 = vunpack.c.l.b16 %v227
      %v308 = vunpack.c.l.b16 %v228
      %v309 = vunpack.c.l.b16 %v229
      %v310 = vunpack.c.l.b16 %v230
      %v311 = vunpack.c.l.b16 %v231
      %v312 = vunpack.c.l.b16 %v232
      %v313 = vunpack.c.l.b16 %v233
      %v314 = vunpack.c.l.b16 %v234
      %v315 = vunpack.c.l.b16 %v235
      %v316 = vunpack.c.l.b16 %v236
      %v317 = vunpack.c.l.b16 %v237
      %v318 = vunpack.c.l.b16 %v238
      %v319 = vunpack.c.l.b16 %v239
      %v320 = vunpack.c.l.b16 %v240
      %v321 = vunpack.c.l.b16 %v241
      %v322 = vunpack.c.l.b16 %v242
      %v323 = vunpack.c.l.b16 %v243
      %v324 = vunpack.c.l.b16 %v244
      %v325 = vunpack.c.l.b16 %v245
      %v326 = vunpack.c.l.b16 %v246
      %v327 = vunpack.c.l.b16 %v247
      %v328 = vunpack.c.l.b16 %v248
      %v329 = vunpack.c.l.b16 %v249
      %v330 = vunpack.c.l.b16 %v250
      %v331 = vunpack.c.l.b16 %v251
      %v332 = vunpack.c.l.b16 %v252
      %v333 = vunpack.c.l.b16 %v253
      %v334 = vunpack.c.l.b16 %v254
      %v335 = vunpack.c.l.b16 %v255
      %v336 = vpack.c.b16 %v305, %v304
      %v337 = vpack.c.b16 %v307, %v306
      %v338 = vpack.c.b16 %v309, %v308
      %v339 = vpack.c.b16 %v311, %v310
      %v340 = vpack.c.b16 %v313, %v312
      %v341 = vpack.c.b16 %v315, %v314
      %v342 = vpack.c.b16 %v317, %v316
      %v343 = vpack.c.b16 %v319, %v318
      %v344 = vpack.c.b16 %v321, %v320
      %v345 = vpack.c.b16 %v323, %v322
      %v346 = vpack.c.b16 %v325, %v324
      %v347 = vpack.c.b16 %v327, %v326
      %v348 = vpack.c.b16 %v329, %v328
      %v349 = vpack.c.b16 %v331, %v330
      %v350 = vpack.c.b16 %v333, %v332
      %v351 = vpack.c.b16 %v335, %v334
      %v361 = vunpack.c.l.b16 %v256
      %v362 = vunpack.c.l.b16 %v257
      %v363 = vunpack.c.l.b16 %v258
      %v364 = vunpack.c.l.b16 %v259
      %v365 = vunpack.c.l.b16 %v260
      %v366 = vunpack.c.l.b16 %v261
      %v367 = vunpack.c.l.b16 %v262
      %v368 = vunpack.c.l.b16 %v263
      %v369 = vunpack.c.l.b16 %v264
      %v370 = vpack.c.b16 %v362, %v361
      %v371 = vpack.c.b16 %v364, %v363
      %v372 = vpack.c.b16 %v366, %v365
      %v373 = vpack.c.b16 %v368, %v367
      %v374 = vpack.c.b16 %v369, %v369
      %vm379 = vcmask 588800
      %v381 = vsel %vm379, %v336, 0
      %v384 = vsel %vm379, %v337, 0
      %v387 = vsel %vm379, %v338, 0
      %v390 = vsel %vm379, %v339, 0
      %v393 = vsel %vm379, %v340, 0
      %v396 = vsel %vm379, %v341, 0
      %v399 = vsel %vm379, %v342, 0
      %v402 = vsel %vm379, %v343, 0
      %v405 = vsel %vm379, %v344, 0
      %v408 = vsel %vm379, %v345, 0
      %v411 = vsel %vm379, %v346, 0
      %v414 = vsel %vm379, %v347, 0
      %v417 = vsel %vm379, %v348, 0
      %v420 = vsel %vm379, %v349, 0
      %v423 = vsel %vm379, %v350, 0
      %v426 = vsel %vm379, %v351, 0
      %vm428 = vcmask 1043456
      %v430 = vsel %vm428, %v374, 0
      %432 = vmatprep.subr.bf16.mxu0 0
      %433 = vmatpush1.bf16.msra.mxu0 %v370
      %434 = vmatprep.subr.bf16.mxu0 0
      %435 = vmatpush1.bf16.msra.mxu0 %v371
      %436 = vmatprep.subr.bf16.mxu0 0
      %437 = vmatpush1.bf16.msra.mxu0 %v372
      %438 = vmatprep.subr.bf16.mxu0 0
      %439 = vmatpush1.bf16.msra.mxu0 %v373
      %440 = vmatprep.subr.bf16.mxu0 0
      %441 = vmatpush1.bf16.msra.mxu0 %v430
      %442 = vmatprep.subr.bf16.mxu0 0
      %443 = vmatpush1.bf16.msra.mxu0 0
      %444 = vmatprep.subr.bf16.mxu0 0
      %445 = vmatpush1.bf16.msra.mxu0 0
      %446 = vmatprep.subr.bf16.mxu0 0
      %447 = vmatpush1.bf16.msra.mxu0 0
      %448 = vmatprep.subr.bf16.mxu0 0
      %449 = vmatpush1.bf16.msra.mxu0 0
      %450 = vmatprep.subr.bf16.mxu0 0
      %451 = vmatpush1.bf16.msra.mxu0 0
      %452 = vmatprep.subr.bf16.mxu0 0
      %453 = vmatpush1.bf16.msra.mxu0 0
      %454 = vmatprep.subr.bf16.mxu0 0
      %455 = vmatpush1.bf16.msra.mxu0 0
      %456 = vmatprep.subr.bf16.mxu0 0
      %457 = vmatpush1.bf16.msra.mxu0 0
      %458 = vmatprep.subr.bf16.mxu0 0
      %459 = vmatpush1.bf16.msra.mxu0 0
      %460 = vmatprep.subr.bf16.mxu0 0
      %461 = vmatpush1.bf16.msra.mxu0 0
      %462 = vmatprep.subr.bf16.mxu0 0
      %463 = vmatpush1.bf16.msra.mxu0 0
      %464 = vmatprep.mubr.bf16.mxu0 0
      %465 = vmatmul.mubr.bf16.gmra.mrb[0].mxu0 %v381
      %v466 = vpop.f32.mrb[0].mxu0
      %v467 = vadd.f32 %v270, %v466
      %v468 = vpop.f32.mrb[0].mxu0
      %v469 = vpop.f32.mrb[0].mxu0
      %v470 = vadd.f32 %v270, %v469
      %v471 = vpop.f32.mrb[0].mxu0
      %472 = vmatprep.mubr.bf16.mxu0 0
      %473 = vmatmul.mubr.bf16.gmra.mrb[0].mxu0 %v384
      %v474 = vpop.f32.mrb[0].mxu0
      %v475 = vadd.f32 %v270, %v474
      %v476 = vpop.f32.mrb[0].mxu0
      %v477 = vpop.f32.mrb[0].mxu0
      %v478 = vadd.f32 %v270, %v477
      %v479 = vpop.f32.mrb[0].mxu0
      %480 = vmatprep.mubr.bf16.mxu0 0
      %481 = vmatmul.mubr.bf16.gmra.mrb[0].mxu0 %v387
      %v482 = vpop.f32.mrb[0].mxu0
      %v483 = vadd.f32 %v270, %v482
      %v484 = vpop.f32.mrb[0].mxu0
      %v485 = vpop.f32.mrb[0].mxu0
      %v486 = vadd.f32 %v270, %v485
      %v487 = vpop.f32.mrb[0].mxu0
      %488 = vmatprep.mubr.bf16.mxu0 0
      %489 = vmatmul.mubr.bf16.gmra.mrb[0].mxu0 %v390
      %v490 = vpop.f32.mrb[0].mxu0
      %v491 = vadd.f32 %v270, %v490
      %v492 = vpop.f32.mrb[0].mxu0
      %v493 = vpop.f32.mrb[0].mxu0
      %v494 = vadd.f32 %v270, %v493
      %v495 = vpop.f32.mrb[0].mxu0
      %496 = vmatprep.mubr.bf16.mxu0 0
      %497 = vmatmul.mubr.bf16.gmra.mrb[0].mxu0 %v393
      %v498 = vpop.f32.mrb[0].mxu0
      %v499 = vadd.f32 %v270, %v498
      %v500 = vpop.f32.mrb[0].mxu0
      %v501 = vpop.f32.mrb[0].mxu0
      %v502 = vadd.f32 %v270, %v501
      %v503 = vpop.f32.mrb[0].mxu0
      %504 = vmatprep.mubr.bf16.mxu0 0
      %505 = vmatmul.mubr.bf16.gmra.mrb[0].mxu0 %v396
      %v506 = vpop.f32.mrb[0].mxu0
      %v507 = vadd.f32 %v270, %v506
      %v508 = vpop.f32.mrb[0].mxu0
      %v509 = vpop.f32.mrb[0].mxu0
      %v510 = vadd.f32 %v270, %v509
      %v511 = vpop.f32.mrb[0].mxu0
      %512 = vmatprep.mubr.bf16.mxu0 0
      %513 = vmatmul.mubr.bf16.gmra.mrb[0].mxu0 %v399
      %v514 = vpop.f32.mrb[0].mxu0
      %v515 = vadd.f32 %v270, %v514
      %v516 = vpop.f32.mrb[0].mxu0
      %v517 = vpop.f32.mrb[0].mxu0
      %v518 = vadd.f32 %v270, %v517
      %v519 = vpop.f32.mrb[0].mxu0
      %520 = vmatprep.mubr.bf16.mxu0 0
      %521 = vmatmul.mubr.bf16.gmra.mrb[0].mxu0 %v402
      %v522 = vpop.f32.mrb[0].mxu0
      %v523 = vadd.f32 %v270, %v522
      %v524 = vpop.f32.mrb[0].mxu0
      %v525 = vpop.f32.mrb[0].mxu0
      %v526 = vadd.f32 %v270, %v525
      %v527 = vpop.f32.mrb[0].mxu0
      %528 = vmatprep.mubr.bf16.mxu0 0
      %529 = vmatmul.mubr.bf16.gmra.mrb[0].mxu0 %v405
      %v530 = vpop.f32.mrb[0].mxu0
      %v531 = vadd.f32 %v270, %v530
      %v532 = vpop.f32.mrb[0].mxu0
      %v533 = vpop.f32.mrb[0].mxu0
      %v534 = vadd.f32 %v270, %v533
      %v535 = vpop.f32.mrb[0].mxu0
      %536 = vmatprep.mubr.bf16.mxu0 0
      %537 = vmatmul.mubr.bf16.gmra.mrb[0].mxu0 %v408
      %v538 = vpop.f32.mrb[0].mxu0
      %v539 = vadd.f32 %v270, %v538
      %v540 = vpop.f32.mrb[0].mxu0
      %v541 = vpop.f32.mrb[0].mxu0
      %v542 = vadd.f32 %v270, %v541
      %v543 = vpop.f32.mrb[0].mxu0
      %544 = vmatprep.mubr.bf16.mxu0 0
      %545 = vmatmul.mubr.bf16.gmra.mrb[0].mxu0 %v411
      %v546 = vpop.f32.mrb[0].mxu0
      %v547 = vadd.f32 %v270, %v546
      %v548 = vpop.f32.mrb[0].mxu0
      %v549 = vpop.f32.mrb[0].mxu0
      %v550 = vadd.f32 %v270, %v549
      %v551 = vpop.f32.mrb[0].mxu0
      %552 = vmatprep.mubr.bf16.mxu0 0
      %553 = vmatmul.mubr.bf16.gmra.mrb[0].mxu0 %v414
      %v554 = vpop.f32.mrb[0].mxu0
      %v555 = vadd.f32 %v270, %v554
      %v556 = vpop.f32.mrb[0].mxu0
      %v557 = vpop.f32.mrb[0].mxu0
      %v558 = vadd.f32 %v270, %v557
      %v559 = vpop.f32.mrb[0].mxu0
      %560 = vmatprep.mubr.bf16.mxu0 0
      %561 = vmatmul.mubr.bf16.gmra.mrb[0].mxu0 %v417
      %v562 = vpop.f32.mrb[0].mxu0
      %v563 = vadd.f32 %v270, %v562
      %v564 = vpop.f32.mrb[0].mxu0
      %v565 = vpop.f32.mrb[0].mxu0
      %v566 = vadd.f32 %v270, %v565
      %v567 = vpop.f32.mrb[0].mxu0
      %568 = vmatprep.mubr.bf16.mxu0 0
      %569 = vmatmul.mubr.bf16.gmra.mrb[0].mxu0 %v420
      %v570 = vpop.f32.mrb[0].mxu0
      %v571 = vadd.f32 %v270, %v570
      %v572 = vpop.f32.mrb[0].mxu0
      %v573 = vpop.f32.mrb[0].mxu0
      %v574 = vadd.f32 %v270, %v573
      %v575 = vpop.f32.mrb[0].mxu0
      %576 = vmatprep.mubr.bf16.mxu0 0
      %577 = vmatmul.mubr.bf16.gmra.mrb[0].mxu0 %v423
      %v578 = vpop.f32.mrb[0].mxu0
      %v579 = vadd.f32 %v270, %v578
      %v580 = vpop.f32.mrb[0].mxu0
      %v581 = vpop.f32.mrb[0].mxu0
      %v582 = vadd.f32 %v270, %v581
      %v583 = vpop.f32.mrb[0].mxu0
      %584 = vmatprep.mubr.bf16.mxu0 0
      %585 = vmatmul.mubr.bf16.gmra.mrb[0].mxu0 %v426
      %v586 = vpop.f32.mrb[0].mxu0
      %v587 = vadd.f32 %v270, %v586
      %v588 = vpop.f32.mrb[0].mxu0
      %v589 = vpop.f32.mrb[0].mxu0
      %v590 = vadd.f32 %v270, %v589
      %v591 = vpop.f32.mrb[0].mxu0
      %592 = vdwg.mxu0
      %v593 = vld [vmem:[%s215] sm:$0xff]
      %v594 = vld [vmem:[%s215 + $0x8] sm:$0xff]
      %v595 = vld [vmem:[%s215 + $0x10] sm:$0xff]
      %v596 = vld [vmem:[%s215 + $0x18] sm:$0xff]
      %v597 = vld [vmem:[%s215 + $0x20] sm:$0xff]
      %v598 = vld [vmem:[%s215 + $0x28] sm:$0xff]
      %v599 = vld [vmem:[%s215 + $0x30] sm:$0xff]
      %v600 = vld [vmem:[%s215 + $0x38] sm:$0xff]
      %v601 = vld [vmem:[%s215 + $0x40] sm:$0xff]
      %v602 = vld [vmem:[%s215 + $0x48] sm:$0xff]
      %v603 = vld [vmem:[%s215 + $0x50] sm:$0xff]
      %v604 = vld [vmem:[%s215 + $0x58] sm:$0xff]
      %v605 = vld [vmem:[%s215 + $0x60] sm:$0xff]
      %v606 = vld [vmem:[%s215 + $0x68] sm:$0xff]
      %v607 = vld [vmem:[%s215 + $0x70] sm:$0xff]
      %v608 = vld [vmem:[%s215 + $0x78] sm:$0xff]
      %v609 = vld [vmem:[%s215 + $0x80] sm:$0xff]
      %v610 = vld [vmem:[%s215 + $0x88] sm:$0xff]
      %v611 = vld [vmem:[%s215 + $0x90] sm:$0xff]
      %v612 = vld [vmem:[%s215 + $0x98] sm:$0xff]
      %v613 = vld [vmem:[%s215 + $0xa0] sm:$0xff]
      %v614 = vld [vmem:[%s215 + $0xa8] sm:$0xff]
      %v615 = vld [vmem:[%s215 + $0xb0] sm:$0xff]
      %v616 = vld [vmem:[%s215 + $0xb8] sm:$0xff]
      %v617 = vld [vmem:[%s215 + $0xc0] sm:$0xff]
      %v618 = vld [vmem:[%s215 + $0xc8] sm:$0xff]
      %v619 = vld [vmem:[%s215 + $0xd0] sm:$0xff]
      %v620 = vld [vmem:[%s215 + $0xd8] sm:$0xff]
      %v621 = vld [vmem:[%s215 + $0xe0] sm:$0xff]
      %v622 = vld [vmem:[%s215 + $0xe8] sm:$0xff]
      %v623 = vld [vmem:[%s215 + $0xf0] sm:$0xff]
      %v624 = vld [vmem:[%s215 + $0xf8] sm:$0xff]
      %v625 = vadd.f32 %v467, %v593
      %v626 = vadd.f32 %v470, %v594
      %v627 = vadd.f32 %v475, %v595
      %v628 = vadd.f32 %v478, %v596
      %v629 = vadd.f32 %v483, %v597
      %v630 = vadd.f32 %v486, %v598
      %v631 = vadd.f32 %v491, %v599
      %v632 = vadd.f32 %v494, %v600
      %v633 = vadd.f32 %v499, %v601
      %v634 = vadd.f32 %v502, %v602
      %v635 = vadd.f32 %v507, %v603
      %v636 = vadd.f32 %v510, %v604
      %v637 = vadd.f32 %v515, %v605
      %v638 = vadd.f32 %v518, %v606
      %v639 = vadd.f32 %v523, %v607
      %v640 = vadd.f32 %v526, %v608
      %v641 = vadd.f32 %v531, %v609
      %v642 = vadd.f32 %v534, %v610
      %v643 = vadd.f32 %v539, %v611
      %v644 = vadd.f32 %v542, %v612
      %v645 = vadd.f32 %v547, %v613
      %v646 = vadd.f32 %v550, %v614
      %v647 = vadd.f32 %v555, %v615
      %v648 = vadd.f32 %v558, %v616
      %v649 = vadd.f32 %v563, %v617
      %v650 = vadd.f32 %v566, %v618
      %v651 = vadd.f32 %v571, %v619
      %v652 = vadd.f32 %v574, %v620
      %v653 = vadd.f32 %v579, %v621
      %v654 = vadd.f32 %v582, %v622
      %v655 = vadd.f32 %v587, %v623
      %v656 = vadd.f32 %v590, %v624
      %v657 = vmax.f32 %v625, 0.0
      %v658 = vmax.f32 %v626, 0.0
      %v659 = vmax.f32 %v627, 0.0
      %v660 = vmax.f32 %v628, 0.0
      %v661 = vmax.f32 %v629, 0.0
      %v662 = vmax.f32 %v630, 0.0
      %v663 = vmax.f32 %v631, 0.0
      %v664 = vmax.f32 %v632, 0.0
      %v665 = vmax.f32 %v633, 0.0
      %v666 = vmax.f32 %v634, 0.0
      %v667 = vmax.f32 %v635, 0.0
      %v668 = vmax.f32 %v636, 0.0
      %v669 = vmax.f32 %v637, 0.0
      %v670 = vmax.f32 %v638, 0.0
      %v671 = vmax.f32 %v639, 0.0
      %v672 = vmax.f32 %v640, 0.0
      %v673 = vmax.f32 %v641, 0.0
      %v674 = vmax.f32 %v642, 0.0
      %v675 = vmax.f32 %v643, 0.0
      %v676 = vmax.f32 %v644, 0.0
      %v677 = vmax.f32 %v645, 0.0
      %v678 = vmax.f32 %v646, 0.0
      %v679 = vmax.f32 %v647, 0.0
      %v680 = vmax.f32 %v648, 0.0
      %v681 = vmax.f32 %v649, 0.0
      %v682 = vmax.f32 %v650, 0.0
      %v683 = vmax.f32 %v651, 0.0
      %v684 = vmax.f32 %v652, 0.0
      %v685 = vmax.f32 %v653, 0.0
      %v686 = vmax.f32 %v654, 0.0
      %v687 = vmax.f32 %v655, 0.0
      %v688 = vmax.f32 %v656, 0.0
      %vm689 = vcmask 64512
      %690 = vst.msk [vmem:[%s221] sm:$0xff] %vm689, %v657
      %691 = vst.msk [vmem:[%s221 + $0x8] sm:$0xff] %vm689, %v658
      %692 = vst.msk [vmem:[%s221 + $0x10] sm:$0xff] %vm689, %v659
      %693 = vst.msk [vmem:[%s221 + $0x18] sm:$0xff] %vm689, %v660
      %694 = vst.msk [vmem:[%s221 + $0x20] sm:$0xff] %vm689, %v661
      %695 = vst.msk [vmem:[%s221 + $0x28] sm:$0xff] %vm689, %v662
      %696 = vst.msk [vmem:[%s221 + $0x30] sm:$0xff] %vm689, %v663
      %697 = vst.msk [vmem:[%s221 + $0x38] sm:$0xff] %vm689, %v664
      %698 = vst.msk [vmem:[%s221 + $0x40] sm:$0xff] %vm689, %v665
      %699 = vst.msk [vmem:[%s221 + $0x48] sm:$0xff] %vm689, %v666
      %700 = vst.msk [vmem:[%s221 + $0x50] sm:$0xff] %vm689, %v667
      %701 = vst.msk [vmem:[%s221 + $0x58] sm:$0xff] %vm689, %v668
      %702 = vst.msk [vmem:[%s221 + $0x60] sm:$0xff] %vm689, %v669
      %703 = vst.msk [vmem:[%s221 + $0x68] sm:$0xff] %vm689, %v670
      %704 = vst.msk [vmem:[%s221 + $0x70] sm:$0xff] %vm689, %v671
      %705 = vst.msk [vmem:[%s221 + $0x78] sm:$0xff] %vm689, %v672
      %706 = vst.msk [vmem:[%s221 + $0x80] sm:$0xff] %vm689, %v673
      %707 = vst.msk [vmem:[%s221 + $0x88] sm:$0xff] %vm689, %v674
      %708 = vst.msk [vmem:[%s221 + $0x90] sm:$0xff] %vm689, %v675
      %709 = vst.msk [vmem:[%s221 + $0x98] sm:$0xff] %vm689, %v676
      %710 = vst.msk [vmem:[%s221 + $0xa0] sm:$0xff] %vm689, %v677
      %711 = vst.msk [vmem:[%s221 + $0xa8] sm:$0xff] %vm689, %v678
      %712 = vst.msk [vmem:[%s221 + $0xb0] sm:$0xff] %vm689, %v679
      %713 = vst.msk [vmem:[%s221 + $0xb8] sm:$0xff] %vm689, %v680
      %714 = vst.msk [vmem:[%s221 + $0xc0] sm:$0xff] %vm689, %v681
      %715 = vst.msk [vmem:[%s221 + $0xc8] sm:$0xff] %vm689, %v682
      %716 = vst.msk [vmem:[%s221 + $0xd0] sm:$0xff] %vm689, %v683
      %717 = vst.msk [vmem:[%s221 + $0xd8] sm:$0xff] %vm689, %v684
      %718 = vst.msk [vmem:[%s221 + $0xe0] sm:$0xff] %vm689, %v685
      %719 = vst.msk [vmem:[%s221 + $0xe8] sm:$0xff] %vm689, %v686
      %720 = vst.msk [vmem:[%s221 + $0xf0] sm:$0xff] %vm689, %v687
      %721 = vst.msk [vmem:[%s221 + $0xf8] sm:$0xff] %vm689, %v688
      %s722 = smul.u32 32, %s15
      %p723 = scmp.lt.s32.totalorder %s722, 63
      %s724 = scalar_select %p723, %s722, 63
      %s725 = smul.addr %s724, 8
      %s726 = scalar_lea.vmem %s4, %s725
      // Predicated region
      $region37: #{resnet_transformer_forward.24} parent=35 // pred_check
        %p727 = pneg %p127
      $region38: #{resnet_transformer_forward.24} parent=35 // pred_check_branch
        %729 = sbr.rel (%p727) target = $region40
      $region39: #{resnet_transformer_forward.24} parent=35 // pred_region
        %s730 = smul.u32 32, %s15
      $region40: #{resnet_transformer_forward.24} parent=35 // pred_fallthru
        _
    $region36: #{resnet_transformer_forward.24} parent=5 // pred_fallthru
      _
    %p731 = scmp.le.s32.totalorder 2, %s10
    // Predicated region
    $region41: #{resnet_transformer_forward.24} parent=5 // pred_check
      %p732 = pneg %p731
    $region42: #{resnet_transformer_forward.24} parent=5 // pred_check_branch
      %734 = sbr.rel (%p732) target = $region44
    $region43: #{resnet_transformer_forward.24} parent=5 // pred_region
      %s735 = ssub.s32 %s10, 2
      // Predicated region
      $region45: #{resnet_transformer_forward.24} parent=43 // pred_check
        %p736 = pneg %p133
      $region46: #{resnet_transformer_forward.24} parent=43 // pred_check_branch
        %738 = sbr.rel (%p736) target = $region48
      $region47: #{resnet_transformer_forward.24} parent=43 // pred_region
        %s739 = smul.u32 32, %s16
        %p740 = scmp.lt.s32.totalorder %s739, 63
        %s741 = scalar_select %p740, %s739, 63
        %s742 = smul.addr %s741, 8
        %s743 = scalar_lea.vmem %s4, %s742
      $region48: #{resnet_transformer_forward.24} parent=43 // pred_fallthru
        _
    $region44: #{resnet_transformer_forward.24} parent=5 // pred_fallthru
      _
  $region6: #{resnet_transformer_forward.24} parent=0 // loop_footer
    %s14 = sadd.s32 1, %s10
  $region7: #{resnet_transformer_forward.24} parent=0 // loop_footer_branch
    %9 = sbr.rel target = $region3
  $region8: #{resnet_transformer_forward.24} parent=0 // loop_exit
    _

// kernel: resnet_transformer_forward.27
$region0: #{resnet_transformer_forward.27}
  #allocation0 [shape = 'u32[]', space=smem, size = 0x4, offset = 0x4, fixed_abs, tag = 'smem constant byte address 0x4 - core index']
  #allocation1 [shape = 'u32[144,128]{1,0:T(1,128)}', space=vmem, size = 0x12000, scoped, tag = 'internal scratch']
  %s0 = inlined_call_operand.vmem [shape: bf16[128,72], index: 0, kind: input, shape index: {}]
  %s1 = inlined_call_operand.vmem [shape: bf16[72,16], index: 1, kind: input, shape index: {}]
  %s2 = inlined_call_operand.vmem [shape: f32[1,16], index: 2, kind: input, shape index: {}]
  %s3 = inlined_call_operand.vmem [shape: f32[128,16], index: 3, kind: output, shape index: {}]
  %s4 = sld [smem:[#allocation0]]
  $region22: #{resnet_transformer_forward.27} parent=0
    _
  %s6 = ssub.s32 1, %s4
  %s7 = scalar_select 0, %s6, %s4
  // Predicated region
  $region2: #{resnet_transformer_forward.27} parent=0 // pred_check
    _
  $region3: #{resnet_transformer_forward.27} parent=0 // pred_check_branch
    %9 = sbr.rel (0) target = $region5
  $region4: #{resnet_transformer_forward.27} parent=0 // pred_region
    _
  $region5: #{resnet_transformer_forward.27} parent=0 // pred_fallthru
    _
  // Predicated region
  $region6: #{resnet_transformer_forward.27} parent=0 // pred_check
    _
  $region7: #{resnet_transformer_forward.27} parent=0 // pred_check_branch
    %11 = sbr.rel (0) target = $region9
  $region8: #{resnet_transformer_forward.27} parent=0 // pred_region
    _
  $region9: #{resnet_transformer_forward.27} parent=0 // pred_fallthru
    _
  // Predicated region
  $region10: #{resnet_transformer_forward.27} parent=0 // pred_check
    _
  $region11: #{resnet_transformer_forward.27} parent=0 // pred_check_branch
    %13 = sbr.rel (0) target = $region13
  $region12: #{resnet_transformer_forward.27} parent=0 // pred_region
    _
  $region13: #{resnet_transformer_forward.27} parent=0 // pred_fallthru
    _
  %v15 = vld [vmem:[%s0] sm:$0xf]
  %v16 = vld [vmem:[%s0 + $0x4] sm:$0xf]
  %v17 = vld [vmem:[%s0 + $0x8] sm:$0xf]
  %v18 = vld [vmem:[%s0 + $0xc] sm:$0xf]
  %v19 = vld [vmem:[%s0 + $0x10] sm:$0xf]
  %v20 = vld [vmem:[%s0 + $0x14] sm:$0xf]
  %v21 = vld [vmem:[%s0 + $0x18] sm:$0xf]
  %v22 = vld [vmem:[%s0 + $0x1c] sm:$0xf]
  %v23 = vld [vmem:[%s0 + $0x20] sm:$0xf]
  %v24 = vld [vmem:[%s0 + $0x24] sm:$0xf]
  %v25 = vld [vmem:[%s0 + $0x28] sm:$0xf]
  %v26 = vld [vmem:[%s0 + $0x2c] sm:$0xf]
  %v27 = vld [vmem:[%s0 + $0x30] sm:$0xf]
  %v28 = vld [vmem:[%s0 + $0x34] sm:$0xf]
  %v29 = vld [vmem:[%s0 + $0x38] sm:$0xf]
  %v30 = vld [vmem:[%s0 + $0x3c] sm:$0xf]
  %v31 = vld [vmem:[%s1] sm:$0xf]
  %v32 = vld [vmem:[%s1 + $0x4] sm:$0xf]
  %v33 = vld [vmem:[%s1 + $0x8] sm:$0xf]
  %v34 = vld [vmem:[%s1 + $0xc] sm:$0xf]
  %v35 = vld [vmem:[%s1 + $0x10] sm:$0xf]
  %v36 = vld [vmem:[%s1 + $0x14] sm:$0xf]
  %v37 = vld [vmem:[%s1 + $0x18] sm:$0xf]
  %v38 = vld [vmem:[%s1 + $0x1c] sm:$0xf]
  %v39 = vld [vmem:[%s1 + $0x20] sm:$0xf]
  %v40 = vld [vmem:[%s2] sm:$0x1]
  %v42 = vlaneseq
  %v43 = vshrl.u32 %v42, 7
  %v44 = vsub.s32 0, %v43
  %v45 = vrot.slane %v40, %v44
  %v63 = vunpack.c.l.b16 %v15
  %v64 = vunpack.c.l.b16 %v16
  %v65 = vunpack.c.l.b16 %v17
  %v66 = vunpack.c.l.b16 %v18
  %v67 = vunpack.c.l.b16 %v19
  %v68 = vunpack.c.l.b16 %v20
  %v69 = vunpack.c.l.b16 %v21
  %v70 = vunpack.c.l.b16 %v22
  %v71 = vunpack.c.l.b16 %v23
  %v72 = vunpack.c.l.b16 %v24
  %v73 = vunpack.c.l.b16 %v25
  %v74 = vunpack.c.l.b16 %v26
  %v75 = vunpack.c.l.b16 %v27
  %v76 = vunpack.c.l.b16 %v28
  %v77 = vunpack.c.l.b16 %v29
  %v78 = vunpack.c.l.b16 %v30
  %v79 = vpack.c.b16 %v64, %v63
  %v80 = vpack.c.b16 %v66, %v65
  %v81 = vpack.c.b16 %v68, %v67
  %v82 = vpack.c.b16 %v70, %v69
  %v83 = vpack.c.b16 %v72, %v71
  %v84 = vpack.c.b16 %v74, %v73
  %v85 = vpack.c.b16 %v76, %v75
  %v86 = vpack.c.b16 %v78, %v77
  %v96 = vunpack.c.l.b16 %v31
  %v97 = vunpack.c.l.b16 %v32
  %v98 = vunpack.c.l.b16 %v33
  %v99 = vunpack.c.l.b16 %v34
  %v100 = vunpack.c.l.b16 %v35
  %v101 = vunpack.c.l.b16 %v36
  %v102 = vunpack.c.l.b16 %v37
  %v103 = vunpack.c.l.b16 %v38
  %v104 = vunpack.c.l.b16 %v39
  %v105 = vpack.c.b16 %v97, %v96
  %v106 = vpack.c.b16 %v99, %v98
  %v107 = vpack.c.b16 %v101, %v100
  %v108 = vpack.c.b16 %v103, %v102
  %v109 = vpack.c.b16 %v104, %v104
  %vm114 = vcmask 588800
  %v116 = vsel %vm114, %v79, 0
  %v119 = vsel %vm114, %v80, 0
  %v122 = vsel %vm114, %v81, 0
  %v125 = vsel %vm114, %v82, 0
  %v128 = vsel %vm114, %v83, 0
  %v131 = vsel %vm114, %v84, 0
  %v134 = vsel %vm114, %v85, 0
  %v137 = vsel %vm114, %v86, 0
  %vm139 = vcmask 1043456
  %v141 = vsel %vm139, %v109, 0
  %143 = vmatprep.subr.bf16.mxu0 0
  %144 = vmatpush1.bf16.msra.mxu0 %v105
  %145 = vmatprep.subr.bf16.mxu0 0
  %146 = vmatpush1.bf16.msra.mxu0 %v106
  %147 = vmatprep.subr.bf16.mxu0 0
  %148 = vmatpush1.bf16.msra.mxu0 %v107
  %149 = vmatprep.subr.bf16.mxu0 0
  %150 = vmatpush1.bf16.msra.mxu0 %v108
  %151 = vmatprep.subr.bf16.mxu0 0
  %152 = vmatpush1.bf16.msra.mxu0 %v141
  %153 = vmatprep.subr.bf16.mxu0 0
  %154 = vmatpush1.bf16.msra.mxu0 0
  %155 = vmatprep.subr.bf16.mxu0 0
  %156 = vmatpush1.bf16.msra.mxu0 0
  %157 = vmatprep.subr.bf16.mxu0 0
  %158 = vmatpush1.bf16.msra.mxu0 0
  %159 = vmatprep.subr.bf16.mxu0 0
  %160 = vmatpush1.bf16.msra.mxu0 0
  %161 = vmatprep.subr.bf16.mxu0 0
  %162 = vmatpush1.bf16.msra.mxu0 0
  %163 = vmatprep.subr.bf16.mxu0 0
  %164 = vmatpush1.bf16.msra.mxu0 0
  %165 = vmatprep.subr.bf16.mxu0 0
  %166 = vmatpush1.bf16.msra.mxu0 0
  %167 = vmatprep.subr.bf16.mxu0 0
  %168 = vmatpush1.bf16.msra.mxu0 0
  %169 = vmatprep.subr.bf16.mxu0 0
  %170 = vmatpush1.bf16.msra.mxu0 0
  %171 = vmatprep.subr.bf16.mxu0 0
  %172 = vmatpush1.bf16.msra.mxu0 0
  %173 = vmatprep.subr.bf16.mxu0 0
  %174 = vmatpush1.bf16.msra.mxu0 0
  %175 = vmatprep.mubr.bf16.mxu0 0
  %176 = vmatmul.mubr.bf16.gmra.mrb[0].mxu0 %v116
  %v177 = vpop.f32.mrb[0].mxu0
  %v178 = vadd.f32 %v45, %v177
  %v179 = vpop.f32.mrb[0].mxu0
  %v180 = vpop.f32.mrb[0].mxu0
  %v181 = vadd.f32 %v45, %v180
  %v182 = vpop.f32.mrb[0].mxu0
  %183 = vmatprep.mubr.bf16.mxu0 0
  %184 = vmatmul.mubr.bf16.gmra.mrb[0].mxu0 %v119
  %v185 = vpop.f32.mrb[0].mxu0
  %v186 = vadd.f32 %v45, %v185
  %v187 = vpop.f32.mrb[0].mxu0
  %v188 = vpop.f32.mrb[0].mxu0
  %v189 = vadd.f32 %v45, %v188
  %v190 = vpop.f32.mrb[0].mxu0
  %191 = vmatprep.mubr.bf16.mxu0 0
  %192 = vmatmul.mubr.bf16.gmra.mrb[0].mxu0 %v122
  %v193 = vpop.f32.mrb[0].mxu0
  %v194 = vadd.f32 %v45, %v193
  %v195 = vpop.f32.mrb[0].mxu0
  %v196 = vpop.f32.mrb[0].mxu0
  %v197 = vadd.f32 %v45, %v196
  %v198 = vpop.f32.mrb[0].mxu0
  %199 = vmatprep.mubr.bf16.mxu0 0
  %200 = vmatmul.mubr.bf16.gmra.mrb[0].mxu0 %v125
  %v201 = vpop.f32.mrb[0].mxu0
  %v202 = vadd.f32 %v45, %v201
  %v203 = vpop.f32.mrb[0].mxu0
  %v204 = vpop.f32.mrb[0].mxu0
  %v205 = vadd.f32 %v45, %v204
  %v206 = vpop.f32.mrb[0].mxu0
  %207 = vmatprep.mubr.bf16.mxu0 0
  %208 = vmatmul.mubr.bf16.gmra.mrb[0].mxu0 %v128
  %v209 = vpop.f32.mrb[0].mxu0
  %v210 = vadd.f32 %v45, %v209
  %v211 = vpop.f32.mrb[0].mxu0
  %v212 = vpop.f32.mrb[0].mxu0
  %v213 = vadd.f32 %v45, %v212
  %v214 = vpop.f32.mrb[0].mxu0
  %215 = vmatprep.mubr.bf16.mxu0 0
  %216 = vmatmul.mubr.bf16.gmra.mrb[0].mxu0 %v131
  %v217 = vpop.f32.mrb[0].mxu0
  %v218 = vadd.f32 %v45, %v217
  %v219 = vpop.f32.mrb[0].mxu0
  %v220 = vpop.f32.mrb[0].mxu0
  %v221 = vadd.f32 %v45, %v220
  %v222 = vpop.f32.mrb[0].mxu0
  %223 = vmatprep.mubr.bf16.mxu0 0
  %224 = vmatmul.mubr.bf16.gmra.mrb[0].mxu0 %v134
  %v225 = vpop.f32.mrb[0].mxu0
  %v226 = vadd.f32 %v45, %v225
  %v227 = vpop.f32.mrb[0].mxu0
  %v228 = vpop.f32.mrb[0].mxu0
  %v229 = vadd.f32 %v45, %v228
  %v230 = vpop.f32.mrb[0].mxu0
  %231 = vmatprep.mubr.bf16.mxu0 0
  %232 = vmatmul.mubr.bf16.gmra.mrb[0].mxu0 %v137
  %v233 = vpop.f32.mrb[0].mxu0
  %v234 = vadd.f32 %v45, %v233
  %v235 = vpop.f32.mrb[0].mxu0
  %v236 = vpop.f32.mrb[0].mxu0
  %v237 = vadd.f32 %v45, %v236
  %v238 = vpop.f32.mrb[0].mxu0
  %239 = vdwg.mxu0
  %v240 = vmax.f32 %v178, 0.0
  %v241 = vmax.f32 %v181, 0.0
  %v242 = vmax.f32 %v186, 0.0
  %v243 = vmax.f32 %v189, 0.0
  %v244 = vmax.f32 %v194, 0.0
  %v245 = vmax.f32 %v197, 0.0
  %v246 = vmax.f32 %v202, 0.0
  %v247 = vmax.f32 %v205, 0.0
  %v248 = vmax.f32 %v210, 0.0
  %v249 = vmax.f32 %v213, 0.0
  %v250 = vmax.f32 %v218, 0.0
  %v251 = vmax.f32 %v221, 0.0
  %v252 = vmax.f32 %v226, 0.0
  %v253 = vmax.f32 %v229, 0.0
  %v254 = vmax.f32 %v234, 0.0
  %v255 = vmax.f32 %v237, 0.0
  %vm256 = vcmask 130048
  %257 = vst.msk [vmem:[%s3] sm:$0xff] %vm256, %v240
  %258 = vst.msk [vmem:[%s3 + $0x8] sm:$0xff] %vm256, %v241
  %259 = vst.msk [vmem:[%s3 + $0x10] sm:$0xff] %vm256, %v242
  %260 = vst.msk [vmem:[%s3 + $0x18] sm:$0xff] %vm256, %v243
  %261 = vst.msk [vmem:[%s3 + $0x20] sm:$0xff] %vm256, %v244
  %262 = vst.msk [vmem:[%s3 + $0x28] sm:$0xff] %vm256, %v245
  %263 = vst.msk [vmem:[%s3 + $0x30] sm:$0xff] %vm256, %v246
  %264 = vst.msk [vmem:[%s3 + $0x38] sm:$0xff] %vm256, %v247
  %265 = vst.msk [vmem:[%s3 + $0x40] sm:$0xff] %vm256, %v248
  %266 = vst.msk [vmem:[%s3 + $0x48] sm:$0xff] %vm256, %v249
  %267 = vst.msk [vmem:[%s3 + $0x50] sm:$0xff] %vm256, %v250
  %268 = vst.msk [vmem:[%s3 + $0x58] sm:$0xff] %vm256, %v251
  %269 = vst.msk [vmem:[%s3 + $0x60] sm:$0xff] %vm256, %v252
  %270 = vst.msk [vmem:[%s3 + $0x68] sm:$0xff] %vm256, %v253
  %271 = vst.msk [vmem:[%s3 + $0x70] sm:$0xff] %vm256, %v254
  %272 = vst.msk [vmem:[%s3 + $0x78] sm:$0xff] %vm256, %v255
  // Predicated region
  $region14: #{resnet_transformer_forward.27} parent=0 // pred_check
    _
  $region15: #{resnet_transformer_forward.27} parent=0 // pred_check_branch
    %274 = sbr.rel (0) target = $region17
  $region16: #{resnet_transformer_forward.27} parent=0 // pred_region
    _
  $region17: #{resnet_transformer_forward.27} parent=0 // pred_fallthru
    _
  // Predicated region
  $region18: #{resnet_transformer_forward.27} parent=0 // pred_check
    _
  $region19: #{resnet_transformer_forward.27} parent=0 // pred_check_branch
    %276 = sbr.rel (0) target = $region21
  $region20: #{resnet_transformer_forward.27} parent=0 // pred_region
    _
  $region21: #{resnet_transformer_forward.27} parent=0 // pred_fallthru
    _

// kernel: resnet_transformer_forward.29
$region0: #{resnet_transformer_forward.29}
  #allocation0 [shape = 'u32[]', space=smem, size = 0x4, offset = 0x4, fixed_abs, tag = 'smem constant byte address 0x4 - core index']
  #allocation1 [shape = 'u32[144,128]{1,0:T(1,128)}', space=vmem, size = 0x12000, scoped, tag = 'internal scratch']
  %s0 = inlined_call_operand.vmem [shape: bf16[128,144], index: 0, kind: input, shape index: {}]
  %s1 = inlined_call_operand.vmem [shape: bf16[144,16], index: 1, kind: input, shape index: {}]
  %s2 = inlined_call_operand.vmem [shape: f32[1,16], index: 2, kind: input, shape index: {}]
  %s3 = inlined_call_operand.vmem [shape: f32[128,16], index: 3, kind: output, shape index: {}]
  %s4 = sld [smem:[#allocation0]]
  $region22: #{resnet_transformer_forward.29} parent=0
    _
  %s6 = ssub.s32 1, %s4
  %s7 = scalar_select 0, %s6, %s4
  // Predicated region
  $region2: #{resnet_transformer_forward.29} parent=0 // pred_check
    _
  $region3: #{resnet_transformer_forward.29} parent=0 // pred_check_branch
    %9 = sbr.rel (0) target = $region5
  $region4: #{resnet_transformer_forward.29} parent=0 // pred_region
    _
  $region5: #{resnet_transformer_forward.29} parent=0 // pred_fallthru
    _
  // Predicated region
  $region6: #{resnet_transformer_forward.29} parent=0 // pred_check
    _
  $region7: #{resnet_transformer_forward.29} parent=0 // pred_check_branch
    %11 = sbr.rel (0) target = $region9
  $region8: #{resnet_transformer_forward.29} parent=0 // pred_region
    _
  $region9: #{resnet_transformer_forward.29} parent=0 // pred_fallthru
    _
  // Predicated region
  $region10: #{resnet_transformer_forward.29} parent=0 // pred_check
    _
  $region11: #{resnet_transformer_forward.29} parent=0 // pred_check_branch
    %13 = sbr.rel (0) target = $region13
  $region12: #{resnet_transformer_forward.29} parent=0 // pred_region
    _
  $region13: #{resnet_transformer_forward.29} parent=0 // pred_fallthru
    _
  %v15 = vld [vmem:[%s0] sm:$0xff]
  %v16 = vld [vmem:[%s0 + $0x8] sm:$0xff]
  %v17 = vld [vmem:[%s0 + $0x10] sm:$0xff]
  %v18 = vld [vmem:[%s0 + $0x18] sm:$0xff]
  %v19 = vld [vmem:[%s0 + $0x20] sm:$0xff]
  %v20 = vld [vmem:[%s0 + $0x28] sm:$0xff]
  %v21 = vld [vmem:[%s0 + $0x30] sm:$0xff]
  %v22 = vld [vmem:[%s0 + $0x38] sm:$0xff]
  %v23 = vld [vmem:[%s0 + $0x40] sm:$0xff]
  %v24 = vld [vmem:[%s0 + $0x48] sm:$0xff]
  %v25 = vld [vmem:[%s0 + $0x50] sm:$0xff]
  %v26 = vld [vmem:[%s0 + $0x58] sm:$0xff]
  %v27 = vld [vmem:[%s0 + $0x60] sm:$0xff]
  %v28 = vld [vmem:[%s0 + $0x68] sm:$0xff]
  %v29 = vld [vmem:[%s0 + $0x70] sm:$0xff]
  %v30 = vld [vmem:[%s0 + $0x78] sm:$0xff]
  %v31 = vld [vmem:[%s1] sm:$0xf]
  %v32 = vld [vmem:[%s1 + $0x4] sm:$0xf]
  %v33 = vld [vmem:[%s1 + $0x8] sm:$0xf]
  %v34 = vld [vmem:[%s1 + $0xc] sm:$0xf]
  %v35 = vld [vmem:[%s1 + $0x10] sm:$0xf]
  %v36 = vld [vmem:[%s1 + $0x14] sm:$0xf]
  %v37 = vld [vmem:[%s1 + $0x18] sm:$0xf]
  %v38 = vld [vmem:[%s1 + $0x1c] sm:$0xf]
  %v39 = vld [vmem:[%s1 + $0x20] sm:$0xf]
  %v40 = vld [vmem:[%s1 + $0x24] sm:$0xf]
  %v41 = vld [vmem:[%s1 + $0x28] sm:$0xf]
  %v42 = vld [vmem:[%s1 + $0x2c] sm:$0xf]
  %v43 = vld [vmem:[%s1 + $0x30] sm:$0xf]
  %v44 = vld [vmem:[%s1 + $0x34] sm:$0xf]
  %v45 = vld [vmem:[%s1 + $0x38] sm:$0xf]
  %v46 = vld [vmem:[%s1 + $0x3c] sm:$0xf]
  %v47 = vld [vmem:[%s1 + $0x40] sm:$0xf]
  %v48 = vld [vmem:[%s1 + $0x44] sm:$0xf]
  %v49 = vld [vmem:[%s2] sm:$0x1]
  %v51 = vlaneseq
  %v52 = vshrl.u32 %v51, 7
  %v53 = vsub.s32 0, %v52
  %v54 = vrot.slane %v49, %v53
  %v72 = vunpack.c.l.b16 %v15
  %v73 = vunpack.c.h.b16 %v15
  %v74 = vunpack.c.l.b16 %v16
  %v75 = vunpack.c.h.b16 %v16
  %v76 = vunpack.c.l.b16 %v17
  %v77 = vunpack.c.h.b16 %v17
  %v78 = vunpack.c.l.b16 %v18
  %v79 = vunpack.c.h.b16 %v18
  %v80 = vunpack.c.l.b16 %v19
  %v81 = vunpack.c.h.b16 %v19
  %v82 = vunpack.c.l.b16 %v20
  %v83 = vunpack.c.h.b16 %v20
  %v84 = vunpack.c.l.b16 %v21
  %v85 = vunpack.c.h.b16 %v21
  %v86 = vunpack.c.l.b16 %v22
  %v87 = vunpack.c.h.b16 %v22
  %v88 = vunpack.c.l.b16 %v23
  %v89 = vunpack.c.h.b16 %v23
  %v90 = vunpack.c.l.b16 %v24
  %v91 = vunpack.c.h.b16 %v24
  %v92 = vunpack.c.l.b16 %v25
  %v93 = vunpack.c.h.b16 %v25
  %v94 = vunpack.c.l.b16 %v26
  %v95 = vunpack.c.h.b16 %v26
  %v96 = vunpack.c.l.b16 %v27
  %v97 = vunpack.c.h.b16 %v27
  %v98 = vunpack.c.l.b16 %v28
  %v99 = vunpack.c.h.b16 %v28
  %v100 = vunpack.c.l.b16 %v29
  %v101 = vunpack.c.h.b16 %v29
  %v102 = vunpack.c.l.b16 %v30
  %v103 = vunpack.c.h.b16 %v30
  %v104 = vpack.c.b16 %v74, %v72
  %v105 = vpack.c.b16 %v75, %v73
  %v106 = vpack.c.b16 %v78, %v76
  %v107 = vpack.c.b16 %v79, %v77
  %v108 = vpack.c.b16 %v82, %v80
  %v109 = vpack.c.b16 %v83, %v81
  %v110 = vpack.c.b16 %v86, %v84
  %v111 = vpack.c.b16 %v87, %v85
  %v112 = vpack.c.b16 %v90, %v88
  %v113 = vpack.c.b16 %v91, %v89
  %v114 = vpack.c.b16 %v94, %v92
  %v115 = vpack.c.b16 %v95, %v93
  %v116 = vpack.c.b16 %v98, %v96
  %v117 = vpack.c.b16 %v99, %v97
  %v118 = vpack.c.b16 %v102, %v100
  %v119 = vpack.c.b16 %v103, %v101
  %v146 = vunpack.c.l.b16 %v31
  %v147 = vunpack.c.l.b16 %v32
  %v148 = vunpack.c.l.b16 %v33
  %v149 = vunpack.c.l.b16 %v34
  %v150 = vunpack.c.l.b16 %v35
  %v151 = vunpack.c.l.b16 %v36
  %v152 = vunpack.c.l.b16 %v37
  %v153 = vunpack.c.l.b16 %v38
  %v154 = vunpack.c.l.b16 %v39
  %v155 = vunpack.c.l.b16 %v40
  %v156 = vunpack.c.l.b16 %v41
  %v157 = vunpack.c.l.b16 %v42
  %v158 = vunpack.c.l.b16 %v43
  %v159 = vunpack.c.l.b16 %v44
  %v160 = vunpack.c.l.b16 %v45
  %v161 = vunpack.c.l.b16 %v46
  %v162 = vunpack.c.l.b16 %v47
  %v163 = vunpack.c.l.b16 %v48
  %v164 = vpack.c.b16 %v147, %v146
  %v165 = vpack.c.b16 %v149, %v148
  %v166 = vpack.c.b16 %v151, %v150
  %v167 = vpack.c.b16 %v153, %v152
  %v168 = vpack.c.b16 %v155, %v154
  %v169 = vpack.c.b16 %v157, %v156
  %v170 = vpack.c.b16 %v159, %v158
  %v171 = vpack.c.b16 %v161, %v160
  %v172 = vpack.c.b16 %v163, %v162
  %vm182 = vcmask 130048
  %v184 = vsel %vm182, %v105, 0
  %v187 = vsel %vm182, %v107, 0
  %v190 = vsel %vm182, %v109, 0
  %v193 = vsel %vm182, %v111, 0
  %v196 = vsel %vm182, %v113, 0
  %v199 = vsel %vm182, %v115, 0
  %v202 = vsel %vm182, %v117, 0
  %v205 = vsel %vm182, %v119, 0
  %207 = vmatprep.subr.bf16.mxu0 0
  %208 = vmatpush1.bf16.msra.mxu0 %v164
  %209 = vmatprep.subr.bf16.mxu0 0
  %210 = vmatpush1.bf16.msra.mxu0 %v165
  %211 = vmatprep.subr.bf16.mxu0 0
  %212 = vmatpush1.bf16.msra.mxu0 %v166
  %213 = vmatprep.subr.bf16.mxu0 0
  %214 = vmatpush1.bf16.msra.mxu0 %v167
  %215 = vmatprep.subr.bf16.mxu0 0
  %216 = vmatpush1.bf16.msra.mxu0 %v168
  %217 = vmatprep.subr.bf16.mxu0 0
  %218 = vmatpush1.bf16.msra.mxu0 %v169
  %219 = vmatprep.subr.bf16.mxu0 0
  %220 = vmatpush1.bf16.msra.mxu0 %v170
  %221 = vmatprep.subr.bf16.mxu0 0
  %222 = vmatpush1.bf16.msra.mxu0 %v171
  %223 = vmatprep.subr.bf16.mxu0 0
  %224 = vmatpush1.bf16.msra.mxu0 %v172
  %225 = vmatprep.subr.bf16.mxu0 0
  %226 = vmatpush1.bf16.msra.mxu0 0
  %227 = vmatprep.subr.bf16.mxu0 0
  %228 = vmatpush1.bf16.msra.mxu0 0
  %229 = vmatprep.subr.bf16.mxu0 0
  %230 = vmatpush1.bf16.msra.mxu0 0
  %231 = vmatprep.subr.bf16.mxu0 0
  %232 = vmatpush1.bf16.msra.mxu0 0
  %233 = vmatprep.subr.bf16.mxu0 0
  %234 = vmatpush1.bf16.msra.mxu0 0
  %235 = vmatprep.subr.bf16.mxu0 0
  %236 = vmatpush1.bf16.msra.mxu0 0
  %237 = vmatprep.subr.bf16.mxu0 0
  %238 = vmatpush1.bf16.msra.mxu0 0
  %239 = vmatprep.mubr.bf16.mxu0 %v184
  %240 = vmatmul.mubr.bf16.gmra.mrb[0].mxu0 %v104
  %v241 = vpop.f32.mrb[0].mxu0
  %v242 = vadd.f32 %v54, %v241
  %v243 = vpop.f32.mrb[0].mxu0
  %v244 = vpop.f32.mrb[0].mxu0
  %v245 = vadd.f32 %v54, %v244
  %v246 = vpop.f32.mrb[0].mxu0
  %247 = vmatprep.mubr.bf16.mxu0 %v187
  %248 = vmatmul.mubr.bf16.gmra.mrb[0].mxu0 %v106
  %v249 = vpop.f32.mrb[0].mxu0
  %v250 = vadd.f32 %v54, %v249
  %v251 = vpop.f32.mrb[0].mxu0
  %v252 = vpop.f32.mrb[0].mxu0
  %v253 = vadd.f32 %v54, %v252
  %v254 = vpop.f32.mrb[0].mxu0
  %255 = vmatprep.mubr.bf16.mxu0 %v190
  %256 = vmatmul.mubr.bf16.gmra.mrb[0].mxu0 %v108
  %v257 = vpop.f32.mrb[0].mxu0
  %v258 = vadd.f32 %v54, %v257
  %v259 = vpop.f32.mrb[0].mxu0
  %v260 = vpop.f32.mrb[0].mxu0
  %v261 = vadd.f32 %v54, %v260
  %v262 = vpop.f32.mrb[0].mxu0
  %263 = vmatprep.mubr.bf16.mxu0 %v193
  %264 = vmatmul.mubr.bf16.gmra.mrb[0].mxu0 %v110
  %v265 = vpop.f32.mrb[0].mxu0
  %v266 = vadd.f32 %v54, %v265
  %v267 = vpop.f32.mrb[0].mxu0
  %v268 = vpop.f32.mrb[0].mxu0
  %v269 = vadd.f32 %v54, %v268
  %v270 = vpop.f32.mrb[0].mxu0
  %271 = vmatprep.mubr.bf16.mxu0 %v196
  %272 = vmatmul.mubr.bf16.gmra.mrb[0].mxu0 %v112
  %v273 = vpop.f32.mrb[0].mxu0
  %v274 = vadd.f32 %v54, %v273
  %v275 = vpop.f32.mrb[0].mxu0
  %v276 = vpop.f32.mrb[0].mxu0
  %v277 = vadd.f32 %v54, %v276
  %v278 = vpop.f32.mrb[0].mxu0
  %279 = vmatprep.mubr.bf16.mxu0 %v199
  %280 = vmatmul.mubr.bf16.gmra.mrb[0].mxu0 %v114
  %v281 = vpop.f32.mrb[0].mxu0
  %v282 = vadd.f32 %v54, %v281
  %v283 = vpop.f32.mrb[0].mxu0
  %v284 = vpop.f32.mrb[0].mxu0
  %v285 = vadd.f32 %v54, %v284
  %v286 = vpop.f32.mrb[0].mxu0
  %287 = vmatprep.mubr.bf16.mxu0 %v202
  %288 = vmatmul.mubr.bf16.gmra.mrb[0].mxu0 %v116
  %v289 = vpop.f32.mrb[0].mxu0
  %v290 = vadd.f32 %v54, %v289
  %v291 = vpop.f32.mrb[0].mxu0
  %v292 = vpop.f32.mrb[0].mxu0
  %v293 = vadd.f32 %v54, %v292
  %v294 = vpop.f32.mrb[0].mxu0
  %295 = vmatprep.mubr.bf16.mxu0 %v205
  %296 = vmatmul.mubr.bf16.gmra.mrb[0].mxu0 %v118
  %v297 = vpop.f32.mrb[0].mxu0
  %v298 = vadd.f32 %v54, %v297
  %v299 = vpop.f32.mrb[0].mxu0
  %v300 = vpop.f32.mrb[0].mxu0
  %v301 = vadd.f32 %v54, %v300
  %v302 = vpop.f32.mrb[0].mxu0
  %303 = vdwg.mxu0
  %v304 = vmax.f32 %v242, 0.0
  %v305 = vmax.f32 %v245, 0.0
  %v306 = vmax.f32 %v250, 0.0
  %v307 = vmax.f32 %v253, 0.0
  %v308 = vmax.f32 %v258, 0.0
  %v309 = vmax.f32 %v261, 0.0
  %v310 = vmax.f32 %v266, 0.0
  %v311 = vmax.f32 %v269, 0.0
  %v312 = vmax.f32 %v274, 0.0
  %v313 = vmax.f32 %v277, 0.0
  %v314 = vmax.f32 %v282, 0.0
  %v315 = vmax.f32 %v285, 0.0
  %v316 = vmax.f32 %v290, 0.0
  %v317 = vmax.f32 %v293, 0.0
  %v318 = vmax.f32 %v298, 0.0
  %v319 = vmax.f32 %v301, 0.0
  %320 = vst.msk [vmem:[%s3] sm:$0xff] %vm182, %v304
  %321 = vst.msk [vmem:[%s3 + $0x8] sm:$0xff] %vm182, %v305
  %322 = vst.msk [vmem:[%s3 + $0x10] sm:$0xff] %vm182, %v306
  %323 = vst.msk [vmem:[%s3 + $0x18] sm:$0xff] %vm182, %v307
  %324 = vst.msk [vmem:[%s3 + $0x20] sm:$0xff] %vm182, %v308
  %325 = vst.msk [vmem:[%s3 + $0x28] sm:$0xff] %vm182, %v309
  %326 = vst.msk [vmem:[%s3 + $0x30] sm:$0xff] %vm182, %v310
  %327 = vst.msk [vmem:[%s3 + $0x38] sm:$0xff] %vm182, %v311
  %328 = vst.msk [vmem:[%s3 + $0x40] sm:$0xff] %vm182, %v312
  %329 = vst.msk [vmem:[%s3 + $0x48] sm:$0xff] %vm182, %v313
  %330 = vst.msk [vmem:[%s3 + $0x50] sm:$0xff] %vm182, %v314
  %331 = vst.msk [vmem:[%s3 + $0x58] sm:$0xff] %vm182, %v315
  %332 = vst.msk [vmem:[%s3 + $0x60] sm:$0xff] %vm182, %v316
  %333 = vst.msk [vmem:[%s3 + $0x68] sm:$0xff] %vm182, %v317
  %334 = vst.msk [vmem:[%s3 + $0x70] sm:$0xff] %vm182, %v318
  %335 = vst.msk [vmem:[%s3 + $0x78] sm:$0xff] %vm182, %v319
  // Predicated region
  $region14: #{resnet_transformer_forward.29} parent=0 // pred_check
    _
  $region15: #{resnet_transformer_forward.29} parent=0 // pred_check_branch
    %337 = sbr.rel (0) target = $region17
  $region16: #{resnet_transformer_forward.29} parent=0 // pred_region
    _
  $region17: #{resnet_transformer_forward.29} parent=0 // pred_fallthru
    _
  // Predicated region
  $region18: #{resnet_transformer_forward.29} parent=0 // pred_check
    _
  $region19: #{resnet_transformer_forward.29} parent=0 // pred_check_branch
    %339 = sbr.rel (0) target = $region21
  $region20: #{resnet_transformer_forward.29} parent=0 // pred_region
    _
  $region21: #{resnet_transformer_forward.29} parent=0 // pred_fallthru
    _

// kernel: resnet_transformer_forward.30
$region0: #{resnet_transformer_forward.30}
  #allocation0 [shape = 'u32[]', space=smem, size = 0x4, offset = 0x4, fixed_abs, tag = 'smem constant byte address 0x4 - core index']
  #allocation1 [shape = 'u32[144,128]{1,0:T(1,128)}', space=vmem, size = 0x12000, scoped, tag = 'internal scratch']
  %s0 = inlined_call_operand.vmem [shape: bf16[128,144], index: 0, kind: input, shape index: {}]
  %s1 = inlined_call_operand.vmem [shape: bf16[144,16], index: 1, kind: input, shape index: {}]
  %s2 = inlined_call_operand.vmem [shape: f32[1,16], index: 2, kind: input, shape index: {}]
  %s3 = inlined_call_operand.vmem [shape: f32[128,16], index: 3, kind: input, shape index: {}]
  %s4 = inlined_call_operand.vmem [shape: f32[128,16], index: 4, kind: output, shape index: {}]
  %s5 = sld [smem:[#allocation0]]
  $region26: #{resnet_transformer_forward.30} parent=0
    _
  %s7 = ssub.s32 1, %s5
  %s8 = scalar_select 0, %s7, %s5
  // Predicated region
  $region2: #{resnet_transformer_forward.30} parent=0 // pred_check
    _
  $region3: #{resnet_transformer_forward.30} parent=0 // pred_check_branch
    %10 = sbr.rel (0) target = $region5
  $region4: #{resnet_transformer_forward.30} parent=0 // pred_region
    _
  $region5: #{resnet_transformer_forward.30} parent=0 // pred_fallthru
    _
  // Predicated region
  $region6: #{resnet_transformer_forward.30} parent=0 // pred_check
    _
  $region7: #{resnet_transformer_forward.30} parent=0 // pred_check_branch
    %12 = sbr.rel (0) target = $region9
  $region8: #{resnet_transformer_forward.30} parent=0 // pred_region
    _
  $region9: #{resnet_transformer_forward.30} parent=0 // pred_fallthru
    _
  // Predicated region
  $region10: #{resnet_transformer_forward.30} parent=0 // pred_check
    _
  $region11: #{resnet_transformer_forward.30} parent=0 // pred_check_branch
    %14 = sbr.rel (0) target = $region13
  $region12: #{resnet_transformer_forward.30} parent=0 // pred_region
    _
  $region13: #{resnet_transformer_forward.30} parent=0 // pred_fallthru
    _
  // Predicated region
  $region14: #{resnet_transformer_forward.30} parent=0 // pred_check
    _
  $region15: #{resnet_transformer_forward.30} parent=0 // pred_check_branch
    %16 = sbr.rel (0) target = $region17
  $region16: #{resnet_transformer_forward.30} parent=0 // pred_region
    _
  $region17: #{resnet_transformer_forward.30} parent=0 // pred_fallthru
    _
  %v18 = vld [vmem:[%s0] sm:$0xff]
  %v19 = vld [vmem:[%s0 + $0x8] sm:$0xff]
  %v20 = vld [vmem:[%s0 + $0x10] sm:$0xff]
  %v21 = vld [vmem:[%s0 + $0x18] sm:$0xff]
  %v22 = vld [vmem:[%s0 + $0x20] sm:$0xff]
  %v23 = vld [vmem:[%s0 + $0x28] sm:$0xff]
  %v24 = vld [vmem:[%s0 + $0x30] sm:$0xff]
  %v25 = vld [vmem:[%s0 + $0x38] sm:$0xff]
  %v26 = vld [vmem:[%s0 + $0x40] sm:$0xff]
  %v27 = vld [vmem:[%s0 + $0x48] sm:$0xff]
  %v28 = vld [vmem:[%s0 + $0x50] sm:$0xff]
  %v29 = vld [vmem:[%s0 + $0x58] sm:$0xff]
  %v30 = vld [vmem:[%s0 + $0x60] sm:$0xff]
  %v31 = vld [vmem:[%s0 + $0x68] sm:$0xff]
  %v32 = vld [vmem:[%s0 + $0x70] sm:$0xff]
  %v33 = vld [vmem:[%s0 + $0x78] sm:$0xff]
  %v34 = vld [vmem:[%s1] sm:$0xf]
  %v35 = vld [vmem:[%s1 + $0x4] sm:$0xf]
  %v36 = vld [vmem:[%s1 + $0x8] sm:$0xf]
  %v37 = vld [vmem:[%s1 + $0xc] sm:$0xf]
  %v38 = vld [vmem:[%s1 + $0x10] sm:$0xf]
  %v39 = vld [vmem:[%s1 + $0x14] sm:$0xf]
  %v40 = vld [vmem:[%s1 + $0x18] sm:$0xf]
  %v41 = vld [vmem:[%s1 + $0x1c] sm:$0xf]
  %v42 = vld [vmem:[%s1 + $0x20] sm:$0xf]
  %v43 = vld [vmem:[%s1 + $0x24] sm:$0xf]
  %v44 = vld [vmem:[%s1 + $0x28] sm:$0xf]
  %v45 = vld [vmem:[%s1 + $0x2c] sm:$0xf]
  %v46 = vld [vmem:[%s1 + $0x30] sm:$0xf]
  %v47 = vld [vmem:[%s1 + $0x34] sm:$0xf]
  %v48 = vld [vmem:[%s1 + $0x38] sm:$0xf]
  %v49 = vld [vmem:[%s1 + $0x3c] sm:$0xf]
  %v50 = vld [vmem:[%s1 + $0x40] sm:$0xf]
  %v51 = vld [vmem:[%s1 + $0x44] sm:$0xf]
  %v52 = vld [vmem:[%s2] sm:$0x1]
  %v54 = vlaneseq
  %v55 = vshrl.u32 %v54, 7
  %v56 = vsub.s32 0, %v55
  %v57 = vrot.slane %v52, %v56
  %v75 = vunpack.c.l.b16 %v18
  %v76 = vunpack.c.h.b16 %v18
  %v77 = vunpack.c.l.b16 %v19
  %v78 = vunpack.c.h.b16 %v19
  %v79 = vunpack.c.l.b16 %v20
  %v80 = vunpack.c.h.b16 %v20
  %v81 = vunpack.c.l.b16 %v21
  %v82 = vunpack.c.h.b16 %v21
  %v83 = vunpack.c.l.b16 %v22
  %v84 = vunpack.c.h.b16 %v22
  %v85 = vunpack.c.l.b16 %v23
  %v86 = vunpack.c.h.b16 %v23
  %v87 = vunpack.c.l.b16 %v24
  %v88 = vunpack.c.h.b16 %v24
  %v89 = vunpack.c.l.b16 %v25
  %v90 = vunpack.c.h.b16 %v25
  %v91 = vunpack.c.l.b16 %v26
  %v92 = vunpack.c.h.b16 %v26
  %v93 = vunpack.c.l.b16 %v27
  %v94 = vunpack.c.h.b16 %v27
  %v95 = vunpack.c.l.b16 %v28
  %v96 = vunpack.c.h.b16 %v28
  %v97 = vunpack.c.l.b16 %v29
  %v98 = vunpack.c.h.b16 %v29
  %v99 = vunpack.c.l.b16 %v30
  %v100 = vunpack.c.h.b16 %v30
  %v101 = vunpack.c.l.b16 %v31
  %v102 = vunpack.c.h.b16 %v31
  %v103 = vunpack.c.l.b16 %v32
  %v104 = vunpack.c.h.b16 %v32
  %v105 = vunpack.c.l.b16 %v33
  %v106 = vunpack.c.h.b16 %v33
  %v107 = vpack.c.b16 %v77, %v75
  %v108 = vpack.c.b16 %v78, %v76
  %v109 = vpack.c.b16 %v81, %v79
  %v110 = vpack.c.b16 %v82, %v80
  %v111 = vpack.c.b16 %v85, %v83
  %v112 = vpack.c.b16 %v86, %v84
  %v113 = vpack.c.b16 %v89, %v87
  %v114 = vpack.c.b16 %v90, %v88
  %v115 = vpack.c.b16 %v93, %v91
  %v116 = vpack.c.b16 %v94, %v92
  %v117 = vpack.c.b16 %v97, %v95
  %v118 = vpack.c.b16 %v98, %v96
  %v119 = vpack.c.b16 %v101, %v99
  %v120 = vpack.c.b16 %v102, %v100
  %v121 = vpack.c.b16 %v105, %v103
  %v122 = vpack.c.b16 %v106, %v104
  %v149 = vunpack.c.l.b16 %v34
  %v150 = vunpack.c.l.b16 %v35
  %v151 = vunpack.c.l.b16 %v36
  %v152 = vunpack.c.l.b16 %v37
  %v153 = vunpack.c.l.b16 %v38
  %v154 = vunpack.c.l.b16 %v39
  %v155 = vunpack.c.l.b16 %v40
  %v156 = vunpack.c.l.b16 %v41
  %v157 = vunpack.c.l.b16 %v42
  %v158 = vunpack.c.l.b16 %v43
  %v159 = vunpack.c.l.b16 %v44
  %v160 = vunpack.c.l.b16 %v45
  %v161 = vunpack.c.l.b16 %v46
  %v162 = vunpack.c.l.b16 %v47
  %v163 = vunpack.c.l.b16 %v48
  %v164 = vunpack.c.l.b16 %v49
  %v165 = vunpack.c.l.b16 %v50
  %v166 = vunpack.c.l.b16 %v51
  %v167 = vpack.c.b16 %v150, %v149
  %v168 = vpack.c.b16 %v152, %v151
  %v169 = vpack.c.b16 %v154, %v153
  %v170 = vpack.c.b16 %v156, %v155
  %v171 = vpack.c.b16 %v158, %v157
  %v172 = vpack.c.b16 %v160, %v159
  %v173 = vpack.c.b16 %v162, %v161
  %v174 = vpack.c.b16 %v164, %v163
  %v175 = vpack.c.b16 %v166, %v165
  %vm185 = vcmask 130048
  %v187 = vsel %vm185, %v108, 0
  %v190 = vsel %vm185, %v110, 0
  %v193 = vsel %vm185, %v112, 0
  %v196 = vsel %vm185, %v114, 0
  %v199 = vsel %vm185, %v116, 0
  %v202 = vsel %vm185, %v118, 0
  %v205 = vsel %vm185, %v120, 0
  %v208 = vsel %vm185, %v122, 0
  %210 = vmatprep.subr.bf16.mxu0 0
  %211 = vmatpush1.bf16.msra.mxu0 %v167
  %212 = vmatprep.subr.bf16.mxu0 0
  %213 = vmatpush1.bf16.msra.mxu0 %v168
  %214 = vmatprep.subr.bf16.mxu0 0
  %215 = vmatpush1.bf16.msra.mxu0 %v169
  %216 = vmatprep.subr.bf16.mxu0 0
  %217 = vmatpush1.bf16.msra.mxu0 %v170
  %218 = vmatprep.subr.bf16.mxu0 0
  %219 = vmatpush1.bf16.msra.mxu0 %v171
  %220 = vmatprep.subr.bf16.mxu0 0
  %221 = vmatpush1.bf16.msra.mxu0 %v172
  %222 = vmatprep.subr.bf16.mxu0 0
  %223 = vmatpush1.bf16.msra.mxu0 %v173
  %224 = vmatprep.subr.bf16.mxu0 0
  %225 = vmatpush1.bf16.msra.mxu0 %v174
  %226 = vmatprep.subr.bf16.mxu0 0
  %227 = vmatpush1.bf16.msra.mxu0 %v175
  %228 = vmatprep.subr.bf16.mxu0 0
  %229 = vmatpush1.bf16.msra.mxu0 0
  %230 = vmatprep.subr.bf16.mxu0 0
  %231 = vmatpush1.bf16.msra.mxu0 0
  %232 = vmatprep.subr.bf16.mxu0 0
  %233 = vmatpush1.bf16.msra.mxu0 0
  %234 = vmatprep.subr.bf16.mxu0 0
  %235 = vmatpush1.bf16.msra.mxu0 0
  %236 = vmatprep.subr.bf16.mxu0 0
  %237 = vmatpush1.bf16.msra.mxu0 0
  %238 = vmatprep.subr.bf16.mxu0 0
  %239 = vmatpush1.bf16.msra.mxu0 0
  %240 = vmatprep.subr.bf16.mxu0 0
  %241 = vmatpush1.bf16.msra.mxu0 0
  %242 = vmatprep.mubr.bf16.mxu0 %v187
  %243 = vmatmul.mubr.bf16.gmra.mrb[0].mxu0 %v107
  %v244 = vpop.f32.mrb[0].mxu0
  %v245 = vadd.f32 %v57, %v244
  %v246 = vpop.f32.mrb[0].mxu0
  %v247 = vpop.f32.mrb[0].mxu0
  %v248 = vadd.f32 %v57, %v247
  %v249 = vpop.f32.mrb[0].mxu0
  %250 = vmatprep.mubr.bf16.mxu0 %v190
  %251 = vmatmul.mubr.bf16.gmra.mrb[0].mxu0 %v109
  %v252 = vpop.f32.mrb[0].mxu0
  %v253 = vadd.f32 %v57, %v252
  %v254 = vpop.f32.mrb[0].mxu0
  %v255 = vpop.f32.mrb[0].mxu0
  %v256 = vadd.f32 %v57, %v255
  %v257 = vpop.f32.mrb[0].mxu0
  %258 = vmatprep.mubr.bf16.mxu0 %v193
  %259 = vmatmul.mubr.bf16.gmra.mrb[0].mxu0 %v111
  %v260 = vpop.f32.mrb[0].mxu0
  %v261 = vadd.f32 %v57, %v260
  %v262 = vpop.f32.mrb[0].mxu0
  %v263 = vpop.f32.mrb[0].mxu0
  %v264 = vadd.f32 %v57, %v263
  %v265 = vpop.f32.mrb[0].mxu0
  %266 = vmatprep.mubr.bf16.mxu0 %v196
  %267 = vmatmul.mubr.bf16.gmra.mrb[0].mxu0 %v113
  %v268 = vpop.f32.mrb[0].mxu0
  %v269 = vadd.f32 %v57, %v268
  %v270 = vpop.f32.mrb[0].mxu0
  %v271 = vpop.f32.mrb[0].mxu0
  %v272 = vadd.f32 %v57, %v271
  %v273 = vpop.f32.mrb[0].mxu0
  %274 = vmatprep.mubr.bf16.mxu0 %v199
  %275 = vmatmul.mubr.bf16.gmra.mrb[0].mxu0 %v115
  %v276 = vpop.f32.mrb[0].mxu0
  %v277 = vadd.f32 %v57, %v276
  %v278 = vpop.f32.mrb[0].mxu0
  %v279 = vpop.f32.mrb[0].mxu0
  %v280 = vadd.f32 %v57, %v279
  %v281 = vpop.f32.mrb[0].mxu0
  %282 = vmatprep.mubr.bf16.mxu0 %v202
  %283 = vmatmul.mubr.bf16.gmra.mrb[0].mxu0 %v117
  %v284 = vpop.f32.mrb[0].mxu0
  %v285 = vadd.f32 %v57, %v284
  %v286 = vpop.f32.mrb[0].mxu0
  %v287 = vpop.f32.mrb[0].mxu0
  %v288 = vadd.f32 %v57, %v287
  %v289 = vpop.f32.mrb[0].mxu0
  %290 = vmatprep.mubr.bf16.mxu0 %v205
  %291 = vmatmul.mubr.bf16.gmra.mrb[0].mxu0 %v119
  %v292 = vpop.f32.mrb[0].mxu0
  %v293 = vadd.f32 %v57, %v292
  %v294 = vpop.f32.mrb[0].mxu0
  %v295 = vpop.f32.mrb[0].mxu0
  %v296 = vadd.f32 %v57, %v295
  %v297 = vpop.f32.mrb[0].mxu0
  %298 = vmatprep.mubr.bf16.mxu0 %v208
  %299 = vmatmul.mubr.bf16.gmra.mrb[0].mxu0 %v121
  %v300 = vpop.f32.mrb[0].mxu0
  %v301 = vadd.f32 %v57, %v300
  %v302 = vpop.f32.mrb[0].mxu0
  %v303 = vpop.f32.mrb[0].mxu0
  %v304 = vadd.f32 %v57, %v303
  %v305 = vpop.f32.mrb[0].mxu0
  %306 = vdwg.mxu0
  %v307 = vld [vmem:[%s3] sm:$0xff]
  %v308 = vld [vmem:[%s3 + $0x8] sm:$0xff]
  %v309 = vld [vmem:[%s3 + $0x10] sm:$0xff]
  %v310 = vld [vmem:[%s3 + $0x18] sm:$0xff]
  %v311 = vld [vmem:[%s3 + $0x20] sm:$0xff]
  %v312 = vld [vmem:[%s3 + $0x28] sm:$0xff]
  %v313 = vld [vmem:[%s3 + $0x30] sm:$0xff]
  %v314 = vld [vmem:[%s3 + $0x38] sm:$0xff]
  %v315 = vld [vmem:[%s3 + $0x40] sm:$0xff]
  %v316 = vld [vmem:[%s3 + $0x48] sm:$0xff]
  %v317 = vld [vmem:[%s3 + $0x50] sm:$0xff]
  %v318 = vld [vmem:[%s3 + $0x58] sm:$0xff]
  %v319 = vld [vmem:[%s3 + $0x60] sm:$0xff]
  %v320 = vld [vmem:[%s3 + $0x68] sm:$0xff]
  %v321 = vld [vmem:[%s3 + $0x70] sm:$0xff]
  %v322 = vld [vmem:[%s3 + $0x78] sm:$0xff]
  %v323 = vadd.f32 %v245, %v307
  %v324 = vadd.f32 %v248, %v308
  %v325 = vadd.f32 %v253, %v309
  %v326 = vadd.f32 %v256, %v310
  %v327 = vadd.f32 %v261, %v311
  %v328 = vadd.f32 %v264, %v312
  %v329 = vadd.f32 %v269, %v313
  %v330 = vadd.f32 %v272, %v314
  %v331 = vadd.f32 %v277, %v315
  %v332 = vadd.f32 %v280, %v316
  %v333 = vadd.f32 %v285, %v317
  %v334 = vadd.f32 %v288, %v318
  %v335 = vadd.f32 %v293, %v319
  %v336 = vadd.f32 %v296, %v320
  %v337 = vadd.f32 %v301, %v321
  %v338 = vadd.f32 %v304, %v322
  %v339 = vmax.f32 %v323, 0.0
  %v340 = vmax.f32 %v324, 0.0
  %v341 = vmax.f32 %v325, 0.0
  %v342 = vmax.f32 %v326, 0.0
  %v343 = vmax.f32 %v327, 0.0
  %v344 = vmax.f32 %v328, 0.0
  %v345 = vmax.f32 %v329, 0.0
  %v346 = vmax.f32 %v330, 0.0
  %v347 = vmax.f32 %v331, 0.0
  %v348 = vmax.f32 %v332, 0.0
  %v349 = vmax.f32 %v333, 0.0
  %v350 = vmax.f32 %v334, 0.0
  %v351 = vmax.f32 %v335, 0.0
  %v352 = vmax.f32 %v336, 0.0
  %v353 = vmax.f32 %v337, 0.0
  %v354 = vmax.f32 %v338, 0.0
  %355 = vst.msk [vmem:[%s4] sm:$0xff] %vm185, %v339
  %356 = vst.msk [vmem:[%s4 + $0x8] sm:$0xff] %vm185, %v340
  %357 = vst.msk [vmem:[%s4 + $0x10] sm:$0xff] %vm185, %v341
  %358 = vst.msk [vmem:[%s4 + $0x18] sm:$0xff] %vm185, %v342
  %359 = vst.msk [vmem:[%s4 + $0x20] sm:$0xff] %vm185, %v343
  %360 = vst.msk [vmem:[%s4 + $0x28] sm:$0xff] %vm185, %v344
  %361 = vst.msk [vmem:[%s4 + $0x30] sm:$0xff] %vm185, %v345
  %362 = vst.msk [vmem:[%s4 + $0x38] sm:$0xff] %vm185, %v346
  %363 = vst.msk [vmem:[%s4 + $0x40] sm:$0xff] %vm185, %v347
  %364 = vst.msk [vmem:[%s4 + $0x48] sm:$0xff] %vm185, %v348
  %365 = vst.msk [vmem:[%s4 + $0x50] sm:$0xff] %vm185, %v349
  %366 = vst.msk [vmem:[%s4 + $0x58] sm:$0xff] %vm185, %v350
  %367 = vst.msk [vmem:[%s4 + $0x60] sm:$0xff] %vm185, %v351
  %368 = vst.msk [vmem:[%s4 + $0x68] sm:$0xff] %vm185, %v352
  %369 = vst.msk [vmem:[%s4 + $0x70] sm:$0xff] %vm185, %v353
  %370 = vst.msk [vmem:[%s4 + $0x78] sm:$0xff] %vm185, %v354
  // Predicated region
  $region18: #{resnet_transformer_forward.30} parent=0 // pred_check
    _
  $region19: #{resnet_transformer_forward.30} parent=0 // pred_check_branch
    %372 = sbr.rel (0) target = $region21
  $region20: #{resnet_transformer_forward.30} parent=0 // pred_region
    _
  $region21: #{resnet_transformer_forward.30} parent=0 // pred_fallthru
    _
  // Predicated region
  $region22: #{resnet_transformer_forward.30} parent=0 // pred_check
    _
  $region23: #{resnet_transformer_forward.30} parent=0 // pred_check_branch
    %374 = sbr.rel (0) target = $region25
  $region24: #{resnet_transformer_forward.30} parent=0 // pred_region
    _
  $region25: #{resnet_transformer_forward.30} parent=0 // pred_fallthru
    _

// kernel: resnet_transformer_forward.28
$region0: #{resnet_transformer_forward.28}
  #allocation0 [shape = 'u32[]', space=smem, size = 0x4, offset = 0x4, fixed_abs, tag = 'smem constant byte address 0x4 - core index']
  #allocation1 [shape = 'u32[144,128]{1,0:T(1,128)}', space=vmem, size = 0x12000, scoped, tag = 'internal scratch']
  %s0 = inlined_call_operand.vmem [shape: bf16[128,144], index: 0, kind: input, shape index: {}]
  %s1 = inlined_call_operand.vmem [shape: bf16[144,16], index: 1, kind: input, shape index: {}]
  %s2 = inlined_call_operand.vmem [shape: f32[1,16], index: 2, kind: input, shape index: {}]
  %s3 = inlined_call_operand.vmem [shape: bf16[128,8], index: 3, kind: input, shape index: {}]
  %s4 = inlined_call_operand.vmem [shape: bf16[8,16], index: 4, kind: input, shape index: {}]
  %s5 = inlined_call_operand.vmem [shape: f32[1,16], index: 5, kind: input, shape index: {}]
  %s6 = inlined_call_operand.vmem [shape: f32[128,16], index: 6, kind: output, shape index: {}]
  %s7 = sld [smem:[#allocation0]]
  $region34: #{resnet_transformer_forward.28} parent=0
    _
  %s9 = ssub.s32 1, %s7
  %s10 = scalar_select 0, %s9, %s7
  // Predicated region
  $region2: #{resnet_transformer_forward.28} parent=0 // pred_check
    _
  $region3: #{resnet_transformer_forward.28} parent=0 // pred_check_branch
    %12 = sbr.rel (0) target = $region5
  $region4: #{resnet_transformer_forward.28} parent=0 // pred_region
    _
  $region5: #{resnet_transformer_forward.28} parent=0 // pred_fallthru
    _
  // Predicated region
  $region6: #{resnet_transformer_forward.28} parent=0 // pred_check
    _
  $region7: #{resnet_transformer_forward.28} parent=0 // pred_check_branch
    %14 = sbr.rel (0) target = $region9
  $region8: #{resnet_transformer_forward.28} parent=0 // pred_region
    _
  $region9: #{resnet_transformer_forward.28} parent=0 // pred_fallthru
    _
  // Predicated region
  $region10: #{resnet_transformer_forward.28} parent=0 // pred_check
    _
  $region11: #{resnet_transformer_forward.28} parent=0 // pred_check_branch
    %16 = sbr.rel (0) target = $region13
  $region12: #{resnet_transformer_forward.28} parent=0 // pred_region
    _
  $region13: #{resnet_transformer_forward.28} parent=0 // pred_fallthru
    _
  // Predicated region
  $region14: #{resnet_transformer_forward.28} parent=0 // pred_check
    _
  $region15: #{resnet_transformer_forward.28} parent=0 // pred_check_branch
    %18 = sbr.rel (0) target = $region17
  $region16: #{resnet_transformer_forward.28} parent=0 // pred_region
    _
  $region17: #{resnet_transformer_forward.28} parent=0 // pred_fallthru
    _
  // Predicated region
  $region18: #{resnet_transformer_forward.28} parent=0 // pred_check
    _
  $region19: #{resnet_transformer_forward.28} parent=0 // pred_check_branch
    %20 = sbr.rel (0) target = $region21
  $region20: #{resnet_transformer_forward.28} parent=0 // pred_region
    _
  $region21: #{resnet_transformer_forward.28} parent=0 // pred_fallthru
    _
  // Predicated region
  $region22: #{resnet_transformer_forward.28} parent=0 // pred_check
    _
  $region23: #{resnet_transformer_forward.28} parent=0 // pred_check_branch
    %22 = sbr.rel (0) target = $region25
  $region24: #{resnet_transformer_forward.28} parent=0 // pred_region
    _
  $region25: #{resnet_transformer_forward.28} parent=0 // pred_fallthru
    _
  %v24 = vld [vmem:[%s0] sm:$0xff]
  %v25 = vld [vmem:[%s0 + $0x8] sm:$0xff]
  %v26 = vld [vmem:[%s0 + $0x10] sm:$0xff]
  %v27 = vld [vmem:[%s0 + $0x18] sm:$0xff]
  %v28 = vld [vmem:[%s0 + $0x20] sm:$0xff]
  %v29 = vld [vmem:[%s0 + $0x28] sm:$0xff]
  %v30 = vld [vmem:[%s0 + $0x30] sm:$0xff]
  %v31 = vld [vmem:[%s0 + $0x38] sm:$0xff]
  %v32 = vld [vmem:[%s0 + $0x40] sm:$0xff]
  %v33 = vld [vmem:[%s0 + $0x48] sm:$0xff]
  %v34 = vld [vmem:[%s0 + $0x50] sm:$0xff]
  %v35 = vld [vmem:[%s0 + $0x58] sm:$0xff]
  %v36 = vld [vmem:[%s0 + $0x60] sm:$0xff]
  %v37 = vld [vmem:[%s0 + $0x68] sm:$0xff]
  %v38 = vld [vmem:[%s0 + $0x70] sm:$0xff]
  %v39 = vld [vmem:[%s0 + $0x78] sm:$0xff]
  %v40 = vld [vmem:[%s1] sm:$0xf]
  %v41 = vld [vmem:[%s1 + $0x4] sm:$0xf]
  %v42 = vld [vmem:[%s1 + $0x8] sm:$0xf]
  %v43 = vld [vmem:[%s1 + $0xc] sm:$0xf]
  %v44 = vld [vmem:[%s1 + $0x10] sm:$0xf]
  %v45 = vld [vmem:[%s1 + $0x14] sm:$0xf]
  %v46 = vld [vmem:[%s1 + $0x18] sm:$0xf]
  %v47 = vld [vmem:[%s1 + $0x1c] sm:$0xf]
  %v48 = vld [vmem:[%s1 + $0x20] sm:$0xf]
  %v49 = vld [vmem:[%s1 + $0x24] sm:$0xf]
  %v50 = vld [vmem:[%s1 + $0x28] sm:$0xf]
  %v51 = vld [vmem:[%s1 + $0x2c] sm:$0xf]
  %v52 = vld [vmem:[%s1 + $0x30] sm:$0xf]
  %v53 = vld [vmem:[%s1 + $0x34] sm:$0xf]
  %v54 = vld [vmem:[%s1 + $0x38] sm:$0xf]
  %v55 = vld [vmem:[%s1 + $0x3c] sm:$0xf]
  %v56 = vld [vmem:[%s1 + $0x40] sm:$0xf]
  %v57 = vld [vmem:[%s1 + $0x44] sm:$0xf]
  %v58 = vld [vmem:[%s2] sm:$0x1]
  %v60 = vlaneseq
  %v61 = vshrl.u32 %v60, 7
  %v62 = vsub.s32 0, %v61
  %v63 = vrot.slane %v58, %v62
  %v81 = vunpack.c.l.b16 %v24
  %v82 = vunpack.c.h.b16 %v24
  %v83 = vunpack.c.l.b16 %v25
  %v84 = vunpack.c.h.b16 %v25
  %v85 = vunpack.c.l.b16 %v26
  %v86 = vunpack.c.h.b16 %v26
  %v87 = vunpack.c.l.b16 %v27
  %v88 = vunpack.c.h.b16 %v27
  %v89 = vunpack.c.l.b16 %v28
  %v90 = vunpack.c.h.b16 %v28
  %v91 = vunpack.c.l.b16 %v29
  %v92 = vunpack.c.h.b16 %v29
  %v93 = vunpack.c.l.b16 %v30
  %v94 = vunpack.c.h.b16 %v30
  %v95 = vunpack.c.l.b16 %v31
  %v96 = vunpack.c.h.b16 %v31
  %v97 = vunpack.c.l.b16 %v32
  %v98 = vunpack.c.h.b16 %v32
  %v99 = vunpack.c.l.b16 %v33
  %v100 = vunpack.c.h.b16 %v33
  %v101 = vunpack.c.l.b16 %v34
  %v102 = vunpack.c.h.b16 %v34
  %v103 = vunpack.c.l.b16 %v35
  %v104 = vunpack.c.h.b16 %v35
  %v105 = vunpack.c.l.b16 %v36
  %v106 = vunpack.c.h.b16 %v36
  %v107 = vunpack.c.l.b16 %v37
  %v108 = vunpack.c.h.b16 %v37
  %v109 = vunpack.c.l.b16 %v38
  %v110 = vunpack.c.h.b16 %v38
  %v111 = vunpack.c.l.b16 %v39
  %v112 = vunpack.c.h.b16 %v39
  %v113 = vpack.c.b16 %v83, %v81
  %v114 = vpack.c.b16 %v84, %v82
  %v115 = vpack.c.b16 %v87, %v85
  %v116 = vpack.c.b16 %v88, %v86
  %v117 = vpack.c.b16 %v91, %v89
  %v118 = vpack.c.b16 %v92, %v90
  %v119 = vpack.c.b16 %v95, %v93
  %v120 = vpack.c.b16 %v96, %v94
  %v121 = vpack.c.b16 %v99, %v97
  %v122 = vpack.c.b16 %v100, %v98
  %v123 = vpack.c.b16 %v103, %v101
  %v124 = vpack.c.b16 %v104, %v102
  %v125 = vpack.c.b16 %v107, %v105
  %v126 = vpack.c.b16 %v108, %v106
  %v127 = vpack.c.b16 %v111, %v109
  %v128 = vpack.c.b16 %v112, %v110
  %v155 = vunpack.c.l.b16 %v40
  %v156 = vunpack.c.l.b16 %v41
  %v157 = vunpack.c.l.b16 %v42
  %v158 = vunpack.c.l.b16 %v43
  %v159 = vunpack.c.l.b16 %v44
  %v160 = vunpack.c.l.b16 %v45
  %v161 = vunpack.c.l.b16 %v46
  %v162 = vunpack.c.l.b16 %v47
  %v163 = vunpack.c.l.b16 %v48
  %v164 = vunpack.c.l.b16 %v49
  %v165 = vunpack.c.l.b16 %v50
  %v166 = vunpack.c.l.b16 %v51
  %v167 = vunpack.c.l.b16 %v52
  %v168 = vunpack.c.l.b16 %v53
  %v169 = vunpack.c.l.b16 %v54
  %v170 = vunpack.c.l.b16 %v55
  %v171 = vunpack.c.l.b16 %v56
  %v172 = vunpack.c.l.b16 %v57
  %v173 = vpack.c.b16 %v156, %v155
  %v174 = vpack.c.b16 %v158, %v157
  %v175 = vpack.c.b16 %v160, %v159
  %v176 = vpack.c.b16 %v162, %v161
  %v177 = vpack.c.b16 %v164, %v163
  %v178 = vpack.c.b16 %v166, %v165
  %v179 = vpack.c.b16 %v168, %v167
  %v180 = vpack.c.b16 %v170, %v169
  %v181 = vpack.c.b16 %v172, %v171
  %vm191 = vcmask 130048
  %v193 = vsel %vm191, %v114, 0
  %v196 = vsel %vm191, %v116, 0
  %v199 = vsel %vm191, %v118, 0
  %v202 = vsel %vm191, %v120, 0
  %v205 = vsel %vm191, %v122, 0
  %v208 = vsel %vm191, %v124, 0
  %v211 = vsel %vm191, %v126, 0
  %v214 = vsel %vm191, %v128, 0
  %216 = vmatprep.subr.bf16.mxu0 0
  %217 = vmatpush1.bf16.msra.mxu0 %v173
  %218 = vmatprep.subr.bf16.mxu0 0
  %219 = vmatpush1.bf16.msra.mxu0 %v174
  %220 = vmatprep.subr.bf16.mxu0 0
  %221 = vmatpush1.bf16.msra.mxu0 %v175
  %222 = vmatprep.subr.bf16.mxu0 0
  %223 = vmatpush1.bf16.msra.mxu0 %v176
  %224 = vmatprep.subr.bf16.mxu0 0
  %225 = vmatpush1.bf16.msra.mxu0 %v177
  %226 = vmatprep.subr.bf16.mxu0 0
  %227 = vmatpush1.bf16.msra.mxu0 %v178
  %228 = vmatprep.subr.bf16.mxu0 0
  %229 = vmatpush1.bf16.msra.mxu0 %v179
  %230 = vmatprep.subr.bf16.mxu0 0
  %231 = vmatpush1.bf16.msra.mxu0 %v180
  %232 = vmatprep.subr.bf16.mxu0 0
  %233 = vmatpush1.bf16.msra.mxu0 %v181
  %234 = vmatprep.subr.bf16.mxu0 0
  %235 = vmatpush1.bf16.msra.mxu0 0
  %236 = vmatprep.subr.bf16.mxu0 0
  %237 = vmatpush1.bf16.msra.mxu0 0
  %238 = vmatprep.subr.bf16.mxu0 0
  %239 = vmatpush1.bf16.msra.mxu0 0
  %240 = vmatprep.subr.bf16.mxu0 0
  %241 = vmatpush1.bf16.msra.mxu0 0
  %242 = vmatprep.subr.bf16.mxu0 0
  %243 = vmatpush1.bf16.msra.mxu0 0
  %244 = vmatprep.subr.bf16.mxu0 0
  %245 = vmatpush1.bf16.msra.mxu0 0
  %246 = vmatprep.subr.bf16.mxu0 0
  %247 = vmatpush1.bf16.msra.mxu0 0
  %248 = vmatprep.mubr.bf16.mxu0 %v193
  %249 = vmatmul.mubr.bf16.gmra.mrb[0].mxu0 %v113
  %v250 = vpop.f32.mrb[0].mxu0
  %v251 = vadd.f32 %v63, %v250
  %v252 = vpop.f32.mrb[0].mxu0
  %v253 = vpop.f32.mrb[0].mxu0
  %v254 = vadd.f32 %v63, %v253
  %v255 = vpop.f32.mrb[0].mxu0
  %256 = vmatprep.mubr.bf16.mxu0 %v196
  %257 = vmatmul.mubr.bf16.gmra.mrb[0].mxu0 %v115
  %v258 = vpop.f32.mrb[0].mxu0
  %v259 = vadd.f32 %v63, %v258
  %v260 = vpop.f32.mrb[0].mxu0
  %v261 = vpop.f32.mrb[0].mxu0
  %v262 = vadd.f32 %v63, %v261
  %v263 = vpop.f32.mrb[0].mxu0
  %264 = vmatprep.mubr.bf16.mxu0 %v199
  %265 = vmatmul.mubr.bf16.gmra.mrb[0].mxu0 %v117
  %v266 = vpop.f32.mrb[0].mxu0
  %v267 = vadd.f32 %v63, %v266
  %v268 = vpop.f32.mrb[0].mxu0
  %v269 = vpop.f32.mrb[0].mxu0
  %v270 = vadd.f32 %v63, %v269
  %v271 = vpop.f32.mrb[0].mxu0
  %272 = vmatprep.mubr.bf16.mxu0 %v202
  %273 = vmatmul.mubr.bf16.gmra.mrb[0].mxu0 %v119
  %v274 = vpop.f32.mrb[0].mxu0
  %v275 = vadd.f32 %v63, %v274
  %v276 = vpop.f32.mrb[0].mxu0
  %v277 = vpop.f32.mrb[0].mxu0
  %v278 = vadd.f32 %v63, %v277
  %v279 = vpop.f32.mrb[0].mxu0
  %280 = vmatprep.mubr.bf16.mxu0 %v205
  %281 = vmatmul.mubr.bf16.gmra.mrb[0].mxu0 %v121
  %v282 = vpop.f32.mrb[0].mxu0
  %v283 = vadd.f32 %v63, %v282
  %v284 = vpop.f32.mrb[0].mxu0
  %v285 = vpop.f32.mrb[0].mxu0
  %v286 = vadd.f32 %v63, %v285
  %v287 = vpop.f32.mrb[0].mxu0
  %288 = vmatprep.mubr.bf16.mxu0 %v208
  %289 = vmatmul.mubr.bf16.gmra.mrb[0].mxu0 %v123
  %v290 = vpop.f32.mrb[0].mxu0
  %v291 = vadd.f32 %v63, %v290
  %v292 = vpop.f32.mrb[0].mxu0
  %v293 = vpop.f32.mrb[0].mxu0
  %v294 = vadd.f32 %v63, %v293
  %v295 = vpop.f32.mrb[0].mxu0
  %296 = vmatprep.mubr.bf16.mxu0 %v211
  %297 = vmatmul.mubr.bf16.gmra.mrb[0].mxu0 %v125
  %v298 = vpop.f32.mrb[0].mxu0
  %v299 = vadd.f32 %v63, %v298
  %v300 = vpop.f32.mrb[0].mxu0
  %v301 = vpop.f32.mrb[0].mxu0
  %v302 = vadd.f32 %v63, %v301
  %v303 = vpop.f32.mrb[0].mxu0
  %304 = vmatprep.mubr.bf16.mxu0 %v214
  %305 = vmatmul.mubr.bf16.gmra.mrb[0].mxu0 %v127
  %v306 = vpop.f32.mrb[0].mxu0
  %v307 = vadd.f32 %v63, %v306
  %v308 = vpop.f32.mrb[0].mxu0
  %v309 = vpop.f32.mrb[0].mxu0
  %v310 = vadd.f32 %v63, %v309
  %v311 = vpop.f32.mrb[0].mxu0
  %312 = vdwg.mxu0
  %v313 = vld [vmem:[%s3] sm:$0xf]
  %v314 = vld [vmem:[%s3 + $0x4] sm:$0xf]
  %v315 = vld [vmem:[%s3 + $0x8] sm:$0xf]
  %v316 = vld [vmem:[%s3 + $0xc] sm:$0xf]
  %v317 = vld [vmem:[%s3 + $0x10] sm:$0xf]
  %v318 = vld [vmem:[%s3 + $0x14] sm:$0xf]
  %v319 = vld [vmem:[%s3 + $0x18] sm:$0xf]
  %v320 = vld [vmem:[%s3 + $0x1c] sm:$0xf]
  %v321 = vld [vmem:[%s3 + $0x20] sm:$0xf]
  %v322 = vld [vmem:[%s3 + $0x24] sm:$0xf]
  %v323 = vld [vmem:[%s3 + $0x28] sm:$0xf]
  %v324 = vld [vmem:[%s3 + $0x2c] sm:$0xf]
  %v325 = vld [vmem:[%s3 + $0x30] sm:$0xf]
  %v326 = vld [vmem:[%s3 + $0x34] sm:$0xf]
  %v327 = vld [vmem:[%s3 + $0x38] sm:$0xf]
  %v328 = vld [vmem:[%s3 + $0x3c] sm:$0xf]
  %v329 = vld [vmem:[%s4] sm:$0xf]
  %v346 = vunpack.c.l.b16 %v313
  %v347 = vunpack.c.l.b16 %v314
  %v348 = vunpack.c.l.b16 %v315
  %v349 = vunpack.c.l.b16 %v316
  %v350 = vunpack.c.l.b16 %v317
  %v351 = vunpack.c.l.b16 %v318
  %v352 = vunpack.c.l.b16 %v319
  %v353 = vunpack.c.l.b16 %v320
  %v354 = vunpack.c.l.b16 %v321
  %v355 = vunpack.c.l.b16 %v322
  %v356 = vunpack.c.l.b16 %v323
  %v357 = vunpack.c.l.b16 %v324
  %v358 = vunpack.c.l.b16 %v325
  %v359 = vunpack.c.l.b16 %v326
  %v360 = vunpack.c.l.b16 %v327
  %v361 = vunpack.c.l.b16 %v328
  %v362 = vpack.c.b16 %v347, %v346
  %v363 = vpack.c.b16 %v349, %v348
  %v364 = vpack.c.b16 %v351, %v350
  %v365 = vpack.c.b16 %v353, %v352
  %v366 = vpack.c.b16 %v355, %v354
  %v367 = vpack.c.b16 %v357, %v356
  %v368 = vpack.c.b16 %v359, %v358
  %v369 = vpack.c.b16 %v361, %v360
  %vm370 = vcmask 64512
  %v372 = vsel %vm370, %v362, 0
  %v375 = vsel %vm370, %v363, 0
  %v378 = vsel %vm370, %v364, 0
  %v381 = vsel %vm370, %v365, 0
  %v384 = vsel %vm370, %v366, 0
  %v387 = vsel %vm370, %v367, 0
  %v390 = vsel %vm370, %v368, 0
  %v393 = vsel %vm370, %v369, 0
  %vm395 = vcmask 1043456
  %v397 = vsel %vm395, %v329, 0
  %399 = vmatprep.subr.bf16.mxu0 0
  %400 = vmatpush1.bf16.msra.mxu0 %v397
  %401 = vmatprep.subr.bf16.mxu0 0
  %402 = vmatpush1.bf16.msra.mxu0 0
  %403 = vmatprep.subr.bf16.mxu0 0
  %404 = vmatpush1.bf16.msra.mxu0 0
  %405 = vmatprep.subr.bf16.mxu0 0
  %406 = vmatpush1.bf16.msra.mxu0 0
  %407 = vmatprep.subr.bf16.mxu0 0
  %408 = vmatpush1.bf16.msra.mxu0 0
  %409 = vmatprep.subr.bf16.mxu0 0
  %410 = vmatpush1.bf16.msra.mxu0 0
  %411 = vmatprep.subr.bf16.mxu0 0
  %412 = vmatpush1.bf16.msra.mxu0 0
  %413 = vmatprep.subr.bf16.mxu0 0
  %414 = vmatpush1.bf16.msra.mxu0 0
  %415 = vmatprep.subr.bf16.mxu0 0
  %416 = vmatpush1.bf16.msra.mxu0 0
  %417 = vmatprep.subr.bf16.mxu0 0
  %418 = vmatpush1.bf16.msra.mxu0 0
  %419 = vmatprep.subr.bf16.mxu0 0
  %420 = vmatpush1.bf16.msra.mxu0 0
  %421 = vmatprep.subr.bf16.mxu0 0
  %422 = vmatpush1.bf16.msra.mxu0 0
  %423 = vmatprep.subr.bf16.mxu0 0
  %424 = vmatpush1.bf16.msra.mxu0 0
  %425 = vmatprep.subr.bf16.mxu0 0
  %426 = vmatpush1.bf16.msra.mxu0 0
  %427 = vmatprep.subr.bf16.mxu0 0
  %428 = vmatpush1.bf16.msra.mxu0 0
  %429 = vmatprep.subr.bf16.mxu0 0
  %430 = vmatpush1.bf16.msra.mxu0 0
  %431 = vmatprep.mubr.bf16.mxu0 0
  %432 = vmatmul.mubr.bf16.gmra.mrb[0].mxu0 %v372
  %v433 = vpop.f32.mrb[0].mxu0
  %v434 = vadd.f32 0.0, %v433
  %v435 = vpop.f32.mrb[0].mxu0
  %v436 = vpop.f32.mrb[0].mxu0
  %v437 = vadd.f32 0.0, %v436
  %v438 = vpop.f32.mrb[0].mxu0
  %439 = vmatprep.mubr.bf16.mxu0 0
  %440 = vmatmul.mubr.bf16.gmra.mrb[0].mxu0 %v375
  %v441 = vpop.f32.mrb[0].mxu0
  %v442 = vadd.f32 0.0, %v441
  %v443 = vpop.f32.mrb[0].mxu0
  %v444 = vpop.f32.mrb[0].mxu0
  %v445 = vadd.f32 0.0, %v444
  %v446 = vpop.f32.mrb[0].mxu0
  %447 = vmatprep.mubr.bf16.mxu0 0
  %448 = vmatmul.mubr.bf16.gmra.mrb[0].mxu0 %v378
  %v449 = vpop.f32.mrb[0].mxu0
  %v450 = vadd.f32 0.0, %v449
  %v451 = vpop.f32.mrb[0].mxu0
  %v452 = vpop.f32.mrb[0].mxu0
  %v453 = vadd.f32 0.0, %v452
  %v454 = vpop.f32.mrb[0].mxu0
  %455 = vmatprep.mubr.bf16.mxu0 0
  %456 = vmatmul.mubr.bf16.gmra.mrb[0].mxu0 %v381
  %v457 = vpop.f32.mrb[0].mxu0
  %v458 = vadd.f32 0.0, %v457
  %v459 = vpop.f32.mrb[0].mxu0
  %v460 = vpop.f32.mrb[0].mxu0
  %v461 = vadd.f32 0.0, %v460
  %v462 = vpop.f32.mrb[0].mxu0
  %463 = vmatprep.mubr.bf16.mxu0 0
  %464 = vmatmul.mubr.bf16.gmra.mrb[0].mxu0 %v384
  %v465 = vpop.f32.mrb[0].mxu0
  %v466 = vadd.f32 0.0, %v465
  %v467 = vpop.f32.mrb[0].mxu0
  %v468 = vpop.f32.mrb[0].mxu0
  %v469 = vadd.f32 0.0, %v468
  %v470 = vpop.f32.mrb[0].mxu0
  %471 = vmatprep.mubr.bf16.mxu0 0
  %472 = vmatmul.mubr.bf16.gmra.mrb[0].mxu0 %v387
  %v473 = vpop.f32.mrb[0].mxu0
  %v474 = vadd.f32 0.0, %v473
  %v475 = vpop.f32.mrb[0].mxu0
  %v476 = vpop.f32.mrb[0].mxu0
  %v477 = vadd.f32 0.0, %v476
  %v478 = vpop.f32.mrb[0].mxu0
  %479 = vmatprep.mubr.bf16.mxu0 0
  %480 = vmatmul.mubr.bf16.gmra.mrb[0].mxu0 %v390
  %v481 = vpop.f32.mrb[0].mxu0
  %v482 = vadd.f32 0.0, %v481
  %v483 = vpop.f32.mrb[0].mxu0
  %v484 = vpop.f32.mrb[0].mxu0
  %v485 = vadd.f32 0.0, %v484
  %v486 = vpop.f32.mrb[0].mxu0
  %487 = vmatprep.mubr.bf16.mxu0 0
  %488 = vmatmul.mubr.bf16.gmra.mrb[0].mxu0 %v393
  %v489 = vpop.f32.mrb[0].mxu0
  %v490 = vadd.f32 0.0, %v489
  %v491 = vpop.f32.mrb[0].mxu0
  %v492 = vpop.f32.mrb[0].mxu0
  %v493 = vadd.f32 0.0, %v492
  %v494 = vpop.f32.mrb[0].mxu0
  %495 = vdwg.mxu0
  %v496 = vadd.f32 %v251, %v434
  %v497 = vadd.f32 %v254, %v437
  %v498 = vadd.f32 %v259, %v442
  %v499 = vadd.f32 %v262, %v445
  %v500 = vadd.f32 %v267, %v450
  %v501 = vadd.f32 %v270, %v453
  %v502 = vadd.f32 %v275, %v458
  %v503 = vadd.f32 %v278, %v461
  %v504 = vadd.f32 %v283, %v466
  %v505 = vadd.f32 %v286, %v469
  %v506 = vadd.f32 %v291, %v474
  %v507 = vadd.f32 %v294, %v477
  %v508 = vadd.f32 %v299, %v482
  %v509 = vadd.f32 %v302, %v485
  %v510 = vadd.f32 %v307, %v490
  %v511 = vadd.f32 %v310, %v493
  %v512 = vld [vmem:[%s5] sm:$0x1]
  %v514 = vlaneseq
  %v515 = vshrl.u32 %v514, 7
  %v516 = vsub.s32 0, %v515
  %v517 = vrot.slane %v512, %v516
  %v519 = vadd.f32 %v496, %v517
  %v520 = vadd.f32 %v497, %v517
  %v521 = vadd.f32 %v498, %v517
  %v522 = vadd.f32 %v499, %v517
  %v523 = vadd.f32 %v500, %v517
  %v524 = vadd.f32 %v501, %v517
  %v525 = vadd.f32 %v502, %v517
  %v526 = vadd.f32 %v503, %v517
  %v527 = vadd.f32 %v504, %v517
  %v528 = vadd.f32 %v505, %v517
  %v529 = vadd.f32 %v506, %v517
  %v530 = vadd.f32 %v507, %v517
  %v531 = vadd.f32 %v508, %v517
  %v532 = vadd.f32 %v509, %v517
  %v533 = vadd.f32 %v510, %v517
  %v534 = vadd.f32 %v511, %v517
  %v535 = vmax.f32 %v519, 0.0
  %v536 = vmax.f32 %v520, 0.0
  %v537 = vmax.f32 %v521, 0.0
  %v538 = vmax.f32 %v522, 0.0
  %v539 = vmax.f32 %v523, 0.0
  %v540 = vmax.f32 %v524, 0.0
  %v541 = vmax.f32 %v525, 0.0
  %v542 = vmax.f32 %v526, 0.0
  %v543 = vmax.f32 %v527, 0.0
  %v544 = vmax.f32 %v528, 0.0
  %v545 = vmax.f32 %v529, 0.0
  %v546 = vmax.f32 %v530, 0.0
  %v547 = vmax.f32 %v531, 0.0
  %v548 = vmax.f32 %v532, 0.0
  %v549 = vmax.f32 %v533, 0.0
  %v550 = vmax.f32 %v534, 0.0
  %551 = vst.msk [vmem:[%s6] sm:$0xff] %vm191, %v535
  %552 = vst.msk [vmem:[%s6 + $0x8] sm:$0xff] %vm191, %v536
  %553 = vst.msk [vmem:[%s6 + $0x10] sm:$0xff] %vm191, %v537
  %554 = vst.msk [vmem:[%s6 + $0x18] sm:$0xff] %vm191, %v538
  %555 = vst.msk [vmem:[%s6 + $0x20] sm:$0xff] %vm191, %v539
  %556 = vst.msk [vmem:[%s6 + $0x28] sm:$0xff] %vm191, %v540
  %557 = vst.msk [vmem:[%s6 + $0x30] sm:$0xff] %vm191, %v541
  %558 = vst.msk [vmem:[%s6 + $0x38] sm:$0xff] %vm191, %v542
  %559 = vst.msk [vmem:[%s6 + $0x40] sm:$0xff] %vm191, %v543
  %560 = vst.msk [vmem:[%s6 + $0x48] sm:$0xff] %vm191, %v544
  %561 = vst.msk [vmem:[%s6 + $0x50] sm:$0xff] %vm191, %v545
  %562 = vst.msk [vmem:[%s6 + $0x58] sm:$0xff] %vm191, %v546
  %563 = vst.msk [vmem:[%s6 + $0x60] sm:$0xff] %vm191, %v547
  %564 = vst.msk [vmem:[%s6 + $0x68] sm:$0xff] %vm191, %v548
  %565 = vst.msk [vmem:[%s6 + $0x70] sm:$0xff] %vm191, %v549
  %566 = vst.msk [vmem:[%s6 + $0x78] sm:$0xff] %vm191, %v550
  // Predicated region
  $region26: #{resnet_transformer_forward.28} parent=0 // pred_check
    _
  $region27: #{resnet_transformer_forward.28} parent=0 // pred_check_branch
    %568 = sbr.rel (0) target = $region29
  $region28: #{resnet_transformer_forward.28} parent=0 // pred_region
    _
  $region29: #{resnet_transformer_forward.28} parent=0 // pred_fallthru
    _
  // Predicated region
  $region30: #{resnet_transformer_forward.28} parent=0 // pred_check
    _
  $region31: #{resnet_transformer_forward.28} parent=0 // pred_check_branch
    %570 = sbr.rel (0) target = $region33
  $region32: #{resnet_transformer_forward.28} parent=0 // pred_region
    _
  $region33: #{resnet_transformer_forward.28} parent=0 // pred_fallthru
    _

// kernel: resnet_transformer_forward.31
$region0: #{resnet_transformer_forward.31}
  #allocation0 [shape = 'u32[]', space=smem, size = 0x4, offset = 0x4, fixed_abs, tag = 'smem constant byte address 0x4 - core index']
  #allocation1 [shape = 'u32[144,128]{1,0:T(1,128)}', space=vmem, size = 0x12000, scoped, tag = 'internal scratch']
  %s0 = inlined_call_operand.vmem [shape: bf16[32,144], index: 0, kind: input, shape index: {}]
  %s1 = inlined_call_operand.vmem [shape: bf16[144,32], index: 1, kind: input, shape index: {}]
  %s2 = inlined_call_operand.vmem [shape: f32[1,32], index: 2, kind: input, shape index: {}]
  %s3 = inlined_call_operand.vmem [shape: f32[32,32], index: 3, kind: output, shape index: {}]
  %s4 = sld [smem:[#allocation0]]
  $region22: #{resnet_transformer_forward.31} parent=0
    _
  %s6 = ssub.s32 1, %s4
  %s7 = scalar_select 0, %s6, %s4
  // Predicated region
  $region2: #{resnet_transformer_forward.31} parent=0 // pred_check
    _
  $region3: #{resnet_transformer_forward.31} parent=0 // pred_check_branch
    %9 = sbr.rel (0) target = $region5
  $region4: #{resnet_transformer_forward.31} parent=0 // pred_region
    _
  $region5: #{resnet_transformer_forward.31} parent=0 // pred_fallthru
    _
  // Predicated region
  $region6: #{resnet_transformer_forward.31} parent=0 // pred_check
    _
  $region7: #{resnet_transformer_forward.31} parent=0 // pred_check_branch
    %11 = sbr.rel (0) target = $region9
  $region8: #{resnet_transformer_forward.31} parent=0 // pred_region
    _
  $region9: #{resnet_transformer_forward.31} parent=0 // pred_fallthru
    _
  // Predicated region
  $region10: #{resnet_transformer_forward.31} parent=0 // pred_check
    _
  $region11: #{resnet_transformer_forward.31} parent=0 // pred_check_branch
    %13 = sbr.rel (0) target = $region13
  $region12: #{resnet_transformer_forward.31} parent=0 // pred_region
    _
  $region13: #{resnet_transformer_forward.31} parent=0 // pred_fallthru
    _
  %v15 = vld [vmem:[%s0] sm:$0xff]
  %v16 = vld [vmem:[%s0 + $0x8] sm:$0xff]
  %v17 = vld [vmem:[%s0 + $0x10] sm:$0xff]
  %v18 = vld [vmem:[%s0 + $0x18] sm:$0xff]
  %v19 = vld [vmem:[%s1] sm:$0xf]
  %v20 = vld [vmem:[%s1 + $0x4] sm:$0xf]
  %v21 = vld [vmem:[%s1 + $0x8] sm:$0xf]
  %v22 = vld [vmem:[%s1 + $0xc] sm:$0xf]
  %v23 = vld [vmem:[%s1 + $0x10] sm:$0xf]
  %v24 = vld [vmem:[%s1 + $0x14] sm:$0xf]
  %v25 = vld [vmem:[%s1 + $0x18] sm:$0xf]
  %v26 = vld [vmem:[%s1 + $0x1c] sm:$0xf]
  %v27 = vld [vmem:[%s1 + $0x20] sm:$0xf]
  %v28 = vld [vmem:[%s1 + $0x24] sm:$0xf]
  %v29 = vld [vmem:[%s1 + $0x28] sm:$0xf]
  %v30 = vld [vmem:[%s1 + $0x2c] sm:$0xf]
  %v31 = vld [vmem:[%s1 + $0x30] sm:$0xf]
  %v32 = vld [vmem:[%s1 + $0x34] sm:$0xf]
  %v33 = vld [vmem:[%s1 + $0x38] sm:$0xf]
  %v34 = vld [vmem:[%s1 + $0x3c] sm:$0xf]
  %v35 = vld [vmem:[%s1 + $0x40] sm:$0xf]
  %v36 = vld [vmem:[%s1 + $0x44] sm:$0xf]
  %v37 = vld [vmem:[%s2] sm:$0x1]
  %v39 = vlaneseq
  %v40 = vshrl.u32 %v39, 7
  %v41 = vsub.s32 0, %v40
  %v42 = vrot.slane %v37, %v41
  %v48 = vunpack.c.l.b16 %v15
  %v49 = vunpack.c.h.b16 %v15
  %v50 = vunpack.c.l.b16 %v16
  %v51 = vunpack.c.h.b16 %v16
  %v52 = vunpack.c.l.b16 %v17
  %v53 = vunpack.c.h.b16 %v17
  %v54 = vunpack.c.l.b16 %v18
  %v55 = vunpack.c.h.b16 %v18
  %v56 = vpack.c.b16 %v50, %v48
  %v57 = vpack.c.b16 %v51, %v49
  %v58 = vpack.c.b16 %v54, %v52
  %v59 = vpack.c.b16 %v55, %v53
  %v80 = vunpack.c.l.b16 %v19
  %v81 = vunpack.c.l.b16 %v20
  %v82 = vunpack.c.l.b16 %v21
  %v83 = vunpack.c.l.b16 %v22
  %v84 = vunpack.c.l.b16 %v23
  %v85 = vunpack.c.l.b16 %v24
  %v86 = vunpack.c.l.b16 %v25
  %v87 = vunpack.c.l.b16 %v26
  %v88 = vunpack.c.l.b16 %v27
  %v89 = vunpack.c.l.b16 %v28
  %v90 = vunpack.c.l.b16 %v29
  %v91 = vunpack.c.l.b16 %v30
  %v92 = vunpack.c.l.b16 %v31
  %v93 = vunpack.c.l.b16 %v32
  %v94 = vunpack.c.l.b16 %v33
  %v95 = vunpack.c.l.b16 %v34
  %v96 = vunpack.c.l.b16 %v35
  %v97 = vunpack.c.l.b16 %v36
  %v98 = vpack.c.b16 %v81, %v80
  %v99 = vpack.c.b16 %v83, %v82
  %v100 = vpack.c.b16 %v85, %v84
  %v101 = vpack.c.b16 %v87, %v86
  %v102 = vpack.c.b16 %v89, %v88
  %v103 = vpack.c.b16 %v91, %v90
  %v104 = vpack.c.b16 %v93, %v92
  %v105 = vpack.c.b16 %v95, %v94
  %v106 = vpack.c.b16 %v97, %v96
  %vm116 = vcmask 130048
  %v118 = vsel %vm116, %v57, 0
  %v121 = vsel %vm116, %v59, 0
  %123 = vmatprep.subr.bf16.mxu0 0
  %124 = vmatpush1.bf16.msra.mxu0 %v98
  %125 = vmatprep.subr.bf16.mxu0 0
  %126 = vmatpush1.bf16.msra.mxu0 %v99
  %127 = vmatprep.subr.bf16.mxu0 0
  %128 = vmatpush1.bf16.msra.mxu0 %v100
  %129 = vmatprep.subr.bf16.mxu0 0
  %130 = vmatpush1.bf16.msra.mxu0 %v101
  %131 = vmatprep.subr.bf16.mxu0 0
  %132 = vmatpush1.bf16.msra.mxu0 %v102
  %133 = vmatprep.subr.bf16.mxu0 0
  %134 = vmatpush1.bf16.msra.mxu0 %v103
  %135 = vmatprep.subr.bf16.mxu0 0
  %136 = vmatpush1.bf16.msra.mxu0 %v104
  %137 = vmatprep.subr.bf16.mxu0 0
  %138 = vmatpush1.bf16.msra.mxu0 %v105
  %139 = vmatprep.subr.bf16.mxu0 0
  %140 = vmatpush1.bf16.msra.mxu0 %v106
  %141 = vmatprep.subr.bf16.mxu0 0
  %142 = vmatpush1.bf16.msra.mxu0 0
  %143 = vmatprep.subr.bf16.mxu0 0
  %144 = vmatpush1.bf16.msra.mxu0 0
  %145 = vmatprep.subr.bf16.mxu0 0
  %146 = vmatpush1.bf16.msra.mxu0 0
  %147 = vmatprep.subr.bf16.mxu0 0
  %148 = vmatpush1.bf16.msra.mxu0 0
  %149 = vmatprep.subr.bf16.mxu0 0
  %150 = vmatpush1.bf16.msra.mxu0 0
  %151 = vmatprep.subr.bf16.mxu0 0
  %152 = vmatpush1.bf16.msra.mxu0 0
  %153 = vmatprep.subr.bf16.mxu0 0
  %154 = vmatpush1.bf16.msra.mxu0 0
  %155 = vmatprep.mubr.bf16.mxu0 %v118
  %156 = vmatmul.mubr.bf16.gmra.mrb[0].mxu0 %v56
  %v157 = vpop.f32.mrb[0].mxu0
  %v158 = vadd.f32 %v42, %v157
  %v159 = vpop.f32.mrb[0].mxu0
  %v160 = vpop.f32.mrb[0].mxu0
  %v161 = vadd.f32 %v42, %v160
  %v162 = vpop.f32.mrb[0].mxu0
  %163 = vmatprep.mubr.bf16.mxu0 %v121
  %164 = vmatmul.mubr.bf16.gmra.mrb[0].mxu0 %v58
  %v165 = vpop.f32.mrb[0].mxu0
  %v166 = vadd.f32 %v42, %v165
  %v167 = vpop.f32.mrb[0].mxu0
  %v168 = vpop.f32.mrb[0].mxu0
  %v169 = vadd.f32 %v42, %v168
  %v170 = vpop.f32.mrb[0].mxu0
  %171 = vdwg.mxu0
  %v172 = vmax.f32 %v158, 0.0
  %v173 = vmax.f32 %v161, 0.0
  %v174 = vmax.f32 %v166, 0.0
  %v175 = vmax.f32 %v169, 0.0
  %vm176 = vcmask 261120
  %177 = vst.msk [vmem:[%s3] sm:$0xff] %vm176, %v172
  %178 = vst.msk [vmem:[%s3 + $0x8] sm:$0xff] %vm176, %v173
  %179 = vst.msk [vmem:[%s3 + $0x10] sm:$0xff] %vm176, %v174
  %180 = vst.msk [vmem:[%s3 + $0x18] sm:$0xff] %vm176, %v175
  // Predicated region
  $region14: #{resnet_transformer_forward.31} parent=0 // pred_check
    _
  $region15: #{resnet_transformer_forward.31} parent=0 // pred_check_branch
    %182 = sbr.rel (0) target = $region17
  $region16: #{resnet_transformer_forward.31} parent=0 // pred_region
    _
  $region17: #{resnet_transformer_forward.31} parent=0 // pred_fallthru
    _
  // Predicated region
  $region18: #{resnet_transformer_forward.31} parent=0 // pred_check
    _
  $region19: #{resnet_transformer_forward.31} parent=0 // pred_check_branch
    %184 = sbr.rel (0) target = $region21
  $region20: #{resnet_transformer_forward.31} parent=0 // pred_region
    _
  $region21: #{resnet_transformer_forward.31} parent=0 // pred_fallthru
    _

// kernel: resnet_transformer_forward.34
$region0: #{resnet_transformer_forward.34}
  #allocation0 [shape = 'u32[]', space=smem, size = 0x4, offset = 0x4, fixed_abs, tag = 'smem constant byte address 0x4 - core index']
  #allocation1 [shape = 'u32[144,128]{1,0:T(1,128)}', space=vmem, size = 0x12000, scoped, tag = 'internal scratch']
  %s0 = inlined_call_operand.vmem [shape: bf16[32,288], index: 0, kind: input, shape index: {}]
  %s1 = inlined_call_operand.vmem [shape: bf16[288,32], index: 1, kind: input, shape index: {}]
  %s2 = inlined_call_operand.vmem [shape: f32[1,32], index: 2, kind: input, shape index: {}]
  %s3 = inlined_call_operand.vmem [shape: f32[32,32], index: 3, kind: input, shape index: {}]
  %s4 = inlined_call_operand.vmem [shape: f32[32,32], index: 4, kind: output, shape index: {}]
  %s5 = sld [smem:[#allocation0]]
  $region26: #{resnet_transformer_forward.34} parent=0
    _
  %s7 = ssub.s32 1, %s5
  %s8 = scalar_select 0, %s7, %s5
  // Predicated region
  $region2: #{resnet_transformer_forward.34} parent=0 // pred_check
    _
  $region3: #{resnet_transformer_forward.34} parent=0 // pred_check_branch
    %10 = sbr.rel (0) target = $region5
  $region4: #{resnet_transformer_forward.34} parent=0 // pred_region
    _
  $region5: #{resnet_transformer_forward.34} parent=0 // pred_fallthru
    _
  // Predicated region
  $region6: #{resnet_transformer_forward.34} parent=0 // pred_check
    _
  $region7: #{resnet_transformer_forward.34} parent=0 // pred_check_branch
    %12 = sbr.rel (0) target = $region9
  $region8: #{resnet_transformer_forward.34} parent=0 // pred_region
    _
  $region9: #{resnet_transformer_forward.34} parent=0 // pred_fallthru
    _
  // Predicated region
  $region10: #{resnet_transformer_forward.34} parent=0 // pred_check
    _
  $region11: #{resnet_transformer_forward.34} parent=0 // pred_check_branch
    %14 = sbr.rel (0) target = $region13
  $region12: #{resnet_transformer_forward.34} parent=0 // pred_region
    _
  $region13: #{resnet_transformer_forward.34} parent=0 // pred_fallthru
    _
  // Predicated region
  $region14: #{resnet_transformer_forward.34} parent=0 // pred_check
    _
  $region15: #{resnet_transformer_forward.34} parent=0 // pred_check_branch
    %16 = sbr.rel (0) target = $region17
  $region16: #{resnet_transformer_forward.34} parent=0 // pred_region
    _
  $region17: #{resnet_transformer_forward.34} parent=0 // pred_fallthru
    _
  %v18 = vld [vmem:[%s0] sm:$0xff]
  %v19 = vld [vmem:[%s0 + $0x8] sm:$0xf]
  %v20 = vld [vmem:[%s0 + $0xc] sm:$0xff]
  %v21 = vld [vmem:[%s0 + $0x14] sm:$0xf]
  %v22 = vld [vmem:[%s0 + $0x18] sm:$0xff]
  %v23 = vld [vmem:[%s0 + $0x20] sm:$0xf]
  %v24 = vld [vmem:[%s0 + $0x24] sm:$0xff]
  %v25 = vld [vmem:[%s0 + $0x2c] sm:$0xf]
  %v26 = vld [vmem:[%s1] sm:$0xf]
  %v27 = vld [vmem:[%s1 + $0x4] sm:$0xf]
  %v28 = vld [vmem:[%s1 + $0x8] sm:$0xf]
  %v29 = vld [vmem:[%s1 + $0xc] sm:$0xf]
  %v30 = vld [vmem:[%s1 + $0x10] sm:$0xf]
  %v31 = vld [vmem:[%s1 + $0x14] sm:$0xf]
  %v32 = vld [vmem:[%s1 + $0x18] sm:$0xf]
  %v33 = vld [vmem:[%s1 + $0x1c] sm:$0xf]
  %v34 = vld [vmem:[%s1 + $0x20] sm:$0xf]
  %v35 = vld [vmem:[%s1 + $0x24] sm:$0xf]
  %v36 = vld [vmem:[%s1 + $0x28] sm:$0xf]
  %v37 = vld [vmem:[%s1 + $0x2c] sm:$0xf]
  %v38 = vld [vmem:[%s1 + $0x30] sm:$0xf]
  %v39 = vld [vmem:[%s1 + $0x34] sm:$0xf]
  %v40 = vld [vmem:[%s1 + $0x38] sm:$0xf]
  %v41 = vld [vmem:[%s1 + $0x3c] sm:$0xf]
  %v42 = vld [vmem:[%s1 + $0x40] sm:$0xf]
  %v43 = vld [vmem:[%s1 + $0x44] sm:$0xf]
  %v44 = vld [vmem:[%s1 + $0x48] sm:$0xf]
  %v45 = vld [vmem:[%s1 + $0x4c] sm:$0xf]
  %v46 = vld [vmem:[%s1 + $0x50] sm:$0xf]
  %v47 = vld [vmem:[%s1 + $0x54] sm:$0xf]
  %v48 = vld [vmem:[%s1 + $0x58] sm:$0xf]
  %v49 = vld [vmem:[%s1 + $0x5c] sm:$0xf]
  %v50 = vld [vmem:[%s1 + $0x60] sm:$0xf]
  %v51 = vld [vmem:[%s1 + $0x64] sm:$0xf]
  %v52 = vld [vmem:[%s1 + $0x68] sm:$0xf]
  %v53 = vld [vmem:[%s1 + $0x6c] sm:$0xf]
  %v54 = vld [vmem:[%s1 + $0x70] sm:$0xf]
  %v55 = vld [vmem:[%s1 + $0x74] sm:$0xf]
  %v56 = vld [vmem:[%s1 + $0x78] sm:$0xf]
  %v57 = vld [vmem:[%s1 + $0x7c] sm:$0xf]
  %v58 = vld [vmem:[%s1 + $0x80] sm:$0xf]
  %v59 = vld [vmem:[%s1 + $0x84] sm:$0xf]
  %v60 = vld [vmem:[%s1 + $0x88] sm:$0xf]
  %v61 = vld [vmem:[%s1 + $0x8c] sm:$0xf]
  %v62 = vld [vmem:[%s2] sm:$0x1]
  %v64 = vlaneseq
  %v65 = vshrl.u32 %v64, 7
  %v66 = vsub.s32 0, %v65
  %v67 = vrot.slane %v62, %v66
  %v77 = vunpack.c.l.b16 %v18
  %v78 = vunpack.c.h.b16 %v18
  %v79 = vunpack.c.l.b16 %v19
  %v80 = vunpack.c.l.b16 %v20
  %v81 = vunpack.c.h.b16 %v20
  %v82 = vunpack.c.l.b16 %v21
  %v83 = vunpack.c.l.b16 %v22
  %v84 = vunpack.c.h.b16 %v22
  %v85 = vunpack.c.l.b16 %v23
  %v86 = vunpack.c.l.b16 %v24
  %v87 = vunpack.c.h.b16 %v24
  %v88 = vunpack.c.l.b16 %v25
  %v89 = vpack.c.b16 %v80, %v77
  %v90 = vpack.c.b16 %v81, %v78
  %v91 = vpack.c.b16 %v82, %v79
  %v92 = vpack.c.b16 %v86, %v83
  %v93 = vpack.c.b16 %v87, %v84
  %v94 = vpack.c.b16 %v88, %v85
  %v135 = vunpack.c.l.b16 %v26
  %v136 = vunpack.c.l.b16 %v27
  %v137 = vunpack.c.l.b16 %v28
  %v138 = vunpack.c.l.b16 %v29
  %v139 = vunpack.c.l.b16 %v30
  %v140 = vunpack.c.l.b16 %v31
  %v141 = vunpack.c.l.b16 %v32
  %v142 = vunpack.c.l.b16 %v33
  %v143 = vunpack.c.l.b16 %v34
  %v144 = vunpack.c.l.b16 %v35
  %v145 = vunpack.c.l.b16 %v36
  %v146 = vunpack.c.l.b16 %v37
  %v147 = vunpack.c.l.b16 %v38
  %v148 = vunpack.c.l.b16 %v39
  %v149 = vunpack.c.l.b16 %v40
  %v150 = vunpack.c.l.b16 %v41
  %v151 = vunpack.c.l.b16 %v42
  %v152 = vunpack.c.l.b16 %v43
  %v153 = vunpack.c.l.b16 %v44
  %v154 = vunpack.c.l.b16 %v45
  %v155 = vunpack.c.l.b16 %v46
  %v156 = vunpack.c.l.b16 %v47
  %v157 = vunpack.c.l.b16 %v48
  %v158 = vunpack.c.l.b16 %v49
  %v159 = vunpack.c.l.b16 %v50
  %v160 = vunpack.c.l.b16 %v51
  %v161 = vunpack.c.l.b16 %v52
  %v162 = vunpack.c.l.b16 %v53
  %v163 = vunpack.c.l.b16 %v54
  %v164 = vunpack.c.l.b16 %v55
  %v165 = vunpack.c.l.b16 %v56
  %v166 = vunpack.c.l.b16 %v57
  %v167 = vunpack.c.l.b16 %v58
  %v168 = vunpack.c.l.b16 %v59
  %v169 = vunpack.c.l.b16 %v60
  %v170 = vunpack.c.l.b16 %v61
  %v171 = vpack.c.b16 %v136, %v135
  %v172 = vpack.c.b16 %v138, %v137
  %v173 = vpack.c.b16 %v140, %v139
  %v174 = vpack.c.b16 %v142, %v141
  %v175 = vpack.c.b16 %v144, %v143
  %v176 = vpack.c.b16 %v146, %v145
  %v177 = vpack.c.b16 %v148, %v147
  %v178 = vpack.c.b16 %v150, %v149
  %v179 = vpack.c.b16 %v152, %v151
  %v180 = vpack.c.b16 %v154, %v153
  %v181 = vpack.c.b16 %v156, %v155
  %v182 = vpack.c.b16 %v158, %v157
  %v183 = vpack.c.b16 %v160, %v159
  %v184 = vpack.c.b16 %v162, %v161
  %v185 = vpack.c.b16 %v164, %v163
  %v186 = vpack.c.b16 %v166, %v165
  %v187 = vpack.c.b16 %v168, %v167
  %v188 = vpack.c.b16 %v170, %v169
  %vm207 = vcmask 261120
  %v209 = vsel %vm207, %v91, 0
  %v212 = vsel %vm207, %v94, 0
  %214 = vmatprep.subr.bf16.mxu0 0
  %215 = vmatpush1.bf16.msra.mxu0 %v171
  %216 = vmatprep.subr.bf16.mxu0 0
  %217 = vmatpush1.bf16.msra.mxu0 %v172
  %218 = vmatprep.subr.bf16.mxu0 0
  %219 = vmatpush1.bf16.msra.mxu0 %v173
  %220 = vmatprep.subr.bf16.mxu0 0
  %221 = vmatpush1.bf16.msra.mxu0 %v174
  %222 = vmatprep.subr.bf16.mxu0 0
  %223 = vmatpush1.bf16.msra.mxu0 %v175
  %224 = vmatprep.subr.bf16.mxu0 0
  %225 = vmatpush1.bf16.msra.mxu0 %v176
  %226 = vmatprep.subr.bf16.mxu0 0
  %227 = vmatpush1.bf16.msra.mxu0 %v177
  %228 = vmatprep.subr.bf16.mxu0 0
  %229 = vmatpush1.bf16.msra.mxu0 %v178
  %230 = vmatprep.subr.bf16.mxu0 0
  %231 = vmatpush1.bf16.msra.mxu0 %v179
  %232 = vmatprep.subr.bf16.mxu0 0
  %233 = vmatpush1.bf16.msra.mxu0 %v180
  %234 = vmatprep.subr.bf16.mxu0 0
  %235 = vmatpush1.bf16.msra.mxu0 %v181
  %236 = vmatprep.subr.bf16.mxu0 0
  %237 = vmatpush1.bf16.msra.mxu0 %v182
  %238 = vmatprep.subr.bf16.mxu0 0
  %239 = vmatpush1.bf16.msra.mxu0 %v183
  %240 = vmatprep.subr.bf16.mxu0 0
  %241 = vmatpush1.bf16.msra.mxu0 %v184
  %242 = vmatprep.subr.bf16.mxu0 0
  %243 = vmatpush1.bf16.msra.mxu0 %v185
  %244 = vmatprep.subr.bf16.mxu0 0
  %245 = vmatpush1.bf16.msra.mxu0 %v186
  %246 = vmatprep.mubr.bf16.mxu0 %v90
  %247 = vmatmul.mubr.bf16.gmra.mrb[0].mxu0 %v89
  %v248 = vpop.f32.mrb[0].mxu0
  %v249 = vadd.f32 %v67, %v248
  %v250 = vpop.f32.mrb[0].mxu0
  %v251 = vpop.f32.mrb[0].mxu0
  %v252 = vadd.f32 %v67, %v251
  %v253 = vpop.f32.mrb[0].mxu0
  %254 = vmatprep.mubr.bf16.mxu0 %v93
  %255 = vmatmul.mubr.bf16.gmra.mrb[0].mxu0 %v92
  %v256 = vpop.f32.mrb[0].mxu0
  %v257 = vadd.f32 %v67, %v256
  %v258 = vpop.f32.mrb[0].mxu0
  %v259 = vpop.f32.mrb[0].mxu0
  %v260 = vadd.f32 %v67, %v259
  %v261 = vpop.f32.mrb[0].mxu0
  %262 = vdwg.mxu0
  %263 = vmatprep.subr.bf16.mxu0 0
  %264 = vmatpush1.bf16.msra.mxu0 %v187
  %265 = vmatprep.subr.bf16.mxu0 0
  %266 = vmatpush1.bf16.msra.mxu0 %v188
  %267 = vmatprep.subr.bf16.mxu0 0
  %268 = vmatpush1.bf16.msra.mxu0 0
  %269 = vmatprep.subr.bf16.mxu0 0
  %270 = vmatpush1.bf16.msra.mxu0 0
  %271 = vmatprep.subr.bf16.mxu0 0
  %272 = vmatpush1.bf16.msra.mxu0 0
  %273 = vmatprep.subr.bf16.mxu0 0
  %274 = vmatpush1.bf16.msra.mxu0 0
  %275 = vmatprep.subr.bf16.mxu0 0
  %276 = vmatpush1.bf16.msra.mxu0 0
  %277 = vmatprep.subr.bf16.mxu0 0
  %278 = vmatpush1.bf16.msra.mxu0 0
  %279 = vmatprep.subr.bf16.mxu0 0
  %280 = vmatpush1.bf16.msra.mxu0 0
  %281 = vmatprep.subr.bf16.mxu0 0
  %282 = vmatpush1.bf16.msra.mxu0 0
  %283 = vmatprep.subr.bf16.mxu0 0
  %284 = vmatpush1.bf16.msra.mxu0 0
  %285 = vmatprep.subr.bf16.mxu0 0
  %286 = vmatpush1.bf16.msra.mxu0 0
  %287 = vmatprep.subr.bf16.mxu0 0
  %288 = vmatpush1.bf16.msra.mxu0 0
  %289 = vmatprep.subr.bf16.mxu0 0
  %290 = vmatpush1.bf16.msra.mxu0 0
  %291 = vmatprep.subr.bf16.mxu0 0
  %292 = vmatpush1.bf16.msra.mxu0 0
  %293 = vmatprep.subr.bf16.mxu0 0
  %294 = vmatpush1.bf16.msra.mxu0 0
  %295 = vmatprep.mubr.bf16.mxu0 0
  %296 = vmatmul.mubr.bf16.gmra.mrb[0].mxu0 %v209
  %v297 = vpop.f32.mrb[0].mxu0
  %v298 = vadd.f32 %v249, %v297
  %v299 = vpop.f32.mrb[0].mxu0
  %v300 = vpop.f32.mrb[0].mxu0
  %v301 = vadd.f32 %v252, %v300
  %v302 = vpop.f32.mrb[0].mxu0
  %303 = vmatprep.mubr.bf16.mxu0 0
  %304 = vmatmul.mubr.bf16.gmra.mrb[0].mxu0 %v212
  %v305 = vpop.f32.mrb[0].mxu0
  %v306 = vadd.f32 %v257, %v305
  %v307 = vpop.f32.mrb[0].mxu0
  %v308 = vpop.f32.mrb[0].mxu0
  %v309 = vadd.f32 %v260, %v308
  %v310 = vpop.f32.mrb[0].mxu0
  %311 = vdwg.mxu0
  %v312 = vld [vmem:[%s3] sm:$0xff]
  %v313 = vld [vmem:[%s3 + $0x8] sm:$0xff]
  %v314 = vld [vmem:[%s3 + $0x10] sm:$0xff]
  %v315 = vld [vmem:[%s3 + $0x18] sm:$0xff]
  %v316 = vadd.f32 %v298, %v312
  %v317 = vadd.f32 %v301, %v313
  %v318 = vadd.f32 %v306, %v314
  %v319 = vadd.f32 %v309, %v315
  %v320 = vmax.f32 %v316, 0.0
  %v321 = vmax.f32 %v317, 0.0
  %v322 = vmax.f32 %v318, 0.0
  %v323 = vmax.f32 %v319, 0.0
  %324 = vst.msk [vmem:[%s4] sm:$0xff] %vm207, %v320
  %325 = vst.msk [vmem:[%s4 + $0x8] sm:$0xff] %vm207, %v321
  %326 = vst.msk [vmem:[%s4 + $0x10] sm:$0xff] %vm207, %v322
  %327 = vst.msk [vmem:[%s4 + $0x18] sm:$0xff] %vm207, %v323
  // Predicated region
  $region18: #{resnet_transformer_forward.34} parent=0 // pred_check
    _
  $region19: #{resnet_transformer_forward.34} parent=0 // pred_check_branch
    %329 = sbr.rel (0) target = $region21
  $region20: #{resnet_transformer_forward.34} parent=0 // pred_region
    _
  $region21: #{resnet_transformer_forward.34} parent=0 // pred_fallthru
    _
  // Predicated region
  $region22: #{resnet_transformer_forward.34} parent=0 // pred_check
    _
  $region23: #{resnet_transformer_forward.34} parent=0 // pred_check_branch
    %331 = sbr.rel (0) target = $region25
  $region24: #{resnet_transformer_forward.34} parent=0 // pred_region
    _
  $region25: #{resnet_transformer_forward.34} parent=0 // pred_fallthru
    _

// kernel: resnet_transformer_forward.33
$region0: #{resnet_transformer_forward.33}
  #allocation0 [shape = 'u32[]', space=smem, size = 0x4, offset = 0x4, fixed_abs, tag = 'smem constant byte address 0x4 - core index']
  #allocation1 [shape = 'u32[144,128]{1,0:T(1,128)}', space=vmem, size = 0x12000, scoped, tag = 'internal scratch']
  %s0 = inlined_call_operand.vmem [shape: bf16[32,288], index: 0, kind: input, shape index: {}]
  %s1 = inlined_call_operand.vmem [shape: bf16[288,32], index: 1, kind: input, shape index: {}]
  %s2 = inlined_call_operand.vmem [shape: f32[1,32], index: 2, kind: input, shape index: {}]
  %s3 = inlined_call_operand.vmem [shape: f32[32,32], index: 3, kind: output, shape index: {}]
  %s4 = sld [smem:[#allocation0]]
  $region22: #{resnet_transformer_forward.33} parent=0
    _
  %s6 = ssub.s32 1, %s4
  %s7 = scalar_select 0, %s6, %s4
  // Predicated region
  $region2: #{resnet_transformer_forward.33} parent=0 // pred_check
    _
  $region3: #{resnet_transformer_forward.33} parent=0 // pred_check_branch
    %9 = sbr.rel (0) target = $region5
  $region4: #{resnet_transformer_forward.33} parent=0 // pred_region
    _
  $region5: #{resnet_transformer_forward.33} parent=0 // pred_fallthru
    _
  // Predicated region
  $region6: #{resnet_transformer_forward.33} parent=0 // pred_check
    _
  $region7: #{resnet_transformer_forward.33} parent=0 // pred_check_branch
    %11 = sbr.rel (0) target = $region9
  $region8: #{resnet_transformer_forward.33} parent=0 // pred_region
    _
  $region9: #{resnet_transformer_forward.33} parent=0 // pred_fallthru
    _
  // Predicated region
  $region10: #{resnet_transformer_forward.33} parent=0 // pred_check
    _
  $region11: #{resnet_transformer_forward.33} parent=0 // pred_check_branch
    %13 = sbr.rel (0) target = $region13
  $region12: #{resnet_transformer_forward.33} parent=0 // pred_region
    _
  $region13: #{resnet_transformer_forward.33} parent=0 // pred_fallthru
    _
  %v15 = vld [vmem:[%s0] sm:$0xff]
  %v16 = vld [vmem:[%s0 + $0x8] sm:$0xf]
  %v17 = vld [vmem:[%s0 + $0xc] sm:$0xff]
  %v18 = vld [vmem:[%s0 + $0x14] sm:$0xf]
  %v19 = vld [vmem:[%s0 + $0x18] sm:$0xff]
  %v20 = vld [vmem:[%s0 + $0x20] sm:$0xf]
  %v21 = vld [vmem:[%s0 + $0x24] sm:$0xff]
  %v22 = vld [vmem:[%s0 + $0x2c] sm:$0xf]
  %v23 = vld [vmem:[%s1] sm:$0xf]
  %v24 = vld [vmem:[%s1 + $0x4] sm:$0xf]
  %v25 = vld [vmem:[%s1 + $0x8] sm:$0xf]
  %v26 = vld [vmem:[%s1 + $0xc] sm:$0xf]
  %v27 = vld [vmem:[%s1 + $0x10] sm:$0xf]
  %v28 = vld [vmem:[%s1 + $0x14] sm:$0xf]
  %v29 = vld [vmem:[%s1 + $0x18] sm:$0xf]
  %v30 = vld [vmem:[%s1 + $0x1c] sm:$0xf]
  %v31 = vld [vmem:[%s1 + $0x20] sm:$0xf]
  %v32 = vld [vmem:[%s1 + $0x24] sm:$0xf]
  %v33 = vld [vmem:[%s1 + $0x28] sm:$0xf]
  %v34 = vld [vmem:[%s1 + $0x2c] sm:$0xf]
  %v35 = vld [vmem:[%s1 + $0x30] sm:$0xf]
  %v36 = vld [vmem:[%s1 + $0x34] sm:$0xf]
  %v37 = vld [vmem:[%s1 + $0x38] sm:$0xf]
  %v38 = vld [vmem:[%s1 + $0x3c] sm:$0xf]
  %v39 = vld [vmem:[%s1 + $0x40] sm:$0xf]
  %v40 = vld [vmem:[%s1 + $0x44] sm:$0xf]
  %v41 = vld [vmem:[%s1 + $0x48] sm:$0xf]
  %v42 = vld [vmem:[%s1 + $0x4c] sm:$0xf]
  %v43 = vld [vmem:[%s1 + $0x50] sm:$0xf]
  %v44 = vld [vmem:[%s1 + $0x54] sm:$0xf]
  %v45 = vld [vmem:[%s1 + $0x58] sm:$0xf]
  %v46 = vld [vmem:[%s1 + $0x5c] sm:$0xf]
  %v47 = vld [vmem:[%s1 + $0x60] sm:$0xf]
  %v48 = vld [vmem:[%s1 + $0x64] sm:$0xf]
  %v49 = vld [vmem:[%s1 + $0x68] sm:$0xf]
  %v50 = vld [vmem:[%s1 + $0x6c] sm:$0xf]
  %v51 = vld [vmem:[%s1 + $0x70] sm:$0xf]
  %v52 = vld [vmem:[%s1 + $0x74] sm:$0xf]
  %v53 = vld [vmem:[%s1 + $0x78] sm:$0xf]
  %v54 = vld [vmem:[%s1 + $0x7c] sm:$0xf]
  %v55 = vld [vmem:[%s1 + $0x80] sm:$0xf]
  %v56 = vld [vmem:[%s1 + $0x84] sm:$0xf]
  %v57 = vld [vmem:[%s1 + $0x88] sm:$0xf]
  %v58 = vld [vmem:[%s1 + $0x8c] sm:$0xf]
  %v59 = vld [vmem:[%s2] sm:$0x1]
  %v61 = vlaneseq
  %v62 = vshrl.u32 %v61, 7
  %v63 = vsub.s32 0, %v62
  %v64 = vrot.slane %v59, %v63
  %v74 = vunpack.c.l.b16 %v15
  %v75 = vunpack.c.h.b16 %v15
  %v76 = vunpack.c.l.b16 %v16
  %v77 = vunpack.c.l.b16 %v17
  %v78 = vunpack.c.h.b16 %v17
  %v79 = vunpack.c.l.b16 %v18
  %v80 = vunpack.c.l.b16 %v19
  %v81 = vunpack.c.h.b16 %v19
  %v82 = vunpack.c.l.b16 %v20
  %v83 = vunpack.c.l.b16 %v21
  %v84 = vunpack.c.h.b16 %v21
  %v85 = vunpack.c.l.b16 %v22
  %v86 = vpack.c.b16 %v77, %v74
  %v87 = vpack.c.b16 %v78, %v75
  %v88 = vpack.c.b16 %v79, %v76
  %v89 = vpack.c.b16 %v83, %v80
  %v90 = vpack.c.b16 %v84, %v81
  %v91 = vpack.c.b16 %v85, %v82
  %v132 = vunpack.c.l.b16 %v23
  %v133 = vunpack.c.l.b16 %v24
  %v134 = vunpack.c.l.b16 %v25
  %v135 = vunpack.c.l.b16 %v26
  %v136 = vunpack.c.l.b16 %v27
  %v137 = vunpack.c.l.b16 %v28
  %v138 = vunpack.c.l.b16 %v29
  %v139 = vunpack.c.l.b16 %v30
  %v140 = vunpack.c.l.b16 %v31
  %v141 = vunpack.c.l.b16 %v32
  %v142 = vunpack.c.l.b16 %v33
  %v143 = vunpack.c.l.b16 %v34
  %v144 = vunpack.c.l.b16 %v35
  %v145 = vunpack.c.l.b16 %v36
  %v146 = vunpack.c.l.b16 %v37
  %v147 = vunpack.c.l.b16 %v38
  %v148 = vunpack.c.l.b16 %v39
  %v149 = vunpack.c.l.b16 %v40
  %v150 = vunpack.c.l.b16 %v41
  %v151 = vunpack.c.l.b16 %v42
  %v152 = vunpack.c.l.b16 %v43
  %v153 = vunpack.c.l.b16 %v44
  %v154 = vunpack.c.l.b16 %v45
  %v155 = vunpack.c.l.b16 %v46
  %v156 = vunpack.c.l.b16 %v47
  %v157 = vunpack.c.l.b16 %v48
  %v158 = vunpack.c.l.b16 %v49
  %v159 = vunpack.c.l.b16 %v50
  %v160 = vunpack.c.l.b16 %v51
  %v161 = vunpack.c.l.b16 %v52
  %v162 = vunpack.c.l.b16 %v53
  %v163 = vunpack.c.l.b16 %v54
  %v164 = vunpack.c.l.b16 %v55
  %v165 = vunpack.c.l.b16 %v56
  %v166 = vunpack.c.l.b16 %v57
  %v167 = vunpack.c.l.b16 %v58
  %v168 = vpack.c.b16 %v133, %v132
  %v169 = vpack.c.b16 %v135, %v134
  %v170 = vpack.c.b16 %v137, %v136
  %v171 = vpack.c.b16 %v139, %v138
  %v172 = vpack.c.b16 %v141, %v140
  %v173 = vpack.c.b16 %v143, %v142
  %v174 = vpack.c.b16 %v145, %v144
  %v175 = vpack.c.b16 %v147, %v146
  %v176 = vpack.c.b16 %v149, %v148
  %v177 = vpack.c.b16 %v151, %v150
  %v178 = vpack.c.b16 %v153, %v152
  %v179 = vpack.c.b16 %v155, %v154
  %v180 = vpack.c.b16 %v157, %v156
  %v181 = vpack.c.b16 %v159, %v158
  %v182 = vpack.c.b16 %v161, %v160
  %v183 = vpack.c.b16 %v163, %v162
  %v184 = vpack.c.b16 %v165, %v164
  %v185 = vpack.c.b16 %v167, %v166
  %vm204 = vcmask 261120
  %v206 = vsel %vm204, %v88, 0
  %v209 = vsel %vm204, %v91, 0
  %211 = vmatprep.subr.bf16.mxu0 0
  %212 = vmatpush1.bf16.msra.mxu0 %v168
  %213 = vmatprep.subr.bf16.mxu0 0
  %214 = vmatpush1.bf16.msra.mxu0 %v169
  %215 = vmatprep.subr.bf16.mxu0 0
  %216 = vmatpush1.bf16.msra.mxu0 %v170
  %217 = vmatprep.subr.bf16.mxu0 0
  %218 = vmatpush1.bf16.msra.mxu0 %v171
  %219 = vmatprep.subr.bf16.mxu0 0
  %220 = vmatpush1.bf16.msra.mxu0 %v172
  %221 = vmatprep.subr.bf16.mxu0 0
  %222 = vmatpush1.bf16.msra.mxu0 %v173
  %223 = vmatprep.subr.bf16.mxu0 0
  %224 = vmatpush1.bf16.msra.mxu0 %v174
  %225 = vmatprep.subr.bf16.mxu0 0
  %226 = vmatpush1.bf16.msra.mxu0 %v175
  %227 = vmatprep.subr.bf16.mxu0 0
  %228 = vmatpush1.bf16.msra.mxu0 %v176
  %229 = vmatprep.subr.bf16.mxu0 0
  %230 = vmatpush1.bf16.msra.mxu0 %v177
  %231 = vmatprep.subr.bf16.mxu0 0
  %232 = vmatpush1.bf16.msra.mxu0 %v178
  %233 = vmatprep.subr.bf16.mxu0 0
  %234 = vmatpush1.bf16.msra.mxu0 %v179
  %235 = vmatprep.subr.bf16.mxu0 0
  %236 = vmatpush1.bf16.msra.mxu0 %v180
  %237 = vmatprep.subr.bf16.mxu0 0
  %238 = vmatpush1.bf16.msra.mxu0 %v181
  %239 = vmatprep.subr.bf16.mxu0 0
  %240 = vmatpush1.bf16.msra.mxu0 %v182
  %241 = vmatprep.subr.bf16.mxu0 0
  %242 = vmatpush1.bf16.msra.mxu0 %v183
  %243 = vmatprep.mubr.bf16.mxu0 %v87
  %244 = vmatmul.mubr.bf16.gmra.mrb[0].mxu0 %v86
  %v245 = vpop.f32.mrb[0].mxu0
  %v246 = vadd.f32 %v64, %v245
  %v247 = vpop.f32.mrb[0].mxu0
  %v248 = vpop.f32.mrb[0].mxu0
  %v249 = vadd.f32 %v64, %v248
  %v250 = vpop.f32.mrb[0].mxu0
  %251 = vmatprep.mubr.bf16.mxu0 %v90
  %252 = vmatmul.mubr.bf16.gmra.mrb[0].mxu0 %v89
  %v253 = vpop.f32.mrb[0].mxu0
  %v254 = vadd.f32 %v64, %v253
  %v255 = vpop.f32.mrb[0].mxu0
  %v256 = vpop.f32.mrb[0].mxu0
  %v257 = vadd.f32 %v64, %v256
  %v258 = vpop.f32.mrb[0].mxu0
  %259 = vdwg.mxu0
  %260 = vmatprep.subr.bf16.mxu0 0
  %261 = vmatpush1.bf16.msra.mxu0 %v184
  %262 = vmatprep.subr.bf16.mxu0 0
  %263 = vmatpush1.bf16.msra.mxu0 %v185
  %264 = vmatprep.subr.bf16.mxu0 0
  %265 = vmatpush1.bf16.msra.mxu0 0
  %266 = vmatprep.subr.bf16.mxu0 0
  %267 = vmatpush1.bf16.msra.mxu0 0
  %268 = vmatprep.subr.bf16.mxu0 0
  %269 = vmatpush1.bf16.msra.mxu0 0
  %270 = vmatprep.subr.bf16.mxu0 0
  %271 = vmatpush1.bf16.msra.mxu0 0
  %272 = vmatprep.subr.bf16.mxu0 0
  %273 = vmatpush1.bf16.msra.mxu0 0
  %274 = vmatprep.subr.bf16.mxu0 0
  %275 = vmatpush1.bf16.msra.mxu0 0
  %276 = vmatprep.subr.bf16.mxu0 0
  %277 = vmatpush1.bf16.msra.mxu0 0
  %278 = vmatprep.subr.bf16.mxu0 0
  %279 = vmatpush1.bf16.msra.mxu0 0
  %280 = vmatprep.subr.bf16.mxu0 0
  %281 = vmatpush1.bf16.msra.mxu0 0
  %282 = vmatprep.subr.bf16.mxu0 0
  %283 = vmatpush1.bf16.msra.mxu0 0
  %284 = vmatprep.subr.bf16.mxu0 0
  %285 = vmatpush1.bf16.msra.mxu0 0
  %286 = vmatprep.subr.bf16.mxu0 0
  %287 = vmatpush1.bf16.msra.mxu0 0
  %288 = vmatprep.subr.bf16.mxu0 0
  %289 = vmatpush1.bf16.msra.mxu0 0
  %290 = vmatprep.subr.bf16.mxu0 0
  %291 = vmatpush1.bf16.msra.mxu0 0
  %292 = vmatprep.mubr.bf16.mxu0 0
  %293 = vmatmul.mubr.bf16.gmra.mrb[0].mxu0 %v206
  %v294 = vpop.f32.mrb[0].mxu0
  %v295 = vadd.f32 %v246, %v294
  %v296 = vpop.f32.mrb[0].mxu0
  %v297 = vpop.f32.mrb[0].mxu0
  %v298 = vadd.f32 %v249, %v297
  %v299 = vpop.f32.mrb[0].mxu0
  %300 = vmatprep.mubr.bf16.mxu0 0
  %301 = vmatmul.mubr.bf16.gmra.mrb[0].mxu0 %v209
  %v302 = vpop.f32.mrb[0].mxu0
  %v303 = vadd.f32 %v254, %v302
  %v304 = vpop.f32.mrb[0].mxu0
  %v305 = vpop.f32.mrb[0].mxu0
  %v306 = vadd.f32 %v257, %v305
  %v307 = vpop.f32.mrb[0].mxu0
  %308 = vdwg.mxu0
  %v309 = vmax.f32 %v295, 0.0
  %v310 = vmax.f32 %v298, 0.0
  %v311 = vmax.f32 %v303, 0.0
  %v312 = vmax.f32 %v306, 0.0
  %313 = vst.msk [vmem:[%s3] sm:$0xff] %vm204, %v309
  %314 = vst.msk [vmem:[%s3 + $0x8] sm:$0xff] %vm204, %v310
  %315 = vst.msk [vmem:[%s3 + $0x10] sm:$0xff] %vm204, %v311
  %316 = vst.msk [vmem:[%s3 + $0x18] sm:$0xff] %vm204, %v312
  // Predicated region
  $region14: #{resnet_transformer_forward.33} parent=0 // pred_check
    _
  $region15: #{resnet_transformer_forward.33} parent=0 // pred_check_branch
    %318 = sbr.rel (0) target = $region17
  $region16: #{resnet_transformer_forward.33} parent=0 // pred_region
    _
  $region17: #{resnet_transformer_forward.33} parent=0 // pred_fallthru
    _
  // Predicated region
  $region18: #{resnet_transformer_forward.33} parent=0 // pred_check
    _
  $region19: #{resnet_transformer_forward.33} parent=0 // pred_check_branch
    %320 = sbr.rel (0) target = $region21
  $region20: #{resnet_transformer_forward.33} parent=0 // pred_region
    _
  $region21: #{resnet_transformer_forward.33} parent=0 // pred_fallthru
    _

// kernel: resnet_transformer_forward.32
$region0: #{resnet_transformer_forward.32}
  #allocation0 [shape = 'u32[]', space=smem, size = 0x4, offset = 0x4, fixed_abs, tag = 'smem constant byte address 0x4 - core index']
  #allocation1 [shape = 'u32[144,128]{1,0:T(1,128)}', space=vmem, size = 0x12000, scoped, tag = 'internal scratch']
  %s0 = inlined_call_operand.vmem [shape: bf16[32,288], index: 0, kind: input, shape index: {}]
  %s1 = inlined_call_operand.vmem [shape: bf16[288,32], index: 1, kind: input, shape index: {}]
  %s2 = inlined_call_operand.vmem [shape: f32[1,32], index: 2, kind: input, shape index: {}]
  %s3 = inlined_call_operand.vmem [shape: bf16[32,16], index: 3, kind: input, shape index: {}]
  %s4 = inlined_call_operand.vmem [shape: bf16[16,32], index: 4, kind: input, shape index: {}]
  %s5 = inlined_call_operand.vmem [shape: f32[1,32], index: 5, kind: input, shape index: {}]
  %s6 = inlined_call_operand.vmem [shape: f32[32,32], index: 6, kind: output, shape index: {}]
  %s7 = sld [smem:[#allocation0]]
  $region34: #{resnet_transformer_forward.32} parent=0
    _
  %s9 = ssub.s32 1, %s7
  %s10 = scalar_select 0, %s9, %s7
  // Predicated region
  $region2: #{resnet_transformer_forward.32} parent=0 // pred_check
    _
  $region3: #{resnet_transformer_forward.32} parent=0 // pred_check_branch
    %12 = sbr.rel (0) target = $region5
  $region4: #{resnet_transformer_forward.32} parent=0 // pred_region
    _
  $region5: #{resnet_transformer_forward.32} parent=0 // pred_fallthru
    _
  // Predicated region
  $region6: #{resnet_transformer_forward.32} parent=0 // pred_check
    _
  $region7: #{resnet_transformer_forward.32} parent=0 // pred_check_branch
    %14 = sbr.rel (0) target = $region9
  $region8: #{resnet_transformer_forward.32} parent=0 // pred_region
    _
  $region9: #{resnet_transformer_forward.32} parent=0 // pred_fallthru
    _
  // Predicated region
  $region10: #{resnet_transformer_forward.32} parent=0 // pred_check
    _
  $region11: #{resnet_transformer_forward.32} parent=0 // pred_check_branch
    %16 = sbr.rel (0) target = $region13
  $region12: #{resnet_transformer_forward.32} parent=0 // pred_region
    _
  $region13: #{resnet_transformer_forward.32} parent=0 // pred_fallthru
    _
  // Predicated region
  $region14: #{resnet_transformer_forward.32} parent=0 // pred_check
    _
  $region15: #{resnet_transformer_forward.32} parent=0 // pred_check_branch
    %18 = sbr.rel (0) target = $region17
  $region16: #{resnet_transformer_forward.32} parent=0 // pred_region
    _
  $region17: #{resnet_transformer_forward.32} parent=0 // pred_fallthru
    _
  // Predicated region
  $region18: #{resnet_transformer_forward.32} parent=0 // pred_check
    _
  $region19: #{resnet_transformer_forward.32} parent=0 // pred_check_branch
    %20 = sbr.rel (0) target = $region21
  $region20: #{resnet_transformer_forward.32} parent=0 // pred_region
    _
  $region21: #{resnet_transformer_forward.32} parent=0 // pred_fallthru
    _
  // Predicated region
  $region22: #{resnet_transformer_forward.32} parent=0 // pred_check
    _
  $region23: #{resnet_transformer_forward.32} parent=0 // pred_check_branch
    %22 = sbr.rel (0) target = $region25
  $region24: #{resnet_transformer_forward.32} parent=0 // pred_region
    _
  $region25: #{resnet_transformer_forward.32} parent=0 // pred_fallthru
    _
  %v24 = vld [vmem:[%s0] sm:$0xff]
  %v25 = vld [vmem:[%s0 + $0x8] sm:$0xf]
  %v26 = vld [vmem:[%s0 + $0xc] sm:$0xff]
  %v27 = vld [vmem:[%s0 + $0x14] sm:$0xf]
  %v28 = vld [vmem:[%s0 + $0x18] sm:$0xff]
  %v29 = vld [vmem:[%s0 + $0x20] sm:$0xf]
  %v30 = vld [vmem:[%s0 + $0x24] sm:$0xff]
  %v31 = vld [vmem:[%s0 + $0x2c] sm:$0xf]
  %v32 = vld [vmem:[%s1] sm:$0xf]
  %v33 = vld [vmem:[%s1 + $0x4] sm:$0xf]
  %v34 = vld [vmem:[%s1 + $0x8] sm:$0xf]
  %v35 = vld [vmem:[%s1 + $0xc] sm:$0xf]
  %v36 = vld [vmem:[%s1 + $0x10] sm:$0xf]
  %v37 = vld [vmem:[%s1 + $0x14] sm:$0xf]
  %v38 = vld [vmem:[%s1 + $0x18] sm:$0xf]
  %v39 = vld [vmem:[%s1 + $0x1c] sm:$0xf]
  %v40 = vld [vmem:[%s1 + $0x20] sm:$0xf]
  %v41 = vld [vmem:[%s1 + $0x24] sm:$0xf]
  %v42 = vld [vmem:[%s1 + $0x28] sm:$0xf]
  %v43 = vld [vmem:[%s1 + $0x2c] sm:$0xf]
  %v44 = vld [vmem:[%s1 + $0x30] sm:$0xf]
  %v45 = vld [vmem:[%s1 + $0x34] sm:$0xf]
  %v46 = vld [vmem:[%s1 + $0x38] sm:$0xf]
  %v47 = vld [vmem:[%s1 + $0x3c] sm:$0xf]
  %v48 = vld [vmem:[%s1 + $0x40] sm:$0xf]
  %v49 = vld [vmem:[%s1 + $0x44] sm:$0xf]
  %v50 = vld [vmem:[%s1 + $0x48] sm:$0xf]
  %v51 = vld [vmem:[%s1 + $0x4c] sm:$0xf]
  %v52 = vld [vmem:[%s1 + $0x50] sm:$0xf]
  %v53 = vld [vmem:[%s1 + $0x54] sm:$0xf]
  %v54 = vld [vmem:[%s1 + $0x58] sm:$0xf]
  %v55 = vld [vmem:[%s1 + $0x5c] sm:$0xf]
  %v56 = vld [vmem:[%s1 + $0x60] sm:$0xf]
  %v57 = vld [vmem:[%s1 + $0x64] sm:$0xf]
  %v58 = vld [vmem:[%s1 + $0x68] sm:$0xf]
  %v59 = vld [vmem:[%s1 + $0x6c] sm:$0xf]
  %v60 = vld [vmem:[%s1 + $0x70] sm:$0xf]
  %v61 = vld [vmem:[%s1 + $0x74] sm:$0xf]
  %v62 = vld [vmem:[%s1 + $0x78] sm:$0xf]
  %v63 = vld [vmem:[%s1 + $0x7c] sm:$0xf]
  %v64 = vld [vmem:[%s1 + $0x80] sm:$0xf]
  %v65 = vld [vmem:[%s1 + $0x84] sm:$0xf]
  %v66 = vld [vmem:[%s1 + $0x88] sm:$0xf]
  %v67 = vld [vmem:[%s1 + $0x8c] sm:$0xf]
  %v68 = vld [vmem:[%s2] sm:$0x1]
  %v70 = vlaneseq
  %v71 = vshrl.u32 %v70, 7
  %v72 = vsub.s32 0, %v71
  %v73 = vrot.slane %v68, %v72
  %v83 = vunpack.c.l.b16 %v24
  %v84 = vunpack.c.h.b16 %v24
  %v85 = vunpack.c.l.b16 %v25
  %v86 = vunpack.c.l.b16 %v26
  %v87 = vunpack.c.h.b16 %v26
  %v88 = vunpack.c.l.b16 %v27
  %v89 = vunpack.c.l.b16 %v28
  %v90 = vunpack.c.h.b16 %v28
  %v91 = vunpack.c.l.b16 %v29
  %v92 = vunpack.c.l.b16 %v30
  %v93 = vunpack.c.h.b16 %v30
  %v94 = vunpack.c.l.b16 %v31
  %v95 = vpack.c.b16 %v86, %v83
  %v96 = vpack.c.b16 %v87, %v84
  %v97 = vpack.c.b16 %v88, %v85
  %v98 = vpack.c.b16 %v92, %v89
  %v99 = vpack.c.b16 %v93, %v90
  %v100 = vpack.c.b16 %v94, %v91
  %v141 = vunpack.c.l.b16 %v32
  %v142 = vunpack.c.l.b16 %v33
  %v143 = vunpack.c.l.b16 %v34
  %v144 = vunpack.c.l.b16 %v35
  %v145 = vunpack.c.l.b16 %v36
  %v146 = vunpack.c.l.b16 %v37
  %v147 = vunpack.c.l.b16 %v38
  %v148 = vunpack.c.l.b16 %v39
  %v149 = vunpack.c.l.b16 %v40
  %v150 = vunpack.c.l.b16 %v41
  %v151 = vunpack.c.l.b16 %v42
  %v152 = vunpack.c.l.b16 %v43
  %v153 = vunpack.c.l.b16 %v44
  %v154 = vunpack.c.l.b16 %v45
  %v155 = vunpack.c.l.b16 %v46
  %v156 = vunpack.c.l.b16 %v47
  %v157 = vunpack.c.l.b16 %v48
  %v158 = vunpack.c.l.b16 %v49
  %v159 = vunpack.c.l.b16 %v50
  %v160 = vunpack.c.l.b16 %v51
  %v161 = vunpack.c.l.b16 %v52
  %v162 = vunpack.c.l.b16 %v53
  %v163 = vunpack.c.l.b16 %v54
  %v164 = vunpack.c.l.b16 %v55
  %v165 = vunpack.c.l.b16 %v56
  %v166 = vunpack.c.l.b16 %v57
  %v167 = vunpack.c.l.b16 %v58
  %v168 = vunpack.c.l.b16 %v59
  %v169 = vunpack.c.l.b16 %v60
  %v170 = vunpack.c.l.b16 %v61
  %v171 = vunpack.c.l.b16 %v62
  %v172 = vunpack.c.l.b16 %v63
  %v173 = vunpack.c.l.b16 %v64
  %v174 = vunpack.c.l.b16 %v65
  %v175 = vunpack.c.l.b16 %v66
  %v176 = vunpack.c.l.b16 %v67
  %v177 = vpack.c.b16 %v142, %v141
  %v178 = vpack.c.b16 %v144, %v143
  %v179 = vpack.c.b16 %v146, %v145
  %v180 = vpack.c.b16 %v148, %v147
  %v181 = vpack.c.b16 %v150, %v149
  %v182 = vpack.c.b16 %v152, %v151
  %v183 = vpack.c.b16 %v154, %v153
  %v184 = vpack.c.b16 %v156, %v155
  %v185 = vpack.c.b16 %v158, %v157
  %v186 = vpack.c.b16 %v160, %v159
  %v187 = vpack.c.b16 %v162, %v161
  %v188 = vpack.c.b16 %v164, %v163
  %v189 = vpack.c.b16 %v166, %v165
  %v190 = vpack.c.b16 %v168, %v167
  %v191 = vpack.c.b16 %v170, %v169
  %v192 = vpack.c.b16 %v172, %v171
  %v193 = vpack.c.b16 %v174, %v173
  %v194 = vpack.c.b16 %v176, %v175
  %vm213 = vcmask 261120
  %v215 = vsel %vm213, %v97, 0
  %v218 = vsel %vm213, %v100, 0
  %220 = vmatprep.subr.bf16.mxu0 0
  %221 = vmatpush1.bf16.msra.mxu0 %v177
  %222 = vmatprep.subr.bf16.mxu0 0
  %223 = vmatpush1.bf16.msra.mxu0 %v178
  %224 = vmatprep.subr.bf16.mxu0 0
  %225 = vmatpush1.bf16.msra.mxu0 %v179
  %226 = vmatprep.subr.bf16.mxu0 0
  %227 = vmatpush1.bf16.msra.mxu0 %v180
  %228 = vmatprep.subr.bf16.mxu0 0
  %229 = vmatpush1.bf16.msra.mxu0 %v181
  %230 = vmatprep.subr.bf16.mxu0 0
  %231 = vmatpush1.bf16.msra.mxu0 %v182
  %232 = vmatprep.subr.bf16.mxu0 0
  %233 = vmatpush1.bf16.msra.mxu0 %v183
  %234 = vmatprep.subr.bf16.mxu0 0
  %235 = vmatpush1.bf16.msra.mxu0 %v184
  %236 = vmatprep.subr.bf16.mxu0 0
  %237 = vmatpush1.bf16.msra.mxu0 %v185
  %238 = vmatprep.subr.bf16.mxu0 0
  %239 = vmatpush1.bf16.msra.mxu0 %v186
  %240 = vmatprep.subr.bf16.mxu0 0
  %241 = vmatpush1.bf16.msra.mxu0 %v187
  %242 = vmatprep.subr.bf16.mxu0 0
  %243 = vmatpush1.bf16.msra.mxu0 %v188
  %244 = vmatprep.subr.bf16.mxu0 0
  %245 = vmatpush1.bf16.msra.mxu0 %v189
  %246 = vmatprep.subr.bf16.mxu0 0
  %247 = vmatpush1.bf16.msra.mxu0 %v190
  %248 = vmatprep.subr.bf16.mxu0 0
  %249 = vmatpush1.bf16.msra.mxu0 %v191
  %250 = vmatprep.subr.bf16.mxu0 0
  %251 = vmatpush1.bf16.msra.mxu0 %v192
  %252 = vmatprep.mubr.bf16.mxu0 %v96
  %253 = vmatmul.mubr.bf16.gmra.mrb[0].mxu0 %v95
  %v254 = vpop.f32.mrb[0].mxu0
  %v255 = vadd.f32 %v73, %v254
  %v256 = vpop.f32.mrb[0].mxu0
  %v257 = vpop.f32.mrb[0].mxu0
  %v258 = vadd.f32 %v73, %v257
  %v259 = vpop.f32.mrb[0].mxu0
  %260 = vmatprep.mubr.bf16.mxu0 %v99
  %261 = vmatmul.mubr.bf16.gmra.mrb[0].mxu0 %v98
  %v262 = vpop.f32.mrb[0].mxu0
  %v263 = vadd.f32 %v73, %v262
  %v264 = vpop.f32.mrb[0].mxu0
  %v265 = vpop.f32.mrb[0].mxu0
  %v266 = vadd.f32 %v73, %v265
  %v267 = vpop.f32.mrb[0].mxu0
  %268 = vdwg.mxu0
  %269 = vmatprep.subr.bf16.mxu0 0
  %270 = vmatpush1.bf16.msra.mxu0 %v193
  %271 = vmatprep.subr.bf16.mxu0 0
  %272 = vmatpush1.bf16.msra.mxu0 %v194
  %273 = vmatprep.subr.bf16.mxu0 0
  %274 = vmatpush1.bf16.msra.mxu0 0
  %275 = vmatprep.subr.bf16.mxu0 0
  %276 = vmatpush1.bf16.msra.mxu0 0
  %277 = vmatprep.subr.bf16.mxu0 0
  %278 = vmatpush1.bf16.msra.mxu0 0
  %279 = vmatprep.subr.bf16.mxu0 0
  %280 = vmatpush1.bf16.msra.mxu0 0
  %281 = vmatprep.subr.bf16.mxu0 0
  %282 = vmatpush1.bf16.msra.mxu0 0
  %283 = vmatprep.subr.bf16.mxu0 0
  %284 = vmatpush1.bf16.msra.mxu0 0
  %285 = vmatprep.subr.bf16.mxu0 0
  %286 = vmatpush1.bf16.msra.mxu0 0
  %287 = vmatprep.subr.bf16.mxu0 0
  %288 = vmatpush1.bf16.msra.mxu0 0
  %289 = vmatprep.subr.bf16.mxu0 0
  %290 = vmatpush1.bf16.msra.mxu0 0
  %291 = vmatprep.subr.bf16.mxu0 0
  %292 = vmatpush1.bf16.msra.mxu0 0
  %293 = vmatprep.subr.bf16.mxu0 0
  %294 = vmatpush1.bf16.msra.mxu0 0
  %295 = vmatprep.subr.bf16.mxu0 0
  %296 = vmatpush1.bf16.msra.mxu0 0
  %297 = vmatprep.subr.bf16.mxu0 0
  %298 = vmatpush1.bf16.msra.mxu0 0
  %299 = vmatprep.subr.bf16.mxu0 0
  %300 = vmatpush1.bf16.msra.mxu0 0
  %301 = vmatprep.mubr.bf16.mxu0 0
  %302 = vmatmul.mubr.bf16.gmra.mrb[0].mxu0 %v215
  %v303 = vpop.f32.mrb[0].mxu0
  %v304 = vadd.f32 %v255, %v303
  %v305 = vpop.f32.mrb[0].mxu0
  %v306 = vpop.f32.mrb[0].mxu0
  %v307 = vadd.f32 %v258, %v306
  %v308 = vpop.f32.mrb[0].mxu0
  %309 = vmatprep.mubr.bf16.mxu0 0
  %310 = vmatmul.mubr.bf16.gmra.mrb[0].mxu0 %v218
  %v311 = vpop.f32.mrb[0].mxu0
  %v312 = vadd.f32 %v263, %v311
  %v313 = vpop.f32.mrb[0].mxu0
  %v314 = vpop.f32.mrb[0].mxu0
  %v315 = vadd.f32 %v266, %v314
  %v316 = vpop.f32.mrb[0].mxu0
  %317 = vdwg.mxu0
  %v318 = vld [vmem:[%s3] sm:$0xf]
  %v319 = vld [vmem:[%s3 + $0x4] sm:$0xf]
  %v320 = vld [vmem:[%s3 + $0x8] sm:$0xf]
  %v321 = vld [vmem:[%s3 + $0xc] sm:$0xf]
  %v322 = vld [vmem:[%s4] sm:$0xf]
  %v323 = vld [vmem:[%s4 + $0x4] sm:$0xf]
  %v328 = vunpack.c.l.b16 %v318
  %v329 = vunpack.c.l.b16 %v319
  %v330 = vunpack.c.l.b16 %v320
  %v331 = vunpack.c.l.b16 %v321
  %v332 = vpack.c.b16 %v329, %v328
  %v333 = vpack.c.b16 %v331, %v330
  %v336 = vunpack.c.l.b16 %v322
  %v337 = vunpack.c.l.b16 %v323
  %v338 = vpack.c.b16 %v337, %v336
  %vm340 = vcmask 130048
  %v342 = vsel %vm340, %v332, 0
  %v345 = vsel %vm340, %v333, 0
  %347 = vmatprep.subr.bf16.mxu0 0
  %348 = vmatpush1.bf16.msra.mxu0 %v338
  %349 = vmatprep.subr.bf16.mxu0 0
  %350 = vmatpush1.bf16.msra.mxu0 0
  %351 = vmatprep.subr.bf16.mxu0 0
  %352 = vmatpush1.bf16.msra.mxu0 0
  %353 = vmatprep.subr.bf16.mxu0 0
  %354 = vmatpush1.bf16.msra.mxu0 0
  %355 = vmatprep.subr.bf16.mxu0 0
  %356 = vmatpush1.bf16.msra.mxu0 0
  %357 = vmatprep.subr.bf16.mxu0 0
  %358 = vmatpush1.bf16.msra.mxu0 0
  %359 = vmatprep.subr.bf16.mxu0 0
  %360 = vmatpush1.bf16.msra.mxu0 0
  %361 = vmatprep.subr.bf16.mxu0 0
  %362 = vmatpush1.bf16.msra.mxu0 0
  %363 = vmatprep.subr.bf16.mxu0 0
  %364 = vmatpush1.bf16.msra.mxu0 0
  %365 = vmatprep.subr.bf16.mxu0 0
  %366 = vmatpush1.bf16.msra.mxu0 0
  %367 = vmatprep.subr.bf16.mxu0 0
  %368 = vmatpush1.bf16.msra.mxu0 0
  %369 = vmatprep.subr.bf16.mxu0 0
  %370 = vmatpush1.bf16.msra.mxu0 0
  %371 = vmatprep.subr.bf16.mxu0 0
  %372 = vmatpush1.bf16.msra.mxu0 0
  %373 = vmatprep.subr.bf16.mxu0 0
  %374 = vmatpush1.bf16.msra.mxu0 0
  %375 = vmatprep.subr.bf16.mxu0 0
  %376 = vmatpush1.bf16.msra.mxu0 0
  %377 = vmatprep.subr.bf16.mxu0 0
  %378 = vmatpush1.bf16.msra.mxu0 0
  %379 = vmatprep.mubr.bf16.mxu0 0
  %380 = vmatmul.mubr.bf16.gmra.mrb[0].mxu0 %v342
  %v381 = vpop.f32.mrb[0].mxu0
  %v382 = vadd.f32 0.0, %v381
  %v383 = vpop.f32.mrb[0].mxu0
  %v384 = vpop.f32.mrb[0].mxu0
  %v385 = vadd.f32 0.0, %v384
  %v386 = vpop.f32.mrb[0].mxu0
  %387 = vmatprep.mubr.bf16.mxu0 0
  %388 = vmatmul.mubr.bf16.gmra.mrb[0].mxu0 %v345
  %v389 = vpop.f32.mrb[0].mxu0
  %v390 = vadd.f32 0.0, %v389
  %v391 = vpop.f32.mrb[0].mxu0
  %v392 = vpop.f32.mrb[0].mxu0
  %v393 = vadd.f32 0.0, %v392
  %v394 = vpop.f32.mrb[0].mxu0
  %395 = vdwg.mxu0
  %v396 = vadd.f32 %v304, %v382
  %v397 = vadd.f32 %v307, %v385
  %v398 = vadd.f32 %v312, %v390
  %v399 = vadd.f32 %v315, %v393
  %v400 = vld [vmem:[%s5] sm:$0x1]
  %v402 = vlaneseq
  %v403 = vshrl.u32 %v402, 7
  %v404 = vsub.s32 0, %v403
  %v405 = vrot.slane %v400, %v404
  %v407 = vadd.f32 %v396, %v405
  %v408 = vadd.f32 %v397, %v405
  %v409 = vadd.f32 %v398, %v405
  %v410 = vadd.f32 %v399, %v405
  %v411 = vmax.f32 %v407, 0.0
  %v412 = vmax.f32 %v408, 0.0
  %v413 = vmax.f32 %v409, 0.0
  %v414 = vmax.f32 %v410, 0.0
  %415 = vst.msk [vmem:[%s6] sm:$0xff] %vm213, %v411
  %416 = vst.msk [vmem:[%s6 + $0x8] sm:$0xff] %vm213, %v412
  %417 = vst.msk [vmem:[%s6 + $0x10] sm:$0xff] %vm213, %v413
  %418 = vst.msk [vmem:[%s6 + $0x18] sm:$0xff] %vm213, %v414
  // Predicated region
  $region26: #{resnet_transformer_forward.32} parent=0 // pred_check
    _
  $region27: #{resnet_transformer_forward.32} parent=0 // pred_check_branch
    %420 = sbr.rel (0) target = $region29
  $region28: #{resnet_transformer_forward.32} parent=0 // pred_region
    _
  $region29: #{resnet_transformer_forward.32} parent=0 // pred_fallthru
    _
  // Predicated region
  $region30: #{resnet_transformer_forward.32} parent=0 // pred_check
    _
  $region31: #{resnet_transformer_forward.32} parent=0 // pred_check_branch
    %422 = sbr.rel (0) target = $region33
  $region32: #{resnet_transformer_forward.32} parent=0 // pred_region
    _
  $region33: #{resnet_transformer_forward.32} parent=0 // pred_fallthru
    _

// kernel: resnet_transformer_forward.35
$region0: #{resnet_transformer_forward.35}
  #allocation0 [shape = 'u32[]', space=smem, size = 0x4, offset = 0x4, fixed_abs, tag = 'smem constant byte address 0x4 - core index']
  #allocation1 [shape = 'u32[144,128]{1,0:T(1,128)}', space=vmem, size = 0x12000, scoped, tag = 'internal scratch']
  %s0 = inlined_call_operand.vmem [shape: bf16[8,288], index: 0, kind: input, shape index: {}]
  %s1 = inlined_call_operand.vmem [shape: bf16[288,64], index: 1, kind: input, shape index: {}]
  %s2 = inlined_call_operand.vmem [shape: f32[1,64], index: 2, kind: input, shape index: {}]
  %s3 = inlined_call_operand.vmem [shape: f32[8,64], index: 3, kind: output, shape index: {}]
  %s4 = sld [smem:[#allocation0]]
  $region22: #{resnet_transformer_forward.35} parent=0
    _
  %s6 = ssub.s32 1, %s4
  %s7 = scalar_select 0, %s6, %s4
  // Predicated region
  $region2: #{resnet_transformer_forward.35} parent=0 // pred_check
    _
  $region3: #{resnet_transformer_forward.35} parent=0 // pred_check_branch
    %9 = sbr.rel (0) target = $region5
  $region4: #{resnet_transformer_forward.35} parent=0 // pred_region
    _
  $region5: #{resnet_transformer_forward.35} parent=0 // pred_fallthru
    _
  // Predicated region
  $region6: #{resnet_transformer_forward.35} parent=0 // pred_check
    _
  $region7: #{resnet_transformer_forward.35} parent=0 // pred_check_branch
    %11 = sbr.rel (0) target = $region9
  $region8: #{resnet_transformer_forward.35} parent=0 // pred_region
    _
  $region9: #{resnet_transformer_forward.35} parent=0 // pred_fallthru
    _
  // Predicated region
  $region10: #{resnet_transformer_forward.35} parent=0 // pred_check
    _
  $region11: #{resnet_transformer_forward.35} parent=0 // pred_check_branch
    %13 = sbr.rel (0) target = $region13
  $region12: #{resnet_transformer_forward.35} parent=0 // pred_region
    _
  $region13: #{resnet_transformer_forward.35} parent=0 // pred_fallthru
    _
  %v15 = vld [vmem:[%s0] sm:$0xff]
  %v16 = vld [vmem:[%s0 + $0x8] sm:$0xf]
  %v17 = vld [vmem:[%s1] sm:$0xf]
  %v18 = vld [vmem:[%s1 + $0x4] sm:$0xf]
  %v19 = vld [vmem:[%s1 + $0x8] sm:$0xf]
  %v20 = vld [vmem:[%s1 + $0xc] sm:$0xf]
  %v21 = vld [vmem:[%s1 + $0x10] sm:$0xf]
  %v22 = vld [vmem:[%s1 + $0x14] sm:$0xf]
  %v23 = vld [vmem:[%s1 + $0x18] sm:$0xf]
  %v24 = vld [vmem:[%s1 + $0x1c] sm:$0xf]
  %v25 = vld [vmem:[%s1 + $0x20] sm:$0xf]
  %v26 = vld [vmem:[%s1 + $0x24] sm:$0xf]
  %v27 = vld [vmem:[%s1 + $0x28] sm:$0xf]
  %v28 = vld [vmem:[%s1 + $0x2c] sm:$0xf]
  %v29 = vld [vmem:[%s1 + $0x30] sm:$0xf]
  %v30 = vld [vmem:[%s1 + $0x34] sm:$0xf]
  %v31 = vld [vmem:[%s1 + $0x38] sm:$0xf]
  %v32 = vld [vmem:[%s1 + $0x3c] sm:$0xf]
  %v33 = vld [vmem:[%s1 + $0x40] sm:$0xf]
  %v34 = vld [vmem:[%s1 + $0x44] sm:$0xf]
  %v35 = vld [vmem:[%s1 + $0x48] sm:$0xf]
  %v36 = vld [vmem:[%s1 + $0x4c] sm:$0xf]
  %v37 = vld [vmem:[%s1 + $0x50] sm:$0xf]
  %v38 = vld [vmem:[%s1 + $0x54] sm:$0xf]
  %v39 = vld [vmem:[%s1 + $0x58] sm:$0xf]
  %v40 = vld [vmem:[%s1 + $0x5c] sm:$0xf]
  %v41 = vld [vmem:[%s1 + $0x60] sm:$0xf]
  %v42 = vld [vmem:[%s1 + $0x64] sm:$0xf]
  %v43 = vld [vmem:[%s1 + $0x68] sm:$0xf]
  %v44 = vld [vmem:[%s1 + $0x6c] sm:$0xf]
  %v45 = vld [vmem:[%s1 + $0x70] sm:$0xf]
  %v46 = vld [vmem:[%s1 + $0x74] sm:$0xf]
  %v47 = vld [vmem:[%s1 + $0x78] sm:$0xf]
  %v48 = vld [vmem:[%s1 + $0x7c] sm:$0xf]
  %v49 = vld [vmem:[%s1 + $0x80] sm:$0xf]
  %v50 = vld [vmem:[%s1 + $0x84] sm:$0xf]
  %v51 = vld [vmem:[%s1 + $0x88] sm:$0xf]
  %v52 = vld [vmem:[%s1 + $0x8c] sm:$0xf]
  %v53 = vld [vmem:[%s2] sm:$0x1]
  %v55 = vlaneseq
  %v56 = vshrl.u32 %v55, 7
  %v57 = vsub.s32 0, %v56
  %v58 = vrot.slane %v53, %v57
  %v62 = vunpack.c.l.b16 %v15
  %v63 = vunpack.c.h.b16 %v15
  %v64 = vunpack.c.l.b16 %v16
  %v65 = vpack.c.b16 %v62, %v62
  %v66 = vpack.c.b16 %v63, %v63
  %v67 = vpack.c.b16 %v64, %v64
  %v106 = vunpack.c.l.b16 %v17
  %v107 = vunpack.c.l.b16 %v18
  %v108 = vunpack.c.l.b16 %v19
  %v109 = vunpack.c.l.b16 %v20
  %v110 = vunpack.c.l.b16 %v21
  %v111 = vunpack.c.l.b16 %v22
  %v112 = vunpack.c.l.b16 %v23
  %v113 = vunpack.c.l.b16 %v24
  %v114 = vunpack.c.l.b16 %v25
  %v115 = vunpack.c.l.b16 %v26
  %v116 = vunpack.c.l.b16 %v27
  %v117 = vunpack.c.l.b16 %v28
  %v118 = vunpack.c.l.b16 %v29
  %v119 = vunpack.c.l.b16 %v30
  %v120 = vunpack.c.l.b16 %v31
  %v121 = vunpack.c.l.b16 %v32
  %v122 = vunpack.c.l.b16 %v33
  %v123 = vunpack.c.l.b16 %v34
  %v124 = vunpack.c.l.b16 %v35
  %v125 = vunpack.c.l.b16 %v36
  %v126 = vunpack.c.l.b16 %v37
  %v127 = vunpack.c.l.b16 %v38
  %v128 = vunpack.c.l.b16 %v39
  %v129 = vunpack.c.l.b16 %v40
  %v130 = vunpack.c.l.b16 %v41
  %v131 = vunpack.c.l.b16 %v42
  %v132 = vunpack.c.l.b16 %v43
  %v133 = vunpack.c.l.b16 %v44
  %v134 = vunpack.c.l.b16 %v45
  %v135 = vunpack.c.l.b16 %v46
  %v136 = vunpack.c.l.b16 %v47
  %v137 = vunpack.c.l.b16 %v48
  %v138 = vunpack.c.l.b16 %v49
  %v139 = vunpack.c.l.b16 %v50
  %v140 = vunpack.c.l.b16 %v51
  %v141 = vunpack.c.l.b16 %v52
  %v142 = vpack.c.b16 %v107, %v106
  %v143 = vpack.c.b16 %v109, %v108
  %v144 = vpack.c.b16 %v111, %v110
  %v145 = vpack.c.b16 %v113, %v112
  %v146 = vpack.c.b16 %v115, %v114
  %v147 = vpack.c.b16 %v117, %v116
  %v148 = vpack.c.b16 %v119, %v118
  %v149 = vpack.c.b16 %v121, %v120
  %v150 = vpack.c.b16 %v123, %v122
  %v151 = vpack.c.b16 %v125, %v124
  %v152 = vpack.c.b16 %v127, %v126
  %v153 = vpack.c.b16 %v129, %v128
  %v154 = vpack.c.b16 %v131, %v130
  %v155 = vpack.c.b16 %v133, %v132
  %v156 = vpack.c.b16 %v135, %v134
  %v157 = vpack.c.b16 %v137, %v136
  %v158 = vpack.c.b16 %v139, %v138
  %v159 = vpack.c.b16 %v141, %v140
  %vm178 = vcmask 261120
  %v180 = vsel %vm178, %v67, 0
  %182 = vmatprep.subr.bf16.mxu0 0
  %183 = vmatpush1.bf16.msra.mxu0 %v142
  %184 = vmatprep.subr.bf16.mxu0 0
  %185 = vmatpush1.bf16.msra.mxu0 %v143
  %186 = vmatprep.subr.bf16.mxu0 0
  %187 = vmatpush1.bf16.msra.mxu0 %v144
  %188 = vmatprep.subr.bf16.mxu0 0
  %189 = vmatpush1.bf16.msra.mxu0 %v145
  %190 = vmatprep.subr.bf16.mxu0 0
  %191 = vmatpush1.bf16.msra.mxu0 %v146
  %192 = vmatprep.subr.bf16.mxu0 0
  %193 = vmatpush1.bf16.msra.mxu0 %v147
  %194 = vmatprep.subr.bf16.mxu0 0
  %195 = vmatpush1.bf16.msra.mxu0 %v148
  %196 = vmatprep.subr.bf16.mxu0 0
  %197 = vmatpush1.bf16.msra.mxu0 %v149
  %198 = vmatprep.subr.bf16.mxu0 0
  %199 = vmatpush1.bf16.msra.mxu0 %v150
  %200 = vmatprep.subr.bf16.mxu0 0
  %201 = vmatpush1.bf16.msra.mxu0 %v151
  %202 = vmatprep.subr.bf16.mxu0 0
  %203 = vmatpush1.bf16.msra.mxu0 %v152
  %204 = vmatprep.subr.bf16.mxu0 0
  %205 = vmatpush1.bf16.msra.mxu0 %v153
  %206 = vmatprep.subr.bf16.mxu0 0
  %207 = vmatpush1.bf16.msra.mxu0 %v154
  %208 = vmatprep.subr.bf16.mxu0 0
  %209 = vmatpush1.bf16.msra.mxu0 %v155
  %210 = vmatprep.subr.bf16.mxu0 0
  %211 = vmatpush1.bf16.msra.mxu0 %v156
  %212 = vmatprep.subr.bf16.mxu0 0
  %213 = vmatpush1.bf16.msra.mxu0 %v157
  %214 = vmatprep.mubr.bf16.mxu0 %v66
  %215 = vmatmul.mubr.bf16.gmra.mrb[0].mxu0 %v65
  %v216 = vpop.f32.mrb[0].mxu0
  %v217 = vadd.f32 %v58, %v216
  %v218 = vpop.f32.mrb[0].mxu0
  %v219 = vpop.f32.mrb[0].mxu0
  %v220 = vpop.f32.mrb[0].mxu0
  %221 = vdwg.mxu0
  %222 = vmatprep.subr.bf16.mxu0 0
  %223 = vmatpush1.bf16.msra.mxu0 %v158
  %224 = vmatprep.subr.bf16.mxu0 0
  %225 = vmatpush1.bf16.msra.mxu0 %v159
  %226 = vmatprep.subr.bf16.mxu0 0
  %227 = vmatpush1.bf16.msra.mxu0 0
  %228 = vmatprep.subr.bf16.mxu0 0
  %229 = vmatpush1.bf16.msra.mxu0 0
  %230 = vmatprep.subr.bf16.mxu0 0
  %231 = vmatpush1.bf16.msra.mxu0 0
  %232 = vmatprep.subr.bf16.mxu0 0
  %233 = vmatpush1.bf16.msra.mxu0 0
  %234 = vmatprep.subr.bf16.mxu0 0
  %235 = vmatpush1.bf16.msra.mxu0 0
  %236 = vmatprep.subr.bf16.mxu0 0
  %237 = vmatpush1.bf16.msra.mxu0 0
  %238 = vmatprep.subr.bf16.mxu0 0
  %239 = vmatpush1.bf16.msra.mxu0 0
  %240 = vmatprep.subr.bf16.mxu0 0
  %241 = vmatpush1.bf16.msra.mxu0 0
  %242 = vmatprep.subr.bf16.mxu0 0
  %243 = vmatpush1.bf16.msra.mxu0 0
  %244 = vmatprep.subr.bf16.mxu0 0
  %245 = vmatpush1.bf16.msra.mxu0 0
  %246 = vmatprep.subr.bf16.mxu0 0
  %247 = vmatpush1.bf16.msra.mxu0 0
  %248 = vmatprep.subr.bf16.mxu0 0
  %249 = vmatpush1.bf16.msra.mxu0 0
  %250 = vmatprep.subr.bf16.mxu0 0
  %251 = vmatpush1.bf16.msra.mxu0 0
  %252 = vmatprep.subr.bf16.mxu0 0
  %253 = vmatpush1.bf16.msra.mxu0 0
  %254 = vmatprep.mubr.bf16.mxu0 0
  %255 = vmatmul.mubr.bf16.gmra.mrb[0].mxu0 %v180
  %v256 = vpop.f32.mrb[0].mxu0
  %v257 = vadd.f32 %v217, %v256
  %v258 = vpop.f32.mrb[0].mxu0
  %v259 = vpop.f32.mrb[0].mxu0
  %v260 = vpop.f32.mrb[0].mxu0
  %261 = vdwg.mxu0
  %v262 = vmax.f32 %v257, 0.0
  %vm263 = vcmask 523264
  %264 = vst.msk [vmem:[%s3] sm:$0xff] %vm263, %v262
  // Predicated region
  $region14: #{resnet_transformer_forward.35} parent=0 // pred_check
    _
  $region15: #{resnet_transformer_forward.35} parent=0 // pred_check_branch
    %266 = sbr.rel (0) target = $region17
  $region16: #{resnet_transformer_forward.35} parent=0 // pred_region
    _
  $region17: #{resnet_transformer_forward.35} parent=0 // pred_fallthru
    _
  // Predicated region
  $region18: #{resnet_transformer_forward.35} parent=0 // pred_check
    _
  $region19: #{resnet_transformer_forward.35} parent=0 // pred_check_branch
    %268 = sbr.rel (0) target = $region21
  $region20: #{resnet_transformer_forward.35} parent=0 // pred_region
    _
  $region21: #{resnet_transformer_forward.35} parent=0 // pred_fallthru
    _

// kernel: eq.15
$region0: #{eq.15}
  %s0 = inlined_call_operand.vmem [shape: s32[2,4], index: 0, kind: input, shape index: {}]
  %s1 = inlined_call_operand.vmem [shape: s32[8], index: 1, kind: output, shape index: {}]
  $region1: #{eq.15} parent=0
    #allocation0 [shape = 'u8[4096]{0}', space=vmem, size = 0x1000, scoped, tag = 'scoped mem for output reshape']
    #allocation1 [shape = 'u8[4096]{0}', space=vmem, size = 0x1000, scoped, tag = 'scoped mem for input reshape']
    %s3 = sshllo.u32 0, 2
    %v4 = vld [vmem:[%s0] sm:%s3]
    %5 = vst [vmem:[#allocation1] sm:%s3] %v4
    %v6 = vld [vmem:[#allocation1] sm:$0x1]
    %vm7 = vcmask 31744
    %8 = vst.msk [vmem:[#allocation0] sm:$0x1] %vm7, %v6
    %s9 = scalar_lea.vmem [#allocation1], 1
    %v10 = vld [vmem:[%s9] sm:$0x1]
    %11 = vrot.lane.b32.xlu0 %v10, 4
    %v12 = vpop.permute.xlu0 %11
    %vm13 = vcmask 64544
    %14 = vst.msk [vmem:[#allocation0] sm:$0x1] %vm13, %v12
    %s16 = sshllo.u32 0, 1
    %v18 = vld [vmem:[#allocation0] sm:%s16]
    %s19 = sshllo.u32 0, 1
    %20 = vst [vmem:[%s1] sm:%s19] %v18

// kernel: resnet_transformer_forward.38
$region0: #{resnet_transformer_forward.38}
  #allocation0 [shape = 'u32[]', space=smem, size = 0x4, offset = 0x4, fixed_abs, tag = 'smem constant byte address 0x4 - core index']
  #allocation1 [shape = 'u32[144,128]{1,0:T(1,128)}', space=vmem, size = 0x12000, scoped, tag = 'internal scratch']
  %s0 = inlined_call_operand.vmem [shape: bf16[8,576], index: 0, kind: input, shape index: {}]
  %s1 = inlined_call_operand.vmem [shape: bf16[576,64], index: 1, kind: input, shape index: {}]
  %s2 = inlined_call_operand.vmem [shape: f32[1,64], index: 2, kind: input, shape index: {}]
  %s3 = inlined_call_operand.vmem [shape: f32[8,64], index: 3, kind: input, shape index: {}]
  %s4 = inlined_call_operand.vmem [shape: f32[8,64], index: 4, kind: output, shape index: {}]
  %s5 = sld [smem:[#allocation0]]
  $region26: #{resnet_transformer_forward.38} parent=0
    _
  %s7 = ssub.s32 1, %s5
  %s8 = scalar_select 0, %s7, %s5
  // Predicated region
  $region2: #{resnet_transformer_forward.38} parent=0 // pred_check
    _
  $region3: #{resnet_transformer_forward.38} parent=0 // pred_check_branch
    %10 = sbr.rel (0) target = $region5
  $region4: #{resnet_transformer_forward.38} parent=0 // pred_region
    _
  $region5: #{resnet_transformer_forward.38} parent=0 // pred_fallthru
    _
  // Predicated region
  $region6: #{resnet_transformer_forward.38} parent=0 // pred_check
    _
  $region7: #{resnet_transformer_forward.38} parent=0 // pred_check_branch
    %12 = sbr.rel (0) target = $region9
  $region8: #{resnet_transformer_forward.38} parent=0 // pred_region
    _
  $region9: #{resnet_transformer_forward.38} parent=0 // pred_fallthru
    _
  // Predicated region
  $region10: #{resnet_transformer_forward.38} parent=0 // pred_check
    _
  $region11: #{resnet_transformer_forward.38} parent=0 // pred_check_branch
    %14 = sbr.rel (0) target = $region13
  $region12: #{resnet_transformer_forward.38} parent=0 // pred_region
    _
  $region13: #{resnet_transformer_forward.38} parent=0 // pred_fallthru
    _
  // Predicated region
  $region14: #{resnet_transformer_forward.38} parent=0 // pred_check
    _
  $region15: #{resnet_transformer_forward.38} parent=0 // pred_check_branch
    %16 = sbr.rel (0) target = $region17
  $region16: #{resnet_transformer_forward.38} parent=0 // pred_region
    _
  $region17: #{resnet_transformer_forward.38} parent=0 // pred_fallthru
    _
  %v18 = vld [vmem:[%s0] sm:$0xff]
  %v19 = vld [vmem:[%s0 + $0x8] sm:$0xff]
  %v20 = vld [vmem:[%s0 + $0x10] sm:$0xf]
  %v21 = vld [vmem:[%s1] sm:$0xf]
  %v22 = vld [vmem:[%s1 + $0x4] sm:$0xf]
  %v23 = vld [vmem:[%s1 + $0x8] sm:$0xf]
  %v24 = vld [vmem:[%s1 + $0xc] sm:$0xf]
  %v25 = vld [vmem:[%s1 + $0x10] sm:$0xf]
  %v26 = vld [vmem:[%s1 + $0x14] sm:$0xf]
  %v27 = vld [vmem:[%s1 + $0x18] sm:$0xf]
  %v28 = vld [vmem:[%s1 + $0x1c] sm:$0xf]
  %v29 = vld [vmem:[%s1 + $0x20] sm:$0xf]
  %v30 = vld [vmem:[%s1 + $0x24] sm:$0xf]
  %v31 = vld [vmem:[%s1 + $0x28] sm:$0xf]
  %v32 = vld [vmem:[%s1 + $0x2c] sm:$0xf]
  %v33 = vld [vmem:[%s1 + $0x30] sm:$0xf]
  %v34 = vld [vmem:[%s1 + $0x34] sm:$0xf]
  %v35 = vld [vmem:[%s1 + $0x38] sm:$0xf]
  %v36 = vld [vmem:[%s1 + $0x3c] sm:$0xf]
  %v37 = vld [vmem:[%s1 + $0x40] sm:$0xf]
  %v38 = vld [vmem:[%s1 + $0x44] sm:$0xf]
  %v39 = vld [vmem:[%s1 + $0x48] sm:$0xf]
  %v40 = vld [vmem:[%s1 + $0x4c] sm:$0xf]
  %v41 = vld [vmem:[%s1 + $0x50] sm:$0xf]
  %v42 = vld [vmem:[%s1 + $0x54] sm:$0xf]
  %v43 = vld [vmem:[%s1 + $0x58] sm:$0xf]
  %v44 = vld [vmem:[%s1 + $0x5c] sm:$0xf]
  %v45 = vld [vmem:[%s1 + $0x60] sm:$0xf]
  %v46 = vld [vmem:[%s1 + $0x64] sm:$0xf]
  %v47 = vld [vmem:[%s1 + $0x68] sm:$0xf]
  %v48 = vld [vmem:[%s1 + $0x6c] sm:$0xf]
  %v49 = vld [vmem:[%s1 + $0x70] sm:$0xf]
  %v50 = vld [vmem:[%s1 + $0x74] sm:$0xf]
  %v51 = vld [vmem:[%s1 + $0x78] sm:$0xf]
  %v52 = vld [vmem:[%s1 + $0x7c] sm:$0xf]
  %v53 = vld [vmem:[%s1 + $0x80] sm:$0xf]
  %v54 = vld [vmem:[%s1 + $0x84] sm:$0xf]
  %v55 = vld [vmem:[%s1 + $0x88] sm:$0xf]
  %v56 = vld [vmem:[%s1 + $0x8c] sm:$0xf]
  %v57 = vld [vmem:[%s1 + $0x90] sm:$0xf]
  %v58 = vld [vmem:[%s1 + $0x94] sm:$0xf]
  %v59 = vld [vmem:[%s1 + $0x98] sm:$0xf]
  %v60 = vld [vmem:[%s1 + $0x9c] sm:$0xf]
  %v61 = vld [vmem:[%s1 + $0xa0] sm:$0xf]
  %v62 = vld [vmem:[%s1 + $0xa4] sm:$0xf]
  %v63 = vld [vmem:[%s1 + $0xa8] sm:$0xf]
  %v64 = vld [vmem:[%s1 + $0xac] sm:$0xf]
  %v65 = vld [vmem:[%s1 + $0xb0] sm:$0xf]
  %v66 = vld [vmem:[%s1 + $0xb4] sm:$0xf]
  %v67 = vld [vmem:[%s1 + $0xb8] sm:$0xf]
  %v68 = vld [vmem:[%s1 + $0xbc] sm:$0xf]
  %v69 = vld [vmem:[%s1 + $0xc0] sm:$0xf]
  %v70 = vld [vmem:[%s1 + $0xc4] sm:$0xf]
  %v71 = vld [vmem:[%s1 + $0xc8] sm:$0xf]
  %v72 = vld [vmem:[%s1 + $0xcc] sm:$0xf]
  %v73 = vld [vmem:[%s1 + $0xd0] sm:$0xf]
  %v74 = vld [vmem:[%s1 + $0xd4] sm:$0xf]
  %v75 = vld [vmem:[%s1 + $0xd8] sm:$0xf]
  %v76 = vld [vmem:[%s1 + $0xdc] sm:$0xf]
  %v77 = vld [vmem:[%s1 + $0xe0] sm:$0xf]
  %v78 = vld [vmem:[%s1 + $0xe4] sm:$0xf]
  %v79 = vld [vmem:[%s1 + $0xe8] sm:$0xf]
  %v80 = vld [vmem:[%s1 + $0xec] sm:$0xf]
  %v81 = vld [vmem:[%s1 + $0xf0] sm:$0xf]
  %v82 = vld [vmem:[%s1 + $0xf4] sm:$0xf]
  %v83 = vld [vmem:[%s1 + $0xf8] sm:$0xf]
  %v84 = vld [vmem:[%s1 + $0xfc] sm:$0xf]
  %v85 = vld [vmem:[%s1 + $0x100] sm:$0xf]
  %v86 = vld [vmem:[%s1 + $0x104] sm:$0xf]
  %v87 = vld [vmem:[%s1 + $0x108] sm:$0xf]
  %v88 = vld [vmem:[%s1 + $0x10c] sm:$0xf]
  %v89 = vld [vmem:[%s1 + $0x110] sm:$0xf]
  %v90 = vld [vmem:[%s1 + $0x114] sm:$0xf]
  %v91 = vld [vmem:[%s1 + $0x118] sm:$0xf]
  %v92 = vld [vmem:[%s1 + $0x11c] sm:$0xf]
  %v93 = vld [vmem:[%s2] sm:$0x1]
  %v95 = vlaneseq
  %v96 = vshrl.u32 %v95, 7
  %v97 = vsub.s32 0, %v96
  %v98 = vrot.slane %v93, %v97
  %v103 = vunpack.c.l.b16 %v18
  %v104 = vunpack.c.h.b16 %v18
  %v105 = vunpack.c.l.b16 %v19
  %v106 = vunpack.c.h.b16 %v19
  %v107 = vunpack.c.l.b16 %v20
  %v108 = vpack.c.b16 %v103, %v103
  %v109 = vpack.c.b16 %v104, %v104
  %v110 = vpack.c.b16 %v105, %v105
  %v111 = vpack.c.b16 %v106, %v106
  %v112 = vpack.c.b16 %v107, %v107
  %v189 = vunpack.c.l.b16 %v21
  %v190 = vunpack.c.l.b16 %v22
  %v191 = vunpack.c.l.b16 %v23
  %v192 = vunpack.c.l.b16 %v24
  %v193 = vunpack.c.l.b16 %v25
  %v194 = vunpack.c.l.b16 %v26
  %v195 = vunpack.c.l.b16 %v27
  %v196 = vunpack.c.l.b16 %v28
  %v197 = vunpack.c.l.b16 %v29
  %v198 = vunpack.c.l.b16 %v30
  %v199 = vunpack.c.l.b16 %v31
  %v200 = vunpack.c.l.b16 %v32
  %v201 = vunpack.c.l.b16 %v33
  %v202 = vunpack.c.l.b16 %v34
  %v203 = vunpack.c.l.b16 %v35
  %v204 = vunpack.c.l.b16 %v36
  %v205 = vunpack.c.l.b16 %v37
  %v206 = vunpack.c.l.b16 %v38
  %v207 = vunpack.c.l.b16 %v39
  %v208 = vunpack.c.l.b16 %v40
  %v209 = vunpack.c.l.b16 %v41
  %v210 = vunpack.c.l.b16 %v42
  %v211 = vunpack.c.l.b16 %v43
  %v212 = vunpack.c.l.b16 %v44
  %v213 = vunpack.c.l.b16 %v45
  %v214 = vunpack.c.l.b16 %v46
  %v215 = vunpack.c.l.b16 %v47
  %v216 = vunpack.c.l.b16 %v48
  %v217 = vunpack.c.l.b16 %v49
  %v218 = vunpack.c.l.b16 %v50
  %v219 = vunpack.c.l.b16 %v51
  %v220 = vunpack.c.l.b16 %v52
  %v221 = vunpack.c.l.b16 %v53
  %v222 = vunpack.c.l.b16 %v54
  %v223 = vunpack.c.l.b16 %v55
  %v224 = vunpack.c.l.b16 %v56
  %v225 = vunpack.c.l.b16 %v57
  %v226 = vunpack.c.l.b16 %v58
  %v227 = vunpack.c.l.b16 %v59
  %v228 = vunpack.c.l.b16 %v60
  %v229 = vunpack.c.l.b16 %v61
  %v230 = vunpack.c.l.b16 %v62
  %v231 = vunpack.c.l.b16 %v63
  %v232 = vunpack.c.l.b16 %v64
  %v233 = vunpack.c.l.b16 %v65
  %v234 = vunpack.c.l.b16 %v66
  %v235 = vunpack.c.l.b16 %v67
  %v236 = vunpack.c.l.b16 %v68
  %v237 = vunpack.c.l.b16 %v69
  %v238 = vunpack.c.l.b16 %v70
  %v239 = vunpack.c.l.b16 %v71
  %v240 = vunpack.c.l.b16 %v72
  %v241 = vunpack.c.l.b16 %v73
  %v242 = vunpack.c.l.b16 %v74
  %v243 = vunpack.c.l.b16 %v75
  %v244 = vunpack.c.l.b16 %v76
  %v245 = vunpack.c.l.b16 %v77
  %v246 = vunpack.c.l.b16 %v78
  %v247 = vunpack.c.l.b16 %v79
  %v248 = vunpack.c.l.b16 %v80
  %v249 = vunpack.c.l.b16 %v81
  %v250 = vunpack.c.l.b16 %v82
  %v251 = vunpack.c.l.b16 %v83
  %v252 = vunpack.c.l.b16 %v84
  %v253 = vunpack.c.l.b16 %v85
  %v254 = vunpack.c.l.b16 %v86
  %v255 = vunpack.c.l.b16 %v87
  %v256 = vunpack.c.l.b16 %v88
  %v257 = vunpack.c.l.b16 %v89
  %v258 = vunpack.c.l.b16 %v90
  %v259 = vunpack.c.l.b16 %v91
  %v260 = vunpack.c.l.b16 %v92
  %v261 = vpack.c.b16 %v190, %v189
  %v262 = vpack.c.b16 %v192, %v191
  %v263 = vpack.c.b16 %v194, %v193
  %v264 = vpack.c.b16 %v196, %v195
  %v265 = vpack.c.b16 %v198, %v197
  %v266 = vpack.c.b16 %v200, %v199
  %v267 = vpack.c.b16 %v202, %v201
  %v268 = vpack.c.b16 %v204, %v203
  %v269 = vpack.c.b16 %v206, %v205
  %v270 = vpack.c.b16 %v208, %v207
  %v271 = vpack.c.b16 %v210, %v209
  %v272 = vpack.c.b16 %v212, %v211
  %v273 = vpack.c.b16 %v214, %v213
  %v274 = vpack.c.b16 %v216, %v215
  %v275 = vpack.c.b16 %v218, %v217
  %v276 = vpack.c.b16 %v220, %v219
  %v277 = vpack.c.b16 %v222, %v221
  %v278 = vpack.c.b16 %v224, %v223
  %v279 = vpack.c.b16 %v226, %v225
  %v280 = vpack.c.b16 %v228, %v227
  %v281 = vpack.c.b16 %v230, %v229
  %v282 = vpack.c.b16 %v232, %v231
  %v283 = vpack.c.b16 %v234, %v233
  %v284 = vpack.c.b16 %v236, %v235
  %v285 = vpack.c.b16 %v238, %v237
  %v286 = vpack.c.b16 %v240, %v239
  %v287 = vpack.c.b16 %v242, %v241
  %v288 = vpack.c.b16 %v244, %v243
  %v289 = vpack.c.b16 %v246, %v245
  %v290 = vpack.c.b16 %v248, %v247
  %v291 = vpack.c.b16 %v250, %v249
  %v292 = vpack.c.b16 %v252, %v251
  %v293 = vpack.c.b16 %v254, %v253
  %v294 = vpack.c.b16 %v256, %v255
  %v295 = vpack.c.b16 %v258, %v257
  %v296 = vpack.c.b16 %v260, %v259
  %vm333 = vcmask 523264
  %v335 = vsel %vm333, %v112, 0
  %337 = vmatprep.subr.bf16.mxu0 0
  %338 = vmatpush1.bf16.msra.mxu0 %v261
  %339 = vmatprep.subr.bf16.mxu0 0
  %340 = vmatpush1.bf16.msra.mxu0 %v262
  %341 = vmatprep.subr.bf16.mxu0 0
  %342 = vmatpush1.bf16.msra.mxu0 %v263
  %343 = vmatprep.subr.bf16.mxu0 0
  %344 = vmatpush1.bf16.msra.mxu0 %v264
  %345 = vmatprep.subr.bf16.mxu0 0
  %346 = vmatpush1.bf16.msra.mxu0 %v265
  %347 = vmatprep.subr.bf16.mxu0 0
  %348 = vmatpush1.bf16.msra.mxu0 %v266
  %349 = vmatprep.subr.bf16.mxu0 0
  %350 = vmatpush1.bf16.msra.mxu0 %v267
  %351 = vmatprep.subr.bf16.mxu0 0
  %352 = vmatpush1.bf16.msra.mxu0 %v268
  %353 = vmatprep.subr.bf16.mxu0 0
  %354 = vmatpush1.bf16.msra.mxu0 %v269
  %355 = vmatprep.subr.bf16.mxu0 0
  %356 = vmatpush1.bf16.msra.mxu0 %v270
  %357 = vmatprep.subr.bf16.mxu0 0
  %358 = vmatpush1.bf16.msra.mxu0 %v271
  %359 = vmatprep.subr.bf16.mxu0 0
  %360 = vmatpush1.bf16.msra.mxu0 %v272
  %361 = vmatprep.subr.bf16.mxu0 0
  %362 = vmatpush1.bf16.msra.mxu0 %v273
  %363 = vmatprep.subr.bf16.mxu0 0
  %364 = vmatpush1.bf16.msra.mxu0 %v274
  %365 = vmatprep.subr.bf16.mxu0 0
  %366 = vmatpush1.bf16.msra.mxu0 %v275
  %367 = vmatprep.subr.bf16.mxu0 0
  %368 = vmatpush1.bf16.msra.mxu0 %v276
  %369 = vmatprep.mubr.bf16.mxu0 %v109
  %370 = vmatmul.mubr.bf16.gmra.mrb[0].mxu0 %v108
  %v371 = vpop.f32.mrb[0].mxu0
  %v372 = vadd.f32 %v98, %v371
  %v373 = vpop.f32.mrb[0].mxu0
  %v374 = vpop.f32.mrb[0].mxu0
  %v375 = vpop.f32.mrb[0].mxu0
  %376 = vdwg.mxu0
  %377 = vmatprep.subr.bf16.mxu0 0
  %378 = vmatpush1.bf16.msra.mxu0 %v277
  %379 = vmatprep.subr.bf16.mxu0 0
  %380 = vmatpush1.bf16.msra.mxu0 %v278
  %381 = vmatprep.subr.bf16.mxu0 0
  %382 = vmatpush1.bf16.msra.mxu0 %v279
  %383 = vmatprep.subr.bf16.mxu0 0
  %384 = vmatpush1.bf16.msra.mxu0 %v280
  %385 = vmatprep.subr.bf16.mxu0 0
  %386 = vmatpush1.bf16.msra.mxu0 %v281
  %387 = vmatprep.subr.bf16.mxu0 0
  %388 = vmatpush1.bf16.msra.mxu0 %v282
  %389 = vmatprep.subr.bf16.mxu0 0
  %390 = vmatpush1.bf16.msra.mxu0 %v283
  %391 = vmatprep.subr.bf16.mxu0 0
  %392 = vmatpush1.bf16.msra.mxu0 %v284
  %393 = vmatprep.subr.bf16.mxu0 0
  %394 = vmatpush1.bf16.msra.mxu0 %v285
  %395 = vmatprep.subr.bf16.mxu0 0
  %396 = vmatpush1.bf16.msra.mxu0 %v286
  %397 = vmatprep.subr.bf16.mxu0 0
  %398 = vmatpush1.bf16.msra.mxu0 %v287
  %399 = vmatprep.subr.bf16.mxu0 0
  %400 = vmatpush1.bf16.msra.mxu0 %v288
  %401 = vmatprep.subr.bf16.mxu0 0
  %402 = vmatpush1.bf16.msra.mxu0 %v289
  %403 = vmatprep.subr.bf16.mxu0 0
  %404 = vmatpush1.bf16.msra.mxu0 %v290
  %405 = vmatprep.subr.bf16.mxu0 0
  %406 = vmatpush1.bf16.msra.mxu0 %v291
  %407 = vmatprep.subr.bf16.mxu0 0
  %408 = vmatpush1.bf16.msra.mxu0 %v292
  %409 = vmatprep.mubr.bf16.mxu0 %v111
  %410 = vmatmul.mubr.bf16.gmra.mrb[0].mxu0 %v110
  %v411 = vpop.f32.mrb[0].mxu0
  %v412 = vadd.f32 %v372, %v411
  %v413 = vpop.f32.mrb[0].mxu0
  %v414 = vpop.f32.mrb[0].mxu0
  %v415 = vpop.f32.mrb[0].mxu0
  %416 = vdwg.mxu0
  %417 = vmatprep.subr.bf16.mxu0 0
  %418 = vmatpush1.bf16.msra.mxu0 %v293
  %419 = vmatprep.subr.bf16.mxu0 0
  %420 = vmatpush1.bf16.msra.mxu0 %v294
  %421 = vmatprep.subr.bf16.mxu0 0
  %422 = vmatpush1.bf16.msra.mxu0 %v295
  %423 = vmatprep.subr.bf16.mxu0 0
  %424 = vmatpush1.bf16.msra.mxu0 %v296
  %425 = vmatprep.subr.bf16.mxu0 0
  %426 = vmatpush1.bf16.msra.mxu0 0
  %427 = vmatprep.subr.bf16.mxu0 0
  %428 = vmatpush1.bf16.msra.mxu0 0
  %429 = vmatprep.subr.bf16.mxu0 0
  %430 = vmatpush1.bf16.msra.mxu0 0
  %431 = vmatprep.subr.bf16.mxu0 0
  %432 = vmatpush1.bf16.msra.mxu0 0
  %433 = vmatprep.subr.bf16.mxu0 0
  %434 = vmatpush1.bf16.msra.mxu0 0
  %435 = vmatprep.subr.bf16.mxu0 0
  %436 = vmatpush1.bf16.msra.mxu0 0
  %437 = vmatprep.subr.bf16.mxu0 0
  %438 = vmatpush1.bf16.msra.mxu0 0
  %439 = vmatprep.subr.bf16.mxu0 0
  %440 = vmatpush1.bf16.msra.mxu0 0
  %441 = vmatprep.subr.bf16.mxu0 0
  %442 = vmatpush1.bf16.msra.mxu0 0
  %443 = vmatprep.subr.bf16.mxu0 0
  %444 = vmatpush1.bf16.msra.mxu0 0
  %445 = vmatprep.subr.bf16.mxu0 0
  %446 = vmatpush1.bf16.msra.mxu0 0
  %447 = vmatprep.subr.bf16.mxu0 0
  %448 = vmatpush1.bf16.msra.mxu0 0
  %449 = vmatprep.mubr.bf16.mxu0 0
  %450 = vmatmul.mubr.bf16.gmra.mrb[0].mxu0 %v335
  %v451 = vpop.f32.mrb[0].mxu0
  %v452 = vadd.f32 %v412, %v451
  %v453 = vpop.f32.mrb[0].mxu0
  %v454 = vpop.f32.mrb[0].mxu0
  %v455 = vpop.f32.mrb[0].mxu0
  %456 = vdwg.mxu0
  %v457 = vld [vmem:[%s3] sm:$0xff]
  %v458 = vadd.f32 %v452, %v457
  %v459 = vmax.f32 %v458, 0.0
  %460 = vst.msk [vmem:[%s4] sm:$0xff] %vm333, %v459
  // Predicated region
  $region18: #{resnet_transformer_forward.38} parent=0 // pred_check
    _
  $region19: #{resnet_transformer_forward.38} parent=0 // pred_check_branch
    %462 = sbr.rel (0) target = $region21
  $region20: #{resnet_transformer_forward.38} parent=0 // pred_region
    _
  $region21: #{resnet_transformer_forward.38} parent=0 // pred_fallthru
    _
  // Predicated region
  $region22: #{resnet_transformer_forward.38} parent=0 // pred_check
    _
  $region23: #{resnet_transformer_forward.38} parent=0 // pred_check_branch
    %464 = sbr.rel (0) target = $region25
  $region24: #{resnet_transformer_forward.38} parent=0 // pred_region
    _
  $region25: #{resnet_transformer_forward.38} parent=0 // pred_fallthru
    _

// kernel: resnet_transformer_forward.37
$region0: #{resnet_transformer_forward.37}
  #allocation0 [shape = 'u32[]', space=smem, size = 0x4, offset = 0x4, fixed_abs, tag = 'smem constant byte address 0x4 - core index']
  #allocation1 [shape = 'u32[144,128]{1,0:T(1,128)}', space=vmem, size = 0x12000, scoped, tag = 'internal scratch']
  %s0 = inlined_call_operand.vmem [shape: bf16[8,576], index: 0, kind: input, shape index: {}]
  %s1 = inlined_call_operand.vmem [shape: bf16[576,64], index: 1, kind: input, shape index: {}]
  %s2 = inlined_call_operand.vmem [shape: f32[1,64], index: 2, kind: input, shape index: {}]
  %s3 = inlined_call_operand.vmem [shape: f32[8,64], index: 3, kind: output, shape index: {}]
  %s4 = sld [smem:[#allocation0]]
  $region22: #{resnet_transformer_forward.37} parent=0
    _
  %s6 = ssub.s32 1, %s4
  %s7 = scalar_select 0, %s6, %s4
  // Predicated region
  $region2: #{resnet_transformer_forward.37} parent=0 // pred_check
    _
  $region3: #{resnet_transformer_forward.37} parent=0 // pred_check_branch
    %9 = sbr.rel (0) target = $region5
  $region4: #{resnet_transformer_forward.37} parent=0 // pred_region
    _
  $region5: #{resnet_transformer_forward.37} parent=0 // pred_fallthru
    _
  // Predicated region
  $region6: #{resnet_transformer_forward.37} parent=0 // pred_check
    _
  $region7: #{resnet_transformer_forward.37} parent=0 // pred_check_branch
    %11 = sbr.rel (0) target = $region9
  $region8: #{resnet_transformer_forward.37} parent=0 // pred_region
    _
  $region9: #{resnet_transformer_forward.37} parent=0 // pred_fallthru
    _
  // Predicated region
  $region10: #{resnet_transformer_forward.37} parent=0 // pred_check
    _
  $region11: #{resnet_transformer_forward.37} parent=0 // pred_check_branch
    %13 = sbr.rel (0) target = $region13
  $region12: #{resnet_transformer_forward.37} parent=0 // pred_region
    _
  $region13: #{resnet_transformer_forward.37} parent=0 // pred_fallthru
    _
  %v15 = vld [vmem:[%s0] sm:$0xff]
  %v16 = vld [vmem:[%s0 + $0x8] sm:$0xff]
  %v17 = vld [vmem:[%s0 + $0x10] sm:$0xf]
  %v18 = vld [vmem:[%s1] sm:$0xf]
  %v19 = vld [vmem:[%s1 + $0x4] sm:$0xf]
  %v20 = vld [vmem:[%s1 + $0x8] sm:$0xf]
  %v21 = vld [vmem:[%s1 + $0xc] sm:$0xf]
  %v22 = vld [vmem:[%s1 + $0x10] sm:$0xf]
  %v23 = vld [vmem:[%s1 + $0x14] sm:$0xf]
  %v24 = vld [vmem:[%s1 + $0x18] sm:$0xf]
  %v25 = vld [vmem:[%s1 + $0x1c] sm:$0xf]
  %v26 = vld [vmem:[%s1 + $0x20] sm:$0xf]
  %v27 = vld [vmem:[%s1 + $0x24] sm:$0xf]
  %v28 = vld [vmem:[%s1 + $0x28] sm:$0xf]
  %v29 = vld [vmem:[%s1 + $0x2c] sm:$0xf]
  %v30 = vld [vmem:[%s1 + $0x30] sm:$0xf]
  %v31 = vld [vmem:[%s1 + $0x34] sm:$0xf]
  %v32 = vld [vmem:[%s1 + $0x38] sm:$0xf]
  %v33 = vld [vmem:[%s1 + $0x3c] sm:$0xf]
  %v34 = vld [vmem:[%s1 + $0x40] sm:$0xf]
  %v35 = vld [vmem:[%s1 + $0x44] sm:$0xf]
  %v36 = vld [vmem:[%s1 + $0x48] sm:$0xf]
  %v37 = vld [vmem:[%s1 + $0x4c] sm:$0xf]
  %v38 = vld [vmem:[%s1 + $0x50] sm:$0xf]
  %v39 = vld [vmem:[%s1 + $0x54] sm:$0xf]
  %v40 = vld [vmem:[%s1 + $0x58] sm:$0xf]
  %v41 = vld [vmem:[%s1 + $0x5c] sm:$0xf]
  %v42 = vld [vmem:[%s1 + $0x60] sm:$0xf]
  %v43 = vld [vmem:[%s1 + $0x64] sm:$0xf]
  %v44 = vld [vmem:[%s1 + $0x68] sm:$0xf]
  %v45 = vld [vmem:[%s1 + $0x6c] sm:$0xf]
  %v46 = vld [vmem:[%s1 + $0x70] sm:$0xf]
  %v47 = vld [vmem:[%s1 + $0x74] sm:$0xf]
  %v48 = vld [vmem:[%s1 + $0x78] sm:$0xf]
  %v49 = vld [vmem:[%s1 + $0x7c] sm:$0xf]
  %v50 = vld [vmem:[%s1 + $0x80] sm:$0xf]
  %v51 = vld [vmem:[%s1 + $0x84] sm:$0xf]
  %v52 = vld [vmem:[%s1 + $0x88] sm:$0xf]
  %v53 = vld [vmem:[%s1 + $0x8c] sm:$0xf]
  %v54 = vld [vmem:[%s1 + $0x90] sm:$0xf]
  %v55 = vld [vmem:[%s1 + $0x94] sm:$0xf]
  %v56 = vld [vmem:[%s1 + $0x98] sm:$0xf]
  %v57 = vld [vmem:[%s1 + $0x9c] sm:$0xf]
  %v58 = vld [vmem:[%s1 + $0xa0] sm:$0xf]
  %v59 = vld [vmem:[%s1 + $0xa4] sm:$0xf]
  %v60 = vld [vmem:[%s1 + $0xa8] sm:$0xf]
  %v61 = vld [vmem:[%s1 + $0xac] sm:$0xf]
  %v62 = vld [vmem:[%s1 + $0xb0] sm:$0xf]
  %v63 = vld [vmem:[%s1 + $0xb4] sm:$0xf]
  %v64 = vld [vmem:[%s1 + $0xb8] sm:$0xf]
  %v65 = vld [vmem:[%s1 + $0xbc] sm:$0xf]
  %v66 = vld [vmem:[%s1 + $0xc0] sm:$0xf]
  %v67 = vld [vmem:[%s1 + $0xc4] sm:$0xf]
  %v68 = vld [vmem:[%s1 + $0xc8] sm:$0xf]
  %v69 = vld [vmem:[%s1 + $0xcc] sm:$0xf]
  %v70 = vld [vmem:[%s1 + $0xd0] sm:$0xf]
  %v71 = vld [vmem:[%s1 + $0xd4] sm:$0xf]
  %v72 = vld [vmem:[%s1 + $0xd8] sm:$0xf]
  %v73 = vld [vmem:[%s1 + $0xdc] sm:$0xf]
  %v74 = vld [vmem:[%s1 + $0xe0] sm:$0xf]
  %v75 = vld [vmem:[%s1 + $0xe4] sm:$0xf]
  %v76 = vld [vmem:[%s1 + $0xe8] sm:$0xf]
  %v77 = vld [vmem:[%s1 + $0xec] sm:$0xf]
  %v78 = vld [vmem:[%s1 + $0xf0] sm:$0xf]
  %v79 = vld [vmem:[%s1 + $0xf4] sm:$0xf]
  %v80 = vld [vmem:[%s1 + $0xf8] sm:$0xf]
  %v81 = vld [vmem:[%s1 + $0xfc] sm:$0xf]
  %v82 = vld [vmem:[%s1 + $0x100] sm:$0xf]
  %v83 = vld [vmem:[%s1 + $0x104] sm:$0xf]
  %v84 = vld [vmem:[%s1 + $0x108] sm:$0xf]
  %v85 = vld [vmem:[%s1 + $0x10c] sm:$0xf]
  %v86 = vld [vmem:[%s1 + $0x110] sm:$0xf]
  %v87 = vld [vmem:[%s1 + $0x114] sm:$0xf]
  %v88 = vld [vmem:[%s1 + $0x118] sm:$0xf]
  %v89 = vld [vmem:[%s1 + $0x11c] sm:$0xf]
  %v90 = vld [vmem:[%s2] sm:$0x1]
  %v92 = vlaneseq
  %v93 = vshrl.u32 %v92, 7
  %v94 = vsub.s32 0, %v93
  %v95 = vrot.slane %v90, %v94
  %v100 = vunpack.c.l.b16 %v15
  %v101 = vunpack.c.h.b16 %v15
  %v102 = vunpack.c.l.b16 %v16
  %v103 = vunpack.c.h.b16 %v16
  %v104 = vunpack.c.l.b16 %v17
  %v105 = vpack.c.b16 %v100, %v100
  %v106 = vpack.c.b16 %v101, %v101
  %v107 = vpack.c.b16 %v102, %v102
  %v108 = vpack.c.b16 %v103, %v103
  %v109 = vpack.c.b16 %v104, %v104
  %v186 = vunpack.c.l.b16 %v18
  %v187 = vunpack.c.l.b16 %v19
  %v188 = vunpack.c.l.b16 %v20
  %v189 = vunpack.c.l.b16 %v21
  %v190 = vunpack.c.l.b16 %v22
  %v191 = vunpack.c.l.b16 %v23
  %v192 = vunpack.c.l.b16 %v24
  %v193 = vunpack.c.l.b16 %v25
  %v194 = vunpack.c.l.b16 %v26
  %v195 = vunpack.c.l.b16 %v27
  %v196 = vunpack.c.l.b16 %v28
  %v197 = vunpack.c.l.b16 %v29
  %v198 = vunpack.c.l.b16 %v30
  %v199 = vunpack.c.l.b16 %v31
  %v200 = vunpack.c.l.b16 %v32
  %v201 = vunpack.c.l.b16 %v33
  %v202 = vunpack.c.l.b16 %v34
  %v203 = vunpack.c.l.b16 %v35
  %v204 = vunpack.c.l.b16 %v36
  %v205 = vunpack.c.l.b16 %v37
  %v206 = vunpack.c.l.b16 %v38
  %v207 = vunpack.c.l.b16 %v39
  %v208 = vunpack.c.l.b16 %v40
  %v209 = vunpack.c.l.b16 %v41
  %v210 = vunpack.c.l.b16 %v42
  %v211 = vunpack.c.l.b16 %v43
  %v212 = vunpack.c.l.b16 %v44
  %v213 = vunpack.c.l.b16 %v45
  %v214 = vunpack.c.l.b16 %v46
  %v215 = vunpack.c.l.b16 %v47
  %v216 = vunpack.c.l.b16 %v48
  %v217 = vunpack.c.l.b16 %v49
  %v218 = vunpack.c.l.b16 %v50
  %v219 = vunpack.c.l.b16 %v51
  %v220 = vunpack.c.l.b16 %v52
  %v221 = vunpack.c.l.b16 %v53
  %v222 = vunpack.c.l.b16 %v54
  %v223 = vunpack.c.l.b16 %v55
  %v224 = vunpack.c.l.b16 %v56
  %v225 = vunpack.c.l.b16 %v57
  %v226 = vunpack.c.l.b16 %v58
  %v227 = vunpack.c.l.b16 %v59
  %v228 = vunpack.c.l.b16 %v60
  %v229 = vunpack.c.l.b16 %v61
  %v230 = vunpack.c.l.b16 %v62
  %v231 = vunpack.c.l.b16 %v63
  %v232 = vunpack.c.l.b16 %v64
  %v233 = vunpack.c.l.b16 %v65
  %v234 = vunpack.c.l.b16 %v66
  %v235 = vunpack.c.l.b16 %v67
  %v236 = vunpack.c.l.b16 %v68
  %v237 = vunpack.c.l.b16 %v69
  %v238 = vunpack.c.l.b16 %v70
  %v239 = vunpack.c.l.b16 %v71
  %v240 = vunpack.c.l.b16 %v72
  %v241 = vunpack.c.l.b16 %v73
  %v242 = vunpack.c.l.b16 %v74
  %v243 = vunpack.c.l.b16 %v75
  %v244 = vunpack.c.l.b16 %v76
  %v245 = vunpack.c.l.b16 %v77
  %v246 = vunpack.c.l.b16 %v78
  %v247 = vunpack.c.l.b16 %v79
  %v248 = vunpack.c.l.b16 %v80
  %v249 = vunpack.c.l.b16 %v81
  %v250 = vunpack.c.l.b16 %v82
  %v251 = vunpack.c.l.b16 %v83
  %v252 = vunpack.c.l.b16 %v84
  %v253 = vunpack.c.l.b16 %v85
  %v254 = vunpack.c.l.b16 %v86
  %v255 = vunpack.c.l.b16 %v87
  %v256 = vunpack.c.l.b16 %v88
  %v257 = vunpack.c.l.b16 %v89
  %v258 = vpack.c.b16 %v187, %v186
  %v259 = vpack.c.b16 %v189, %v188
  %v260 = vpack.c.b16 %v191, %v190
  %v261 = vpack.c.b16 %v193, %v192
  %v262 = vpack.c.b16 %v195, %v194
  %v263 = vpack.c.b16 %v197, %v196
  %v264 = vpack.c.b16 %v199, %v198
  %v265 = vpack.c.b16 %v201, %v200
  %v266 = vpack.c.b16 %v203, %v202
  %v267 = vpack.c.b16 %v205, %v204
  %v268 = vpack.c.b16 %v207, %v206
  %v269 = vpack.c.b16 %v209, %v208
  %v270 = vpack.c.b16 %v211, %v210
  %v271 = vpack.c.b16 %v213, %v212
  %v272 = vpack.c.b16 %v215, %v214
  %v273 = vpack.c.b16 %v217, %v216
  %v274 = vpack.c.b16 %v219, %v218
  %v275 = vpack.c.b16 %v221, %v220
  %v276 = vpack.c.b16 %v223, %v222
  %v277 = vpack.c.b16 %v225, %v224
  %v278 = vpack.c.b16 %v227, %v226
  %v279 = vpack.c.b16 %v229, %v228
  %v280 = vpack.c.b16 %v231, %v230
  %v281 = vpack.c.b16 %v233, %v232
  %v282 = vpack.c.b16 %v235, %v234
  %v283 = vpack.c.b16 %v237, %v236
  %v284 = vpack.c.b16 %v239, %v238
  %v285 = vpack.c.b16 %v241, %v240
  %v286 = vpack.c.b16 %v243, %v242
  %v287 = vpack.c.b16 %v245, %v244
  %v288 = vpack.c.b16 %v247, %v246
  %v289 = vpack.c.b16 %v249, %v248
  %v290 = vpack.c.b16 %v251, %v250
  %v291 = vpack.c.b16 %v253, %v252
  %v292 = vpack.c.b16 %v255, %v254
  %v293 = vpack.c.b16 %v257, %v256
  %vm330 = vcmask 523264
  %v332 = vsel %vm330, %v109, 0
  %334 = vmatprep.subr.bf16.mxu0 0
  %335 = vmatpush1.bf16.msra.mxu0 %v258
  %336 = vmatprep.subr.bf16.mxu0 0
  %337 = vmatpush1.bf16.msra.mxu0 %v259
  %338 = vmatprep.subr.bf16.mxu0 0
  %339 = vmatpush1.bf16.msra.mxu0 %v260
  %340 = vmatprep.subr.bf16.mxu0 0
  %341 = vmatpush1.bf16.msra.mxu0 %v261
  %342 = vmatprep.subr.bf16.mxu0 0
  %343 = vmatpush1.bf16.msra.mxu0 %v262
  %344 = vmatprep.subr.bf16.mxu0 0
  %345 = vmatpush1.bf16.msra.mxu0 %v263
  %346 = vmatprep.subr.bf16.mxu0 0
  %347 = vmatpush1.bf16.msra.mxu0 %v264
  %348 = vmatprep.subr.bf16.mxu0 0
  %349 = vmatpush1.bf16.msra.mxu0 %v265
  %350 = vmatprep.subr.bf16.mxu0 0
  %351 = vmatpush1.bf16.msra.mxu0 %v266
  %352 = vmatprep.subr.bf16.mxu0 0
  %353 = vmatpush1.bf16.msra.mxu0 %v267
  %354 = vmatprep.subr.bf16.mxu0 0
  %355 = vmatpush1.bf16.msra.mxu0 %v268
  %356 = vmatprep.subr.bf16.mxu0 0
  %357 = vmatpush1.bf16.msra.mxu0 %v269
  %358 = vmatprep.subr.bf16.mxu0 0
  %359 = vmatpush1.bf16.msra.mxu0 %v270
  %360 = vmatprep.subr.bf16.mxu0 0
  %361 = vmatpush1.bf16.msra.mxu0 %v271
  %362 = vmatprep.subr.bf16.mxu0 0
  %363 = vmatpush1.bf16.msra.mxu0 %v272
  %364 = vmatprep.subr.bf16.mxu0 0
  %365 = vmatpush1.bf16.msra.mxu0 %v273
  %366 = vmatprep.mubr.bf16.mxu0 %v106
  %367 = vmatmul.mubr.bf16.gmra.mrb[0].mxu0 %v105
  %v368 = vpop.f32.mrb[0].mxu0
  %v369 = vadd.f32 %v95, %v368
  %v370 = vpop.f32.mrb[0].mxu0
  %v371 = vpop.f32.mrb[0].mxu0
  %v372 = vpop.f32.mrb[0].mxu0
  %373 = vdwg.mxu0
  %374 = vmatprep.subr.bf16.mxu0 0
  %375 = vmatpush1.bf16.msra.mxu0 %v274
  %376 = vmatprep.subr.bf16.mxu0 0
  %377 = vmatpush1.bf16.msra.mxu0 %v275
  %378 = vmatprep.subr.bf16.mxu0 0
  %379 = vmatpush1.bf16.msra.mxu0 %v276
  %380 = vmatprep.subr.bf16.mxu0 0
  %381 = vmatpush1.bf16.msra.mxu0 %v277
  %382 = vmatprep.subr.bf16.mxu0 0
  %383 = vmatpush1.bf16.msra.mxu0 %v278
  %384 = vmatprep.subr.bf16.mxu0 0
  %385 = vmatpush1.bf16.msra.mxu0 %v279
  %386 = vmatprep.subr.bf16.mxu0 0
  %387 = vmatpush1.bf16.msra.mxu0 %v280
  %388 = vmatprep.subr.bf16.mxu0 0
  %389 = vmatpush1.bf16.msra.mxu0 %v281
  %390 = vmatprep.subr.bf16.mxu0 0
  %391 = vmatpush1.bf16.msra.mxu0 %v282
  %392 = vmatprep.subr.bf16.mxu0 0
  %393 = vmatpush1.bf16.msra.mxu0 %v283
  %394 = vmatprep.subr.bf16.mxu0 0
  %395 = vmatpush1.bf16.msra.mxu0 %v284
  %396 = vmatprep.subr.bf16.mxu0 0
  %397 = vmatpush1.bf16.msra.mxu0 %v285
  %398 = vmatprep.subr.bf16.mxu0 0
  %399 = vmatpush1.bf16.msra.mxu0 %v286
  %400 = vmatprep.subr.bf16.mxu0 0
  %401 = vmatpush1.bf16.msra.mxu0 %v287
  %402 = vmatprep.subr.bf16.mxu0 0
  %403 = vmatpush1.bf16.msra.mxu0 %v288
  %404 = vmatprep.subr.bf16.mxu0 0
  %405 = vmatpush1.bf16.msra.mxu0 %v289
  %406 = vmatprep.mubr.bf16.mxu0 %v108
  %407 = vmatmul.mubr.bf16.gmra.mrb[0].mxu0 %v107
  %v408 = vpop.f32.mrb[0].mxu0
  %v409 = vadd.f32 %v369, %v408
  %v410 = vpop.f32.mrb[0].mxu0
  %v411 = vpop.f32.mrb[0].mxu0
  %v412 = vpop.f32.mrb[0].mxu0
  %413 = vdwg.mxu0
  %414 = vmatprep.subr.bf16.mxu0 0
  %415 = vmatpush1.bf16.msra.mxu0 %v290
  %416 = vmatprep.subr.bf16.mxu0 0
  %417 = vmatpush1.bf16.msra.mxu0 %v291
  %418 = vmatprep.subr.bf16.mxu0 0
  %419 = vmatpush1.bf16.msra.mxu0 %v292
  %420 = vmatprep.subr.bf16.mxu0 0
  %421 = vmatpush1.bf16.msra.mxu0 %v293
  %422 = vmatprep.subr.bf16.mxu0 0
  %423 = vmatpush1.bf16.msra.mxu0 0
  %424 = vmatprep.subr.bf16.mxu0 0
  %425 = vmatpush1.bf16.msra.mxu0 0
  %426 = vmatprep.subr.bf16.mxu0 0
  %427 = vmatpush1.bf16.msra.mxu0 0
  %428 = vmatprep.subr.bf16.mxu0 0
  %429 = vmatpush1.bf16.msra.mxu0 0
  %430 = vmatprep.subr.bf16.mxu0 0
  %431 = vmatpush1.bf16.msra.mxu0 0
  %432 = vmatprep.subr.bf16.mxu0 0
  %433 = vmatpush1.bf16.msra.mxu0 0
  %434 = vmatprep.subr.bf16.mxu0 0
  %435 = vmatpush1.bf16.msra.mxu0 0
  %436 = vmatprep.subr.bf16.mxu0 0
  %437 = vmatpush1.bf16.msra.mxu0 0
  %438 = vmatprep.subr.bf16.mxu0 0
  %439 = vmatpush1.bf16.msra.mxu0 0
  %440 = vmatprep.subr.bf16.mxu0 0
  %441 = vmatpush1.bf16.msra.mxu0 0
  %442 = vmatprep.subr.bf16.mxu0 0
  %443 = vmatpush1.bf16.msra.mxu0 0
  %444 = vmatprep.subr.bf16.mxu0 0
  %445 = vmatpush1.bf16.msra.mxu0 0
  %446 = vmatprep.mubr.bf16.mxu0 0
  %447 = vmatmul.mubr.bf16.gmra.mrb[0].mxu0 %v332
  %v448 = vpop.f32.mrb[0].mxu0
  %v449 = vadd.f32 %v409, %v448
  %v450 = vpop.f32.mrb[0].mxu0
  %v451 = vpop.f32.mrb[0].mxu0
  %v452 = vpop.f32.mrb[0].mxu0
  %453 = vdwg.mxu0
  %v454 = vmax.f32 %v449, 0.0
  %455 = vst.msk [vmem:[%s3] sm:$0xff] %vm330, %v454
  // Predicated region
  $region14: #{resnet_transformer_forward.37} parent=0 // pred_check
    _
  $region15: #{resnet_transformer_forward.37} parent=0 // pred_check_branch
    %457 = sbr.rel (0) target = $region17
  $region16: #{resnet_transformer_forward.37} parent=0 // pred_region
    _
  $region17: #{resnet_transformer_forward.37} parent=0 // pred_fallthru
    _
  // Predicated region
  $region18: #{resnet_transformer_forward.37} parent=0 // pred_check
    _
  $region19: #{resnet_transformer_forward.37} parent=0 // pred_check_branch
    %459 = sbr.rel (0) target = $region21
  $region20: #{resnet_transformer_forward.37} parent=0 // pred_region
    _
  $region21: #{resnet_transformer_forward.37} parent=0 // pred_fallthru
    _

// kernel: resnet_transformer_forward.36
$region0: #{resnet_transformer_forward.36}
  #allocation0 [shape = 'u32[]', space=smem, size = 0x4, offset = 0x4, fixed_abs, tag = 'smem constant byte address 0x4 - core index']
  #allocation1 [shape = 'u32[144,128]{1,0:T(1,128)}', space=vmem, size = 0x12000, scoped, tag = 'internal scratch']
  %s0 = inlined_call_operand.vmem [shape: bf16[8,576], index: 0, kind: input, shape index: {}]
  %s1 = inlined_call_operand.vmem [shape: bf16[576,64], index: 1, kind: input, shape index: {}]
  %s2 = inlined_call_operand.vmem [shape: f32[1,64], index: 2, kind: input, shape index: {}]
  %s3 = inlined_call_operand.vmem [shape: bf16[8,32], index: 3, kind: input, shape index: {}]
  %s4 = inlined_call_operand.vmem [shape: bf16[32,64], index: 4, kind: input, shape index: {}]
  %s5 = inlined_call_operand.vmem [shape: f32[1,64], index: 5, kind: input, shape index: {}]
  %s6 = inlined_call_operand.vmem [shape: f32[8,64], index: 6, kind: output, shape index: {}]
  %s7 = sld [smem:[#allocation0]]
  $region34: #{resnet_transformer_forward.36} parent=0
    _
  %s9 = ssub.s32 1, %s7
  %s10 = scalar_select 0, %s9, %s7
  // Predicated region
  $region2: #{resnet_transformer_forward.36} parent=0 // pred_check
    _
  $region3: #{resnet_transformer_forward.36} parent=0 // pred_check_branch
    %12 = sbr.rel (0) target = $region5
  $region4: #{resnet_transformer_forward.36} parent=0 // pred_region
    _
  $region5: #{resnet_transformer_forward.36} parent=0 // pred_fallthru
    _
  // Predicated region
  $region6: #{resnet_transformer_forward.36} parent=0 // pred_check
    _
  $region7: #{resnet_transformer_forward.36} parent=0 // pred_check_branch
    %14 = sbr.rel (0) target = $region9
  $region8: #{resnet_transformer_forward.36} parent=0 // pred_region
    _
  $region9: #{resnet_transformer_forward.36} parent=0 // pred_fallthru
    _
  // Predicated region
  $region10: #{resnet_transformer_forward.36} parent=0 // pred_check
    _
  $region11: #{resnet_transformer_forward.36} parent=0 // pred_check_branch
    %16 = sbr.rel (0) target = $region13
  $region12: #{resnet_transformer_forward.36} parent=0 // pred_region
    _
  $region13: #{resnet_transformer_forward.36} parent=0 // pred_fallthru
    _
  // Predicated region
  $region14: #{resnet_transformer_forward.36} parent=0 // pred_check
    _
  $region15: #{resnet_transformer_forward.36} parent=0 // pred_check_branch
    %18 = sbr.rel (0) target = $region17
  $region16: #{resnet_transformer_forward.36} parent=0 // pred_region
    _
  $region17: #{resnet_transformer_forward.36} parent=0 // pred_fallthru
    _
  // Predicated region
  $region18: #{resnet_transformer_forward.36} parent=0 // pred_check
    _
  $region19: #{resnet_transformer_forward.36} parent=0 // pred_check_branch
    %20 = sbr.rel (0) target = $region21
  $region20: #{resnet_transformer_forward.36} parent=0 // pred_region
    _
  $region21: #{resnet_transformer_forward.36} parent=0 // pred_fallthru
    _
  // Predicated region
  $region22: #{resnet_transformer_forward.36} parent=0 // pred_check
    _
  $region23: #{resnet_transformer_forward.36} parent=0 // pred_check_branch
    %22 = sbr.rel (0) target = $region25
  $region24: #{resnet_transformer_forward.36} parent=0 // pred_region
    _
  $region25: #{resnet_transformer_forward.36} parent=0 // pred_fallthru
    _
  %v24 = vld [vmem:[%s0] sm:$0xff]
  %v25 = vld [vmem:[%s0 + $0x8] sm:$0xff]
  %v26 = vld [vmem:[%s0 + $0x10] sm:$0xf]
  %v27 = vld [vmem:[%s1] sm:$0xf]
  %v28 = vld [vmem:[%s1 + $0x4] sm:$0xf]
  %v29 = vld [vmem:[%s1 + $0x8] sm:$0xf]
  %v30 = vld [vmem:[%s1 + $0xc] sm:$0xf]
  %v31 = vld [vmem:[%s1 + $0x10] sm:$0xf]
  %v32 = vld [vmem:[%s1 + $0x14] sm:$0xf]
  %v33 = vld [vmem:[%s1 + $0x18] sm:$0xf]
  %v34 = vld [vmem:[%s1 + $0x1c] sm:$0xf]
  %v35 = vld [vmem:[%s1 + $0x20] sm:$0xf]
  %v36 = vld [vmem:[%s1 + $0x24] sm:$0xf]
  %v37 = vld [vmem:[%s1 + $0x28] sm:$0xf]
  %v38 = vld [vmem:[%s1 + $0x2c] sm:$0xf]
  %v39 = vld [vmem:[%s1 + $0x30] sm:$0xf]
  %v40 = vld [vmem:[%s1 + $0x34] sm:$0xf]
  %v41 = vld [vmem:[%s1 + $0x38] sm:$0xf]
  %v42 = vld [vmem:[%s1 + $0x3c] sm:$0xf]
  %v43 = vld [vmem:[%s1 + $0x40] sm:$0xf]
  %v44 = vld [vmem:[%s1 + $0x44] sm:$0xf]
  %v45 = vld [vmem:[%s1 + $0x48] sm:$0xf]
  %v46 = vld [vmem:[%s1 + $0x4c] sm:$0xf]
  %v47 = vld [vmem:[%s1 + $0x50] sm:$0xf]
  %v48 = vld [vmem:[%s1 + $0x54] sm:$0xf]
  %v49 = vld [vmem:[%s1 + $0x58] sm:$0xf]
  %v50 = vld [vmem:[%s1 + $0x5c] sm:$0xf]
  %v51 = vld [vmem:[%s1 + $0x60] sm:$0xf]
  %v52 = vld [vmem:[%s1 + $0x64] sm:$0xf]
  %v53 = vld [vmem:[%s1 + $0x68] sm:$0xf]
  %v54 = vld [vmem:[%s1 + $0x6c] sm:$0xf]
  %v55 = vld [vmem:[%s1 + $0x70] sm:$0xf]
  %v56 = vld [vmem:[%s1 + $0x74] sm:$0xf]
  %v57 = vld [vmem:[%s1 + $0x78] sm:$0xf]
  %v58 = vld [vmem:[%s1 + $0x7c] sm:$0xf]
  %v59 = vld [vmem:[%s1 + $0x80] sm:$0xf]
  %v60 = vld [vmem:[%s1 + $0x84] sm:$0xf]
  %v61 = vld [vmem:[%s1 + $0x88] sm:$0xf]
  %v62 = vld [vmem:[%s1 + $0x8c] sm:$0xf]
  %v63 = vld [vmem:[%s1 + $0x90] sm:$0xf]
  %v64 = vld [vmem:[%s1 + $0x94] sm:$0xf]
  %v65 = vld [vmem:[%s1 + $0x98] sm:$0xf]
  %v66 = vld [vmem:[%s1 + $0x9c] sm:$0xf]
  %v67 = vld [vmem:[%s1 + $0xa0] sm:$0xf]
  %v68 = vld [vmem:[%s1 + $0xa4] sm:$0xf]
  %v69 = vld [vmem:[%s1 + $0xa8] sm:$0xf]
  %v70 = vld [vmem:[%s1 + $0xac] sm:$0xf]
  %v71 = vld [vmem:[%s1 + $0xb0] sm:$0xf]
  %v72 = vld [vmem:[%s1 + $0xb4] sm:$0xf]
  %v73 = vld [vmem:[%s1 + $0xb8] sm:$0xf]
  %v74 = vld [vmem:[%s1 + $0xbc] sm:$0xf]
  %v75 = vld [vmem:[%s1 + $0xc0] sm:$0xf]
  %v76 = vld [vmem:[%s1 + $0xc4] sm:$0xf]
  %v77 = vld [vmem:[%s1 + $0xc8] sm:$0xf]
  %v78 = vld [vmem:[%s1 + $0xcc] sm:$0xf]
  %v79 = vld [vmem:[%s1 + $0xd0] sm:$0xf]
  %v80 = vld [vmem:[%s1 + $0xd4] sm:$0xf]
  %v81 = vld [vmem:[%s1 + $0xd8] sm:$0xf]
  %v82 = vld [vmem:[%s1 + $0xdc] sm:$0xf]
  %v83 = vld [vmem:[%s1 + $0xe0] sm:$0xf]
  %v84 = vld [vmem:[%s1 + $0xe4] sm:$0xf]
  %v85 = vld [vmem:[%s1 + $0xe8] sm:$0xf]
  %v86 = vld [vmem:[%s1 + $0xec] sm:$0xf]
  %v87 = vld [vmem:[%s1 + $0xf0] sm:$0xf]
  %v88 = vld [vmem:[%s1 + $0xf4] sm:$0xf]
  %v89 = vld [vmem:[%s1 + $0xf8] sm:$0xf]
  %v90 = vld [vmem:[%s1 + $0xfc] sm:$0xf]
  %v91 = vld [vmem:[%s1 + $0x100] sm:$0xf]
  %v92 = vld [vmem:[%s1 + $0x104] sm:$0xf]
  %v93 = vld [vmem:[%s1 + $0x108] sm:$0xf]
  %v94 = vld [vmem:[%s1 + $0x10c] sm:$0xf]
  %v95 = vld [vmem:[%s1 + $0x110] sm:$0xf]
  %v96 = vld [vmem:[%s1 + $0x114] sm:$0xf]
  %v97 = vld [vmem:[%s1 + $0x118] sm:$0xf]
  %v98 = vld [vmem:[%s1 + $0x11c] sm:$0xf]
  %v99 = vld [vmem:[%s2] sm:$0x1]
  %v101 = vlaneseq
  %v102 = vshrl.u32 %v101, 7
  %v103 = vsub.s32 0, %v102
  %v104 = vrot.slane %v99, %v103
  %v109 = vunpack.c.l.b16 %v24
  %v110 = vunpack.c.h.b16 %v24
  %v111 = vunpack.c.l.b16 %v25
  %v112 = vunpack.c.h.b16 %v25
  %v113 = vunpack.c.l.b16 %v26
  %v114 = vpack.c.b16 %v109, %v109
  %v115 = vpack.c.b16 %v110, %v110
  %v116 = vpack.c.b16 %v111, %v111
  %v117 = vpack.c.b16 %v112, %v112
  %v118 = vpack.c.b16 %v113, %v113
  %v195 = vunpack.c.l.b16 %v27
  %v196 = vunpack.c.l.b16 %v28
  %v197 = vunpack.c.l.b16 %v29
  %v198 = vunpack.c.l.b16 %v30
  %v199 = vunpack.c.l.b16 %v31
  %v200 = vunpack.c.l.b16 %v32
  %v201 = vunpack.c.l.b16 %v33
  %v202 = vunpack.c.l.b16 %v34
  %v203 = vunpack.c.l.b16 %v35
  %v204 = vunpack.c.l.b16 %v36
  %v205 = vunpack.c.l.b16 %v37
  %v206 = vunpack.c.l.b16 %v38
  %v207 = vunpack.c.l.b16 %v39
  %v208 = vunpack.c.l.b16 %v40
  %v209 = vunpack.c.l.b16 %v41
  %v210 = vunpack.c.l.b16 %v42
  %v211 = vunpack.c.l.b16 %v43
  %v212 = vunpack.c.l.b16 %v44
  %v213 = vunpack.c.l.b16 %v45
  %v214 = vunpack.c.l.b16 %v46
  %v215 = vunpack.c.l.b16 %v47
  %v216 = vunpack.c.l.b16 %v48
  %v217 = vunpack.c.l.b16 %v49
  %v218 = vunpack.c.l.b16 %v50
  %v219 = vunpack.c.l.b16 %v51
  %v220 = vunpack.c.l.b16 %v52
  %v221 = vunpack.c.l.b16 %v53
  %v222 = vunpack.c.l.b16 %v54
  %v223 = vunpack.c.l.b16 %v55
  %v224 = vunpack.c.l.b16 %v56
  %v225 = vunpack.c.l.b16 %v57
  %v226 = vunpack.c.l.b16 %v58
  %v227 = vunpack.c.l.b16 %v59
  %v228 = vunpack.c.l.b16 %v60
  %v229 = vunpack.c.l.b16 %v61
  %v230 = vunpack.c.l.b16 %v62
  %v231 = vunpack.c.l.b16 %v63
  %v232 = vunpack.c.l.b16 %v64
  %v233 = vunpack.c.l.b16 %v65
  %v234 = vunpack.c.l.b16 %v66
  %v235 = vunpack.c.l.b16 %v67
  %v236 = vunpack.c.l.b16 %v68
  %v237 = vunpack.c.l.b16 %v69
  %v238 = vunpack.c.l.b16 %v70
  %v239 = vunpack.c.l.b16 %v71
  %v240 = vunpack.c.l.b16 %v72
  %v241 = vunpack.c.l.b16 %v73
  %v242 = vunpack.c.l.b16 %v74
  %v243 = vunpack.c.l.b16 %v75
  %v244 = vunpack.c.l.b16 %v76
  %v245 = vunpack.c.l.b16 %v77
  %v246 = vunpack.c.l.b16 %v78
  %v247 = vunpack.c.l.b16 %v79
  %v248 = vunpack.c.l.b16 %v80
  %v249 = vunpack.c.l.b16 %v81
  %v250 = vunpack.c.l.b16 %v82
  %v251 = vunpack.c.l.b16 %v83
  %v252 = vunpack.c.l.b16 %v84
  %v253 = vunpack.c.l.b16 %v85
  %v254 = vunpack.c.l.b16 %v86
  %v255 = vunpack.c.l.b16 %v87
  %v256 = vunpack.c.l.b16 %v88
  %v257 = vunpack.c.l.b16 %v89
  %v258 = vunpack.c.l.b16 %v90
  %v259 = vunpack.c.l.b16 %v91
  %v260 = vunpack.c.l.b16 %v92
  %v261 = vunpack.c.l.b16 %v93
  %v262 = vunpack.c.l.b16 %v94
  %v263 = vunpack.c.l.b16 %v95
  %v264 = vunpack.c.l.b16 %v96
  %v265 = vunpack.c.l.b16 %v97
  %v266 = vunpack.c.l.b16 %v98
  %v267 = vpack.c.b16 %v196, %v195
  %v268 = vpack.c.b16 %v198, %v197
  %v269 = vpack.c.b16 %v200, %v199
  %v270 = vpack.c.b16 %v202, %v201
  %v271 = vpack.c.b16 %v204, %v203
  %v272 = vpack.c.b16 %v206, %v205
  %v273 = vpack.c.b16 %v208, %v207
  %v274 = vpack.c.b16 %v210, %v209
  %v275 = vpack.c.b16 %v212, %v211
  %v276 = vpack.c.b16 %v214, %v213
  %v277 = vpack.c.b16 %v216, %v215
  %v278 = vpack.c.b16 %v218, %v217
  %v279 = vpack.c.b16 %v220, %v219
  %v280 = vpack.c.b16 %v222, %v221
  %v281 = vpack.c.b16 %v224, %v223
  %v282 = vpack.c.b16 %v226, %v225
  %v283 = vpack.c.b16 %v228, %v227
  %v284 = vpack.c.b16 %v230, %v229
  %v285 = vpack.c.b16 %v232, %v231
  %v286 = vpack.c.b16 %v234, %v233
  %v287 = vpack.c.b16 %v236, %v235
  %v288 = vpack.c.b16 %v238, %v237
  %v289 = vpack.c.b16 %v240, %v239
  %v290 = vpack.c.b16 %v242, %v241
  %v291 = vpack.c.b16 %v244, %v243
  %v292 = vpack.c.b16 %v246, %v245
  %v293 = vpack.c.b16 %v248, %v247
  %v294 = vpack.c.b16 %v250, %v249
  %v295 = vpack.c.b16 %v252, %v251
  %v296 = vpack.c.b16 %v254, %v253
  %v297 = vpack.c.b16 %v256, %v255
  %v298 = vpack.c.b16 %v258, %v257
  %v299 = vpack.c.b16 %v260, %v259
  %v300 = vpack.c.b16 %v262, %v261
  %v301 = vpack.c.b16 %v264, %v263
  %v302 = vpack.c.b16 %v266, %v265
  %vm339 = vcmask 523264
  %v341 = vsel %vm339, %v118, 0
  %343 = vmatprep.subr.bf16.mxu0 0
  %344 = vmatpush1.bf16.msra.mxu0 %v267
  %345 = vmatprep.subr.bf16.mxu0 0
  %346 = vmatpush1.bf16.msra.mxu0 %v268
  %347 = vmatprep.subr.bf16.mxu0 0
  %348 = vmatpush1.bf16.msra.mxu0 %v269
  %349 = vmatprep.subr.bf16.mxu0 0
  %350 = vmatpush1.bf16.msra.mxu0 %v270
  %351 = vmatprep.subr.bf16.mxu0 0
  %352 = vmatpush1.bf16.msra.mxu0 %v271
  %353 = vmatprep.subr.bf16.mxu0 0
  %354 = vmatpush1.bf16.msra.mxu0 %v272
  %355 = vmatprep.subr.bf16.mxu0 0
  %356 = vmatpush1.bf16.msra.mxu0 %v273
  %357 = vmatprep.subr.bf16.mxu0 0
  %358 = vmatpush1.bf16.msra.mxu0 %v274
  %359 = vmatprep.subr.bf16.mxu0 0
  %360 = vmatpush1.bf16.msra.mxu0 %v275
  %361 = vmatprep.subr.bf16.mxu0 0
  %362 = vmatpush1.bf16.msra.mxu0 %v276
  %363 = vmatprep.subr.bf16.mxu0 0
  %364 = vmatpush1.bf16.msra.mxu0 %v277
  %365 = vmatprep.subr.bf16.mxu0 0
  %366 = vmatpush1.bf16.msra.mxu0 %v278
  %367 = vmatprep.subr.bf16.mxu0 0
  %368 = vmatpush1.bf16.msra.mxu0 %v279
  %369 = vmatprep.subr.bf16.mxu0 0
  %370 = vmatpush1.bf16.msra.mxu0 %v280
  %371 = vmatprep.subr.bf16.mxu0 0
  %372 = vmatpush1.bf16.msra.mxu0 %v281
  %373 = vmatprep.subr.bf16.mxu0 0
  %374 = vmatpush1.bf16.msra.mxu0 %v282
  %375 = vmatprep.mubr.bf16.mxu0 %v115
  %376 = vmatmul.mubr.bf16.gmra.mrb[0].mxu0 %v114
  %v377 = vpop.f32.mrb[0].mxu0
  %v378 = vadd.f32 %v104, %v377
  %v379 = vpop.f32.mrb[0].mxu0
  %v380 = vpop.f32.mrb[0].mxu0
  %v381 = vpop.f32.mrb[0].mxu0
  %382 = vdwg.mxu0
  %383 = vmatprep.subr.bf16.mxu0 0
  %384 = vmatpush1.bf16.msra.mxu0 %v283
  %385 = vmatprep.subr.bf16.mxu0 0
  %386 = vmatpush1.bf16.msra.mxu0 %v284
  %387 = vmatprep.subr.bf16.mxu0 0
  %388 = vmatpush1.bf16.msra.mxu0 %v285
  %389 = vmatprep.subr.bf16.mxu0 0
  %390 = vmatpush1.bf16.msra.mxu0 %v286
  %391 = vmatprep.subr.bf16.mxu0 0
  %392 = vmatpush1.bf16.msra.mxu0 %v287
  %393 = vmatprep.subr.bf16.mxu0 0
  %394 = vmatpush1.bf16.msra.mxu0 %v288
  %395 = vmatprep.subr.bf16.mxu0 0
  %396 = vmatpush1.bf16.msra.mxu0 %v289
  %397 = vmatprep.subr.bf16.mxu0 0
  %398 = vmatpush1.bf16.msra.mxu0 %v290
  %399 = vmatprep.subr.bf16.mxu0 0
  %400 = vmatpush1.bf16.msra.mxu0 %v291
  %401 = vmatprep.subr.bf16.mxu0 0
  %402 = vmatpush1.bf16.msra.mxu0 %v292
  %403 = vmatprep.subr.bf16.mxu0 0
  %404 = vmatpush1.bf16.msra.mxu0 %v293
  %405 = vmatprep.subr.bf16.mxu0 0
  %406 = vmatpush1.bf16.msra.mxu0 %v294
  %407 = vmatprep.subr.bf16.mxu0 0
  %408 = vmatpush1.bf16.msra.mxu0 %v295
  %409 = vmatprep.subr.bf16.mxu0 0
  %410 = vmatpush1.bf16.msra.mxu0 %v296
  %411 = vmatprep.subr.bf16.mxu0 0
  %412 = vmatpush1.bf16.msra.mxu0 %v297
  %413 = vmatprep.subr.bf16.mxu0 0
  %414 = vmatpush1.bf16.msra.mxu0 %v298
  %415 = vmatprep.mubr.bf16.mxu0 %v117
  %416 = vmatmul.mubr.bf16.gmra.mrb[0].mxu0 %v116
  %v417 = vpop.f32.mrb[0].mxu0
  %v418 = vadd.f32 %v378, %v417
  %v419 = vpop.f32.mrb[0].mxu0
  %v420 = vpop.f32.mrb[0].mxu0
  %v421 = vpop.f32.mrb[0].mxu0
  %422 = vdwg.mxu0
  %423 = vmatprep.subr.bf16.mxu0 0
  %424 = vmatpush1.bf16.msra.mxu0 %v299
  %425 = vmatprep.subr.bf16.mxu0 0
  %426 = vmatpush1.bf16.msra.mxu0 %v300
  %427 = vmatprep.subr.bf16.mxu0 0
  %428 = vmatpush1.bf16.msra.mxu0 %v301
  %429 = vmatprep.subr.bf16.mxu0 0
  %430 = vmatpush1.bf16.msra.mxu0 %v302
  %431 = vmatprep.subr.bf16.mxu0 0
  %432 = vmatpush1.bf16.msra.mxu0 0
  %433 = vmatprep.subr.bf16.mxu0 0
  %434 = vmatpush1.bf16.msra.mxu0 0
  %435 = vmatprep.subr.bf16.mxu0 0
  %436 = vmatpush1.bf16.msra.mxu0 0
  %437 = vmatprep.subr.bf16.mxu0 0
  %438 = vmatpush1.bf16.msra.mxu0 0
  %439 = vmatprep.subr.bf16.mxu0 0
  %440 = vmatpush1.bf16.msra.mxu0 0
  %441 = vmatprep.subr.bf16.mxu0 0
  %442 = vmatpush1.bf16.msra.mxu0 0
  %443 = vmatprep.subr.bf16.mxu0 0
  %444 = vmatpush1.bf16.msra.mxu0 0
  %445 = vmatprep.subr.bf16.mxu0 0
  %446 = vmatpush1.bf16.msra.mxu0 0
  %447 = vmatprep.subr.bf16.mxu0 0
  %448 = vmatpush1.bf16.msra.mxu0 0
  %449 = vmatprep.subr.bf16.mxu0 0
  %450 = vmatpush1.bf16.msra.mxu0 0
  %451 = vmatprep.subr.bf16.mxu0 0
  %452 = vmatpush1.bf16.msra.mxu0 0
  %453 = vmatprep.subr.bf16.mxu0 0
  %454 = vmatpush1.bf16.msra.mxu0 0
  %455 = vmatprep.mubr.bf16.mxu0 0
  %456 = vmatmul.mubr.bf16.gmra.mrb[0].mxu0 %v341
  %v457 = vpop.f32.mrb[0].mxu0
  %v458 = vadd.f32 %v418, %v457
  %v459 = vpop.f32.mrb[0].mxu0
  %v460 = vpop.f32.mrb[0].mxu0
  %v461 = vpop.f32.mrb[0].mxu0
  %462 = vdwg.mxu0
  %v463 = vld [vmem:[%s3] sm:$0xf]
  %v464 = vld [vmem:[%s4] sm:$0xf]
  %v465 = vld [vmem:[%s4 + $0x4] sm:$0xf]
  %v466 = vld [vmem:[%s4 + $0x8] sm:$0xf]
  %v467 = vld [vmem:[%s4 + $0xc] sm:$0xf]
  %v472 = vunpack.c.l.b16 %v464
  %v473 = vunpack.c.l.b16 %v465
  %v474 = vunpack.c.l.b16 %v466
  %v475 = vunpack.c.l.b16 %v467
  %v476 = vpack.c.b16 %v473, %v472
  %v477 = vpack.c.b16 %v475, %v474
  %vm480 = vcmask 261120
  %v482 = vsel %vm480, %v463, 0
  %484 = vmatprep.subr.bf16.mxu0 0
  %485 = vmatpush1.bf16.msra.mxu0 %v476
  %486 = vmatprep.subr.bf16.mxu0 0
  %487 = vmatpush1.bf16.msra.mxu0 %v477
  %488 = vmatprep.subr.bf16.mxu0 0
  %489 = vmatpush1.bf16.msra.mxu0 0
  %490 = vmatprep.subr.bf16.mxu0 0
  %491 = vmatpush1.bf16.msra.mxu0 0
  %492 = vmatprep.subr.bf16.mxu0 0
  %493 = vmatpush1.bf16.msra.mxu0 0
  %494 = vmatprep.subr.bf16.mxu0 0
  %495 = vmatpush1.bf16.msra.mxu0 0
  %496 = vmatprep.subr.bf16.mxu0 0
  %497 = vmatpush1.bf16.msra.mxu0 0
  %498 = vmatprep.subr.bf16.mxu0 0
  %499 = vmatpush1.bf16.msra.mxu0 0
  %500 = vmatprep.subr.bf16.mxu0 0
  %501 = vmatpush1.bf16.msra.mxu0 0
  %502 = vmatprep.subr.bf16.mxu0 0
  %503 = vmatpush1.bf16.msra.mxu0 0
  %504 = vmatprep.subr.bf16.mxu0 0
  %505 = vmatpush1.bf16.msra.mxu0 0
  %506 = vmatprep.subr.bf16.mxu0 0
  %507 = vmatpush1.bf16.msra.mxu0 0
  %508 = vmatprep.subr.bf16.mxu0 0
  %509 = vmatpush1.bf16.msra.mxu0 0
  %510 = vmatprep.subr.bf16.mxu0 0
  %511 = vmatpush1.bf16.msra.mxu0 0
  %512 = vmatprep.subr.bf16.mxu0 0
  %513 = vmatpush1.bf16.msra.mxu0 0
  %514 = vmatprep.subr.bf16.mxu0 0
  %515 = vmatpush1.bf16.msra.mxu0 0
  %516 = vmatprep.mubr.bf16.mxu0 0
  %517 = vmatmul.mubr.bf16.gmra.mrb[0].mxu0 %v482
  %v518 = vpop.f32.mrb[0].mxu0
  %v519 = vadd.f32 0.0, %v518
  %v520 = vpop.f32.mrb[0].mxu0
  %v521 = vpop.f32.mrb[0].mxu0
  %v522 = vpop.f32.mrb[0].mxu0
  %523 = vdwg.mxu0
  %v524 = vadd.f32 %v458, %v519
  %v525 = vld [vmem:[%s5] sm:$0x1]
  %v527 = vlaneseq
  %v528 = vshrl.u32 %v527, 7
  %v529 = vsub.s32 0, %v528
  %v530 = vrot.slane %v525, %v529
  %v532 = vadd.f32 %v524, %v530
  %v533 = vmax.f32 %v532, 0.0
  %534 = vst.msk [vmem:[%s6] sm:$0xff] %vm339, %v533
  // Predicated region
  $region26: #{resnet_transformer_forward.36} parent=0 // pred_check
    _
  $region27: #{resnet_transformer_forward.36} parent=0 // pred_check_branch
    %536 = sbr.rel (0) target = $region29
  $region28: #{resnet_transformer_forward.36} parent=0 // pred_region
    _
  $region29: #{resnet_transformer_forward.36} parent=0 // pred_fallthru
    _
  // Predicated region
  $region30: #{resnet_transformer_forward.36} parent=0 // pred_check
    _
  $region31: #{resnet_transformer_forward.36} parent=0 // pred_check_branch
    %538 = sbr.rel (0) target = $region33
  $region32: #{resnet_transformer_forward.36} parent=0 // pred_region
    _
  $region33: #{resnet_transformer_forward.36} parent=0 // pred_fallthru
    _

// kernel: resnet_transformer_forward.41
$region0: #{resnet_transformer_forward.41}
  #allocation0 [shape = 'u32[]', space=smem, size = 0x4, offset = 0x4, fixed_abs, tag = 'smem constant byte address 0x4 - core index']
  #allocation1 [shape = 'u32[144,128]{1,0:T(1,128)}', space=vmem, size = 0x12000, scoped, tag = 'internal scratch']
  %s0 = inlined_call_operand.vmem [shape: f32[8,64], index: 0, kind: input, shape index: {}]
  %s1 = inlined_call_operand.vmem [shape: f32[2,8], index: 1, kind: input, shape index: {}]
  %s2 = inlined_call_operand.vmem [shape: f32[64,7], index: 2, kind: input, shape index: {}]
  %s3 = inlined_call_operand.vmem [shape: f32[1,7], index: 3, kind: input, shape index: {}]
  %s4 = inlined_call_operand.hbm [shape: f32[2,7], index: 4, kind: output, shape index: {}]
  %s5 = sld [smem:[#allocation0]]
  $region26: #{resnet_transformer_forward.41} parent=0
    _
  %s7 = ssub.s32 1, %s5
  %s8 = scalar_select 0, %s7, %s5
  $region1: #{resnet_transformer_forward.41} parent=0
    #allocation2 [shape = 'u8[1024]{0}', space=vmem, size = 0x400, scoped, tag = 'output window, operand 0, single buffered']
    #allocation3 [shape = 's32[1]{0}', space=sflag, size = 0x4, scoped, tag = 'scoped memory for resnet_transformer_forward.41']
    %9 = vsyncpa [#allocation3], 0
    // Predicated region
    $region2: #{resnet_transformer_forward.41} parent=1 // pred_check
      _
    $region3: #{resnet_transformer_forward.41} parent=1 // pred_check_branch
      %11 = sbr.rel (0) target = $region5
    $region4: #{resnet_transformer_forward.41} parent=1 // pred_region
      _
    $region5: #{resnet_transformer_forward.41} parent=1 // pred_fallthru
      _
    // Predicated region
    $region6: #{resnet_transformer_forward.41} parent=1 // pred_check
      _
    $region7: #{resnet_transformer_forward.41} parent=1 // pred_check_branch
      %13 = sbr.rel (0) target = $region9
    $region8: #{resnet_transformer_forward.41} parent=1 // pred_region
      _
    $region9: #{resnet_transformer_forward.41} parent=1 // pred_fallthru
      _
    // Predicated region
    $region10: #{resnet_transformer_forward.41} parent=1 // pred_check
      _
    $region11: #{resnet_transformer_forward.41} parent=1 // pred_check_branch
      %15 = sbr.rel (0) target = $region13
    $region12: #{resnet_transformer_forward.41} parent=1 // pred_region
      _
    $region13: #{resnet_transformer_forward.41} parent=1 // pred_fallthru
      _
    // Predicated region
    $region14: #{resnet_transformer_forward.41} parent=1 // pred_check
      _
    $region15: #{resnet_transformer_forward.41} parent=1 // pred_check_branch
      %17 = sbr.rel (0) target = $region17
    $region16: #{resnet_transformer_forward.41} parent=1 // pred_region
      _
    $region17: #{resnet_transformer_forward.41} parent=1 // pred_fallthru
      _
    %v18 = vld [vmem:[%s1] sm:$0x3]
    %v19 = vld [vmem:[%s0] sm:$0xff]
    %vm20 = vcmask 64512
    %v22 = vsel %vm20, %v18, 0
    %24 = vmatprep.subr.mxu0 0.0
    %25 = vmatpush1.msra.mxu0 %v19
    %26 = vmatprep.subr.mxu0 0.0
    %27 = vmatpush1.msra.mxu0 0.0
    %28 = vmatprep.subr.mxu0 0.0
    %29 = vmatpush1.msra.mxu0 0.0
    %30 = vmatprep.subr.mxu0 0.0
    %31 = vmatpush1.msra.mxu0 0.0
    %32 = vmatprep.subr.mxu0 0.0
    %33 = vmatpush1.msra.mxu0 0.0
    %34 = vmatprep.subr.mxu0 0.0
    %35 = vmatpush1.msra.mxu0 0.0
    %36 = vmatprep.subr.mxu0 0.0
    %37 = vmatpush1.msra.mxu0 0.0
    %38 = vmatprep.subr.mxu0 0.0
    %39 = vmatpush1.msra.mxu0 0.0
    %40 = vmatprep.subr.mxu0 0.0
    %41 = vmatpush1.msra.mxu0 0.0
    %42 = vmatprep.subr.mxu0 0.0
    %43 = vmatpush1.msra.mxu0 0.0
    %44 = vmatprep.subr.mxu0 0.0
    %45 = vmatpush1.msra.mxu0 0.0
    %46 = vmatprep.subr.mxu0 0.0
    %47 = vmatpush1.msra.mxu0 0.0
    %48 = vmatprep.subr.mxu0 0.0
    %49 = vmatpush1.msra.mxu0 0.0
    %50 = vmatprep.subr.mxu0 0.0
    %51 = vmatpush1.msra.mxu0 0.0
    %52 = vmatprep.subr.mxu0 0.0
    %53 = vmatpush1.msra.mxu0 0.0
    %54 = vmatprep.subr.mxu0 0.0
    %55 = vmatpush1.msra.mxu0 0.0
    %56 = vmatprep.subr.mxu0 0.0
    %57 = vmatpush1.msra.mxu0 0.0
    %58 = vmatprep.subr.mxu0 0.0
    %59 = vmatpush1.msra.mxu0 0.0
    %60 = vmatprep.subr.mxu0 0.0
    %61 = vmatpush1.msra.mxu0 0.0
    %62 = vmatprep.subr.mxu0 0.0
    %63 = vmatpush1.msra.mxu0 0.0
    %64 = vmatprep.subr.mxu0 0.0
    %65 = vmatpush1.msra.mxu0 0.0
    %66 = vmatprep.subr.mxu0 0.0
    %67 = vmatpush1.msra.mxu0 0.0
    %68 = vmatprep.subr.mxu0 0.0
    %69 = vmatpush1.msra.mxu0 0.0
    %70 = vmatprep.subr.mxu0 0.0
    %71 = vmatpush1.msra.mxu0 0.0
    %72 = vmatprep.subr.mxu0 0.0
    %73 = vmatpush1.msra.mxu0 0.0
    %74 = vmatprep.subr.mxu0 0.0
    %75 = vmatpush1.msra.mxu0 0.0
    %76 = vmatprep.subr.mxu0 0.0
    %77 = vmatpush1.msra.mxu0 0.0
    %78 = vmatprep.subr.mxu0 0.0
    %79 = vmatpush1.msra.mxu0 0.0
    %80 = vmatprep.subr.mxu0 0.0
    %81 = vmatpush1.msra.mxu0 0.0
    %82 = vmatprep.subr.mxu0 0.0
    %83 = vmatpush1.msra.mxu0 0.0
    %84 = vmatprep.subr.mxu0 0.0
    %85 = vmatpush1.msra.mxu0 0.0
    %86 = vmatprep.subr.mxu0 0.0
    %87 = vmatpush1.msra.mxu0 0.0
    %88 = vmatprep.mubr.f32.mxu0 0.0
    %89 = vmatmul.mubr.f32.gmra.mrb[0].mxu0 %v22
    %v90 = vpop.f32.mrb[0].mxu0
    %v91 = vadd.f32 0.0, %v90
    %v92 = vpop.f32.mrb[0].mxu0
    %93 = vdwg.mxu0
    %v94 = vld [vmem:[%s2] sm:$0xff]
    %v95 = vld [vmem:[%s2 + $0x8] sm:$0xff]
    %v96 = vld [vmem:[%s2 + $0x10] sm:$0xff]
    %v97 = vld [vmem:[%s2 + $0x18] sm:$0xff]
    %v98 = vld [vmem:[%s2 + $0x20] sm:$0xff]
    %v99 = vld [vmem:[%s2 + $0x28] sm:$0xff]
    %v100 = vld [vmem:[%s2 + $0x30] sm:$0xff]
    %v101 = vld [vmem:[%s2 + $0x38] sm:$0xff]
    %v102 = vld [vmem:[%s3] sm:$0x1]
    %v104 = vlaneseq
    %v105 = vshrl.u32 %v104, 7
    %v106 = vsub.s32 0, %v105
    %v107 = vrot.slane %v102, %v106
    %vm109 = vcmask 523264
    %v111 = vsel %vm109, %v91, 0
    %113 = vmatprep.subr.mxu0 0.0
    %114 = vmatpush1.msra.mxu0 %v94
    %115 = vmatprep.subr.mxu0 0.0
    %116 = vmatpush1.msra.mxu0 %v95
    %117 = vmatprep.subr.mxu0 0.0
    %118 = vmatpush1.msra.mxu0 %v96
    %119 = vmatprep.subr.mxu0 0.0
    %120 = vmatpush1.msra.mxu0 %v97
    %121 = vmatprep.subr.mxu0 0.0
    %122 = vmatpush1.msra.mxu0 %v98
    %123 = vmatprep.subr.mxu0 0.0
    %124 = vmatpush1.msra.mxu0 %v99
    %125 = vmatprep.subr.mxu0 0.0
    %126 = vmatpush1.msra.mxu0 %v100
    %127 = vmatprep.subr.mxu0 0.0
    %128 = vmatpush1.msra.mxu0 %v101
    %129 = vmatprep.subr.mxu0 0.0
    %130 = vmatpush1.msra.mxu0 0.0
    %131 = vmatprep.subr.mxu0 0.0
    %132 = vmatpush1.msra.mxu0 0.0
    %133 = vmatprep.subr.mxu0 0.0
    %134 = vmatpush1.msra.mxu0 0.0
    %135 = vmatprep.subr.mxu0 0.0
    %136 = vmatpush1.msra.mxu0 0.0
    %137 = vmatprep.subr.mxu0 0.0
    %138 = vmatpush1.msra.mxu0 0.0
    %139 = vmatprep.subr.mxu0 0.0
    %140 = vmatpush1.msra.mxu0 0.0
    %141 = vmatprep.subr.mxu0 0.0
    %142 = vmatpush1.msra.mxu0 0.0
    %143 = vmatprep.subr.mxu0 0.0
    %144 = vmatpush1.msra.mxu0 0.0
    %145 = vmatprep.subr.mxu0 0.0
    %146 = vmatpush1.msra.mxu0 0.0
    %147 = vmatprep.subr.mxu0 0.0
    %148 = vmatpush1.msra.mxu0 0.0
    %149 = vmatprep.subr.mxu0 0.0
    %150 = vmatpush1.msra.mxu0 0.0
    %151 = vmatprep.subr.mxu0 0.0
    %152 = vmatpush1.msra.mxu0 0.0
    %153 = vmatprep.subr.mxu0 0.0
    %154 = vmatpush1.msra.mxu0 0.0
    %155 = vmatprep.subr.mxu0 0.0
    %156 = vmatpush1.msra.mxu0 0.0
    %157 = vmatprep.subr.mxu0 0.0
    %158 = vmatpush1.msra.mxu0 0.0
    %159 = vmatprep.subr.mxu0 0.0
    %160 = vmatpush1.msra.mxu0 0.0
    %161 = vmatprep.subr.mxu0 0.0
    %162 = vmatpush1.msra.mxu0 0.0
    %163 = vmatprep.subr.mxu0 0.0
    %164 = vmatpush1.msra.mxu0 0.0
    %165 = vmatprep.subr.mxu0 0.0
    %166 = vmatpush1.msra.mxu0 0.0
    %167 = vmatprep.subr.mxu0 0.0
    %168 = vmatpush1.msra.mxu0 0.0
    %169 = vmatprep.subr.mxu0 0.0
    %170 = vmatpush1.msra.mxu0 0.0
    %171 = vmatprep.subr.mxu0 0.0
    %172 = vmatpush1.msra.mxu0 0.0
    %173 = vmatprep.subr.mxu0 0.0
    %174 = vmatpush1.msra.mxu0 0.0
    %175 = vmatprep.subr.mxu0 0.0
    %176 = vmatpush1.msra.mxu0 0.0
    %177 = vmatprep.mubr.f32.mxu0 0.0
    %178 = vmatmul.mubr.f32.gmra.mrb[0].mxu0 %v111
    %v179 = vpop.f32.mrb[0].mxu0
    %v180 = vadd.f32 %v107, %v179
    %v181 = vpop.f32.mrb[0].mxu0
    %182 = vdwg.mxu0
    %vm183 = vcmask 50176
    %184 = vst.msk [vmem:[#allocation2] sm:$0x3] %vm183, %v180
    // Predicated region
    $region18: #{resnet_transformer_forward.41} parent=1 // pred_check
      _
    $region19: #{resnet_transformer_forward.41} parent=1 // pred_check_branch
      %186 = sbr.rel (0) target = $region21
    $region20: #{resnet_transformer_forward.41} parent=1 // pred_region
      %s188 = ssub.s32 32, 32
      %189 = vsyncadd [#allocation3], %s188
      %s191 = sshll.u32 [#allocation2], 4
      %s192 = int_to_ptr.vmem [resolvable:$true] %s191
      %194 = dma.vmem_to_hbm [thread:$0]  %s192, 32, %s4, [#allocation3]
    $region21: #{resnet_transformer_forward.41} parent=1 // pred_fallthru
      _
    // Predicated region
    $region22: #{resnet_transformer_forward.41} parent=1 // pred_check
      _
    $region23: #{resnet_transformer_forward.41} parent=1 // pred_check_branch
      %196 = sbr.rel (0) target = $region25
    $region24: #{resnet_transformer_forward.41} parent=1 // pred_region
      %197 = dma.done [#allocation3], 32
    $region25: #{resnet_transformer_forward.41} parent=1 // pred_fallthru
      _
    %198 = vsyncpa [#allocation3], 1

// kernel: resnet_transformer_forward.39
$region0: #{resnet_transformer_forward.39}
  #allocation0 [shape = 'u32[]', space=smem, size = 0x4, offset = 0x4, fixed_abs, tag = 'smem constant byte address 0x4 - core index']
  #allocation1 [shape = 'u32[144,128]{1,0:T(1,128)}', space=vmem, size = 0x12000, scoped, tag = 'internal scratch']
  #allocation2 [shape = 'f32[8,192]{1,0:T(8,128)}', space=vmem, size = 0x2000, scoped, tag = 'scratch operand']
  #allocation3 [shape = 'f32[8,64]{1,0:T(8,128)}', space=vmem, size = 0x1000, scoped, tag = 'scratch operand']
  %s0 = inlined_call_operand.vmem [shape: f32[8,64], index: 0, kind: input, shape index: {}]
  %s1 = inlined_call_operand.vmem [shape: f32[8,8], index: 1, kind: input, shape index: {}]
  %s2 = inlined_call_operand.vmem [shape: f32[64,192], index: 2, kind: input, shape index: {}]
  %s3 = inlined_call_operand.vmem [shape: f32[1,192], index: 3, kind: input, shape index: {}]
  %s4 = inlined_call_operand.vmem [shape: f32[64,64], index: 4, kind: input, shape index: {}]
  %s5 = inlined_call_operand.vmem [shape: f32[1,64], index: 5, kind: input, shape index: {}]
  %s6 = inlined_call_operand.vmem [shape: f32[1,64], index: 6, kind: input, shape index: {}]
  %s7 = inlined_call_operand.vmem [shape: f32[1,64], index: 7, kind: input, shape index: {}]
  %s8 = inlined_call_operand.vmem [shape: f32[64,256], index: 8, kind: input, shape index: {}]
  %s9 = inlined_call_operand.vmem [shape: f32[1,256], index: 9, kind: input, shape index: {}]
  %s10 = inlined_call_operand.vmem [shape: f32[256,64], index: 10, kind: input, shape index: {}]
  %s11 = inlined_call_operand.vmem [shape: f32[1,64], index: 11, kind: input, shape index: {}]
  %s12 = inlined_call_operand.vmem [shape: f32[1,64], index: 12, kind: input, shape index: {}]
  %s13 = inlined_call_operand.vmem [shape: f32[1,64], index: 13, kind: input, shape index: {}]
  %s14 = inlined_call_operand.vmem [shape: f32[8,64], index: 14, kind: output, shape index: {}]
  %s15 = sld [smem:[#allocation0]]
  $region66: #{resnet_transformer_forward.39} parent=0
    _
  %s17 = ssub.s32 1, %s15
  %s18 = scalar_select 0, %s17, %s15
  // Predicated region
  $region2: #{resnet_transformer_forward.39} parent=0 // pred_check
    _
  $region3: #{resnet_transformer_forward.39} parent=0 // pred_check_branch
    %20 = sbr.rel (0) target = $region5
  $region4: #{resnet_transformer_forward.39} parent=0 // pred_region
    _
  $region5: #{resnet_transformer_forward.39} parent=0 // pred_fallthru
    _
  // Predicated region
  $region6: #{resnet_transformer_forward.39} parent=0 // pred_check
    _
  $region7: #{resnet_transformer_forward.39} parent=0 // pred_check_branch
    %22 = sbr.rel (0) target = $region9
  $region8: #{resnet_transformer_forward.39} parent=0 // pred_region
    _
  $region9: #{resnet_transformer_forward.39} parent=0 // pred_fallthru
    _
  // Predicated region
  $region10: #{resnet_transformer_forward.39} parent=0 // pred_check
    _
  $region11: #{resnet_transformer_forward.39} parent=0 // pred_check_branch
    %24 = sbr.rel (0) target = $region13
  $region12: #{resnet_transformer_forward.39} parent=0 // pred_region
    _
  $region13: #{resnet_transformer_forward.39} parent=0 // pred_fallthru
    _
  // Predicated region
  $region14: #{resnet_transformer_forward.39} parent=0 // pred_check
    _
  $region15: #{resnet_transformer_forward.39} parent=0 // pred_check_branch
    %26 = sbr.rel (0) target = $region17
  $region16: #{resnet_transformer_forward.39} parent=0 // pred_region
    _
  $region17: #{resnet_transformer_forward.39} parent=0 // pred_fallthru
    _
  // Predicated region
  $region18: #{resnet_transformer_forward.39} parent=0 // pred_check
    _
  $region19: #{resnet_transformer_forward.39} parent=0 // pred_check_branch
    %28 = sbr.rel (0) target = $region21
  $region20: #{resnet_transformer_forward.39} parent=0 // pred_region
    _
  $region21: #{resnet_transformer_forward.39} parent=0 // pred_fallthru
    _
  // Predicated region
  $region22: #{resnet_transformer_forward.39} parent=0 // pred_check
    _
  $region23: #{resnet_transformer_forward.39} parent=0 // pred_check_branch
    %30 = sbr.rel (0) target = $region25
  $region24: #{resnet_transformer_forward.39} parent=0 // pred_region
    _
  $region25: #{resnet_transformer_forward.39} parent=0 // pred_fallthru
    _
  // Predicated region
  $region26: #{resnet_transformer_forward.39} parent=0 // pred_check
    _
  $region27: #{resnet_transformer_forward.39} parent=0 // pred_check_branch
    %32 = sbr.rel (0) target = $region29
  $region28: #{resnet_transformer_forward.39} parent=0 // pred_region
    _
  $region29: #{resnet_transformer_forward.39} parent=0 // pred_fallthru
    _
  // Predicated region
  $region30: #{resnet_transformer_forward.39} parent=0 // pred_check
    _
  $region31: #{resnet_transformer_forward.39} parent=0 // pred_check_branch
    %34 = sbr.rel (0) target = $region33
  $region32: #{resnet_transformer_forward.39} parent=0 // pred_region
    _
  $region33: #{resnet_transformer_forward.39} parent=0 // pred_fallthru
    _
  // Predicated region
  $region34: #{resnet_transformer_forward.39} parent=0 // pred_check
    _
  $region35: #{resnet_transformer_forward.39} parent=0 // pred_check_branch
    %36 = sbr.rel (0) target = $region37
  $region36: #{resnet_transformer_forward.39} parent=0 // pred_region
    _
  $region37: #{resnet_transformer_forward.39} parent=0 // pred_fallthru
    _
  // Predicated region
  $region38: #{resnet_transformer_forward.39} parent=0 // pred_check
    _
  $region39: #{resnet_transformer_forward.39} parent=0 // pred_check_branch
    %38 = sbr.rel (0) target = $region41
  $region40: #{resnet_transformer_forward.39} parent=0 // pred_region
    _
  $region41: #{resnet_transformer_forward.39} parent=0 // pred_fallthru
    _
  // Predicated region
  $region42: #{resnet_transformer_forward.39} parent=0 // pred_check
    _
  $region43: #{resnet_transformer_forward.39} parent=0 // pred_check_branch
    %40 = sbr.rel (0) target = $region45
  $region44: #{resnet_transformer_forward.39} parent=0 // pred_region
    _
  $region45: #{resnet_transformer_forward.39} parent=0 // pred_fallthru
    _
  // Predicated region
  $region46: #{resnet_transformer_forward.39} parent=0 // pred_check
    _
  $region47: #{resnet_transformer_forward.39} parent=0 // pred_check_branch
    %42 = sbr.rel (0) target = $region49
  $region48: #{resnet_transformer_forward.39} parent=0 // pred_region
    _
  $region49: #{resnet_transformer_forward.39} parent=0 // pred_fallthru
    _
  // Predicated region
  $region50: #{resnet_transformer_forward.39} parent=0 // pred_check
    _
  $region51: #{resnet_transformer_forward.39} parent=0 // pred_check_branch
    %44 = sbr.rel (0) target = $region53
  $region52: #{resnet_transformer_forward.39} parent=0 // pred_region
    _
  $region53: #{resnet_transformer_forward.39} parent=0 // pred_fallthru
    _
  // Predicated region
  $region54: #{resnet_transformer_forward.39} parent=0 // pred_check
    _
  $region55: #{resnet_transformer_forward.39} parent=0 // pred_check_branch
    %46 = sbr.rel (0) target = $region57
  $region56: #{resnet_transformer_forward.39} parent=0 // pred_region
    _
  $region57: #{resnet_transformer_forward.39} parent=0 // pred_fallthru
    _
  %v47 = vld [vmem:[%s0] sm:$0xff]
  %v48 = vld [vmem:[%s2] sm:$0xff]
  %v49 = vld [vmem:[%s2 + $0x8] sm:$0xff]
  %v50 = vld [vmem:[%s2 + $0x10] sm:$0xff]
  %v51 = vld [vmem:[%s2 + $0x18] sm:$0xff]
  %v52 = vld [vmem:[%s2 + $0x20] sm:$0xff]
  %v53 = vld [vmem:[%s2 + $0x28] sm:$0xff]
  %v54 = vld [vmem:[%s2 + $0x30] sm:$0xff]
  %v55 = vld [vmem:[%s2 + $0x38] sm:$0xff]
  %v56 = vld [vmem:[%s2 + $0x40] sm:$0xff]
  %v57 = vld [vmem:[%s2 + $0x48] sm:$0xff]
  %v58 = vld [vmem:[%s2 + $0x50] sm:$0xff]
  %v59 = vld [vmem:[%s2 + $0x58] sm:$0xff]
  %v60 = vld [vmem:[%s2 + $0x60] sm:$0xff]
  %v61 = vld [vmem:[%s2 + $0x68] sm:$0xff]
  %v62 = vld [vmem:[%s2 + $0x70] sm:$0xff]
  %v63 = vld [vmem:[%s2 + $0x78] sm:$0xff]
  %v64 = vld [vmem:[%s3] sm:$0x3]
  %v66 = vlaneseq
  %v67 = vshrl.u32 %v66, 7
  %v68 = vsub.s32 0, %v67
  %v69 = vrot.slane %v64, %v68
  %v70 = vlaneseq
  %v71 = vshrl.u32 %v70, 7
  %v72 = vsub.s32 1, %v71
  %v73 = vrot.slane %v64, %v72
  %vm76 = vcmask 523264
  %v78 = vsel %vm76, %v47, 0
  %80 = vmatprep.subr.mxu0 %v49
  %81 = vmatpush1.msra.mxu0 %v48
  %82 = vmatprep.subr.mxu0 %v51
  %83 = vmatpush1.msra.mxu0 %v50
  %84 = vmatprep.subr.mxu0 %v53
  %85 = vmatpush1.msra.mxu0 %v52
  %86 = vmatprep.subr.mxu0 %v55
  %87 = vmatpush1.msra.mxu0 %v54
  %88 = vmatprep.subr.mxu0 %v57
  %89 = vmatpush1.msra.mxu0 %v56
  %90 = vmatprep.subr.mxu0 %v59
  %91 = vmatpush1.msra.mxu0 %v58
  %92 = vmatprep.subr.mxu0 %v61
  %93 = vmatpush1.msra.mxu0 %v60
  %94 = vmatprep.subr.mxu0 %v63
  %95 = vmatpush1.msra.mxu0 %v62
  %96 = vmatprep.subr.mxu0 0.0
  %97 = vmatpush1.msra.mxu0 0.0
  %98 = vmatprep.subr.mxu0 0.0
  %99 = vmatpush1.msra.mxu0 0.0
  %100 = vmatprep.subr.mxu0 0.0
  %101 = vmatpush1.msra.mxu0 0.0
  %102 = vmatprep.subr.mxu0 0.0
  %103 = vmatpush1.msra.mxu0 0.0
  %104 = vmatprep.subr.mxu0 0.0
  %105 = vmatpush1.msra.mxu0 0.0
  %106 = vmatprep.subr.mxu0 0.0
  %107 = vmatpush1.msra.mxu0 0.0
  %108 = vmatprep.subr.mxu0 0.0
  %109 = vmatpush1.msra.mxu0 0.0
  %110 = vmatprep.subr.mxu0 0.0
  %111 = vmatpush1.msra.mxu0 0.0
  %112 = vmatprep.subr.mxu0 0.0
  %113 = vmatpush1.msra.mxu0 0.0
  %114 = vmatprep.subr.mxu0 0.0
  %115 = vmatpush1.msra.mxu0 0.0
  %116 = vmatprep.subr.mxu0 0.0
  %117 = vmatpush1.msra.mxu0 0.0
  %118 = vmatprep.subr.mxu0 0.0
  %119 = vmatpush1.msra.mxu0 0.0
  %120 = vmatprep.subr.mxu0 0.0
  %121 = vmatpush1.msra.mxu0 0.0
  %122 = vmatprep.subr.mxu0 0.0
  %123 = vmatpush1.msra.mxu0 0.0
  %124 = vmatprep.subr.mxu0 0.0
  %125 = vmatpush1.msra.mxu0 0.0
  %126 = vmatprep.subr.mxu0 0.0
  %127 = vmatpush1.msra.mxu0 0.0
  %128 = vmatprep.subr.mxu0 0.0
  %129 = vmatpush1.msra.mxu0 0.0
  %130 = vmatprep.subr.mxu0 0.0
  %131 = vmatpush1.msra.mxu0 0.0
  %132 = vmatprep.subr.mxu0 0.0
  %133 = vmatpush1.msra.mxu0 0.0
  %134 = vmatprep.subr.mxu0 0.0
  %135 = vmatpush1.msra.mxu0 0.0
  %136 = vmatprep.subr.mxu0 0.0
  %137 = vmatpush1.msra.mxu0 0.0
  %138 = vmatprep.subr.mxu0 0.0
  %139 = vmatpush1.msra.mxu0 0.0
  %140 = vmatprep.subr.mxu0 0.0
  %141 = vmatpush1.msra.mxu0 0.0
  %142 = vmatprep.subr.mxu0 0.0
  %143 = vmatpush1.msra.mxu0 0.0
  %144 = vmatprep.mubr.f32.mxu0 0.0
  %145 = vmatmul.mubr.f32.gmra.mrb[0].mxu0 %v78
  %v146 = vpop.f32.mrb[0].mxu0
  %v147 = vadd.f32 %v69, %v146
  %v148 = vpop.f32.mrb[0].mxu0
  %v149 = vadd.f32 %v73, %v148
  %150 = vdwg.mxu0
  %151 = vst [vmem:[#allocation2] sm:$0xff] %v147
  %152 = vst.msk [vmem:[#allocation2 + $0x8] sm:$0xff] %vm76, %v149
  %v153 = vld [vmem:[%s1] sm:$0xff]
  %v154 = vld [vmem:[#allocation2] sm:$0xff]
  %v155 = vld [vmem:[#allocation2 + $0x8] sm:$0xff]
  %157 = vrot.lane.b32.xlu0 %v154, 64
  %v158 = vpop.permute.xlu0 %157
  %vm159 = vcmask 130048
  %v160 = vsel %vm159, %v154, 0
  %v162 = vsel %vm159, %v158, 0
  %164 = vmatprep.subr.mxu0 0.0
  %165 = vmatpush1.xpose.msra.mxu0 %v162
  %166 = vmatprep.subr.mxu0 0.0
  %167 = vmatpush1.xpose.msra.mxu0 0.0
  %168 = vmatprep.subr.mxu0 0.0
  %169 = vmatpush1.xpose.msra.mxu0 0.0
  %170 = vmatprep.subr.mxu0 0.0
  %171 = vmatpush1.xpose.msra.mxu0 0.0
  %172 = vmatprep.subr.mxu0 0.0
  %173 = vmatpush1.xpose.msra.mxu0 0.0
  %174 = vmatprep.subr.mxu0 0.0
  %175 = vmatpush1.xpose.msra.mxu0 0.0
  %176 = vmatprep.subr.mxu0 0.0
  %177 = vmatpush1.xpose.msra.mxu0 0.0
  %178 = vmatprep.subr.mxu0 0.0
  %179 = vmatpush1.xpose.msra.mxu0 0.0
  %180 = vmatprep.subr.mxu0 0.0
  %181 = vmatpush1.xpose.msra.mxu0 0.0
  %182 = vmatprep.subr.mxu0 0.0
  %183 = vmatpush1.xpose.msra.mxu0 0.0
  %184 = vmatprep.subr.mxu0 0.0
  %185 = vmatpush1.xpose.msra.mxu0 0.0
  %186 = vmatprep.subr.mxu0 0.0
  %187 = vmatpush1.xpose.msra.mxu0 0.0
  %188 = vmatprep.subr.mxu0 0.0
  %189 = vmatpush1.xpose.msra.mxu0 0.0
  %190 = vmatprep.subr.mxu0 0.0
  %191 = vmatpush1.xpose.msra.mxu0 0.0
  %192 = vmatprep.subr.mxu0 0.0
  %193 = vmatpush1.xpose.msra.mxu0 0.0
  %194 = vmatprep.subr.mxu0 0.0
  %195 = vmatpush1.xpose.msra.mxu0 0.0
  %196 = vmatprep.subr.mxu0 0.0
  %197 = vmatpush1.xpose.msra.mxu0 0.0
  %198 = vmatprep.subr.mxu0 0.0
  %199 = vmatpush1.xpose.msra.mxu0 0.0
  %200 = vmatprep.subr.mxu0 0.0
  %201 = vmatpush1.xpose.msra.mxu0 0.0
  %202 = vmatprep.subr.mxu0 0.0
  %203 = vmatpush1.xpose.msra.mxu0 0.0
  %204 = vmatprep.subr.mxu0 0.0
  %205 = vmatpush1.xpose.msra.mxu0 0.0
  %206 = vmatprep.subr.mxu0 0.0
  %207 = vmatpush1.xpose.msra.mxu0 0.0
  %208 = vmatprep.subr.mxu0 0.0
  %209 = vmatpush1.xpose.msra.mxu0 0.0
  %210 = vmatprep.subr.mxu0 0.0
  %211 = vmatpush1.xpose.msra.mxu0 0.0
  %212 = vmatprep.subr.mxu0 0.0
  %213 = vmatpush1.xpose.msra.mxu0 0.0
  %214 = vmatprep.subr.mxu0 0.0
  %215 = vmatpush1.xpose.msra.mxu0 0.0
  %216 = vmatprep.subr.mxu0 0.0
  %217 = vmatpush1.xpose.msra.mxu0 0.0
  %218 = vmatprep.subr.mxu0 0.0
  %219 = vmatpush1.xpose.msra.mxu0 0.0
  %220 = vmatprep.subr.mxu0 0.0
  %221 = vmatpush1.xpose.msra.mxu0 0.0
  %222 = vmatprep.subr.mxu0 0.0
  %223 = vmatpush1.xpose.msra.mxu0 0.0
  %224 = vmatprep.subr.mxu0 0.0
  %225 = vmatpush1.xpose.msra.mxu0 0.0
  %226 = vmatprep.subr.mxu0 0.0
  %227 = vmatpush1.xpose.msra.mxu0 0.0
  %228 = vmatprep.mubr.f32.mxu0 0.0
  %229 = vmatmul.mubr.f32.gmra.mrb[0].mxu0 %v160
  %v230 = vpop.f32.mrb[0].mxu0
  %v231 = vadd.f32 0.0, %v230
  %v232 = vpop.f32.mrb[0].mxu0
  %233 = vdwg.mxu0
  %v234 = vmul.f32 %v231, 0.25
  %v235 = vadd.f32 %v234, %v153
  %vm236 = vcmask 64512
  %v237 = vsel %vm236, %v235, -inf
  %238 = vmax.xlane.f32.xlu0 %v237
  %v239 = vpop.xlane.xlu0 %238
  %v240 = vsub.f32 %v235, %v239
  %v241 = vmul.f32 %v240, 1.442695
  %v242 = vpow.pop %v241
  %v243 = vsel %vm236, %v242, 0.0
  %244 = vadd.xlane.f32.xlu0 %v243
  %v245 = vpop.xlane.xlu0 %244
  %v246 = vrcp.pop %v245
  %v247 = vmul.f32 %v242, %v246
  %v249 = vsel %vm236, %v247, 0
  %251 = vmatprep.subr.mxu0 0.0
  %252 = vmatpush1.msra.mxu0 %v155
  %253 = vmatprep.subr.mxu0 0.0
  %254 = vmatpush1.msra.mxu0 0.0
  %255 = vmatprep.subr.mxu0 0.0
  %256 = vmatpush1.msra.mxu0 0.0
  %257 = vmatprep.subr.mxu0 0.0
  %258 = vmatpush1.msra.mxu0 0.0
  %259 = vmatprep.subr.mxu0 0.0
  %260 = vmatpush1.msra.mxu0 0.0
  %261 = vmatprep.subr.mxu0 0.0
  %262 = vmatpush1.msra.mxu0 0.0
  %263 = vmatprep.subr.mxu0 0.0
  %264 = vmatpush1.msra.mxu0 0.0
  %265 = vmatprep.subr.mxu0 0.0
  %266 = vmatpush1.msra.mxu0 0.0
  %267 = vmatprep.subr.mxu0 0.0
  %268 = vmatpush1.msra.mxu0 0.0
  %269 = vmatprep.subr.mxu0 0.0
  %270 = vmatpush1.msra.mxu0 0.0
  %271 = vmatprep.subr.mxu0 0.0
  %272 = vmatpush1.msra.mxu0 0.0
  %273 = vmatprep.subr.mxu0 0.0
  %274 = vmatpush1.msra.mxu0 0.0
  %275 = vmatprep.subr.mxu0 0.0
  %276 = vmatpush1.msra.mxu0 0.0
  %277 = vmatprep.subr.mxu0 0.0
  %278 = vmatpush1.msra.mxu0 0.0
  %279 = vmatprep.subr.mxu0 0.0
  %280 = vmatpush1.msra.mxu0 0.0
  %281 = vmatprep.subr.mxu0 0.0
  %282 = vmatpush1.msra.mxu0 0.0
  %283 = vmatprep.subr.mxu0 0.0
  %284 = vmatpush1.msra.mxu0 0.0
  %285 = vmatprep.subr.mxu0 0.0
  %286 = vmatpush1.msra.mxu0 0.0
  %287 = vmatprep.subr.mxu0 0.0
  %288 = vmatpush1.msra.mxu0 0.0
  %289 = vmatprep.subr.mxu0 0.0
  %290 = vmatpush1.msra.mxu0 0.0
  %291 = vmatprep.subr.mxu0 0.0
  %292 = vmatpush1.msra.mxu0 0.0
  %293 = vmatprep.subr.mxu0 0.0
  %294 = vmatpush1.msra.mxu0 0.0
  %295 = vmatprep.subr.mxu0 0.0
  %296 = vmatpush1.msra.mxu0 0.0
  %297 = vmatprep.subr.mxu0 0.0
  %298 = vmatpush1.msra.mxu0 0.0
  %299 = vmatprep.subr.mxu0 0.0
  %300 = vmatpush1.msra.mxu0 0.0
  %301 = vmatprep.subr.mxu0 0.0
  %302 = vmatpush1.msra.mxu0 0.0
  %303 = vmatprep.subr.mxu0 0.0
  %304 = vmatpush1.msra.mxu0 0.0
  %305 = vmatprep.subr.mxu0 0.0
  %306 = vmatpush1.msra.mxu0 0.0
  %307 = vmatprep.subr.mxu0 0.0
  %308 = vmatpush1.msra.mxu0 0.0
  %309 = vmatprep.subr.mxu0 0.0
  %310 = vmatpush1.msra.mxu0 0.0
  %311 = vmatprep.subr.mxu0 0.0
  %312 = vmatpush1.msra.mxu0 0.0
  %313 = vmatprep.subr.mxu0 0.0
  %314 = vmatpush1.msra.mxu0 0.0
  %315 = vmatprep.mubr.f32.mxu0 0.0
  %316 = vmatmul.mubr.f32.gmra.mrb[0].mxu0 %v249
  %v317 = vpop.f32.mrb[0].mxu0
  %v318 = vadd.f32 0.0, %v317
  %v319 = vpop.f32.mrb[0].mxu0
  %320 = vdwg.mxu0
  %321 = vst.msk [vmem:[#allocation3] sm:$0xff] %vm159, %v318
  %v322 = vld [vmem:[#allocation2] sm:$0xff]
  %v323 = vld [vmem:[#allocation2 + $0x8] sm:$0xff]
  %325 = vrot.lane.b32.xlu0 %v322, 112
  %v326 = vpop.permute.xlu0 %325
  %327 = vrot.lane.b32.xlu0 %v322, 48
  %v328 = vpop.permute.xlu0 %327
  %v329 = vsel %vm159, %v326, 0
  %v331 = vsel %vm159, %v328, 0
  %333 = vmatprep.subr.mxu0 0.0
  %334 = vmatpush1.xpose.msra.mxu0 %v331
  %335 = vmatprep.subr.mxu0 0.0
  %336 = vmatpush1.xpose.msra.mxu0 0.0
  %337 = vmatprep.subr.mxu0 0.0
  %338 = vmatpush1.xpose.msra.mxu0 0.0
  %339 = vmatprep.subr.mxu0 0.0
  %340 = vmatpush1.xpose.msra.mxu0 0.0
  %341 = vmatprep.subr.mxu0 0.0
  %342 = vmatpush1.xpose.msra.mxu0 0.0
  %343 = vmatprep.subr.mxu0 0.0
  %344 = vmatpush1.xpose.msra.mxu0 0.0
  %345 = vmatprep.subr.mxu0 0.0
  %346 = vmatpush1.xpose.msra.mxu0 0.0
  %347 = vmatprep.subr.mxu0 0.0
  %348 = vmatpush1.xpose.msra.mxu0 0.0
  %349 = vmatprep.subr.mxu0 0.0
  %350 = vmatpush1.xpose.msra.mxu0 0.0
  %351 = vmatprep.subr.mxu0 0.0
  %352 = vmatpush1.xpose.msra.mxu0 0.0
  %353 = vmatprep.subr.mxu0 0.0
  %354 = vmatpush1.xpose.msra.mxu0 0.0
  %355 = vmatprep.subr.mxu0 0.0
  %356 = vmatpush1.xpose.msra.mxu0 0.0
  %357 = vmatprep.subr.mxu0 0.0
  %358 = vmatpush1.xpose.msra.mxu0 0.0
  %359 = vmatprep.subr.mxu0 0.0
  %360 = vmatpush1.xpose.msra.mxu0 0.0
  %361 = vmatprep.subr.mxu0 0.0
  %362 = vmatpush1.xpose.msra.mxu0 0.0
  %363 = vmatprep.subr.mxu0 0.0
  %364 = vmatpush1.xpose.msra.mxu0 0.0
  %365 = vmatprep.subr.mxu0 0.0
  %366 = vmatpush1.xpose.msra.mxu0 0.0
  %367 = vmatprep.subr.mxu0 0.0
  %368 = vmatpush1.xpose.msra.mxu0 0.0
  %369 = vmatprep.subr.mxu0 0.0
  %370 = vmatpush1.xpose.msra.mxu0 0.0
  %371 = vmatprep.subr.mxu0 0.0
  %372 = vmatpush1.xpose.msra.mxu0 0.0
  %373 = vmatprep.subr.mxu0 0.0
  %374 = vmatpush1.xpose.msra.mxu0 0.0
  %375 = vmatprep.subr.mxu0 0.0
  %376 = vmatpush1.xpose.msra.mxu0 0.0
  %377 = vmatprep.subr.mxu0 0.0
  %378 = vmatpush1.xpose.msra.mxu0 0.0
  %379 = vmatprep.subr.mxu0 0.0
  %380 = vmatpush1.xpose.msra.mxu0 0.0
  %381 = vmatprep.subr.mxu0 0.0
  %382 = vmatpush1.xpose.msra.mxu0 0.0
  %383 = vmatprep.subr.mxu0 0.0
  %384 = vmatpush1.xpose.msra.mxu0 0.0
  %385 = vmatprep.subr.mxu0 0.0
  %386 = vmatpush1.xpose.msra.mxu0 0.0
  %387 = vmatprep.subr.mxu0 0.0
  %388 = vmatpush1.xpose.msra.mxu0 0.0
  %389 = vmatprep.subr.mxu0 0.0
  %390 = vmatpush1.xpose.msra.mxu0 0.0
  %391 = vmatprep.subr.mxu0 0.0
  %392 = vmatpush1.xpose.msra.mxu0 0.0
  %393 = vmatprep.subr.mxu0 0.0
  %394 = vmatpush1.xpose.msra.mxu0 0.0
  %395 = vmatprep.subr.mxu0 0.0
  %396 = vmatpush1.xpose.msra.mxu0 0.0
  %397 = vmatprep.mubr.f32.mxu0 0.0
  %398 = vmatmul.mubr.f32.gmra.mrb[0].mxu0 %v329
  %v399 = vpop.f32.mrb[0].mxu0
  %v400 = vadd.f32 0.0, %v399
  %v401 = vpop.f32.mrb[0].mxu0
  %402 = vdwg.mxu0
  %v403 = vmul.f32 %v400, 0.25
  %v404 = vadd.f32 %v403, %v153
  %v405 = vsel %vm236, %v404, -inf
  %406 = vmax.xlane.f32.xlu0 %v405
  %v407 = vpop.xlane.xlu0 %406
  %v408 = vsub.f32 %v404, %v407
  %v409 = vmul.f32 %v408, 1.442695
  %v410 = vpow.pop %v409
  %v411 = vsel %vm236, %v410, 0.0
  %412 = vadd.xlane.f32.xlu0 %v411
  %v413 = vpop.xlane.xlu0 %412
  %v414 = vrcp.pop %v413
  %v415 = vmul.f32 %v410, %v414
  %417 = vrot.lane.b32.xlu0 %v323, 112
  %v418 = vpop.permute.xlu0 %417
  %v421 = vsel %vm236, %v415, 0
  %423 = vmatprep.subr.mxu0 0.0
  %424 = vmatpush1.msra.mxu0 %v418
  %425 = vmatprep.subr.mxu0 0.0
  %426 = vmatpush1.msra.mxu0 0.0
  %427 = vmatprep.subr.mxu0 0.0
  %428 = vmatpush1.msra.mxu0 0.0
  %429 = vmatprep.subr.mxu0 0.0
  %430 = vmatpush1.msra.mxu0 0.0
  %431 = vmatprep.subr.mxu0 0.0
  %432 = vmatpush1.msra.mxu0 0.0
  %433 = vmatprep.subr.mxu0 0.0
  %434 = vmatpush1.msra.mxu0 0.0
  %435 = vmatprep.subr.mxu0 0.0
  %436 = vmatpush1.msra.mxu0 0.0
  %437 = vmatprep.subr.mxu0 0.0
  %438 = vmatpush1.msra.mxu0 0.0
  %439 = vmatprep.subr.mxu0 0.0
  %440 = vmatpush1.msra.mxu0 0.0
  %441 = vmatprep.subr.mxu0 0.0
  %442 = vmatpush1.msra.mxu0 0.0
  %443 = vmatprep.subr.mxu0 0.0
  %444 = vmatpush1.msra.mxu0 0.0
  %445 = vmatprep.subr.mxu0 0.0
  %446 = vmatpush1.msra.mxu0 0.0
  %447 = vmatprep.subr.mxu0 0.0
  %448 = vmatpush1.msra.mxu0 0.0
  %449 = vmatprep.subr.mxu0 0.0
  %450 = vmatpush1.msra.mxu0 0.0
  %451 = vmatprep.subr.mxu0 0.0
  %452 = vmatpush1.msra.mxu0 0.0
  %453 = vmatprep.subr.mxu0 0.0
  %454 = vmatpush1.msra.mxu0 0.0
  %455 = vmatprep.subr.mxu0 0.0
  %456 = vmatpush1.msra.mxu0 0.0
  %457 = vmatprep.subr.mxu0 0.0
  %458 = vmatpush1.msra.mxu0 0.0
  %459 = vmatprep.subr.mxu0 0.0
  %460 = vmatpush1.msra.mxu0 0.0
  %461 = vmatprep.subr.mxu0 0.0
  %462 = vmatpush1.msra.mxu0 0.0
  %463 = vmatprep.subr.mxu0 0.0
  %464 = vmatpush1.msra.mxu0 0.0
  %465 = vmatprep.subr.mxu0 0.0
  %466 = vmatpush1.msra.mxu0 0.0
  %467 = vmatprep.subr.mxu0 0.0
  %468 = vmatpush1.msra.mxu0 0.0
  %469 = vmatprep.subr.mxu0 0.0
  %470 = vmatpush1.msra.mxu0 0.0
  %471 = vmatprep.subr.mxu0 0.0
  %472 = vmatpush1.msra.mxu0 0.0
  %473 = vmatprep.subr.mxu0 0.0
  %474 = vmatpush1.msra.mxu0 0.0
  %475 = vmatprep.subr.mxu0 0.0
  %476 = vmatpush1.msra.mxu0 0.0
  %477 = vmatprep.subr.mxu0 0.0
  %478 = vmatpush1.msra.mxu0 0.0
  %479 = vmatprep.subr.mxu0 0.0
  %480 = vmatpush1.msra.mxu0 0.0
  %481 = vmatprep.subr.mxu0 0.0
  %482 = vmatpush1.msra.mxu0 0.0
  %483 = vmatprep.subr.mxu0 0.0
  %484 = vmatpush1.msra.mxu0 0.0
  %485 = vmatprep.subr.mxu0 0.0
  %486 = vmatpush1.msra.mxu0 0.0
  %487 = vmatprep.mubr.f32.mxu0 0.0
  %488 = vmatmul.mubr.f32.gmra.mrb[0].mxu0 %v421
  %v489 = vpop.f32.mrb[0].mxu0
  %v490 = vadd.f32 0.0, %v489
  %v491 = vpop.f32.mrb[0].mxu0
  %492 = vdwg.mxu0
  %494 = vrot.lane.b32.xlu0 %v490, 16
  %v495 = vpop.permute.xlu0 %494
  %vm497 = vcmask 261248
  %498 = vst.msk [vmem:[#allocation3] sm:$0xff] %vm497, %v495
  %v499 = vld [vmem:[#allocation2] sm:$0xff]
  %v500 = vld [vmem:[#allocation2 + $0x8] sm:$0xff]
  %502 = vrot.lane.b32.xlu0 %v499, 96
  %v503 = vpop.permute.xlu0 %502
  %504 = vrot.lane.b32.xlu0 %v499, 32
  %v505 = vpop.permute.xlu0 %504
  %v506 = vsel %vm159, %v503, 0
  %v508 = vsel %vm159, %v505, 0
  %510 = vmatprep.subr.mxu0 0.0
  %511 = vmatpush1.xpose.msra.mxu0 %v508
  %512 = vmatprep.subr.mxu0 0.0
  %513 = vmatpush1.xpose.msra.mxu0 0.0
  %514 = vmatprep.subr.mxu0 0.0
  %515 = vmatpush1.xpose.msra.mxu0 0.0
  %516 = vmatprep.subr.mxu0 0.0
  %517 = vmatpush1.xpose.msra.mxu0 0.0
  %518 = vmatprep.subr.mxu0 0.0
  %519 = vmatpush1.xpose.msra.mxu0 0.0
  %520 = vmatprep.subr.mxu0 0.0
  %521 = vmatpush1.xpose.msra.mxu0 0.0
  %522 = vmatprep.subr.mxu0 0.0
  %523 = vmatpush1.xpose.msra.mxu0 0.0
  %524 = vmatprep.subr.mxu0 0.0
  %525 = vmatpush1.xpose.msra.mxu0 0.0
  %526 = vmatprep.subr.mxu0 0.0
  %527 = vmatpush1.xpose.msra.mxu0 0.0
  %528 = vmatprep.subr.mxu0 0.0
  %529 = vmatpush1.xpose.msra.mxu0 0.0
  %530 = vmatprep.subr.mxu0 0.0
  %531 = vmatpush1.xpose.msra.mxu0 0.0
  %532 = vmatprep.subr.mxu0 0.0
  %533 = vmatpush1.xpose.msra.mxu0 0.0
  %534 = vmatprep.subr.mxu0 0.0
  %535 = vmatpush1.xpose.msra.mxu0 0.0
  %536 = vmatprep.subr.mxu0 0.0
  %537 = vmatpush1.xpose.msra.mxu0 0.0
  %538 = vmatprep.subr.mxu0 0.0
  %539 = vmatpush1.xpose.msra.mxu0 0.0
  %540 = vmatprep.subr.mxu0 0.0
  %541 = vmatpush1.xpose.msra.mxu0 0.0
  %542 = vmatprep.subr.mxu0 0.0
  %543 = vmatpush1.xpose.msra.mxu0 0.0
  %544 = vmatprep.subr.mxu0 0.0
  %545 = vmatpush1.xpose.msra.mxu0 0.0
  %546 = vmatprep.subr.mxu0 0.0
  %547 = vmatpush1.xpose.msra.mxu0 0.0
  %548 = vmatprep.subr.mxu0 0.0
  %549 = vmatpush1.xpose.msra.mxu0 0.0
  %550 = vmatprep.subr.mxu0 0.0
  %551 = vmatpush1.xpose.msra.mxu0 0.0
  %552 = vmatprep.subr.mxu0 0.0
  %553 = vmatpush1.xpose.msra.mxu0 0.0
  %554 = vmatprep.subr.mxu0 0.0
  %555 = vmatpush1.xpose.msra.mxu0 0.0
  %556 = vmatprep.subr.mxu0 0.0
  %557 = vmatpush1.xpose.msra.mxu0 0.0
  %558 = vmatprep.subr.mxu0 0.0
  %559 = vmatpush1.xpose.msra.mxu0 0.0
  %560 = vmatprep.subr.mxu0 0.0
  %561 = vmatpush1.xpose.msra.mxu0 0.0
  %562 = vmatprep.subr.mxu0 0.0
  %563 = vmatpush1.xpose.msra.mxu0 0.0
  %564 = vmatprep.subr.mxu0 0.0
  %565 = vmatpush1.xpose.msra.mxu0 0.0
  %566 = vmatprep.subr.mxu0 0.0
  %567 = vmatpush1.xpose.msra.mxu0 0.0
  %568 = vmatprep.subr.mxu0 0.0
  %569 = vmatpush1.xpose.msra.mxu0 0.0
  %570 = vmatprep.subr.mxu0 0.0
  %571 = vmatpush1.xpose.msra.mxu0 0.0
  %572 = vmatprep.subr.mxu0 0.0
  %573 = vmatpush1.xpose.msra.mxu0 0.0
  %574 = vmatprep.mubr.f32.mxu0 0.0
  %575 = vmatmul.mubr.f32.gmra.mrb[0].mxu0 %v506
  %v576 = vpop.f32.mrb[0].mxu0
  %v577 = vadd.f32 0.0, %v576
  %v578 = vpop.f32.mrb[0].mxu0
  %579 = vdwg.mxu0
  %v580 = vmul.f32 %v577, 0.25
  %v581 = vadd.f32 %v580, %v153
  %v582 = vsel %vm236, %v581, -inf
  %583 = vmax.xlane.f32.xlu0 %v582
  %v584 = vpop.xlane.xlu0 %583
  %v585 = vsub.f32 %v581, %v584
  %v586 = vmul.f32 %v585, 1.442695
  %v587 = vpow.pop %v586
  %v588 = vsel %vm236, %v587, 0.0
  %589 = vadd.xlane.f32.xlu0 %v588
  %v590 = vpop.xlane.xlu0 %589
  %v591 = vrcp.pop %v590
  %v592 = vmul.f32 %v587, %v591
  %594 = vrot.lane.b32.xlu0 %v500, 96
  %v595 = vpop.permute.xlu0 %594
  %v598 = vsel %vm236, %v592, 0
  %600 = vmatprep.subr.mxu0 0.0
  %601 = vmatpush1.msra.mxu0 %v595
  %602 = vmatprep.subr.mxu0 0.0
  %603 = vmatpush1.msra.mxu0 0.0
  %604 = vmatprep.subr.mxu0 0.0
  %605 = vmatpush1.msra.mxu0 0.0
  %606 = vmatprep.subr.mxu0 0.0
  %607 = vmatpush1.msra.mxu0 0.0
  %608 = vmatprep.subr.mxu0 0.0
  %609 = vmatpush1.msra.mxu0 0.0
  %610 = vmatprep.subr.mxu0 0.0
  %611 = vmatpush1.msra.mxu0 0.0
  %612 = vmatprep.subr.mxu0 0.0
  %613 = vmatpush1.msra.mxu0 0.0
  %614 = vmatprep.subr.mxu0 0.0
  %615 = vmatpush1.msra.mxu0 0.0
  %616 = vmatprep.subr.mxu0 0.0
  %617 = vmatpush1.msra.mxu0 0.0
  %618 = vmatprep.subr.mxu0 0.0
  %619 = vmatpush1.msra.mxu0 0.0
  %620 = vmatprep.subr.mxu0 0.0
  %621 = vmatpush1.msra.mxu0 0.0
  %622 = vmatprep.subr.mxu0 0.0
  %623 = vmatpush1.msra.mxu0 0.0
  %624 = vmatprep.subr.mxu0 0.0
  %625 = vmatpush1.msra.mxu0 0.0
  %626 = vmatprep.subr.mxu0 0.0
  %627 = vmatpush1.msra.mxu0 0.0
  %628 = vmatprep.subr.mxu0 0.0
  %629 = vmatpush1.msra.mxu0 0.0
  %630 = vmatprep.subr.mxu0 0.0
  %631 = vmatpush1.msra.mxu0 0.0
  %632 = vmatprep.subr.mxu0 0.0
  %633 = vmatpush1.msra.mxu0 0.0
  %634 = vmatprep.subr.mxu0 0.0
  %635 = vmatpush1.msra.mxu0 0.0
  %636 = vmatprep.subr.mxu0 0.0
  %637 = vmatpush1.msra.mxu0 0.0
  %638 = vmatprep.subr.mxu0 0.0
  %639 = vmatpush1.msra.mxu0 0.0
  %640 = vmatprep.subr.mxu0 0.0
  %641 = vmatpush1.msra.mxu0 0.0
  %642 = vmatprep.subr.mxu0 0.0
  %643 = vmatpush1.msra.mxu0 0.0
  %644 = vmatprep.subr.mxu0 0.0
  %645 = vmatpush1.msra.mxu0 0.0
  %646 = vmatprep.subr.mxu0 0.0
  %647 = vmatpush1.msra.mxu0 0.0
  %648 = vmatprep.subr.mxu0 0.0
  %649 = vmatpush1.msra.mxu0 0.0
  %650 = vmatprep.subr.mxu0 0.0
  %651 = vmatpush1.msra.mxu0 0.0
  %652 = vmatprep.subr.mxu0 0.0
  %653 = vmatpush1.msra.mxu0 0.0
  %654 = vmatprep.subr.mxu0 0.0
  %655 = vmatpush1.msra.mxu0 0.0
  %656 = vmatprep.subr.mxu0 0.0
  %657 = vmatpush1.msra.mxu0 0.0
  %658 = vmatprep.subr.mxu0 0.0
  %659 = vmatpush1.msra.mxu0 0.0
  %660 = vmatprep.subr.mxu0 0.0
  %661 = vmatpush1.msra.mxu0 0.0
  %662 = vmatprep.subr.mxu0 0.0
  %663 = vmatpush1.msra.mxu0 0.0
  %664 = vmatprep.mubr.f32.mxu0 0.0
  %665 = vmatmul.mubr.f32.gmra.mrb[0].mxu0 %v598
  %v666 = vpop.f32.mrb[0].mxu0
  %v667 = vadd.f32 0.0, %v666
  %v668 = vpop.f32.mrb[0].mxu0
  %669 = vdwg.mxu0
  %671 = vrot.lane.b32.xlu0 %v667, 32
  %v672 = vpop.permute.xlu0 %671
  %vm674 = vcmask 392448
  %675 = vst.msk [vmem:[#allocation3] sm:$0xff] %vm674, %v672
  %v676 = vld [vmem:[#allocation2] sm:$0xff]
  %v677 = vld [vmem:[#allocation2 + $0x8] sm:$0xff]
  %679 = vrot.lane.b32.xlu0 %v676, 80
  %v680 = vpop.permute.xlu0 %679
  %681 = vrot.lane.b32.xlu0 %v676, 16
  %v682 = vpop.permute.xlu0 %681
  %v683 = vsel %vm159, %v680, 0
  %v685 = vsel %vm159, %v682, 0
  %687 = vmatprep.subr.mxu0 0.0
  %688 = vmatpush1.xpose.msra.mxu0 %v685
  %689 = vmatprep.subr.mxu0 0.0
  %690 = vmatpush1.xpose.msra.mxu0 0.0
  %691 = vmatprep.subr.mxu0 0.0
  %692 = vmatpush1.xpose.msra.mxu0 0.0
  %693 = vmatprep.subr.mxu0 0.0
  %694 = vmatpush1.xpose.msra.mxu0 0.0
  %695 = vmatprep.subr.mxu0 0.0
  %696 = vmatpush1.xpose.msra.mxu0 0.0
  %697 = vmatprep.subr.mxu0 0.0
  %698 = vmatpush1.xpose.msra.mxu0 0.0
  %699 = vmatprep.subr.mxu0 0.0
  %700 = vmatpush1.xpose.msra.mxu0 0.0
  %701 = vmatprep.subr.mxu0 0.0
  %702 = vmatpush1.xpose.msra.mxu0 0.0
  %703 = vmatprep.subr.mxu0 0.0
  %704 = vmatpush1.xpose.msra.mxu0 0.0
  %705 = vmatprep.subr.mxu0 0.0
  %706 = vmatpush1.xpose.msra.mxu0 0.0
  %707 = vmatprep.subr.mxu0 0.0
  %708 = vmatpush1.xpose.msra.mxu0 0.0
  %709 = vmatprep.subr.mxu0 0.0
  %710 = vmatpush1.xpose.msra.mxu0 0.0
  %711 = vmatprep.subr.mxu0 0.0
  %712 = vmatpush1.xpose.msra.mxu0 0.0
  %713 = vmatprep.subr.mxu0 0.0
  %714 = vmatpush1.xpose.msra.mxu0 0.0
  %715 = vmatprep.subr.mxu0 0.0
  %716 = vmatpush1.xpose.msra.mxu0 0.0
  %717 = vmatprep.subr.mxu0 0.0
  %718 = vmatpush1.xpose.msra.mxu0 0.0
  %719 = vmatprep.subr.mxu0 0.0
  %720 = vmatpush1.xpose.msra.mxu0 0.0
  %721 = vmatprep.subr.mxu0 0.0
  %722 = vmatpush1.xpose.msra.mxu0 0.0
  %723 = vmatprep.subr.mxu0 0.0
  %724 = vmatpush1.xpose.msra.mxu0 0.0
  %725 = vmatprep.subr.mxu0 0.0
  %726 = vmatpush1.xpose.msra.mxu0 0.0
  %727 = vmatprep.subr.mxu0 0.0
  %728 = vmatpush1.xpose.msra.mxu0 0.0
  %729 = vmatprep.subr.mxu0 0.0
  %730 = vmatpush1.xpose.msra.mxu0 0.0
  %731 = vmatprep.subr.mxu0 0.0
  %732 = vmatpush1.xpose.msra.mxu0 0.0
  %733 = vmatprep.subr.mxu0 0.0
  %734 = vmatpush1.xpose.msra.mxu0 0.0
  %735 = vmatprep.subr.mxu0 0.0
  %736 = vmatpush1.xpose.msra.mxu0 0.0
  %737 = vmatprep.subr.mxu0 0.0
  %738 = vmatpush1.xpose.msra.mxu0 0.0
  %739 = vmatprep.subr.mxu0 0.0
  %740 = vmatpush1.xpose.msra.mxu0 0.0
  %741 = vmatprep.subr.mxu0 0.0
  %742 = vmatpush1.xpose.msra.mxu0 0.0
  %743 = vmatprep.subr.mxu0 0.0
  %744 = vmatpush1.xpose.msra.mxu0 0.0
  %745 = vmatprep.subr.mxu0 0.0
  %746 = vmatpush1.xpose.msra.mxu0 0.0
  %747 = vmatprep.subr.mxu0 0.0
  %748 = vmatpush1.xpose.msra.mxu0 0.0
  %749 = vmatprep.subr.mxu0 0.0
  %750 = vmatpush1.xpose.msra.mxu0 0.0
  %751 = vmatprep.mubr.f32.mxu0 0.0
  %752 = vmatmul.mubr.f32.gmra.mrb[0].mxu0 %v683
  %v753 = vpop.f32.mrb[0].mxu0
  %v754 = vadd.f32 0.0, %v753
  %v755 = vpop.f32.mrb[0].mxu0
  %756 = vdwg.mxu0
  %v757 = vmul.f32 %v754, 0.25
  %v758 = vadd.f32 %v757, %v153
  %v759 = vsel %vm236, %v758, -inf
  %760 = vmax.xlane.f32.xlu0 %v759
  %v761 = vpop.xlane.xlu0 %760
  %v762 = vsub.f32 %v758, %v761
  %v763 = vmul.f32 %v762, 1.442695
  %v764 = vpow.pop %v763
  %v765 = vsel %vm236, %v764, 0.0
  %766 = vadd.xlane.f32.xlu0 %v765
  %v767 = vpop.xlane.xlu0 %766
  %v768 = vrcp.pop %v767
  %v769 = vmul.f32 %v764, %v768
  %771 = vrot.lane.b32.xlu0 %v677, 80
  %v772 = vpop.permute.xlu0 %771
  %v775 = vsel %vm236, %v769, 0
  %777 = vmatprep.subr.mxu0 0.0
  %778 = vmatpush1.msra.mxu0 %v772
  %779 = vmatprep.subr.mxu0 0.0
  %780 = vmatpush1.msra.mxu0 0.0
  %781 = vmatprep.subr.mxu0 0.0
  %782 = vmatpush1.msra.mxu0 0.0
  %783 = vmatprep.subr.mxu0 0.0
  %784 = vmatpush1.msra.mxu0 0.0
  %785 = vmatprep.subr.mxu0 0.0
  %786 = vmatpush1.msra.mxu0 0.0
  %787 = vmatprep.subr.mxu0 0.0
  %788 = vmatpush1.msra.mxu0 0.0
  %789 = vmatprep.subr.mxu0 0.0
  %790 = vmatpush1.msra.mxu0 0.0
  %791 = vmatprep.subr.mxu0 0.0
  %792 = vmatpush1.msra.mxu0 0.0
  %793 = vmatprep.subr.mxu0 0.0
  %794 = vmatpush1.msra.mxu0 0.0
  %795 = vmatprep.subr.mxu0 0.0
  %796 = vmatpush1.msra.mxu0 0.0
  %797 = vmatprep.subr.mxu0 0.0
  %798 = vmatpush1.msra.mxu0 0.0
  %799 = vmatprep.subr.mxu0 0.0
  %800 = vmatpush1.msra.mxu0 0.0
  %801 = vmatprep.subr.mxu0 0.0
  %802 = vmatpush1.msra.mxu0 0.0
  %803 = vmatprep.subr.mxu0 0.0
  %804 = vmatpush1.msra.mxu0 0.0
  %805 = vmatprep.subr.mxu0 0.0
  %806 = vmatpush1.msra.mxu0 0.0
  %807 = vmatprep.subr.mxu0 0.0
  %808 = vmatpush1.msra.mxu0 0.0
  %809 = vmatprep.subr.mxu0 0.0
  %810 = vmatpush1.msra.mxu0 0.0
  %811 = vmatprep.subr.mxu0 0.0
  %812 = vmatpush1.msra.mxu0 0.0
  %813 = vmatprep.subr.mxu0 0.0
  %814 = vmatpush1.msra.mxu0 0.0
  %815 = vmatprep.subr.mxu0 0.0
  %816 = vmatpush1.msra.mxu0 0.0
  %817 = vmatprep.subr.mxu0 0.0
  %818 = vmatpush1.msra.mxu0 0.0
  %819 = vmatprep.subr.mxu0 0.0
  %820 = vmatpush1.msra.mxu0 0.0
  %821 = vmatprep.subr.mxu0 0.0
  %822 = vmatpush1.msra.mxu0 0.0
  %823 = vmatprep.subr.mxu0 0.0
  %824 = vmatpush1.msra.mxu0 0.0
  %825 = vmatprep.subr.mxu0 0.0
  %826 = vmatpush1.msra.mxu0 0.0
  %827 = vmatprep.subr.mxu0 0.0
  %828 = vmatpush1.msra.mxu0 0.0
  %829 = vmatprep.subr.mxu0 0.0
  %830 = vmatpush1.msra.mxu0 0.0
  %831 = vmatprep.subr.mxu0 0.0
  %832 = vmatpush1.msra.mxu0 0.0
  %833 = vmatprep.subr.mxu0 0.0
  %834 = vmatpush1.msra.mxu0 0.0
  %835 = vmatprep.subr.mxu0 0.0
  %836 = vmatpush1.msra.mxu0 0.0
  %837 = vmatprep.subr.mxu0 0.0
  %838 = vmatpush1.msra.mxu0 0.0
  %839 = vmatprep.subr.mxu0 0.0
  %840 = vmatpush1.msra.mxu0 0.0
  %841 = vmatprep.mubr.f32.mxu0 0.0
  %842 = vmatmul.mubr.f32.gmra.mrb[0].mxu0 %v775
  %v843 = vpop.f32.mrb[0].mxu0
  %v844 = vadd.f32 0.0, %v843
  %v845 = vpop.f32.mrb[0].mxu0
  %846 = vdwg.mxu0
  %848 = vrot.lane.b32.xlu0 %v844, 48
  %v849 = vpop.permute.xlu0 %848
  %vm851 = vcmask 523648
  %852 = vst.msk [vmem:[#allocation3] sm:$0xff] %vm851, %v849
  %v853 = vld [vmem:[#allocation3] sm:$0xff]
  %v854 = vld [vmem:[%s4] sm:$0xff]
  %v855 = vld [vmem:[%s4 + $0x8] sm:$0xff]
  %v856 = vld [vmem:[%s4 + $0x10] sm:$0xff]
  %v857 = vld [vmem:[%s4 + $0x18] sm:$0xff]
  %v858 = vld [vmem:[%s4 + $0x20] sm:$0xff]
  %v859 = vld [vmem:[%s4 + $0x28] sm:$0xff]
  %v860 = vld [vmem:[%s4 + $0x30] sm:$0xff]
  %v861 = vld [vmem:[%s4 + $0x38] sm:$0xff]
  %v862 = vld [vmem:[%s5] sm:$0x1]
  %v864 = vlaneseq
  %v865 = vshrl.u32 %v864, 7
  %v866 = vsub.s32 0, %v865
  %v867 = vrot.slane %v862, %v866
  %v870 = vsel %vm76, %v853, 0
  %872 = vmatprep.subr.mxu0 0.0
  %873 = vmatpush1.msra.mxu0 %v854
  %874 = vmatprep.subr.mxu0 0.0
  %875 = vmatpush1.msra.mxu0 %v855
  %876 = vmatprep.subr.mxu0 0.0
  %877 = vmatpush1.msra.mxu0 %v856
  %878 = vmatprep.subr.mxu0 0.0
  %879 = vmatpush1.msra.mxu0 %v857
  %880 = vmatprep.subr.mxu0 0.0
  %881 = vmatpush1.msra.mxu0 %v858
  %882 = vmatprep.subr.mxu0 0.0
  %883 = vmatpush1.msra.mxu0 %v859
  %884 = vmatprep.subr.mxu0 0.0
  %885 = vmatpush1.msra.mxu0 %v860
  %886 = vmatprep.subr.mxu0 0.0
  %887 = vmatpush1.msra.mxu0 %v861
  %888 = vmatprep.subr.mxu0 0.0
  %889 = vmatpush1.msra.mxu0 0.0
  %890 = vmatprep.subr.mxu0 0.0
  %891 = vmatpush1.msra.mxu0 0.0
  %892 = vmatprep.subr.mxu0 0.0
  %893 = vmatpush1.msra.mxu0 0.0
  %894 = vmatprep.subr.mxu0 0.0
  %895 = vmatpush1.msra.mxu0 0.0
  %896 = vmatprep.subr.mxu0 0.0
  %897 = vmatpush1.msra.mxu0 0.0
  %898 = vmatprep.subr.mxu0 0.0
  %899 = vmatpush1.msra.mxu0 0.0
  %900 = vmatprep.subr.mxu0 0.0
  %901 = vmatpush1.msra.mxu0 0.0
  %902 = vmatprep.subr.mxu0 0.0
  %903 = vmatpush1.msra.mxu0 0.0
  %904 = vmatprep.subr.mxu0 0.0
  %905 = vmatpush1.msra.mxu0 0.0
  %906 = vmatprep.subr.mxu0 0.0
  %907 = vmatpush1.msra.mxu0 0.0
  %908 = vmatprep.subr.mxu0 0.0
  %909 = vmatpush1.msra.mxu0 0.0
  %910 = vmatprep.subr.mxu0 0.0
  %911 = vmatpush1.msra.mxu0 0.0
  %912 = vmatprep.subr.mxu0 0.0
  %913 = vmatpush1.msra.mxu0 0.0
  %914 = vmatprep.subr.mxu0 0.0
  %915 = vmatpush1.msra.mxu0 0.0
  %916 = vmatprep.subr.mxu0 0.0
  %917 = vmatpush1.msra.mxu0 0.0
  %918 = vmatprep.subr.mxu0 0.0
  %919 = vmatpush1.msra.mxu0 0.0
  %920 = vmatprep.subr.mxu0 0.0
  %921 = vmatpush1.msra.mxu0 0.0
  %922 = vmatprep.subr.mxu0 0.0
  %923 = vmatpush1.msra.mxu0 0.0
  %924 = vmatprep.subr.mxu0 0.0
  %925 = vmatpush1.msra.mxu0 0.0
  %926 = vmatprep.subr.mxu0 0.0
  %927 = vmatpush1.msra.mxu0 0.0
  %928 = vmatprep.subr.mxu0 0.0
  %929 = vmatpush1.msra.mxu0 0.0
  %930 = vmatprep.subr.mxu0 0.0
  %931 = vmatpush1.msra.mxu0 0.0
  %932 = vmatprep.subr.mxu0 0.0
  %933 = vmatpush1.msra.mxu0 0.0
  %934 = vmatprep.subr.mxu0 0.0
  %935 = vmatpush1.msra.mxu0 0.0
  %936 = vmatprep.mubr.f32.mxu0 0.0
  %937 = vmatmul.mubr.f32.gmra.mrb[0].mxu0 %v870
  %v938 = vpop.f32.mrb[0].mxu0
  %v939 = vadd.f32 %v867, %v938
  %v940 = vpop.f32.mrb[0].mxu0
  %941 = vdwg.mxu0
  %v942 = vadd.f32 %v47, %v939
  %v943 = vld [vmem:[%s6] sm:$0x1]
  %v944 = vld [vmem:[%s7] sm:$0x1]
  %v945 = vsel %vm76, %v942, 0.0
  %946 = vadd.xlane.f32.xlu0 %v945
  %v947 = vpop.xlane.xlu0 %946
  %v948 = vrcp.pop 64.0
  %v949 = vmul.f32 %v947, %v948
  %v950 = vsub.f32 %v942, %v949
  %v951 = vmul.f32 %v950, %v950
  %v952 = vsel %vm76, %v951, 0.0
  %953 = vadd.xlane.f32.xlu0 %v952
  %v954 = vpop.xlane.xlu0 %953
  %v955 = vmul.f32 %v954, %v948
  %v956 = vadd.f32 %v955, 1e-05
  %v957 = vrsqrt.pop %v956
  %v958 = vmul.f32 %v950, %v957
  %v960 = vlaneseq
  %v961 = vshrl.u32 %v960, 7
  %v962 = vsub.s32 0, %v961
  %v963 = vrot.slane %v943, %v962
  %v965 = vmul.f32 %v958, %v963
  %v967 = vlaneseq
  %v968 = vshrl.u32 %v967, 7
  %v969 = vsub.s32 0, %v968
  %v970 = vrot.slane %v944, %v969
  %v972 = vadd.f32 %v965, %v970
  %v973 = vld [vmem:[%s8] sm:$0xff]
  %v974 = vld [vmem:[%s8 + $0x8] sm:$0xff]
  %v975 = vld [vmem:[%s8 + $0x10] sm:$0xff]
  %v976 = vld [vmem:[%s8 + $0x18] sm:$0xff]
  %v977 = vld [vmem:[%s8 + $0x20] sm:$0xff]
  %v978 = vld [vmem:[%s8 + $0x28] sm:$0xff]
  %v979 = vld [vmem:[%s8 + $0x30] sm:$0xff]
  %v980 = vld [vmem:[%s8 + $0x38] sm:$0xff]
  %v981 = vld [vmem:[%s8 + $0x40] sm:$0xff]
  %v982 = vld [vmem:[%s8 + $0x48] sm:$0xff]
  %v983 = vld [vmem:[%s8 + $0x50] sm:$0xff]
  %v984 = vld [vmem:[%s8 + $0x58] sm:$0xff]
  %v985 = vld [vmem:[%s8 + $0x60] sm:$0xff]
  %v986 = vld [vmem:[%s8 + $0x68] sm:$0xff]
  %v987 = vld [vmem:[%s8 + $0x70] sm:$0xff]
  %v988 = vld [vmem:[%s8 + $0x78] sm:$0xff]
  %v989 = vld [vmem:[%s9] sm:$0x3]
  %v991 = vlaneseq
  %v992 = vshrl.u32 %v991, 7
  %v993 = vsub.s32 0, %v992
  %v994 = vrot.slane %v989, %v993
  %v995 = vlaneseq
  %v996 = vshrl.u32 %v995, 7
  %v997 = vsub.s32 1, %v996
  %v998 = vrot.slane %v989, %v997
  %v1002 = vsel %vm76, %v972, 0
  %1004 = vmatprep.subr.mxu0 %v974
  %1005 = vmatpush1.msra.mxu0 %v973
  %1006 = vmatprep.subr.mxu0 %v976
  %1007 = vmatpush1.msra.mxu0 %v975
  %1008 = vmatprep.subr.mxu0 %v978
  %1009 = vmatpush1.msra.mxu0 %v977
  %1010 = vmatprep.subr.mxu0 %v980
  %1011 = vmatpush1.msra.mxu0 %v979
  %1012 = vmatprep.subr.mxu0 %v982
  %1013 = vmatpush1.msra.mxu0 %v981
  %1014 = vmatprep.subr.mxu0 %v984
  %1015 = vmatpush1.msra.mxu0 %v983
  %1016 = vmatprep.subr.mxu0 %v986
  %1017 = vmatpush1.msra.mxu0 %v985
  %1018 = vmatprep.subr.mxu0 %v988
  %1019 = vmatpush1.msra.mxu0 %v987
  %1020 = vmatprep.subr.mxu0 0.0
  %1021 = vmatpush1.msra.mxu0 0.0
  %1022 = vmatprep.subr.mxu0 0.0
  %1023 = vmatpush1.msra.mxu0 0.0
  %1024 = vmatprep.subr.mxu0 0.0
  %1025 = vmatpush1.msra.mxu0 0.0
  %1026 = vmatprep.subr.mxu0 0.0
  %1027 = vmatpush1.msra.mxu0 0.0
  %1028 = vmatprep.subr.mxu0 0.0
  %1029 = vmatpush1.msra.mxu0 0.0
  %1030 = vmatprep.subr.mxu0 0.0
  %1031 = vmatpush1.msra.mxu0 0.0
  %1032 = vmatprep.subr.mxu0 0.0
  %1033 = vmatpush1.msra.mxu0 0.0
  %1034 = vmatprep.subr.mxu0 0.0
  %1035 = vmatpush1.msra.mxu0 0.0
  %1036 = vmatprep.subr.mxu0 0.0
  %1037 = vmatpush1.msra.mxu0 0.0
  %1038 = vmatprep.subr.mxu0 0.0
  %1039 = vmatpush1.msra.mxu0 0.0
  %1040 = vmatprep.subr.mxu0 0.0
  %1041 = vmatpush1.msra.mxu0 0.0
  %1042 = vmatprep.subr.mxu0 0.0
  %1043 = vmatpush1.msra.mxu0 0.0
  %1044 = vmatprep.subr.mxu0 0.0
  %1045 = vmatpush1.msra.mxu0 0.0
  %1046 = vmatprep.subr.mxu0 0.0
  %1047 = vmatpush1.msra.mxu0 0.0
  %1048 = vmatprep.subr.mxu0 0.0
  %1049 = vmatpush1.msra.mxu0 0.0
  %1050 = vmatprep.subr.mxu0 0.0
  %1051 = vmatpush1.msra.mxu0 0.0
  %1052 = vmatprep.subr.mxu0 0.0
  %1053 = vmatpush1.msra.mxu0 0.0
  %1054 = vmatprep.subr.mxu0 0.0
  %1055 = vmatpush1.msra.mxu0 0.0
  %1056 = vmatprep.subr.mxu0 0.0
  %1057 = vmatpush1.msra.mxu0 0.0
  %1058 = vmatprep.subr.mxu0 0.0
  %1059 = vmatpush1.msra.mxu0 0.0
  %1060 = vmatprep.subr.mxu0 0.0
  %1061 = vmatpush1.msra.mxu0 0.0
  %1062 = vmatprep.subr.mxu0 0.0
  %1063 = vmatpush1.msra.mxu0 0.0
  %1064 = vmatprep.subr.mxu0 0.0
  %1065 = vmatpush1.msra.mxu0 0.0
  %1066 = vmatprep.subr.mxu0 0.0
  %1067 = vmatpush1.msra.mxu0 0.0
  %1068 = vmatprep.mubr.f32.mxu0 0.0
  %1069 = vmatmul.mubr.f32.gmra.mrb[0].mxu0 %v1002
  %v1070 = vpop.f32.mrb[0].mxu0
  %v1071 = vadd.f32 %v994, %v1070
  %v1072 = vpop.f32.mrb[0].mxu0
  %v1073 = vadd.f32 %v998, %v1072
  %1074 = vdwg.mxu0
  %v1075 = vmul.f32 %v1071, 0.5
  %v1076 = vmul.f32 %v1073, 0.5
  %v1077 = vmul.f32 %v1071, 0.70710677
  %v1078 = vmul.f32 %v1073, 0.70710677
  %v1079 = verf.f32.pop %v1077
  %v1080 = verf.f32.pop %v1078
  %v1081 = vadd.f32 %v1079, 1.0
  %v1082 = vadd.f32 %v1080, 1.0
  %v1083 = vmul.f32 %v1075, %v1081
  %v1084 = vmul.f32 %v1076, %v1082
  %v1085 = vld [vmem:[%s10] sm:$0xff]
  %v1086 = vld [vmem:[%s10 + $0x8] sm:$0xff]
  %v1087 = vld [vmem:[%s10 + $0x10] sm:$0xff]
  %v1088 = vld [vmem:[%s10 + $0x18] sm:$0xff]
  %v1089 = vld [vmem:[%s10 + $0x20] sm:$0xff]
  %v1090 = vld [vmem:[%s10 + $0x28] sm:$0xff]
  %v1091 = vld [vmem:[%s10 + $0x30] sm:$0xff]
  %v1092 = vld [vmem:[%s10 + $0x38] sm:$0xff]
  %v1093 = vld [vmem:[%s10 + $0x40] sm:$0xff]
  %v1094 = vld [vmem:[%s10 + $0x48] sm:$0xff]
  %v1095 = vld [vmem:[%s10 + $0x50] sm:$0xff]
  %v1096 = vld [vmem:[%s10 + $0x58] sm:$0xff]
  %v1097 = vld [vmem:[%s10 + $0x60] sm:$0xff]
  %v1098 = vld [vmem:[%s10 + $0x68] sm:$0xff]
  %v1099 = vld [vmem:[%s10 + $0x70] sm:$0xff]
  %v1100 = vld [vmem:[%s10 + $0x78] sm:$0xff]
  %v1101 = vld [vmem:[%s10 + $0x80] sm:$0xff]
  %v1102 = vld [vmem:[%s10 + $0x88] sm:$0xff]
  %v1103 = vld [vmem:[%s10 + $0x90] sm:$0xff]
  %v1104 = vld [vmem:[%s10 + $0x98] sm:$0xff]
  %v1105 = vld [vmem:[%s10 + $0xa0] sm:$0xff]
  %v1106 = vld [vmem:[%s10 + $0xa8] sm:$0xff]
  %v1107 = vld [vmem:[%s10 + $0xb0] sm:$0xff]
  %v1108 = vld [vmem:[%s10 + $0xb8] sm:$0xff]
  %v1109 = vld [vmem:[%s10 + $0xc0] sm:$0xff]
  %v1110 = vld [vmem:[%s10 + $0xc8] sm:$0xff]
  %v1111 = vld [vmem:[%s10 + $0xd0] sm:$0xff]
  %v1112 = vld [vmem:[%s10 + $0xd8] sm:$0xff]
  %v1113 = vld [vmem:[%s10 + $0xe0] sm:$0xff]
  %v1114 = vld [vmem:[%s10 + $0xe8] sm:$0xff]
  %v1115 = vld [vmem:[%s10 + $0xf0] sm:$0xff]
  %v1116 = vld [vmem:[%s10 + $0xf8] sm:$0xff]
  %v1117 = vld [vmem:[%s11] sm:$0x1]
  %v1119 = vlaneseq
  %v1120 = vshrl.u32 %v1119, 7
  %v1121 = vsub.s32 0, %v1120
  %v1122 = vrot.slane %v1117, %v1121
  %1124 = vmatprep.subr.mxu0 0.0
  %1125 = vmatpush1.msra.mxu0 %v1085
  %1126 = vmatprep.subr.mxu0 0.0
  %1127 = vmatpush1.msra.mxu0 %v1086
  %1128 = vmatprep.subr.mxu0 0.0
  %1129 = vmatpush1.msra.mxu0 %v1087
  %1130 = vmatprep.subr.mxu0 0.0
  %1131 = vmatpush1.msra.mxu0 %v1088
  %1132 = vmatprep.subr.mxu0 0.0
  %1133 = vmatpush1.msra.mxu0 %v1089
  %1134 = vmatprep.subr.mxu0 0.0
  %1135 = vmatpush1.msra.mxu0 %v1090
  %1136 = vmatprep.subr.mxu0 0.0
  %1137 = vmatpush1.msra.mxu0 %v1091
  %1138 = vmatprep.subr.mxu0 0.0
  %1139 = vmatpush1.msra.mxu0 %v1092
  %1140 = vmatprep.subr.mxu0 0.0
  %1141 = vmatpush1.msra.mxu0 %v1093
  %1142 = vmatprep.subr.mxu0 0.0
  %1143 = vmatpush1.msra.mxu0 %v1094
  %1144 = vmatprep.subr.mxu0 0.0
  %1145 = vmatpush1.msra.mxu0 %v1095
  %1146 = vmatprep.subr.mxu0 0.0
  %1147 = vmatpush1.msra.mxu0 %v1096
  %1148 = vmatprep.subr.mxu0 0.0
  %1149 = vmatpush1.msra.mxu0 %v1097
  %1150 = vmatprep.subr.mxu0 0.0
  %1151 = vmatpush1.msra.mxu0 %v1098
  %1152 = vmatprep.subr.mxu0 0.0
  %1153 = vmatpush1.msra.mxu0 %v1099
  %1154 = vmatprep.subr.mxu0 0.0
  %1155 = vmatpush1.msra.mxu0 %v1100
  %1156 = vmatprep.subr.mxu0 0.0
  %1157 = vmatpush1.msra.mxu0 %v1101
  %1158 = vmatprep.subr.mxu0 0.0
  %1159 = vmatpush1.msra.mxu0 %v1102
  %1160 = vmatprep.subr.mxu0 0.0
  %1161 = vmatpush1.msra.mxu0 %v1103
  %1162 = vmatprep.subr.mxu0 0.0
  %1163 = vmatpush1.msra.mxu0 %v1104
  %1164 = vmatprep.subr.mxu0 0.0
  %1165 = vmatpush1.msra.mxu0 %v1105
  %1166 = vmatprep.subr.mxu0 0.0
  %1167 = vmatpush1.msra.mxu0 %v1106
  %1168 = vmatprep.subr.mxu0 0.0
  %1169 = vmatpush1.msra.mxu0 %v1107
  %1170 = vmatprep.subr.mxu0 0.0
  %1171 = vmatpush1.msra.mxu0 %v1108
  %1172 = vmatprep.subr.mxu0 0.0
  %1173 = vmatpush1.msra.mxu0 %v1109
  %1174 = vmatprep.subr.mxu0 0.0
  %1175 = vmatpush1.msra.mxu0 %v1110
  %1176 = vmatprep.subr.mxu0 0.0
  %1177 = vmatpush1.msra.mxu0 %v1111
  %1178 = vmatprep.subr.mxu0 0.0
  %1179 = vmatpush1.msra.mxu0 %v1112
  %1180 = vmatprep.subr.mxu0 0.0
  %1181 = vmatpush1.msra.mxu0 %v1113
  %1182 = vmatprep.subr.mxu0 0.0
  %1183 = vmatpush1.msra.mxu0 %v1114
  %1184 = vmatprep.subr.mxu0 0.0
  %1185 = vmatpush1.msra.mxu0 %v1115
  %1186 = vmatprep.subr.mxu0 0.0
  %1187 = vmatpush1.msra.mxu0 %v1116
  %1188 = vmatprep.mubr.f32.mxu0 %v1084
  %1189 = vmatmul.mubr.f32.gmra.mrb[0].mxu0 %v1083
  %v1190 = vpop.f32.mrb[0].mxu0
  %v1191 = vadd.f32 %v1122, %v1190
  %v1192 = vpop.f32.mrb[0].mxu0
  %1193 = vdwg.mxu0
  %v1194 = vadd.f32 %v972, %v1191
  %v1195 = vld [vmem:[%s12] sm:$0x1]
  %v1196 = vld [vmem:[%s13] sm:$0x1]
  %v1197 = vsel %vm76, %v1194, 0.0
  %1198 = vadd.xlane.f32.xlu0 %v1197
  %v1199 = vpop.xlane.xlu0 %1198
  %v1200 = vmul.f32 %v1199, %v948
  %v1201 = vsub.f32 %v1194, %v1200
  %v1202 = vmul.f32 %v1201, %v1201
  %v1203 = vsel %vm76, %v1202, 0.0
  %1204 = vadd.xlane.f32.xlu0 %v1203
  %v1205 = vpop.xlane.xlu0 %1204
  %v1206 = vmul.f32 %v1205, %v948
  %v1207 = vadd.f32 %v1206, 1e-05
  %v1208 = vrsqrt.pop %v1207
  %v1209 = vmul.f32 %v1201, %v1208
  %v1211 = vlaneseq
  %v1212 = vshrl.u32 %v1211, 7
  %v1213 = vsub.s32 0, %v1212
  %v1214 = vrot.slane %v1195, %v1213
  %v1216 = vmul.f32 %v1209, %v1214
  %v1218 = vlaneseq
  %v1219 = vshrl.u32 %v1218, 7
  %v1220 = vsub.s32 0, %v1219
  %v1221 = vrot.slane %v1196, %v1220
  %v1223 = vadd.f32 %v1216, %v1221
  %1224 = vst.msk [vmem:[%s14] sm:$0xff] %vm76, %v1223
  // Predicated region
  $region58: #{resnet_transformer_forward.39} parent=0 // pred_check
    _
  $region59: #{resnet_transformer_forward.39} parent=0 // pred_check_branch
    %1226 = sbr.rel (0) target = $region61
  $region60: #{resnet_transformer_forward.39} parent=0 // pred_region
    _
  $region61: #{resnet_transformer_forward.39} parent=0 // pred_fallthru
    _
  // Predicated region
  $region62: #{resnet_transformer_forward.39} parent=0 // pred_check
    _
  $region63: #{resnet_transformer_forward.39} parent=0 // pred_check_branch
    %1228 = sbr.rel (0) target = $region65
  $region64: #{resnet_transformer_forward.39} parent=0 // pred_region
    _
  $region65: #{resnet_transformer_forward.39} parent=0 // pred_fallthru
    _

</llo_original>
